<compile_context>
chip_gen: v7x
topology: tpu7x:2x2x1
jax: 0.10.0
libtpu: 0.0.40
codegen_flags: <defaults>
</compile_context>

<pallas_src>
import jax
import jax.numpy as jnp
from jax import lax
from jax.experimental import pallas as pl
from jax.experimental.pallas import tpu as pltpu


# (Cin, Cout) of the 5 conv layers inside features[:12]
_CONV_CFG = [(3, 8), (8, 8), (8, 16), (16, 16), (16, 32)]


# --------------------------------------------------------------------------
# Trace-time constant builders (tiny; constant-folded by XLA under jit).
# --------------------------------------------------------------------------
def _tap_gather_matrix(H, W):
    """(9*M, M) 0/1 matrix G (M = H*W) for a 3x3, pad-1 conv in (C, M) layout.

    For tap t = (dh+1)*3 + (dw+1), with G_t = G[t*M:(t+1)*M]:
        (X @ G_t)[c, m] == X[c, m + dh*W + dw]   if (i+dh, j+dw) is in-bounds
                         == 0                    otherwise (zero padding)
    i.e. the shifted+masked tap gather, executed on the MXU inside the kernel.
    """
    M = H * W
    m = jnp.arange(M)
    i, j = m // W, m % W
    rows = jnp.arange(M)[:, None]
    blocks = []
    for dh in (-1, 0, 1):
        for dw in (-1, 0, 1):
            valid = (i + dh >= 0) & (i + dh < H) & (j + dw >= 0) & (j + dw < W)
            src = (i + dh) * W + (j + dw)
            blocks.append((rows == src[None, :]) & valid[None, :])
    return jnp.concatenate(blocks, axis=0).astype(jnp.float32)


def _pool_select_matrix(H, W):
    """(M, M/4) 0/1 matrix S with (X @ S)[c, p] == X[c, 2*(p//Wo)*W + 2*(p%Wo)]."""
    Ho, Wo = H // 2, W // 2
    p = jnp.arange(Ho * Wo)
    src = 2 * (p // Wo) * W + 2 * (p % Wo)
    return (jnp.arange(H * W)[:, None] == src[None, :]).astype(jnp.float32)


# --------------------------------------------------------------------------
# The fused kernel: conv-relu, conv-relu, pool, conv-relu, conv-relu, pool,
# conv-relu — all on VMEM/vreg-resident (C, H*W) activations.
# --------------------------------------------------------------------------
def _features12_kernel(x_ref,
                       w0_ref, b0_ref, w1_ref, b1_ref, w2_ref, b2_ref,
                       w3_ref, b3_ref, w4_ref, b4_ref,
                       g16_ref, g8_ref, g4_ref, s16_ref, s8_ref,
                       o_ref):
    f32 = jnp.float32

    def conv3x3_relu(x, w_ref, b_ref, g_ref):
        # x: (cin, m); w_ref: (9*cout, cin); b_ref: (cout, 1); g_ref: (9*m, m)
        cin, m = x.shape
        cout = w_ref.shape[0] // 9
        acc = jnp.zeros((cout, m), f32)
        for t in range(9):                                   # static unroll
            g_t = g_ref[t * m:(t + 1) * m, :]                # (m, m) 0/1
            tap = jnp.dot(x, g_t, preferred_element_type=f32)        # (cin, m)
            w_t = w_ref[t * cout:(t + 1) * cout, :]          # (cout, cin)
            acc = acc + jnp.dot(w_t, tap, preferred_element_type=f32)
        return jnp.maximum(acc + b_ref[...], 0.0)            # fused bias+ReLU

    def maxpool2x2(x, g_ref, s_ref):
        # x: (c, m) with non-negative (post-ReLU) entries.
        m = x.shape[1]
        # tap (dh=0, dw=+1) is block 5, tap (dh=+1, dw=0) is block 7.
        right = jnp.dot(x, g_ref[5 * m:6 * m, :], preferred_element_type=f32)
        a = jnp.maximum(x, right)          # horizontal pairwise max
        down = jnp.dot(a, g_ref[7 * m:8 * m, :], preferred_element_type=f32)
        b = jnp.maximum(a, down)           # vertical pairwise max
        return jnp.dot(b, s_ref[...], preferred_element_type=f32)  # pick even (i, j)

    x = x_ref[0].astype(f32)                               # (3, 256)
    x = conv3x3_relu(x, w0_ref, b0_ref, g16_ref)           # (8, 256)   layers 0,1
    x = conv3x3_relu(x, w1_ref, b1_ref, g16_ref)           # (8, 256)   layers 2,3
    x = maxpool2x2(x, g16_ref, s16_ref)                    # (8, 64)    layer  4
    x = conv3x3_relu(x, w2_ref, b2_ref, g8_ref)            # (16, 64)   layers 5,6
    x = conv3x3_relu(x, w3_ref, b3_ref, g8_ref)            # (16, 64)   layers 7,8
    x = maxpool2x2(x, g8_ref, s8_ref)                      # (16, 16)   layer  9
    x = conv3x3_relu(x, w4_ref, b4_ref, g4_ref)            # (32, 16)   layers 10,11
    o_ref[0] = x.astype(o_ref.dtype)


# --------------------------------------------------------------------------
# Wrapper: flattened-NCHW in, flattened-NCHW out (no transposes needed).
# --------------------------------------------------------------------------
def feature_extractor(x_nchw, params):
    """features[:12] forward. Input NCHW -> output NCHW (PyTorch semantics)."""
    N, Cin0, H, W = x_nchw.shape
    assert H % 4 == 0 and W % 4 == 0, "two 2x2 pools need H, W divisible by 4"
    f32 = jnp.float32

    flat_inputs = [x_nchw.reshape(N, Cin0, H * W).astype(f32)]
    in_specs = [pl.BlockSpec((1, Cin0, H * W), lambda n: (n, 0, 0))]

    # Conv weights: OIHW -> per-tap (cout, cin) blocks stacked as (9*cout, cin),
    # tap order (kh, kw) row-major, matching the gather-matrix tap order.
    for (w, b) in params:
        cout, cin = w.shape[0], w.shape[1]
        w2d = jnp.transpose(w, (2, 3, 0, 1)).reshape(9 * cout, cin).astype(f32)
        b2d = b.reshape(cout, 1).astype(f32)
        flat_inputs += [w2d, b2d]
        in_specs += [pl.BlockSpec((9 * cout, cin), lambda n: (0, 0)),
                     pl.BlockSpec((cout, 1), lambda n: (0, 0))]

    # Tap-gather / pool-select constants for the three spatial sizes.
    consts = [_tap_gather_matrix(H, W),
              _tap_gather_matrix(H // 2, W // 2),
              _tap_gather_matrix(H // 4, W // 4),
              _pool_select_matrix(H, W),
              _pool_select_matrix(H // 2, W // 2)]
    for c in consts:
        flat_inputs.append(c)
        in_specs.append(pl.BlockSpec(c.shape, lambda n: (0, 0)))

    cout_last = params[-1][0].shape[0]
    Ho, Wo = H // 4, W // 4

    out = pl.pallas_call(
        _features12_kernel,
        out_shape=jax.ShapeDtypeStruct((N, cout_last, Ho * Wo), f32),
        grid=(N,),
        in_specs=in_specs,
        out_specs=pl.BlockSpec((1, cout_last, Ho * Wo), lambda n: (n, 0, 0)),
        compiler_params=pltpu.CompilerParams(
            dimension_semantics=("parallel",),
            vmem_limit_bytes=64 * 1024 * 1024),
    )(*flat_inputs)
    return out.reshape(N, cout_last, Ho, Wo)


# --------------------------------- params ------------------------------------
def init_params(key):
    params = []
    for cin, cout in _CONV_CFG:
        key, kw, kb = jax.random.split(key, 3)
        w = jax.random.normal(kw, (cout, cin, 3, 3), jnp.float32) / jnp.sqrt(9.0 * cin)
        b = jax.random.normal(kb, (cout,), jnp.float32) * 0.01
        params.append((w, b))
    return params


# ------------------------------- pure-JAX ref ---------------------------------
def _ref_conv(x, w, b):   # x NCHW, w OIHW
    y = lax.conv_general_dilated(
        x, w, window_strides=(1, 1), padding=((1, 1), (1, 1)),
        dimension_numbers=('NCHW', 'OIHW', 'NCHW'),
        precision=lax.Precision.HIGHEST)
    return jnp.maximum(y + b[None, :, None, None], 0.0)


def _ref_pool(x):
    return lax.reduce_window(x, -jnp.inf, lax.max,
                             (1, 1, 2, 2), (1, 1, 2, 2), 'VALID')


def reference(x, params):
    x = _ref_conv(x, *params[0]); x = _ref_conv(x, *params[1]); x = _ref_pool(x)
    x = _ref_conv(x, *params[2]); x = _ref_conv(x, *params[3]); x = _ref_pool(x)
    x = _ref_conv(x, *params[4])
    return x


# ----------------------------------- main -------------------------------------
if __name__ == "__main__":
    key = jax.random.PRNGKey(0)
    key, kx = jax.random.split(key)
    x = jax.random.normal(kx, (2, 3, 16, 16), jnp.float32)   # NCHW, like PyTorch
    params = init_params(key)

    fwd = jax.jit(feature_extractor)
    out = jax.block_until_ready(fwd(x, params))

    assert out.shape == (2, 32, 4, 4), out.shape
    ref = reference(x, params)
    assert jnp.allclose(out, ref, atol=1e-3, rtol=1e-3), \
        float(jnp.max(jnp.abs(out - ref)))
    print("KERNEL_OK")
</pallas_src>

<mosaic_0001>
module attributes {stable_mosaic.version = 11 : i64} {
  func.func @_features12_kernel(%arg0: i32, %arg1: memref<1x3x256xf32, #tpu.memory_space<vmem>>, %arg2: memref<72x3xf32, #tpu.memory_space<vmem>>, %arg3: memref<8x1xf32, #tpu.memory_space<vmem>>, %arg4: memref<72x8xf32, #tpu.memory_space<vmem>>, %arg5: memref<8x1xf32, #tpu.memory_space<vmem>>, %arg6: memref<144x8xf32, #tpu.memory_space<vmem>>, %arg7: memref<16x1xf32, #tpu.memory_space<vmem>>, %arg8: memref<144x16xf32, #tpu.memory_space<vmem>>, %arg9: memref<16x1xf32, #tpu.memory_space<vmem>>, %arg10: memref<288x16xf32, #tpu.memory_space<vmem>>, %arg11: memref<32x1xf32, #tpu.memory_space<vmem>>, %arg12: memref<2304x256xf32, #tpu.memory_space<vmem>>, %arg13: memref<576x64xf32, #tpu.memory_space<vmem>>, %arg14: memref<144x16xf32, #tpu.memory_space<vmem>>, %arg15: memref<256x64xf32, #tpu.memory_space<vmem>>, %arg16: memref<64x16xf32, #tpu.memory_space<vmem>>, %arg17: memref<1x32x16xf32, #tpu.memory_space<vmem>>) attributes {dimension_semantics = [#tpu.dimension_semantics<parallel>], iteration_bounds = array<i64: 2>, scalar_prefetch = 0 : i64, scratch_operands = 0 : i64, tpu.core_type = #tpu.core_type<tc>, window_params = [{transform_indices = @transform_0, window_bounds = array<i64: 1, 3, 256>}, {pipeline_mode = #tpu.pipeline_mode<synchronous>, transform_indices = @transform_1, window_bounds = array<i64: 72, 3>}, {pipeline_mode = #tpu.pipeline_mode<synchronous>, transform_indices = @transform_2, window_bounds = array<i64: 8, 1>}, {pipeline_mode = #tpu.pipeline_mode<synchronous>, transform_indices = @transform_3, window_bounds = array<i64: 72, 8>}, {pipeline_mode = #tpu.pipeline_mode<synchronous>, transform_indices = @transform_4, window_bounds = array<i64: 8, 1>}, {pipeline_mode = #tpu.pipeline_mode<synchronous>, transform_indices = @transform_5, window_bounds = array<i64: 144, 8>}, {pipeline_mode = #tpu.pipeline_mode<synchronous>, transform_indices = @transform_6, window_bounds = array<i64: 16, 1>}, {pipeline_mode = #tpu.pipeline_mode<synchronous>, transform_indices = @transform_7, window_bounds = array<i64: 144, 16>}, {pipeline_mode = #tpu.pipeline_mode<synchronous>, transform_indices = @transform_8, window_bounds = array<i64: 16, 1>}, {pipeline_mode = #tpu.pipeline_mode<synchronous>, transform_indices = @transform_9, window_bounds = array<i64: 288, 16>}, {pipeline_mode = #tpu.pipeline_mode<synchronous>, transform_indices = @transform_10, window_bounds = array<i64: 32, 1>}, {pipeline_mode = #tpu.pipeline_mode<synchronous>, transform_indices = @transform_11, window_bounds = array<i64: 2304, 256>}, {pipeline_mode = #tpu.pipeline_mode<synchronous>, transform_indices = @transform_12, window_bounds = array<i64: 576, 64>}, {pipeline_mode = #tpu.pipeline_mode<synchronous>, transform_indices = @transform_13, window_bounds = array<i64: 144, 16>}, {pipeline_mode = #tpu.pipeline_mode<synchronous>, transform_indices = @transform_14, window_bounds = array<i64: 256, 64>}, {pipeline_mode = #tpu.pipeline_mode<synchronous>, transform_indices = @transform_15, window_bounds = array<i64: 64, 16>}, {transform_indices = @transform_16, window_bounds = array<i64: 1, 32, 16>}]} {
    %c0 = arith.constant 0 : index
    %c0_0 = arith.constant 0 : index
    %c0_1 = arith.constant 0 : index
    %0 = vector.load %arg1[%c0, %c0_0, %c0_1] : memref<1x3x256xf32, #tpu.memory_space<vmem>>, vector<1x3x256xf32>
    %1 = vector.shape_cast %0 : vector<1x3x256xf32> to vector<3x256xf32>
    %cst = arith.constant 0.000000e+00 : f32
    %2 = vector.broadcast %cst : f32 to vector<8x256xf32>
    %c0_2 = arith.constant 0 : index
    %c0_3 = arith.constant 0 : index
    %3 = vector.load %arg12[%c0_2, %c0_3] : memref<2304x256xf32, #tpu.memory_space<vmem>>, vector<256x256xf32>
    %cst_4 = arith.constant dense<0.000000e+00> : vector<3x256xf32>
    %4 = tpu.matmul %1, %3, %cst_4 {dimension_numbers = #tpu.dot_dimension_numbers<[1], [0], [0], [1], [0, 0, 1, 1], [], []>} : vector<3x256xf32>, vector<256x256xf32>, vector<3x256xf32> -> vector<3x256xf32>
    %c0_5 = arith.constant 0 : index
    %c0_6 = arith.constant 0 : index
    %5 = vector.load %arg2[%c0_5, %c0_6] : memref<72x3xf32, #tpu.memory_space<vmem>>, vector<8x3xf32>
    %cst_7 = arith.constant dense<0.000000e+00> : vector<8x256xf32>
    %6 = tpu.matmul %5, %4, %cst_7 {dimension_numbers = #tpu.dot_dimension_numbers<[1], [0], [0], [1], [0, 0, 1, 1], [], []>} : vector<8x3xf32>, vector<3x256xf32>, vector<8x256xf32> -> vector<8x256xf32>
    %7 = arith.addf %2, %6 : vector<8x256xf32>
    %c256 = arith.constant 256 : index
    %c0_8 = arith.constant 0 : index
    %8 = vector.load %arg12[%c256, %c0_8] : memref<2304x256xf32, #tpu.memory_space<vmem>>, vector<256x256xf32>
    %cst_9 = arith.constant dense<0.000000e+00> : vector<3x256xf32>
    %9 = tpu.matmul %1, %8, %cst_9 {dimension_numbers = #tpu.dot_dimension_numbers<[1], [0], [0], [1], [0, 0, 1, 1], [], []>} : vector<3x256xf32>, vector<256x256xf32>, vector<3x256xf32> -> vector<3x256xf32>
    %c8 = arith.constant 8 : index
    %c0_10 = arith.constant 0 : index
    %10 = vector.load %arg2[%c8, %c0_10] : memref<72x3xf32, #tpu.memory_space<vmem>>, vector<8x3xf32>
    %cst_11 = arith.constant dense<0.000000e+00> : vector<8x256xf32>
    %11 = tpu.matmul %10, %9, %cst_11 {dimension_numbers = #tpu.dot_dimension_numbers<[1], [0], [0], [1], [0, 0, 1, 1], [], []>} : vector<8x3xf32>, vector<3x256xf32>, vector<8x256xf32> -> vector<8x256xf32>
    %12 = arith.addf %7, %11 : vector<8x256xf32>
    %c512 = arith.constant 512 : index
    %c0_12 = arith.constant 0 : index
    %13 = vector.load %arg12[%c512, %c0_12] : memref<2304x256xf32, #tpu.memory_space<vmem>>, vector<256x256xf32>
    %cst_13 = arith.constant dense<0.000000e+00> : vector<3x256xf32>
    %14 = tpu.matmul %1, %13, %cst_13 {dimension_numbers = #tpu.dot_dimension_numbers<[1], [0], [0], [1], [0, 0, 1, 1], [], []>} : vector<3x256xf32>, vector<256x256xf32>, vector<3x256xf32> -> vector<3x256xf32>
    %c16 = arith.constant 16 : index
    %c0_14 = arith.constant 0 : index
    %15 = vector.load %arg2[%c16, %c0_14] : memref<72x3xf32, #tpu.memory_space<vmem>>, vector<8x3xf32>
    %cst_15 = arith.constant dense<0.000000e+00> : vector<8x256xf32>
    %16 = tpu.matmul %15, %14, %cst_15 {dimension_numbers = #tpu.dot_dimension_numbers<[1], [0], [0], [1], [0, 0, 1, 1], [], []>} : vector<8x3xf32>, vector<3x256xf32>, vector<8x256xf32> -> vector<8x256xf32>
    %17 = arith.addf %12, %16 : vector<8x256xf32>
    %c768 = arith.constant 768 : index
    %c0_16 = arith.constant 0 : index
    %18 = vector.load %arg12[%c768, %c0_16] : memref<2304x256xf32, #tpu.memory_space<vmem>>, vector<256x256xf32>
    %cst_17 = arith.constant dense<0.000000e+00> : vector<3x256xf32>
    %19 = tpu.matmul %1, %18, %cst_17 {dimension_numbers = #tpu.dot_dimension_numbers<[1], [0], [0], [1], [0, 0, 1, 1], [], []>} : vector<3x256xf32>, vector<256x256xf32>, vector<3x256xf32> -> vector<3x256xf32>
    %c24 = arith.constant 24 : index
    %c0_18 = arith.constant 0 : index
    %20 = vector.load %arg2[%c24, %c0_18] : memref<72x3xf32, #tpu.memory_space<vmem>>, vector<8x3xf32>
    %cst_19 = arith.constant dense<0.000000e+00> : vector<8x256xf32>
    %21 = tpu.matmul %20, %19, %cst_19 {dimension_numbers = #tpu.dot_dimension_numbers<[1], [0], [0], [1], [0, 0, 1, 1], [], []>} : vector<8x3xf32>, vector<3x256xf32>, vector<8x256xf32> -> vector<8x256xf32>
    %22 = arith.addf %17, %21 : vector<8x256xf32>
    %c1024 = arith.constant 1024 : index
    %c0_20 = arith.constant 0 : index
    %23 = vector.load %arg12[%c1024, %c0_20] : memref<2304x256xf32, #tpu.memory_space<vmem>>, vector<256x256xf32>
    %cst_21 = arith.constant dense<0.000000e+00> : vector<3x256xf32>
    %24 = tpu.matmul %1, %23, %cst_21 {dimension_numbers = #tpu.dot_dimension_numbers<[1], [0], [0], [1], [0, 0, 1, 1], [], []>} : vector<3x256xf32>, vector<256x256xf32>, vector<3x256xf32> -> vector<3x256xf32>
    %c32 = arith.constant 32 : index
    %c0_22 = arith.constant 0 : index
    %25 = vector.load %arg2[%c32, %c0_22] : memref<72x3xf32, #tpu.memory_space<vmem>>, vector<8x3xf32>
    %cst_23 = arith.constant dense<0.000000e+00> : vector<8x256xf32>
    %26 = tpu.matmul %25, %24, %cst_23 {dimension_numbers = #tpu.dot_dimension_numbers<[1], [0], [0], [1], [0, 0, 1, 1], [], []>} : vector<8x3xf32>, vector<3x256xf32>, vector<8x256xf32> -> vector<8x256xf32>
    %27 = arith.addf %22, %26 : vector<8x256xf32>
    %c1280 = arith.constant 1280 : index
    %c0_24 = arith.constant 0 : index
    %28 = vector.load %arg12[%c1280, %c0_24] : memref<2304x256xf32, #tpu.memory_space<vmem>>, vector<256x256xf32>
    %cst_25 = arith.constant dense<0.000000e+00> : vector<3x256xf32>
    %29 = tpu.matmul %1, %28, %cst_25 {dimension_numbers = #tpu.dot_dimension_numbers<[1], [0], [0], [1], [0, 0, 1, 1], [], []>} : vector<3x256xf32>, vector<256x256xf32>, vector<3x256xf32> -> vector<3x256xf32>
    %c40 = arith.constant 40 : index
    %c0_26 = arith.constant 0 : index
    %30 = vector.load %arg2[%c40, %c0_26] : memref<72x3xf32, #tpu.memory_space<vmem>>, vector<8x3xf32>
    %cst_27 = arith.constant dense<0.000000e+00> : vector<8x256xf32>
    %31 = tpu.matmul %30, %29, %cst_27 {dimension_numbers = #tpu.dot_dimension_numbers<[1], [0], [0], [1], [0, 0, 1, 1], [], []>} : vector<8x3xf32>, vector<3x256xf32>, vector<8x256xf32> -> vector<8x256xf32>
    %32 = arith.addf %27, %31 : vector<8x256xf32>
    %c1536 = arith.constant 1536 : index
    %c0_28 = arith.constant 0 : index
    %33 = vector.load %arg12[%c1536, %c0_28] : memref<2304x256xf32, #tpu.memory_space<vmem>>, vector<256x256xf32>
    %cst_29 = arith.constant dense<0.000000e+00> : vector<3x256xf32>
    %34 = tpu.matmul %1, %33, %cst_29 {dimension_numbers = #tpu.dot_dimension_numbers<[1], [0], [0], [1], [0, 0, 1, 1], [], []>} : vector<3x256xf32>, vector<256x256xf32>, vector<3x256xf32> -> vector<3x256xf32>
    %c48 = arith.constant 48 : index
    %c0_30 = arith.constant 0 : index
    %35 = vector.load %arg2[%c48, %c0_30] : memref<72x3xf32, #tpu.memory_space<vmem>>, vector<8x3xf32>
    %cst_31 = arith.constant dense<0.000000e+00> : vector<8x256xf32>
    %36 = tpu.matmul %35, %34, %cst_31 {dimension_numbers = #tpu.dot_dimension_numbers<[1], [0], [0], [1], [0, 0, 1, 1], [], []>} : vector<8x3xf32>, vector<3x256xf32>, vector<8x256xf32> -> vector<8x256xf32>
    %37 = arith.addf %32, %36 : vector<8x256xf32>
    %c1792 = arith.constant 1792 : index
    %c0_32 = arith.constant 0 : index
    %38 = vector.load %arg12[%c1792, %c0_32] : memref<2304x256xf32, #tpu.memory_space<vmem>>, vector<256x256xf32>
    %cst_33 = arith.constant dense<0.000000e+00> : vector<3x256xf32>
    %39 = tpu.matmul %1, %38, %cst_33 {dimension_numbers = #tpu.dot_dimension_numbers<[1], [0], [0], [1], [0, 0, 1, 1], [], []>} : vector<3x256xf32>, vector<256x256xf32>, vector<3x256xf32> -> vector<3x256xf32>
    %c56 = arith.constant 56 : index
    %c0_34 = arith.constant 0 : index
    %40 = vector.load %arg2[%c56, %c0_34] : memref<72x3xf32, #tpu.memory_space<vmem>>, vector<8x3xf32>
    %cst_35 = arith.constant dense<0.000000e+00> : vector<8x256xf32>
    %41 = tpu.matmul %40, %39, %cst_35 {dimension_numbers = #tpu.dot_dimension_numbers<[1], [0], [0], [1], [0, 0, 1, 1], [], []>} : vector<8x3xf32>, vector<3x256xf32>, vector<8x256xf32> -> vector<8x256xf32>
    %42 = arith.addf %37, %41 : vector<8x256xf32>
    %c2048 = arith.constant 2048 : index
    %c0_36 = arith.constant 0 : index
    %43 = vector.load %arg12[%c2048, %c0_36] : memref<2304x256xf32, #tpu.memory_space<vmem>>, vector<256x256xf32>
    %cst_37 = arith.constant dense<0.000000e+00> : vector<3x256xf32>
    %44 = tpu.matmul %1, %43, %cst_37 {dimension_numbers = #tpu.dot_dimension_numbers<[1], [0], [0], [1], [0, 0, 1, 1], [], []>} : vector<3x256xf32>, vector<256x256xf32>, vector<3x256xf32> -> vector<3x256xf32>
    %c64 = arith.constant 64 : index
    %c0_38 = arith.constant 0 : index
    %45 = vector.load %arg2[%c64, %c0_38] : memref<72x3xf32, #tpu.memory_space<vmem>>, vector<8x3xf32>
    %cst_39 = arith.constant dense<0.000000e+00> : vector<8x256xf32>
    %46 = tpu.matmul %45, %44, %cst_39 {dimension_numbers = #tpu.dot_dimension_numbers<[1], [0], [0], [1], [0, 0, 1, 1], [], []>} : vector<8x3xf32>, vector<3x256xf32>, vector<8x256xf32> -> vector<8x256xf32>
    %47 = arith.addf %42, %46 : vector<8x256xf32>
    %c0_40 = arith.constant 0 : index
    %c0_41 = arith.constant 0 : index
    %48 = vector.load %arg3[%c0_40, %c0_41] : memref<8x1xf32, #tpu.memory_space<vmem>>, vector<8x1xf32>
    %49 = vector.broadcast %48 : vector<8x1xf32> to vector<8x256xf32>
    %50 = arith.addf %47, %49 : vector<8x256xf32>
    %cst_42 = arith.constant 0.000000e+00 : f32
    %51 = vector.broadcast %cst_42 : f32 to vector<8x256xf32>
    %52 = arith.maximumf %50, %51 : vector<8x256xf32>
    %cst_43 = arith.constant 0.000000e+00 : f32
    %53 = vector.broadcast %cst_43 : f32 to vector<8x256xf32>
    %c0_44 = arith.constant 0 : index
    %c0_45 = arith.constant 0 : index
    %54 = vector.load %arg12[%c0_44, %c0_45] : memref<2304x256xf32, #tpu.memory_space<vmem>>, vector<256x256xf32>
    %cst_46 = arith.constant dense<0.000000e+00> : vector<8x256xf32>
    %55 = tpu.matmul %52, %54, %cst_46 {dimension_numbers = #tpu.dot_dimension_numbers<[1], [0], [0], [1], [0, 0, 1, 1], [], []>} : vector<8x256xf32>, vector<256x256xf32>, vector<8x256xf32> -> vector<8x256xf32>
    %c0_47 = arith.constant 0 : index
    %c0_48 = arith.constant 0 : index
    %56 = vector.load %arg4[%c0_47, %c0_48] : memref<72x8xf32, #tpu.memory_space<vmem>>, vector<8x8xf32>
    %cst_49 = arith.constant dense<0.000000e+00> : vector<8x256xf32>
    %57 = tpu.matmul %56, %55, %cst_49 {dimension_numbers = #tpu.dot_dimension_numbers<[1], [0], [0], [1], [0, 0, 1, 1], [], []>} : vector<8x8xf32>, vector<8x256xf32>, vector<8x256xf32> -> vector<8x256xf32>
    %58 = arith.addf %53, %57 : vector<8x256xf32>
    %c256_50 = arith.constant 256 : index
    %c0_51 = arith.constant 0 : index
    %59 = vector.load %arg12[%c256_50, %c0_51] : memref<2304x256xf32, #tpu.memory_space<vmem>>, vector<256x256xf32>
    %cst_52 = arith.constant dense<0.000000e+00> : vector<8x256xf32>
    %60 = tpu.matmul %52, %59, %cst_52 {dimension_numbers = #tpu.dot_dimension_numbers<[1], [0], [0], [1], [0, 0, 1, 1], [], []>} : vector<8x256xf32>, vector<256x256xf32>, vector<8x256xf32> -> vector<8x256xf32>
    %c8_53 = arith.constant 8 : index
    %c0_54 = arith.constant 0 : index
    %61 = vector.load %arg4[%c8_53, %c0_54] : memref<72x8xf32, #tpu.memory_space<vmem>>, vector<8x8xf32>
    %cst_55 = arith.constant dense<0.000000e+00> : vector<8x256xf32>
    %62 = tpu.matmul %61, %60, %cst_55 {dimension_numbers = #tpu.dot_dimension_numbers<[1], [0], [0], [1], [0, 0, 1, 1], [], []>} : vector<8x8xf32>, vector<8x256xf32>, vector<8x256xf32> -> vector<8x256xf32>
    %63 = arith.addf %58, %62 : vector<8x256xf32>
    %c512_56 = arith.constant 512 : index
    %c0_57 = arith.constant 0 : index
    %64 = vector.load %arg12[%c512_56, %c0_57] : memref<2304x256xf32, #tpu.memory_space<vmem>>, vector<256x256xf32>
    %cst_58 = arith.constant dense<0.000000e+00> : vector<8x256xf32>
    %65 = tpu.matmul %52, %64, %cst_58 {dimension_numbers = #tpu.dot_dimension_numbers<[1], [0], [0], [1], [0, 0, 1, 1], [], []>} : vector<8x256xf32>, vector<256x256xf32>, vector<8x256xf32> -> vector<8x256xf32>
    %c16_59 = arith.constant 16 : index
    %c0_60 = arith.constant 0 : index
    %66 = vector.load %arg4[%c16_59, %c0_60] : memref<72x8xf32, #tpu.memory_space<vmem>>, vector<8x8xf32>
    %cst_61 = arith.constant dense<0.000000e+00> : vector<8x256xf32>
    %67 = tpu.matmul %66, %65, %cst_61 {dimension_numbers = #tpu.dot_dimension_numbers<[1], [0], [0], [1], [0, 0, 1, 1], [], []>} : vector<8x8xf32>, vector<8x256xf32>, vector<8x256xf32> -> vector<8x256xf32>
    %68 = arith.addf %63, %67 : vector<8x256xf32>
    %c768_62 = arith.constant 768 : index
    %c0_63 = arith.constant 0 : index
    %69 = vector.load %arg12[%c768_62, %c0_63] : memref<2304x256xf32, #tpu.memory_space<vmem>>, vector<256x256xf32>
    %cst_64 = arith.constant dense<0.000000e+00> : vector<8x256xf32>
    %70 = tpu.matmul %52, %69, %cst_64 {dimension_numbers = #tpu.dot_dimension_numbers<[1], [0], [0], [1], [0, 0, 1, 1], [], []>} : vector<8x256xf32>, vector<256x256xf32>, vector<8x256xf32> -> vector<8x256xf32>
    %c24_65 = arith.constant 24 : index
    %c0_66 = arith.constant 0 : index
    %71 = vector.load %arg4[%c24_65, %c0_66] : memref<72x8xf32, #tpu.memory_space<vmem>>, vector<8x8xf32>
    %cst_67 = arith.constant dense<0.000000e+00> : vector<8x256xf32>
    %72 = tpu.matmul %71, %70, %cst_67 {dimension_numbers = #tpu.dot_dimension_numbers<[1], [0], [0], [1], [0, 0, 1, 1], [], []>} : vector<8x8xf32>, vector<8x256xf32>, vector<8x256xf32> -> vector<8x256xf32>
    %73 = arith.addf %68, %72 : vector<8x256xf32>
    %c1024_68 = arith.constant 1024 : index
    %c0_69 = arith.constant 0 : index
    %74 = vector.load %arg12[%c1024_68, %c0_69] : memref<2304x256xf32, #tpu.memory_space<vmem>>, vector<256x256xf32>
    %cst_70 = arith.constant dense<0.000000e+00> : vector<8x256xf32>
    %75 = tpu.matmul %52, %74, %cst_70 {dimension_numbers = #tpu.dot_dimension_numbers<[1], [0], [0], [1], [0, 0, 1, 1], [], []>} : vector<8x256xf32>, vector<256x256xf32>, vector<8x256xf32> -> vector<8x256xf32>
    %c32_71 = arith.constant 32 : index
    %c0_72 = arith.constant 0 : index
    %76 = vector.load %arg4[%c32_71, %c0_72] : memref<72x8xf32, #tpu.memory_space<vmem>>, vector<8x8xf32>
    %cst_73 = arith.constant dense<0.000000e+00> : vector<8x256xf32>
    %77 = tpu.matmul %76, %75, %cst_73 {dimension_numbers = #tpu.dot_dimension_numbers<[1], [0], [0], [1], [0, 0, 1, 1], [], []>} : vector<8x8xf32>, vector<8x256xf32>, vector<8x256xf32> -> vector<8x256xf32>
    %78 = arith.addf %73, %77 : vector<8x256xf32>
    %c1280_74 = arith.constant 1280 : index
    %c0_75 = arith.constant 0 : index
    %79 = vector.load %arg12[%c1280_74, %c0_75] : memref<2304x256xf32, #tpu.memory_space<vmem>>, vector<256x256xf32>
    %cst_76 = arith.constant dense<0.000000e+00> : vector<8x256xf32>
    %80 = tpu.matmul %52, %79, %cst_76 {dimension_numbers = #tpu.dot_dimension_numbers<[1], [0], [0], [1], [0, 0, 1, 1], [], []>} : vector<8x256xf32>, vector<256x256xf32>, vector<8x256xf32> -> vector<8x256xf32>
    %c40_77 = arith.constant 40 : index
    %c0_78 = arith.constant 0 : index
    %81 = vector.load %arg4[%c40_77, %c0_78] : memref<72x8xf32, #tpu.memory_space<vmem>>, vector<8x8xf32>
    %cst_79 = arith.constant dense<0.000000e+00> : vector<8x256xf32>
    %82 = tpu.matmul %81, %80, %cst_79 {dimension_numbers = #tpu.dot_dimension_numbers<[1], [0], [0], [1], [0, 0, 1, 1], [], []>} : vector<8x8xf32>, vector<8x256xf32>, vector<8x256xf32> -> vector<8x256xf32>
    %83 = arith.addf %78, %82 : vector<8x256xf32>
    %c1536_80 = arith.constant 1536 : index
    %c0_81 = arith.constant 0 : index
    %84 = vector.load %arg12[%c1536_80, %c0_81] : memref<2304x256xf32, #tpu.memory_space<vmem>>, vector<256x256xf32>
    %cst_82 = arith.constant dense<0.000000e+00> : vector<8x256xf32>
    %85 = tpu.matmul %52, %84, %cst_82 {dimension_numbers = #tpu.dot_dimension_numbers<[1], [0], [0], [1], [0, 0, 1, 1], [], []>} : vector<8x256xf32>, vector<256x256xf32>, vector<8x256xf32> -> vector<8x256xf32>
    %c48_83 = arith.constant 48 : index
    %c0_84 = arith.constant 0 : index
    %86 = vector.load %arg4[%c48_83, %c0_84] : memref<72x8xf32, #tpu.memory_space<vmem>>, vector<8x8xf32>
    %cst_85 = arith.constant dense<0.000000e+00> : vector<8x256xf32>
    %87 = tpu.matmul %86, %85, %cst_85 {dimension_numbers = #tpu.dot_dimension_numbers<[1], [0], [0], [1], [0, 0, 1, 1], [], []>} : vector<8x8xf32>, vector<8x256xf32>, vector<8x256xf32> -> vector<8x256xf32>
    %88 = arith.addf %83, %87 : vector<8x256xf32>
    %c1792_86 = arith.constant 1792 : index
    %c0_87 = arith.constant 0 : index
    %89 = vector.load %arg12[%c1792_86, %c0_87] : memref<2304x256xf32, #tpu.memory_space<vmem>>, vector<256x256xf32>
    %cst_88 = arith.constant dense<0.000000e+00> : vector<8x256xf32>
    %90 = tpu.matmul %52, %89, %cst_88 {dimension_numbers = #tpu.dot_dimension_numbers<[1], [0], [0], [1], [0, 0, 1, 1], [], []>} : vector<8x256xf32>, vector<256x256xf32>, vector<8x256xf32> -> vector<8x256xf32>
    %c56_89 = arith.constant 56 : index
    %c0_90 = arith.constant 0 : index
    %91 = vector.load %arg4[%c56_89, %c0_90] : memref<72x8xf32, #tpu.memory_space<vmem>>, vector<8x8xf32>
    %cst_91 = arith.constant dense<0.000000e+00> : vector<8x256xf32>
    %92 = tpu.matmul %91, %90, %cst_91 {dimension_numbers = #tpu.dot_dimension_numbers<[1], [0], [0], [1], [0, 0, 1, 1], [], []>} : vector<8x8xf32>, vector<8x256xf32>, vector<8x256xf32> -> vector<8x256xf32>
    %93 = arith.addf %88, %92 : vector<8x256xf32>
    %c2048_92 = arith.constant 2048 : index
    %c0_93 = arith.constant 0 : index
    %94 = vector.load %arg12[%c2048_92, %c0_93] : memref<2304x256xf32, #tpu.memory_space<vmem>>, vector<256x256xf32>
    %cst_94 = arith.constant dense<0.000000e+00> : vector<8x256xf32>
    %95 = tpu.matmul %52, %94, %cst_94 {dimension_numbers = #tpu.dot_dimension_numbers<[1], [0], [0], [1], [0, 0, 1, 1], [], []>} : vector<8x256xf32>, vector<256x256xf32>, vector<8x256xf32> -> vector<8x256xf32>
    %c64_95 = arith.constant 64 : index
    %c0_96 = arith.constant 0 : index
    %96 = vector.load %arg4[%c64_95, %c0_96] : memref<72x8xf32, #tpu.memory_space<vmem>>, vector<8x8xf32>
    %cst_97 = arith.constant dense<0.000000e+00> : vector<8x256xf32>
    %97 = tpu.matmul %96, %95, %cst_97 {dimension_numbers = #tpu.dot_dimension_numbers<[1], [0], [0], [1], [0, 0, 1, 1], [], []>} : vector<8x8xf32>, vector<8x256xf32>, vector<8x256xf32> -> vector<8x256xf32>
    %98 = arith.addf %93, %97 : vector<8x256xf32>
    %c0_98 = arith.constant 0 : index
    %c0_99 = arith.constant 0 : index
    %99 = vector.load %arg5[%c0_98, %c0_99] : memref<8x1xf32, #tpu.memory_space<vmem>>, vector<8x1xf32>
    %100 = vector.broadcast %99 : vector<8x1xf32> to vector<8x256xf32>
    %101 = arith.addf %98, %100 : vector<8x256xf32>
    %cst_100 = arith.constant 0.000000e+00 : f32
    %102 = vector.broadcast %cst_100 : f32 to vector<8x256xf32>
    %103 = arith.maximumf %101, %102 : vector<8x256xf32>
    %c1280_101 = arith.constant 1280 : index
    %c0_102 = arith.constant 0 : index
    %104 = vector.load %arg12[%c1280_101, %c0_102] : memref<2304x256xf32, #tpu.memory_space<vmem>>, vector<256x256xf32>
    %cst_103 = arith.constant dense<0.000000e+00> : vector<8x256xf32>
    %105 = tpu.matmul %103, %104, %cst_103 {dimension_numbers = #tpu.dot_dimension_numbers<[1], [0], [0], [1], [0, 0, 1, 1], [], []>} : vector<8x256xf32>, vector<256x256xf32>, vector<8x256xf32> -> vector<8x256xf32>
    %106 = arith.maximumf %103, %105 : vector<8x256xf32>
    %c1792_104 = arith.constant 1792 : index
    %c0_105 = arith.constant 0 : index
    %107 = vector.load %arg12[%c1792_104, %c0_105] : memref<2304x256xf32, #tpu.memory_space<vmem>>, vector<256x256xf32>
    %cst_106 = arith.constant dense<0.000000e+00> : vector<8x256xf32>
    %108 = tpu.matmul %106, %107, %cst_106 {dimension_numbers = #tpu.dot_dimension_numbers<[1], [0], [0], [1], [0, 0, 1, 1], [], []>} : vector<8x256xf32>, vector<256x256xf32>, vector<8x256xf32> -> vector<8x256xf32>
    %109 = arith.maximumf %106, %108 : vector<8x256xf32>
    %c0_107 = arith.constant 0 : index
    %c0_108 = arith.constant 0 : index
    %110 = vector.load %arg15[%c0_107, %c0_108] : memref<256x64xf32, #tpu.memory_space<vmem>>, vector<256x64xf32>
    %cst_109 = arith.constant dense<0.000000e+00> : vector<8x64xf32>
    %111 = tpu.matmul %109, %110, %cst_109 {dimension_numbers = #tpu.dot_dimension_numbers<[1], [0], [0], [1], [0, 0, 1, 1], [], []>} : vector<8x256xf32>, vector<256x64xf32>, vector<8x64xf32> -> vector<8x64xf32>
    %cst_110 = arith.constant 0.000000e+00 : f32
    %112 = vector.broadcast %cst_110 : f32 to vector<16x64xf32>
    %c0_111 = arith.constant 0 : index
    %c0_112 = arith.constant 0 : index
    %113 = vector.load %arg13[%c0_111, %c0_112] : memref<576x64xf32, #tpu.memory_space<vmem>>, vector<64x64xf32>
    %cst_113 = arith.constant dense<0.000000e+00> : vector<8x64xf32>
    %114 = tpu.matmul %111, %113, %cst_113 {dimension_numbers = #tpu.dot_dimension_numbers<[1], [0], [0], [1], [0, 0, 1, 1], [], []>} : vector<8x64xf32>, vector<64x64xf32>, vector<8x64xf32> -> vector<8x64xf32>
    %c0_114 = arith.constant 0 : index
    %c0_115 = arith.constant 0 : index
    %115 = vector.load %arg6[%c0_114, %c0_115] : memref<144x8xf32, #tpu.memory_space<vmem>>, vector<16x8xf32>
    %cst_116 = arith.constant dense<0.000000e+00> : vector<16x64xf32>
    %116 = tpu.matmul %115, %114, %cst_116 {dimension_numbers = #tpu.dot_dimension_numbers<[1], [0], [0], [1], [0, 0, 1, 1], [], []>} : vector<16x8xf32>, vector<8x64xf32>, vector<16x64xf32> -> vector<16x64xf32>
    %117 = arith.addf %112, %116 : vector<16x64xf32>
    %c64_117 = arith.constant 64 : index
    %c0_118 = arith.constant 0 : index
    %118 = vector.load %arg13[%c64_117, %c0_118] : memref<576x64xf32, #tpu.memory_space<vmem>>, vector<64x64xf32>
    %cst_119 = arith.constant dense<0.000000e+00> : vector<8x64xf32>
    %119 = tpu.matmul %111, %118, %cst_119 {dimension_numbers = #tpu.dot_dimension_numbers<[1], [0], [0], [1], [0, 0, 1, 1], [], []>} : vector<8x64xf32>, vector<64x64xf32>, vector<8x64xf32> -> vector<8x64xf32>
    %c16_120 = arith.constant 16 : index
    %c0_121 = arith.constant 0 : index
    %120 = vector.load %arg6[%c16_120, %c0_121] : memref<144x8xf32, #tpu.memory_space<vmem>>, vector<16x8xf32>
    %cst_122 = arith.constant dense<0.000000e+00> : vector<16x64xf32>
    %121 = tpu.matmul %120, %119, %cst_122 {dimension_numbers = #tpu.dot_dimension_numbers<[1], [0], [0], [1], [0, 0, 1, 1], [], []>} : vector<16x8xf32>, vector<8x64xf32>, vector<16x64xf32> -> vector<16x64xf32>
    %122 = arith.addf %117, %121 : vector<16x64xf32>
    %c128 = arith.constant 128 : index
    %c0_123 = arith.constant 0 : index
    %123 = vector.load %arg13[%c128, %c0_123] : memref<576x64xf32, #tpu.memory_space<vmem>>, vector<64x64xf32>
    %cst_124 = arith.constant dense<0.000000e+00> : vector<8x64xf32>
    %124 = tpu.matmul %111, %123, %cst_124 {dimension_numbers = #tpu.dot_dimension_numbers<[1], [0], [0], [1], [0, 0, 1, 1], [], []>} : vector<8x64xf32>, vector<64x64xf32>, vector<8x64xf32> -> vector<8x64xf32>
    %c32_125 = arith.constant 32 : index
    %c0_126 = arith.constant 0 : index
    %125 = vector.load %arg6[%c32_125, %c0_126] : memref<144x8xf32, #tpu.memory_space<vmem>>, vector<16x8xf32>
    %cst_127 = arith.constant dense<0.000000e+00> : vector<16x64xf32>
    %126 = tpu.matmul %125, %124, %cst_127 {dimension_numbers = #tpu.dot_dimension_numbers<[1], [0], [0], [1], [0, 0, 1, 1], [], []>} : vector<16x8xf32>, vector<8x64xf32>, vector<16x64xf32> -> vector<16x64xf32>
    %127 = arith.addf %122, %126 : vector<16x64xf32>
    %c192 = arith.constant 192 : index
    %c0_128 = arith.constant 0 : index
    %128 = vector.load %arg13[%c192, %c0_128] : memref<576x64xf32, #tpu.memory_space<vmem>>, vector<64x64xf32>
    %cst_129 = arith.constant dense<0.000000e+00> : vector<8x64xf32>
    %129 = tpu.matmul %111, %128, %cst_129 {dimension_numbers = #tpu.dot_dimension_numbers<[1], [0], [0], [1], [0, 0, 1, 1], [], []>} : vector<8x64xf32>, vector<64x64xf32>, vector<8x64xf32> -> vector<8x64xf32>
    %c48_130 = arith.constant 48 : index
    %c0_131 = arith.constant 0 : index
    %130 = vector.load %arg6[%c48_130, %c0_131] : memref<144x8xf32, #tpu.memory_space<vmem>>, vector<16x8xf32>
    %cst_132 = arith.constant dense<0.000000e+00> : vector<16x64xf32>
    %131 = tpu.matmul %130, %129, %cst_132 {dimension_numbers = #tpu.dot_dimension_numbers<[1], [0], [0], [1], [0, 0, 1, 1], [], []>} : vector<16x8xf32>, vector<8x64xf32>, vector<16x64xf32> -> vector<16x64xf32>
    %132 = arith.addf %127, %131 : vector<16x64xf32>
    %c256_133 = arith.constant 256 : index
    %c0_134 = arith.constant 0 : index
    %133 = vector.load %arg13[%c256_133, %c0_134] : memref<576x64xf32, #tpu.memory_space<vmem>>, vector<64x64xf32>
    %cst_135 = arith.constant dense<0.000000e+00> : vector<8x64xf32>
    %134 = tpu.matmul %111, %133, %cst_135 {dimension_numbers = #tpu.dot_dimension_numbers<[1], [0], [0], [1], [0, 0, 1, 1], [], []>} : vector<8x64xf32>, vector<64x64xf32>, vector<8x64xf32> -> vector<8x64xf32>
    %c64_136 = arith.constant 64 : index
    %c0_137 = arith.constant 0 : index
    %135 = vector.load %arg6[%c64_136, %c0_137] : memref<144x8xf32, #tpu.memory_space<vmem>>, vector<16x8xf32>
    %cst_138 = arith.constant dense<0.000000e+00> : vector<16x64xf32>
    %136 = tpu.matmul %135, %134, %cst_138 {dimension_numbers = #tpu.dot_dimension_numbers<[1], [0], [0], [1], [0, 0, 1, 1], [], []>} : vector<16x8xf32>, vector<8x64xf32>, vector<16x64xf32> -> vector<16x64xf32>
    %137 = arith.addf %132, %136 : vector<16x64xf32>
    %c320 = arith.constant 320 : index
    %c0_139 = arith.constant 0 : index
    %138 = vector.load %arg13[%c320, %c0_139] : memref<576x64xf32, #tpu.memory_space<vmem>>, vector<64x64xf32>
    %cst_140 = arith.constant dense<0.000000e+00> : vector<8x64xf32>
    %139 = tpu.matmul %111, %138, %cst_140 {dimension_numbers = #tpu.dot_dimension_numbers<[1], [0], [0], [1], [0, 0, 1, 1], [], []>} : vector<8x64xf32>, vector<64x64xf32>, vector<8x64xf32> -> vector<8x64xf32>
    %c80 = arith.constant 80 : index
    %c0_141 = arith.constant 0 : index
    %140 = vector.load %arg6[%c80, %c0_141] : memref<144x8xf32, #tpu.memory_space<vmem>>, vector<16x8xf32>
    %cst_142 = arith.constant dense<0.000000e+00> : vector<16x64xf32>
    %141 = tpu.matmul %140, %139, %cst_142 {dimension_numbers = #tpu.dot_dimension_numbers<[1], [0], [0], [1], [0, 0, 1, 1], [], []>} : vector<16x8xf32>, vector<8x64xf32>, vector<16x64xf32> -> vector<16x64xf32>
    %142 = arith.addf %137, %141 : vector<16x64xf32>
    %c384 = arith.constant 384 : index
    %c0_143 = arith.constant 0 : index
    %143 = vector.load %arg13[%c384, %c0_143] : memref<576x64xf32, #tpu.memory_space<vmem>>, vector<64x64xf32>
    %cst_144 = arith.constant dense<0.000000e+00> : vector<8x64xf32>
    %144 = tpu.matmul %111, %143, %cst_144 {dimension_numbers = #tpu.dot_dimension_numbers<[1], [0], [0], [1], [0, 0, 1, 1], [], []>} : vector<8x64xf32>, vector<64x64xf32>, vector<8x64xf32> -> vector<8x64xf32>
    %c96 = arith.constant 96 : index
    %c0_145 = arith.constant 0 : index
    %145 = vector.load %arg6[%c96, %c0_145] : memref<144x8xf32, #tpu.memory_space<vmem>>, vector<16x8xf32>
    %cst_146 = arith.constant dense<0.000000e+00> : vector<16x64xf32>
    %146 = tpu.matmul %145, %144, %cst_146 {dimension_numbers = #tpu.dot_dimension_numbers<[1], [0], [0], [1], [0, 0, 1, 1], [], []>} : vector<16x8xf32>, vector<8x64xf32>, vector<16x64xf32> -> vector<16x64xf32>
    %147 = arith.addf %142, %146 : vector<16x64xf32>
    %c448 = arith.constant 448 : index
    %c0_147 = arith.constant 0 : index
    %148 = vector.load %arg13[%c448, %c0_147] : memref<576x64xf32, #tpu.memory_space<vmem>>, vector<64x64xf32>
    %cst_148 = arith.constant dense<0.000000e+00> : vector<8x64xf32>
    %149 = tpu.matmul %111, %148, %cst_148 {dimension_numbers = #tpu.dot_dimension_numbers<[1], [0], [0], [1], [0, 0, 1, 1], [], []>} : vector<8x64xf32>, vector<64x64xf32>, vector<8x64xf32> -> vector<8x64xf32>
    %c112 = arith.constant 112 : index
    %c0_149 = arith.constant 0 : index
    %150 = vector.load %arg6[%c112, %c0_149] : memref<144x8xf32, #tpu.memory_space<vmem>>, vector<16x8xf32>
    %cst_150 = arith.constant dense<0.000000e+00> : vector<16x64xf32>
    %151 = tpu.matmul %150, %149, %cst_150 {dimension_numbers = #tpu.dot_dimension_numbers<[1], [0], [0], [1], [0, 0, 1, 1], [], []>} : vector<16x8xf32>, vector<8x64xf32>, vector<16x64xf32> -> vector<16x64xf32>
    %152 = arith.addf %147, %151 : vector<16x64xf32>
    %c512_151 = arith.constant 512 : index
    %c0_152 = arith.constant 0 : index
    %153 = vector.load %arg13[%c512_151, %c0_152] : memref<576x64xf32, #tpu.memory_space<vmem>>, vector<64x64xf32>
    %cst_153 = arith.constant dense<0.000000e+00> : vector<8x64xf32>
    %154 = tpu.matmul %111, %153, %cst_153 {dimension_numbers = #tpu.dot_dimension_numbers<[1], [0], [0], [1], [0, 0, 1, 1], [], []>} : vector<8x64xf32>, vector<64x64xf32>, vector<8x64xf32> -> vector<8x64xf32>
    %c128_154 = arith.constant 128 : index
    %c0_155 = arith.constant 0 : index
    %155 = vector.load %arg6[%c128_154, %c0_155] : memref<144x8xf32, #tpu.memory_space<vmem>>, vector<16x8xf32>
    %cst_156 = arith.constant dense<0.000000e+00> : vector<16x64xf32>
    %156 = tpu.matmul %155, %154, %cst_156 {dimension_numbers = #tpu.dot_dimension_numbers<[1], [0], [0], [1], [0, 0, 1, 1], [], []>} : vector<16x8xf32>, vector<8x64xf32>, vector<16x64xf32> -> vector<16x64xf32>
    %157 = arith.addf %152, %156 : vector<16x64xf32>
    %c0_157 = arith.constant 0 : index
    %c0_158 = arith.constant 0 : index
    %158 = vector.load %arg7[%c0_157, %c0_158] : memref<16x1xf32, #tpu.memory_space<vmem>>, vector<16x1xf32>
    %159 = vector.broadcast %158 : vector<16x1xf32> to vector<16x64xf32>
    %160 = arith.addf %157, %159 : vector<16x64xf32>
    %cst_159 = arith.constant 0.000000e+00 : f32
    %161 = vector.broadcast %cst_159 : f32 to vector<16x64xf32>
    %162 = arith.maximumf %160, %161 : vector<16x64xf32>
    %cst_160 = arith.constant 0.000000e+00 : f32
    %163 = vector.broadcast %cst_160 : f32 to vector<16x64xf32>
    %c0_161 = arith.constant 0 : index
    %c0_162 = arith.constant 0 : index
    %164 = vector.load %arg13[%c0_161, %c0_162] : memref<576x64xf32, #tpu.memory_space<vmem>>, vector<64x64xf32>
    %cst_163 = arith.constant dense<0.000000e+00> : vector<16x64xf32>
    %165 = tpu.matmul %162, %164, %cst_163 {dimension_numbers = #tpu.dot_dimension_numbers<[1], [0], [0], [1], [0, 0, 1, 1], [], []>} : vector<16x64xf32>, vector<64x64xf32>, vector<16x64xf32> -> vector<16x64xf32>
    %c0_164 = arith.constant 0 : index
    %c0_165 = arith.constant 0 : index
    %166 = vector.load %arg8[%c0_164, %c0_165] : memref<144x16xf32, #tpu.memory_space<vmem>>, vector<16x16xf32>
    %cst_166 = arith.constant dense<0.000000e+00> : vector<16x64xf32>
    %167 = tpu.matmul %166, %165, %cst_166 {dimension_numbers = #tpu.dot_dimension_numbers<[1], [0], [0], [1], [0, 0, 1, 1], [], []>} : vector<16x16xf32>, vector<16x64xf32>, vector<16x64xf32> -> vector<16x64xf32>
    %168 = arith.addf %163, %167 : vector<16x64xf32>
    %c64_167 = arith.constant 64 : index
    %c0_168 = arith.constant 0 : index
    %169 = vector.load %arg13[%c64_167, %c0_168] : memref<576x64xf32, #tpu.memory_space<vmem>>, vector<64x64xf32>
    %cst_169 = arith.constant dense<0.000000e+00> : vector<16x64xf32>
    %170 = tpu.matmul %162, %169, %cst_169 {dimension_numbers = #tpu.dot_dimension_numbers<[1], [0], [0], [1], [0, 0, 1, 1], [], []>} : vector<16x64xf32>, vector<64x64xf32>, vector<16x64xf32> -> vector<16x64xf32>
    %c16_170 = arith.constant 16 : index
    %c0_171 = arith.constant 0 : index
    %171 = vector.load %arg8[%c16_170, %c0_171] : memref<144x16xf32, #tpu.memory_space<vmem>>, vector<16x16xf32>
    %cst_172 = arith.constant dense<0.000000e+00> : vector<16x64xf32>
    %172 = tpu.matmul %171, %170, %cst_172 {dimension_numbers = #tpu.dot_dimension_numbers<[1], [0], [0], [1], [0, 0, 1, 1], [], []>} : vector<16x16xf32>, vector<16x64xf32>, vector<16x64xf32> -> vector<16x64xf32>
    %173 = arith.addf %168, %172 : vector<16x64xf32>
    %c128_173 = arith.constant 128 : index
    %c0_174 = arith.constant 0 : index
    %174 = vector.load %arg13[%c128_173, %c0_174] : memref<576x64xf32, #tpu.memory_space<vmem>>, vector<64x64xf32>
    %cst_175 = arith.constant dense<0.000000e+00> : vector<16x64xf32>
    %175 = tpu.matmul %162, %174, %cst_175 {dimension_numbers = #tpu.dot_dimension_numbers<[1], [0], [0], [1], [0, 0, 1, 1], [], []>} : vector<16x64xf32>, vector<64x64xf32>, vector<16x64xf32> -> vector<16x64xf32>
    %c32_176 = arith.constant 32 : index
    %c0_177 = arith.constant 0 : index
    %176 = vector.load %arg8[%c32_176, %c0_177] : memref<144x16xf32, #tpu.memory_space<vmem>>, vector<16x16xf32>
    %cst_178 = arith.constant dense<0.000000e+00> : vector<16x64xf32>
    %177 = tpu.matmul %176, %175, %cst_178 {dimension_numbers = #tpu.dot_dimension_numbers<[1], [0], [0], [1], [0, 0, 1, 1], [], []>} : vector<16x16xf32>, vector<16x64xf32>, vector<16x64xf32> -> vector<16x64xf32>
    %178 = arith.addf %173, %177 : vector<16x64xf32>
    %c192_179 = arith.constant 192 : index
    %c0_180 = arith.constant 0 : index
    %179 = vector.load %arg13[%c192_179, %c0_180] : memref<576x64xf32, #tpu.memory_space<vmem>>, vector<64x64xf32>
    %cst_181 = arith.constant dense<0.000000e+00> : vector<16x64xf32>
    %180 = tpu.matmul %162, %179, %cst_181 {dimension_numbers = #tpu.dot_dimension_numbers<[1], [0], [0], [1], [0, 0, 1, 1], [], []>} : vector<16x64xf32>, vector<64x64xf32>, vector<16x64xf32> -> vector<16x64xf32>
    %c48_182 = arith.constant 48 : index
    %c0_183 = arith.constant 0 : index
    %181 = vector.load %arg8[%c48_182, %c0_183] : memref<144x16xf32, #tpu.memory_space<vmem>>, vector<16x16xf32>
    %cst_184 = arith.constant dense<0.000000e+00> : vector<16x64xf32>
    %182 = tpu.matmul %181, %180, %cst_184 {dimension_numbers = #tpu.dot_dimension_numbers<[1], [0], [0], [1], [0, 0, 1, 1], [], []>} : vector<16x16xf32>, vector<16x64xf32>, vector<16x64xf32> -> vector<16x64xf32>
    %183 = arith.addf %178, %182 : vector<16x64xf32>
    %c256_185 = arith.constant 256 : index
    %c0_186 = arith.constant 0 : index
    %184 = vector.load %arg13[%c256_185, %c0_186] : memref<576x64xf32, #tpu.memory_space<vmem>>, vector<64x64xf32>
    %cst_187 = arith.constant dense<0.000000e+00> : vector<16x64xf32>
    %185 = tpu.matmul %162, %184, %cst_187 {dimension_numbers = #tpu.dot_dimension_numbers<[1], [0], [0], [1], [0, 0, 1, 1], [], []>} : vector<16x64xf32>, vector<64x64xf32>, vector<16x64xf32> -> vector<16x64xf32>
    %c64_188 = arith.constant 64 : index
    %c0_189 = arith.constant 0 : index
    %186 = vector.load %arg8[%c64_188, %c0_189] : memref<144x16xf32, #tpu.memory_space<vmem>>, vector<16x16xf32>
    %cst_190 = arith.constant dense<0.000000e+00> : vector<16x64xf32>
    %187 = tpu.matmul %186, %185, %cst_190 {dimension_numbers = #tpu.dot_dimension_numbers<[1], [0], [0], [1], [0, 0, 1, 1], [], []>} : vector<16x16xf32>, vector<16x64xf32>, vector<16x64xf32> -> vector<16x64xf32>
    %188 = arith.addf %183, %187 : vector<16x64xf32>
    %c320_191 = arith.constant 320 : index
    %c0_192 = arith.constant 0 : index
    %189 = vector.load %arg13[%c320_191, %c0_192] : memref<576x64xf32, #tpu.memory_space<vmem>>, vector<64x64xf32>
    %cst_193 = arith.constant dense<0.000000e+00> : vector<16x64xf32>
    %190 = tpu.matmul %162, %189, %cst_193 {dimension_numbers = #tpu.dot_dimension_numbers<[1], [0], [0], [1], [0, 0, 1, 1], [], []>} : vector<16x64xf32>, vector<64x64xf32>, vector<16x64xf32> -> vector<16x64xf32>
    %c80_194 = arith.constant 80 : index
    %c0_195 = arith.constant 0 : index
    %191 = vector.load %arg8[%c80_194, %c0_195] : memref<144x16xf32, #tpu.memory_space<vmem>>, vector<16x16xf32>
    %cst_196 = arith.constant dense<0.000000e+00> : vector<16x64xf32>
    %192 = tpu.matmul %191, %190, %cst_196 {dimension_numbers = #tpu.dot_dimension_numbers<[1], [0], [0], [1], [0, 0, 1, 1], [], []>} : vector<16x16xf32>, vector<16x64xf32>, vector<16x64xf32> -> vector<16x64xf32>
    %193 = arith.addf %188, %192 : vector<16x64xf32>
    %c384_197 = arith.constant 384 : index
    %c0_198 = arith.constant 0 : index
    %194 = vector.load %arg13[%c384_197, %c0_198] : memref<576x64xf32, #tpu.memory_space<vmem>>, vector<64x64xf32>
    %cst_199 = arith.constant dense<0.000000e+00> : vector<16x64xf32>
    %195 = tpu.matmul %162, %194, %cst_199 {dimension_numbers = #tpu.dot_dimension_numbers<[1], [0], [0], [1], [0, 0, 1, 1], [], []>} : vector<16x64xf32>, vector<64x64xf32>, vector<16x64xf32> -> vector<16x64xf32>
    %c96_200 = arith.constant 96 : index
    %c0_201 = arith.constant 0 : index
    %196 = vector.load %arg8[%c96_200, %c0_201] : memref<144x16xf32, #tpu.memory_space<vmem>>, vector<16x16xf32>
    %cst_202 = arith.constant dense<0.000000e+00> : vector<16x64xf32>
    %197 = tpu.matmul %196, %195, %cst_202 {dimension_numbers = #tpu.dot_dimension_numbers<[1], [0], [0], [1], [0, 0, 1, 1], [], []>} : vector<16x16xf32>, vector<16x64xf32>, vector<16x64xf32> -> vector<16x64xf32>
    %198 = arith.addf %193, %197 : vector<16x64xf32>
    %c448_203 = arith.constant 448 : index
    %c0_204 = arith.constant 0 : index
    %199 = vector.load %arg13[%c448_203, %c0_204] : memref<576x64xf32, #tpu.memory_space<vmem>>, vector<64x64xf32>
    %cst_205 = arith.constant dense<0.000000e+00> : vector<16x64xf32>
    %200 = tpu.matmul %162, %199, %cst_205 {dimension_numbers = #tpu.dot_dimension_numbers<[1], [0], [0], [1], [0, 0, 1, 1], [], []>} : vector<16x64xf32>, vector<64x64xf32>, vector<16x64xf32> -> vector<16x64xf32>
    %c112_206 = arith.constant 112 : index
    %c0_207 = arith.constant 0 : index
    %201 = vector.load %arg8[%c112_206, %c0_207] : memref<144x16xf32, #tpu.memory_space<vmem>>, vector<16x16xf32>
    %cst_208 = arith.constant dense<0.000000e+00> : vector<16x64xf32>
    %202 = tpu.matmul %201, %200, %cst_208 {dimension_numbers = #tpu.dot_dimension_numbers<[1], [0], [0], [1], [0, 0, 1, 1], [], []>} : vector<16x16xf32>, vector<16x64xf32>, vector<16x64xf32> -> vector<16x64xf32>
    %203 = arith.addf %198, %202 : vector<16x64xf32>
    %c512_209 = arith.constant 512 : index
    %c0_210 = arith.constant 0 : index
    %204 = vector.load %arg13[%c512_209, %c0_210] : memref<576x64xf32, #tpu.memory_space<vmem>>, vector<64x64xf32>
    %cst_211 = arith.constant dense<0.000000e+00> : vector<16x64xf32>
    %205 = tpu.matmul %162, %204, %cst_211 {dimension_numbers = #tpu.dot_dimension_numbers<[1], [0], [0], [1], [0, 0, 1, 1], [], []>} : vector<16x64xf32>, vector<64x64xf32>, vector<16x64xf32> -> vector<16x64xf32>
    %c128_212 = arith.constant 128 : index
    %c0_213 = arith.constant 0 : index
    %206 = vector.load %arg8[%c128_212, %c0_213] : memref<144x16xf32, #tpu.memory_space<vmem>>, vector<16x16xf32>
    %cst_214 = arith.constant dense<0.000000e+00> : vector<16x64xf32>
    %207 = tpu.matmul %206, %205, %cst_214 {dimension_numbers = #tpu.dot_dimension_numbers<[1], [0], [0], [1], [0, 0, 1, 1], [], []>} : vector<16x16xf32>, vector<16x64xf32>, vector<16x64xf32> -> vector<16x64xf32>
    %208 = arith.addf %203, %207 : vector<16x64xf32>
    %c0_215 = arith.constant 0 : index
    %c0_216 = arith.constant 0 : index
    %209 = vector.load %arg9[%c0_215, %c0_216] : memref<16x1xf32, #tpu.memory_space<vmem>>, vector<16x1xf32>
    %210 = vector.broadcast %209 : vector<16x1xf32> to vector<16x64xf32>
    %211 = arith.addf %208, %210 : vector<16x64xf32>
    %cst_217 = arith.constant 0.000000e+00 : f32
    %212 = vector.broadcast %cst_217 : f32 to vector<16x64xf32>
    %213 = arith.maximumf %211, %212 : vector<16x64xf32>
    %c320_218 = arith.constant 320 : index
    %c0_219 = arith.constant 0 : index
    %214 = vector.load %arg13[%c320_218, %c0_219] : memref<576x64xf32, #tpu.memory_space<vmem>>, vector<64x64xf32>
    %cst_220 = arith.constant dense<0.000000e+00> : vector<16x64xf32>
    %215 = tpu.matmul %213, %214, %cst_220 {dimension_numbers = #tpu.dot_dimension_numbers<[1], [0], [0], [1], [0, 0, 1, 1], [], []>} : vector<16x64xf32>, vector<64x64xf32>, vector<16x64xf32> -> vector<16x64xf32>
    %216 = arith.maximumf %213, %215 : vector<16x64xf32>
    %c448_221 = arith.constant 448 : index
    %c0_222 = arith.constant 0 : index
    %217 = vector.load %arg13[%c448_221, %c0_222] : memref<576x64xf32, #tpu.memory_space<vmem>>, vector<64x64xf32>
    %cst_223 = arith.constant dense<0.000000e+00> : vector<16x64xf32>
    %218 = tpu.matmul %216, %217, %cst_223 {dimension_numbers = #tpu.dot_dimension_numbers<[1], [0], [0], [1], [0, 0, 1, 1], [], []>} : vector<16x64xf32>, vector<64x64xf32>, vector<16x64xf32> -> vector<16x64xf32>
    %219 = arith.maximumf %216, %218 : vector<16x64xf32>
    %c0_224 = arith.constant 0 : index
    %c0_225 = arith.constant 0 : index
    %220 = vector.load %arg16[%c0_224, %c0_225] : memref<64x16xf32, #tpu.memory_space<vmem>>, vector<64x16xf32>
    %cst_226 = arith.constant dense<0.000000e+00> : vector<16x16xf32>
    %221 = tpu.matmul %219, %220, %cst_226 {dimension_numbers = #tpu.dot_dimension_numbers<[1], [0], [0], [1], [0, 0, 1, 1], [], []>} : vector<16x64xf32>, vector<64x16xf32>, vector<16x16xf32> -> vector<16x16xf32>
    %cst_227 = arith.constant 0.000000e+00 : f32
    %222 = vector.broadcast %cst_227 : f32 to vector<32x16xf32>
    %c0_228 = arith.constant 0 : index
    %c0_229 = arith.constant 0 : index
    %223 = vector.load %arg14[%c0_228, %c0_229] : memref<144x16xf32, #tpu.memory_space<vmem>>, vector<16x16xf32>
    %cst_230 = arith.constant dense<0.000000e+00> : vector<16x16xf32>
    %224 = tpu.matmul %221, %223, %cst_230 {dimension_numbers = #tpu.dot_dimension_numbers<[1], [0], [0], [1], [0, 0, 1, 1], [], []>} : vector<16x16xf32>, vector<16x16xf32>, vector<16x16xf32> -> vector<16x16xf32>
    %c0_231 = arith.constant 0 : index
    %c0_232 = arith.constant 0 : index
    %225 = vector.load %arg10[%c0_231, %c0_232] : memref<288x16xf32, #tpu.memory_space<vmem>>, vector<32x16xf32>
    %cst_233 = arith.constant dense<0.000000e+00> : vector<32x16xf32>
    %226 = tpu.matmul %225, %224, %cst_233 {dimension_numbers = #tpu.dot_dimension_numbers<[1], [0], [0], [1], [0, 0, 1, 1], [], []>} : vector<32x16xf32>, vector<16x16xf32>, vector<32x16xf32> -> vector<32x16xf32>
    %227 = arith.addf %222, %226 : vector<32x16xf32>
    %c16_234 = arith.constant 16 : index
    %c0_235 = arith.constant 0 : index
    %228 = vector.load %arg14[%c16_234, %c0_235] : memref<144x16xf32, #tpu.memory_space<vmem>>, vector<16x16xf32>
    %cst_236 = arith.constant dense<0.000000e+00> : vector<16x16xf32>
    %229 = tpu.matmul %221, %228, %cst_236 {dimension_numbers = #tpu.dot_dimension_numbers<[1], [0], [0], [1], [0, 0, 1, 1], [], []>} : vector<16x16xf32>, vector<16x16xf32>, vector<16x16xf32> -> vector<16x16xf32>
    %c32_237 = arith.constant 32 : index
    %c0_238 = arith.constant 0 : index
    %230 = vector.load %arg10[%c32_237, %c0_238] : memref<288x16xf32, #tpu.memory_space<vmem>>, vector<32x16xf32>
    %cst_239 = arith.constant dense<0.000000e+00> : vector<32x16xf32>
    %231 = tpu.matmul %230, %229, %cst_239 {dimension_numbers = #tpu.dot_dimension_numbers<[1], [0], [0], [1], [0, 0, 1, 1], [], []>} : vector<32x16xf32>, vector<16x16xf32>, vector<32x16xf32> -> vector<32x16xf32>
    %232 = arith.addf %227, %231 : vector<32x16xf32>
    %c32_240 = arith.constant 32 : index
    %c0_241 = arith.constant 0 : index
    %233 = vector.load %arg14[%c32_240, %c0_241] : memref<144x16xf32, #tpu.memory_space<vmem>>, vector<16x16xf32>
    %cst_242 = arith.constant dense<0.000000e+00> : vector<16x16xf32>
    %234 = tpu.matmul %221, %233, %cst_242 {dimension_numbers = #tpu.dot_dimension_numbers<[1], [0], [0], [1], [0, 0, 1, 1], [], []>} : vector<16x16xf32>, vector<16x16xf32>, vector<16x16xf32> -> vector<16x16xf32>
    %c64_243 = arith.constant 64 : index
    %c0_244 = arith.constant 0 : index
    %235 = vector.load %arg10[%c64_243, %c0_244] : memref<288x16xf32, #tpu.memory_space<vmem>>, vector<32x16xf32>
    %cst_245 = arith.constant dense<0.000000e+00> : vector<32x16xf32>
    %236 = tpu.matmul %235, %234, %cst_245 {dimension_numbers = #tpu.dot_dimension_numbers<[1], [0], [0], [1], [0, 0, 1, 1], [], []>} : vector<32x16xf32>, vector<16x16xf32>, vector<32x16xf32> -> vector<32x16xf32>
    %237 = arith.addf %232, %236 : vector<32x16xf32>
    %c48_246 = arith.constant 48 : index
    %c0_247 = arith.constant 0 : index
    %238 = vector.load %arg14[%c48_246, %c0_247] : memref<144x16xf32, #tpu.memory_space<vmem>>, vector<16x16xf32>
    %cst_248 = arith.constant dense<0.000000e+00> : vector<16x16xf32>
    %239 = tpu.matmul %221, %238, %cst_248 {dimension_numbers = #tpu.dot_dimension_numbers<[1], [0], [0], [1], [0, 0, 1, 1], [], []>} : vector<16x16xf32>, vector<16x16xf32>, vector<16x16xf32> -> vector<16x16xf32>
    %c96_249 = arith.constant 96 : index
    %c0_250 = arith.constant 0 : index
    %240 = vector.load %arg10[%c96_249, %c0_250] : memref<288x16xf32, #tpu.memory_space<vmem>>, vector<32x16xf32>
    %cst_251 = arith.constant dense<0.000000e+00> : vector<32x16xf32>
    %241 = tpu.matmul %240, %239, %cst_251 {dimension_numbers = #tpu.dot_dimension_numbers<[1], [0], [0], [1], [0, 0, 1, 1], [], []>} : vector<32x16xf32>, vector<16x16xf32>, vector<32x16xf32> -> vector<32x16xf32>
    %242 = arith.addf %237, %241 : vector<32x16xf32>
    %c64_252 = arith.constant 64 : index
    %c0_253 = arith.constant 0 : index
    %243 = vector.load %arg14[%c64_252, %c0_253] : memref<144x16xf32, #tpu.memory_space<vmem>>, vector<16x16xf32>
    %cst_254 = arith.constant dense<0.000000e+00> : vector<16x16xf32>
    %244 = tpu.matmul %221, %243, %cst_254 {dimension_numbers = #tpu.dot_dimension_numbers<[1], [0], [0], [1], [0, 0, 1, 1], [], []>} : vector<16x16xf32>, vector<16x16xf32>, vector<16x16xf32> -> vector<16x16xf32>
    %c128_255 = arith.constant 128 : index
    %c0_256 = arith.constant 0 : index
    %245 = vector.load %arg10[%c128_255, %c0_256] : memref<288x16xf32, #tpu.memory_space<vmem>>, vector<32x16xf32>
    %cst_257 = arith.constant dense<0.000000e+00> : vector<32x16xf32>
    %246 = tpu.matmul %245, %244, %cst_257 {dimension_numbers = #tpu.dot_dimension_numbers<[1], [0], [0], [1], [0, 0, 1, 1], [], []>} : vector<32x16xf32>, vector<16x16xf32>, vector<32x16xf32> -> vector<32x16xf32>
    %247 = arith.addf %242, %246 : vector<32x16xf32>
    %c80_258 = arith.constant 80 : index
    %c0_259 = arith.constant 0 : index
    %248 = vector.load %arg14[%c80_258, %c0_259] : memref<144x16xf32, #tpu.memory_space<vmem>>, vector<16x16xf32>
    %cst_260 = arith.constant dense<0.000000e+00> : vector<16x16xf32>
    %249 = tpu.matmul %221, %248, %cst_260 {dimension_numbers = #tpu.dot_dimension_numbers<[1], [0], [0], [1], [0, 0, 1, 1], [], []>} : vector<16x16xf32>, vector<16x16xf32>, vector<16x16xf32> -> vector<16x16xf32>
    %c160 = arith.constant 160 : index
    %c0_261 = arith.constant 0 : index
    %250 = vector.load %arg10[%c160, %c0_261] : memref<288x16xf32, #tpu.memory_space<vmem>>, vector<32x16xf32>
    %cst_262 = arith.constant dense<0.000000e+00> : vector<32x16xf32>
    %251 = tpu.matmul %250, %249, %cst_262 {dimension_numbers = #tpu.dot_dimension_numbers<[1], [0], [0], [1], [0, 0, 1, 1], [], []>} : vector<32x16xf32>, vector<16x16xf32>, vector<32x16xf32> -> vector<32x16xf32>
    %252 = arith.addf %247, %251 : vector<32x16xf32>
    %c96_263 = arith.constant 96 : index
    %c0_264 = arith.constant 0 : index
    %253 = vector.load %arg14[%c96_263, %c0_264] : memref<144x16xf32, #tpu.memory_space<vmem>>, vector<16x16xf32>
    %cst_265 = arith.constant dense<0.000000e+00> : vector<16x16xf32>
    %254 = tpu.matmul %221, %253, %cst_265 {dimension_numbers = #tpu.dot_dimension_numbers<[1], [0], [0], [1], [0, 0, 1, 1], [], []>} : vector<16x16xf32>, vector<16x16xf32>, vector<16x16xf32> -> vector<16x16xf32>
    %c192_266 = arith.constant 192 : index
    %c0_267 = arith.constant 0 : index
    %255 = vector.load %arg10[%c192_266, %c0_267] : memref<288x16xf32, #tpu.memory_space<vmem>>, vector<32x16xf32>
    %cst_268 = arith.constant dense<0.000000e+00> : vector<32x16xf32>
    %256 = tpu.matmul %255, %254, %cst_268 {dimension_numbers = #tpu.dot_dimension_numbers<[1], [0], [0], [1], [0, 0, 1, 1], [], []>} : vector<32x16xf32>, vector<16x16xf32>, vector<32x16xf32> -> vector<32x16xf32>
    %257 = arith.addf %252, %256 : vector<32x16xf32>
    %c112_269 = arith.constant 112 : index
    %c0_270 = arith.constant 0 : index
    %258 = vector.load %arg14[%c112_269, %c0_270] : memref<144x16xf32, #tpu.memory_space<vmem>>, vector<16x16xf32>
    %cst_271 = arith.constant dense<0.000000e+00> : vector<16x16xf32>
    %259 = tpu.matmul %221, %258, %cst_271 {dimension_numbers = #tpu.dot_dimension_numbers<[1], [0], [0], [1], [0, 0, 1, 1], [], []>} : vector<16x16xf32>, vector<16x16xf32>, vector<16x16xf32> -> vector<16x16xf32>
    %c224 = arith.constant 224 : index
    %c0_272 = arith.constant 0 : index
    %260 = vector.load %arg10[%c224, %c0_272] : memref<288x16xf32, #tpu.memory_space<vmem>>, vector<32x16xf32>
    %cst_273 = arith.constant dense<0.000000e+00> : vector<32x16xf32>
    %261 = tpu.matmul %260, %259, %cst_273 {dimension_numbers = #tpu.dot_dimension_numbers<[1], [0], [0], [1], [0, 0, 1, 1], [], []>} : vector<32x16xf32>, vector<16x16xf32>, vector<32x16xf32> -> vector<32x16xf32>
    %262 = arith.addf %257, %261 : vector<32x16xf32>
    %c128_274 = arith.constant 128 : index
    %c0_275 = arith.constant 0 : index
    %263 = vector.load %arg14[%c128_274, %c0_275] : memref<144x16xf32, #tpu.memory_space<vmem>>, vector<16x16xf32>
    %cst_276 = arith.constant dense<0.000000e+00> : vector<16x16xf32>
    %264 = tpu.matmul %221, %263, %cst_276 {dimension_numbers = #tpu.dot_dimension_numbers<[1], [0], [0], [1], [0, 0, 1, 1], [], []>} : vector<16x16xf32>, vector<16x16xf32>, vector<16x16xf32> -> vector<16x16xf32>
    %c256_277 = arith.constant 256 : index
    %c0_278 = arith.constant 0 : index
    %265 = vector.load %arg10[%c256_277, %c0_278] : memref<288x16xf32, #tpu.memory_space<vmem>>, vector<32x16xf32>
    %cst_279 = arith.constant dense<0.000000e+00> : vector<32x16xf32>
    %266 = tpu.matmul %265, %264, %cst_279 {dimension_numbers = #tpu.dot_dimension_numbers<[1], [0], [0], [1], [0, 0, 1, 1], [], []>} : vector<32x16xf32>, vector<16x16xf32>, vector<32x16xf32> -> vector<32x16xf32>
    %267 = arith.addf %262, %266 : vector<32x16xf32>
    %c0_280 = arith.constant 0 : index
    %c0_281 = arith.constant 0 : index
    %268 = vector.load %arg11[%c0_280, %c0_281] : memref<32x1xf32, #tpu.memory_space<vmem>>, vector<32x1xf32>
    %269 = vector.broadcast %268 : vector<32x1xf32> to vector<32x16xf32>
    %270 = arith.addf %267, %269 : vector<32x16xf32>
    %cst_282 = arith.constant 0.000000e+00 : f32
    %271 = vector.broadcast %cst_282 : f32 to vector<32x16xf32>
    %272 = arith.maximumf %270, %271 : vector<32x16xf32>
    %c0_283 = arith.constant 0 : index
    %c0_284 = arith.constant 0 : index
    %c0_285 = arith.constant 0 : index
    %273 = vector.load %arg17[%c0_283, %c0_284, %c0_285] : memref<1x32x16xf32, #tpu.memory_space<vmem>>, vector<1x32x16xf32>
    %274 = vector.shape_cast %273 : vector<1x32x16xf32> to vector<32x16xf32>
    %275 = vector.shape_cast %272 : vector<32x16xf32> to vector<1x32x16xf32>
    tpu.vector_store %arg17[%c0_283, %c0_284, %c0_285], %275 {strides = array<i32>} : memref<1x32x16xf32, #tpu.memory_space<vmem>>, vector<1x32x16xf32>,
    return
  }
  func.func @transform_0(%arg0: i32) -> (i32, i32, i32) {
    %c0_i32 = arith.constant 0 : i32
    %c0_i32_0 = arith.constant 0 : i32
    %c0_i32_1 = arith.constant 0 : i32
    return %arg0, %c0_i32, %c0_i32_0 : i32, i32, i32
  }
  func.func @transform_1(%arg0: i32) -> (i32, i32) {
    %c0_i32 = arith.constant 0 : i32
    %c0_i32_0 = arith.constant 0 : i32
    %c0_i32_1 = arith.constant 0 : i32
    return %c0_i32, %c0_i32_0 : i32, i32
  }
  func.func @transform_2(%arg0: i32) -> (i32, i32) {
    %c0_i32 = arith.constant 0 : i32
    %c0_i32_0 = arith.constant 0 : i32
    %c0_i32_1 = arith.constant 0 : i32
    return %c0_i32, %c0_i32_0 : i32, i32
  }
  func.func @transform_3(%arg0: i32) -> (i32, i32) {
    %c0_i32 = arith.constant 0 : i32
    %c0_i32_0 = arith.constant 0 : i32
    %c0_i32_1 = arith.constant 0 : i32
    return %c0_i32, %c0_i32_0 : i32, i32
  }
  func.func @transform_4(%arg0: i32) -> (i32, i32) {
    %c0_i32 = arith.constant 0 : i32
    %c0_i32_0 = arith.constant 0 : i32
    %c0_i32_1 = arith.constant 0 : i32
    return %c0_i32, %c0_i32_0 : i32, i32
  }
  func.func @transform_5(%arg0: i32) -> (i32, i32) {
    %c0_i32 = arith.constant 0 : i32
    %c0_i32_0 = arith.constant 0 : i32
    %c0_i32_1 = arith.constant 0 : i32
    return %c0_i32, %c0_i32_0 : i32, i32
  }
  func.func @transform_6(%arg0: i32) -> (i32, i32) {
    %c0_i32 = arith.constant 0 : i32
    %c0_i32_0 = arith.constant 0 : i32
    %c0_i32_1 = arith.constant 0 : i32
    return %c0_i32, %c0_i32_0 : i32, i32
  }
  func.func @transform_7(%arg0: i32) -> (i32, i32) {
    %c0_i32 = arith.constant 0 : i32
    %c0_i32_0 = arith.constant 0 : i32
    %c0_i32_1 = arith.constant 0 : i32
    return %c0_i32, %c0_i32_0 : i32, i32
  }
  func.func @transform_8(%arg0: i32) -> (i32, i32) {
    %c0_i32 = arith.constant 0 : i32
    %c0_i32_0 = arith.constant 0 : i32
    %c0_i32_1 = arith.constant 0 : i32
    return %c0_i32, %c0_i32_0 : i32, i32
  }
  func.func @transform_9(%arg0: i32) -> (i32, i32) {
    %c0_i32 = arith.constant 0 : i32
    %c0_i32_0 = arith.constant 0 : i32
    %c0_i32_1 = arith.constant 0 : i32
    return %c0_i32, %c0_i32_0 : i32, i32
  }
  func.func @transform_10(%arg0: i32) -> (i32, i32) {
    %c0_i32 = arith.constant 0 : i32
    %c0_i32_0 = arith.constant 0 : i32
    %c0_i32_1 = arith.constant 0 : i32
    return %c0_i32, %c0_i32_0 : i32, i32
  }
  func.func @transform_11(%arg0: i32) -> (i32, i32) {
    %c0_i32 = arith.constant 0 : i32
    %c0_i32_0 = arith.constant 0 : i32
    %c0_i32_1 = arith.constant 0 : i32
    return %c0_i32, %c0_i32_0 : i32, i32
  }
  func.func @transform_12(%arg0: i32) -> (i32, i32) {
    %c0_i32 = arith.constant 0 : i32
    %c0_i32_0 = arith.constant 0 : i32
    %c0_i32_1 = arith.constant 0 : i32
    return %c0_i32, %c0_i32_0 : i32, i32
  }
  func.func @transform_13(%arg0: i32) -> (i32, i32) {
    %c0_i32 = arith.constant 0 : i32
    %c0_i32_0 = arith.constant 0 : i32
    %c0_i32_1 = arith.constant 0 : i32
    return %c0_i32, %c0_i32_0 : i32, i32
  }
  func.func @transform_14(%arg0: i32) -> (i32, i32) {
    %c0_i32 = arith.constant 0 : i32
    %c0_i32_0 = arith.constant 0 : i32
    %c0_i32_1 = arith.constant 0 : i32
    return %c0_i32, %c0_i32_0 : i32, i32
  }
  func.func @transform_15(%arg0: i32) -> (i32, i32) {
    %c0_i32 = arith.constant 0 : i32
    %c0_i32_0 = arith.constant 0 : i32
    %c0_i32_1 = arith.constant 0 : i32
    return %c0_i32, %c0_i32_0 : i32, i32
  }
  func.func @transform_16(%arg0: i32) -> (i32, i32, i32) {
    %c0_i32 = arith.constant 0 : i32
    %c0_i32_0 = arith.constant 0 : i32
    %c0_i32_1 = arith.constant 0 : i32
    return %arg0, %c0_i32, %c0_i32_0 : i32, i32, i32
  }
}

</mosaic_0001>

<llo_original>
// kernel: feature_extractor.1
$region0: #{feature_extractor.1}
  #allocation0 [shape = 'u32[]', space=smem, size = 0x4, offset = 0x4, fixed_abs, tag = 'smem constant byte address 0x4 - core index']
  #allocation1 [shape = 'u32[144,128]{1,0:T(1,128)}', space=vmem, size = 0x12000, scoped, tag = 'internal scratch']
  %s0 = inlined_call_operand.hbm [shape: f32[2,3,256], index: 0, kind: input, shape index: {}]
  %s1 = inlined_call_operand.hbm [shape: f32[72,3], index: 1, kind: input, shape index: {}]
  %s2 = inlined_call_operand.hbm [shape: f32[8,1], index: 2, kind: input, shape index: {}]
  %s3 = inlined_call_operand.hbm [shape: f32[72,8], index: 3, kind: input, shape index: {}]
  %s4 = inlined_call_operand.hbm [shape: f32[8,1], index: 4, kind: input, shape index: {}]
  %s5 = inlined_call_operand.hbm [shape: f32[144,8], index: 5, kind: input, shape index: {}]
  %s6 = inlined_call_operand.hbm [shape: f32[16,1], index: 6, kind: input, shape index: {}]
  %s7 = inlined_call_operand.hbm [shape: f32[144,16], index: 7, kind: input, shape index: {}]
  %s8 = inlined_call_operand.hbm [shape: f32[16,1], index: 8, kind: input, shape index: {}]
  %s9 = inlined_call_operand.hbm [shape: f32[288,16], index: 9, kind: input, shape index: {}]
  %s10 = inlined_call_operand.hbm [shape: f32[32,1], index: 10, kind: input, shape index: {}]
  %s11 = inlined_call_operand.hbm [shape: f32[2304,256], index: 11, kind: input, shape index: {}]
  %s12 = inlined_call_operand.hbm [shape: f32[576,64], index: 12, kind: input, shape index: {}]
  %s13 = inlined_call_operand.hbm [shape: f32[144,16], index: 13, kind: input, shape index: {}]
  %s14 = inlined_call_operand.hbm [shape: f32[256,64], index: 14, kind: input, shape index: {}]
  %s15 = inlined_call_operand.hbm [shape: f32[64,16], index: 15, kind: input, shape index: {}]
  %s16 = inlined_call_operand.hbm [shape: f32[2,32,16], index: 16, kind: output, shape index: {}]
  %s17 = sld [smem:[#allocation0]]
  $region161: #{feature_extractor.1} parent=0
    _
  %s19 = ssub.s32 1, %s17
  %s20 = scalar_select 0, %s19, %s17
  $region1: #{feature_extractor.1} parent=0
    #allocation2 [shape = 'u8[8192]{0}', space=vmem, size = 0x2000, scoped, tag = 'input window, operand 0']
    #allocation3 [shape = 's32[2]{0}', space=sflag, size = 0x8, scoped, tag = 'scoped memory for feature_extractor.1']
    #allocation4 [shape = 's32[2]{0}', space=sflag, size = 0x8, scoped, tag = 'scoped memory for feature_extractor.1']
    #allocation5 [shape = 'u8[36864]{0}', space=vmem, size = 0x9000, scoped, tag = 'input window, operand 1, single buffered']
    #allocation6 [shape = 's32[1]{0}', space=sflag, size = 0x4, scoped, tag = 'scoped memory for feature_extractor.1']
    #allocation7 [shape = 'u8[4096]{0}', space=vmem, size = 0x1000, scoped, tag = 'input window, operand 2, single buffered']
    #allocation8 [shape = 'u8[36864]{0}', space=vmem, size = 0x9000, scoped, tag = 'input window, operand 3, single buffered']
    #allocation9 [shape = 's32[1]{0}', space=sflag, size = 0x4, scoped, tag = 'scoped memory for feature_extractor.1']
    #allocation10 [shape = 'u8[4096]{0}', space=vmem, size = 0x1000, scoped, tag = 'input window, operand 4, single buffered']
    #allocation11 [shape = 'u8[73728]{0}', space=vmem, size = 0x12000, scoped, tag = 'input window, operand 5, single buffered']
    #allocation12 [shape = 's32[1]{0}', space=sflag, size = 0x4, scoped, tag = 'scoped memory for feature_extractor.1']
    #allocation13 [shape = 'u8[8192]{0}', space=vmem, size = 0x2000, scoped, tag = 'input window, operand 6, single buffered']
    #allocation14 [shape = 'u8[73728]{0}', space=vmem, size = 0x12000, scoped, tag = 'input window, operand 7, single buffered']
    #allocation15 [shape = 's32[1]{0}', space=sflag, size = 0x4, scoped, tag = 'scoped memory for feature_extractor.1']
    #allocation16 [shape = 'u8[8192]{0}', space=vmem, size = 0x2000, scoped, tag = 'input window, operand 8, single buffered']
    #allocation17 [shape = 'u8[147456]{0}', space=vmem, size = 0x24000, scoped, tag = 'input window, operand 9, single buffered']
    #allocation18 [shape = 's32[1]{0}', space=sflag, size = 0x4, scoped, tag = 'scoped memory for feature_extractor.1']
    #allocation19 [shape = 'u8[16384]{0}', space=vmem, size = 0x4000, scoped, tag = 'input window, operand 10, single buffered']
    #allocation20 [shape = 'u8[2359296]{0}', space=vmem, size = 0x240000, scoped, tag = 'input window, operand 11, single buffered']
    #allocation21 [shape = 's32[1]{0}', space=sflag, size = 0x4, scoped, tag = 'scoped memory for feature_extractor.1']
    #allocation22 [shape = 'u8[294912]{0}', space=vmem, size = 0x48000, scoped, tag = 'input window, operand 12, single buffered']
    #allocation23 [shape = 'u8[73728]{0}', space=vmem, size = 0x12000, scoped, tag = 'input window, operand 13, single buffered']
    #allocation24 [shape = 's32[1]{0}', space=sflag, size = 0x4, scoped, tag = 'scoped memory for feature_extractor.1']
    #allocation25 [shape = 'u8[131072]{0}', space=vmem, size = 0x20000, scoped, tag = 'input window, operand 14, single buffered']
    #allocation26 [shape = 'u8[32768]{0}', space=vmem, size = 0x8000, scoped, tag = 'input window, operand 15, single buffered']
    #allocation27 [shape = 's32[1]{0}', space=sflag, size = 0x4, scoped, tag = 'scoped memory for feature_extractor.1']
    #allocation28 [shape = 'u8[32768]{0}', space=vmem, size = 0x8000, scoped, tag = 'output window, operand 0']
    %21 = vsyncpa [#allocation3], 0
    %s22 = scalar_lea.sflag [#allocation3], 1
    %23 = vsyncpa %s22, 0
    %24 = vsyncpa [#allocation6], 0
    %25 = vsyncpa [#allocation9], 0
    %26 = vsyncpa [#allocation12], 0
    %27 = vsyncpa [#allocation15], 0
    %28 = vsyncpa [#allocation18], 0
    %29 = vsyncpa [#allocation21], 0
    %30 = vsyncpa [#allocation24], 0
    %31 = vsyncpa [#allocation27], 0
    %32 = vsyncpa [#allocation4], 0
    %s33 = scalar_lea.sflag [#allocation4], 1
    %34 = vsyncpa %s33, 0
    loop: start=0, step=1, limit=4
    $region2: #{feature_extractor.1} parent=1 // loop_pre_header
      _
    $region3: #{feature_extractor.1} parent=1 // loop_header
      %s36 = sphi 0, %s40
      %p37 = scmp.ge.s32.totalorder %s36, 4
      %s46 = sphi 0, %s48
      %s49 = sphi 0, %s46
      %s50 = sphi 0, %s49
      %s66 = sphi 0, %s50
      %s70 = sphi 0, %s70
      %s72 = sphi 0, %s70
      %s73 = sphi 0, %s72
      %s87 = sphi 0, %s73
      %s91 = sphi 0, %s91
      %s93 = sphi 0, %s91
      %s94 = sphi 0, %s93
      %s108 = sphi 0, %s94
      %s112 = sphi 0, %s112
      %s114 = sphi 0, %s112
      %s115 = sphi 0, %s114
      %s129 = sphi 0, %s115
      %s133 = sphi 0, %s133
      %s135 = sphi 0, %s133
      %s136 = sphi 0, %s135
      %s150 = sphi 0, %s136
      %s154 = sphi 0, %s154
      %s156 = sphi 0, %s154
      %s157 = sphi 0, %s156
      %s171 = sphi 0, %s157
      %s175 = sphi 0, %s175
      %s177 = sphi 0, %s175
      %s178 = sphi 0, %s177
      %s192 = sphi 0, %s178
      %s196 = sphi 0, %s196
      %s198 = sphi 0, %s196
      %s199 = sphi 0, %s198
      %s213 = sphi 0, %s199
      %s217 = sphi 0, %s217
      %s219 = sphi 0, %s217
      %s220 = sphi 0, %s219
      %s234 = sphi 0, %s220
      %s238 = sphi 0, %s238
      %s240 = sphi 0, %s238
      %s241 = sphi 0, %s240
      %s255 = sphi 0, %s241
      %s259 = sphi 0, %s259
      %s261 = sphi 0, %s259
      %s262 = sphi 0, %s261
      %s276 = sphi 0, %s262
      %s280 = sphi 0, %s280
      %s282 = sphi 0, %s280
      %s283 = sphi 0, %s282
      %s297 = sphi 0, %s283
      %s301 = sphi 0, %s301
      %s303 = sphi 0, %s301
      %s304 = sphi 0, %s303
      %s318 = sphi 0, %s304
      %s322 = sphi 0, %s322
      %s324 = sphi 0, %s322
      %s325 = sphi 0, %s324
      %s339 = sphi 0, %s325
      %s343 = sphi 0, %s343
      %s345 = sphi 0, %s343
      %s346 = sphi 0, %s345
      %s360 = sphi 0, %s346
      %s364 = sphi 0, %s364
      %s366 = sphi 0, %s364
      %s367 = sphi 0, %s366
      %s381 = sphi 0, %s367
      %s387 = sphi 0, %s389
      %s390 = sphi 0, %s387
      %s391 = sphi 0, %s390
      %s407 = sphi 0, %s391
    $region4: #{feature_extractor.1} parent=1 // loop_header_branch
      %39 = sbr.rel (%p37) target = $region8
    $region5: #{feature_extractor.1} parent=1 // loop_body
      %s41 = ssub.s32 %s36, 1
      %s42 = ssub.s32 %s36, 2
      %s43 = sadd.s32 %s36, 1
      %s44 = ssub.s32 %s36, %s43
      %p45 = scmp.eq.s32.totalorder %s44, 0
      %s47 = sadd.s32 %s46, 1
      %s48 = scalar_select %p45, %s46, %s47
      %p51 = pneg %p45
      %p52 = scmp.eq.s32.totalorder %s36, 1
      %p53 = por %p51, %p52
      %p54 = scmp.ne.s32.totalorder %s46, %s49
      %p55 = scmp.eq.s32.totalorder %s36, 0
      %p56 = por %p54, %p55
      %p57 = scmp.ne.s32.totalorder %s46, %s49
      %p58 = scmp.eq.s32.totalorder %s41, 1
      %p59 = por %p57, %p58
      %p60 = scmp.ne.s32.totalorder %s49, %s50
      %p61 = scmp.eq.s32.totalorder %s41, 0
      %p62 = por %p60, %p61
      %p63 = scmp.ne.s32.totalorder %s49, %s50
      %p64 = scmp.eq.s32.totalorder %s42, 1
      %p65 = por %p63, %p64
      %p67 = scmp.ne.s32.totalorder %s50, %s66
      %p68 = scmp.eq.s32.totalorder %s42, 0
      %p69 = por %p67, %p68
      %s71 = sadd.s32 %s70, 1
      %p74 = scmp.eq.s32.totalorder %s36, 1
      %p75 = scmp.ne.s32.totalorder %s70, %s72
      %p76 = scmp.eq.s32.totalorder %s36, 0
      %p77 = por %p75, %p76
      %p78 = scmp.ne.s32.totalorder %s70, %s72
      %p79 = scmp.eq.s32.totalorder %s41, 1
      %p80 = por %p78, %p79
      %p81 = scmp.ne.s32.totalorder %s72, %s73
      %p82 = scmp.eq.s32.totalorder %s41, 0
      %p83 = por %p81, %p82
      %p84 = scmp.ne.s32.totalorder %s72, %s73
      %p85 = scmp.eq.s32.totalorder %s42, 1
      %p86 = por %p84, %p85
      %p88 = scmp.ne.s32.totalorder %s73, %s87
      %p89 = scmp.eq.s32.totalorder %s42, 0
      %p90 = por %p88, %p89
      %s92 = sadd.s32 %s91, 1
      %p95 = scmp.eq.s32.totalorder %s36, 1
      %p96 = scmp.ne.s32.totalorder %s91, %s93
      %p97 = scmp.eq.s32.totalorder %s36, 0
      %p98 = por %p96, %p97
      %p99 = scmp.ne.s32.totalorder %s91, %s93
      %p100 = scmp.eq.s32.totalorder %s41, 1
      %p101 = por %p99, %p100
      %p102 = scmp.ne.s32.totalorder %s93, %s94
      %p103 = scmp.eq.s32.totalorder %s41, 0
      %p104 = por %p102, %p103
      %p105 = scmp.ne.s32.totalorder %s93, %s94
      %p106 = scmp.eq.s32.totalorder %s42, 1
      %p107 = por %p105, %p106
      %p109 = scmp.ne.s32.totalorder %s94, %s108
      %p110 = scmp.eq.s32.totalorder %s42, 0
      %p111 = por %p109, %p110
      %s113 = sadd.s32 %s112, 1
      %p116 = scmp.eq.s32.totalorder %s36, 1
      %p117 = scmp.ne.s32.totalorder %s112, %s114
      %p118 = scmp.eq.s32.totalorder %s36, 0
      %p119 = por %p117, %p118
      %p120 = scmp.ne.s32.totalorder %s112, %s114
      %p121 = scmp.eq.s32.totalorder %s41, 1
      %p122 = por %p120, %p121
      %p123 = scmp.ne.s32.totalorder %s114, %s115
      %p124 = scmp.eq.s32.totalorder %s41, 0
      %p125 = por %p123, %p124
      %p126 = scmp.ne.s32.totalorder %s114, %s115
      %p127 = scmp.eq.s32.totalorder %s42, 1
      %p128 = por %p126, %p127
      %p130 = scmp.ne.s32.totalorder %s115, %s129
      %p131 = scmp.eq.s32.totalorder %s42, 0
      %p132 = por %p130, %p131
      %s134 = sadd.s32 %s133, 1
      %p137 = scmp.eq.s32.totalorder %s36, 1
      %p138 = scmp.ne.s32.totalorder %s133, %s135
      %p139 = scmp.eq.s32.totalorder %s36, 0
      %p140 = por %p138, %p139
      %p141 = scmp.ne.s32.totalorder %s133, %s135
      %p142 = scmp.eq.s32.totalorder %s41, 1
      %p143 = por %p141, %p142
      %p144 = scmp.ne.s32.totalorder %s135, %s136
      %p145 = scmp.eq.s32.totalorder %s41, 0
      %p146 = por %p144, %p145
      %p147 = scmp.ne.s32.totalorder %s135, %s136
      %p148 = scmp.eq.s32.totalorder %s42, 1
      %p149 = por %p147, %p148
      %p151 = scmp.ne.s32.totalorder %s136, %s150
      %p152 = scmp.eq.s32.totalorder %s42, 0
      %p153 = por %p151, %p152
      %s155 = sadd.s32 %s154, 1
      %p158 = scmp.eq.s32.totalorder %s36, 1
      %p159 = scmp.ne.s32.totalorder %s154, %s156
      %p160 = scmp.eq.s32.totalorder %s36, 0
      %p161 = por %p159, %p160
      %p162 = scmp.ne.s32.totalorder %s154, %s156
      %p163 = scmp.eq.s32.totalorder %s41, 1
      %p164 = por %p162, %p163
      %p165 = scmp.ne.s32.totalorder %s156, %s157
      %p166 = scmp.eq.s32.totalorder %s41, 0
      %p167 = por %p165, %p166
      %p168 = scmp.ne.s32.totalorder %s156, %s157
      %p169 = scmp.eq.s32.totalorder %s42, 1
      %p170 = por %p168, %p169
      %p172 = scmp.ne.s32.totalorder %s157, %s171
      %p173 = scmp.eq.s32.totalorder %s42, 0
      %p174 = por %p172, %p173
      %s176 = sadd.s32 %s175, 1
      %p179 = scmp.eq.s32.totalorder %s36, 1
      %p180 = scmp.ne.s32.totalorder %s175, %s177
      %p181 = scmp.eq.s32.totalorder %s36, 0
      %p182 = por %p180, %p181
      %p183 = scmp.ne.s32.totalorder %s175, %s177
      %p184 = scmp.eq.s32.totalorder %s41, 1
      %p185 = por %p183, %p184
      %p186 = scmp.ne.s32.totalorder %s177, %s178
      %p187 = scmp.eq.s32.totalorder %s41, 0
      %p188 = por %p186, %p187
      %p189 = scmp.ne.s32.totalorder %s177, %s178
      %p190 = scmp.eq.s32.totalorder %s42, 1
      %p191 = por %p189, %p190
      %p193 = scmp.ne.s32.totalorder %s178, %s192
      %p194 = scmp.eq.s32.totalorder %s42, 0
      %p195 = por %p193, %p194
      %s197 = sadd.s32 %s196, 1
      %p200 = scmp.eq.s32.totalorder %s36, 1
      %p201 = scmp.ne.s32.totalorder %s196, %s198
      %p202 = scmp.eq.s32.totalorder %s36, 0
      %p203 = por %p201, %p202
      %p204 = scmp.ne.s32.totalorder %s196, %s198
      %p205 = scmp.eq.s32.totalorder %s41, 1
      %p206 = por %p204, %p205
      %p207 = scmp.ne.s32.totalorder %s198, %s199
      %p208 = scmp.eq.s32.totalorder %s41, 0
      %p209 = por %p207, %p208
      %p210 = scmp.ne.s32.totalorder %s198, %s199
      %p211 = scmp.eq.s32.totalorder %s42, 1
      %p212 = por %p210, %p211
      %p214 = scmp.ne.s32.totalorder %s199, %s213
      %p215 = scmp.eq.s32.totalorder %s42, 0
      %p216 = por %p214, %p215
      %s218 = sadd.s32 %s217, 1
      %p221 = scmp.eq.s32.totalorder %s36, 1
      %p222 = scmp.ne.s32.totalorder %s217, %s219
      %p223 = scmp.eq.s32.totalorder %s36, 0
      %p224 = por %p222, %p223
      %p225 = scmp.ne.s32.totalorder %s217, %s219
      %p226 = scmp.eq.s32.totalorder %s41, 1
      %p227 = por %p225, %p226
      %p228 = scmp.ne.s32.totalorder %s219, %s220
      %p229 = scmp.eq.s32.totalorder %s41, 0
      %p230 = por %p228, %p229
      %p231 = scmp.ne.s32.totalorder %s219, %s220
      %p232 = scmp.eq.s32.totalorder %s42, 1
      %p233 = por %p231, %p232
      %p235 = scmp.ne.s32.totalorder %s220, %s234
      %p236 = scmp.eq.s32.totalorder %s42, 0
      %p237 = por %p235, %p236
      %s239 = sadd.s32 %s238, 1
      %p242 = scmp.eq.s32.totalorder %s36, 1
      %p243 = scmp.ne.s32.totalorder %s238, %s240
      %p244 = scmp.eq.s32.totalorder %s36, 0
      %p245 = por %p243, %p244
      %p246 = scmp.ne.s32.totalorder %s238, %s240
      %p247 = scmp.eq.s32.totalorder %s41, 1
      %p248 = por %p246, %p247
      %p249 = scmp.ne.s32.totalorder %s240, %s241
      %p250 = scmp.eq.s32.totalorder %s41, 0
      %p251 = por %p249, %p250
      %p252 = scmp.ne.s32.totalorder %s240, %s241
      %p253 = scmp.eq.s32.totalorder %s42, 1
      %p254 = por %p252, %p253
      %p256 = scmp.ne.s32.totalorder %s241, %s255
      %p257 = scmp.eq.s32.totalorder %s42, 0
      %p258 = por %p256, %p257
      %s260 = sadd.s32 %s259, 1
      %p263 = scmp.eq.s32.totalorder %s36, 1
      %p264 = scmp.ne.s32.totalorder %s259, %s261
      %p265 = scmp.eq.s32.totalorder %s36, 0
      %p266 = por %p264, %p265
      %p267 = scmp.ne.s32.totalorder %s259, %s261
      %p268 = scmp.eq.s32.totalorder %s41, 1
      %p269 = por %p267, %p268
      %p270 = scmp.ne.s32.totalorder %s261, %s262
      %p271 = scmp.eq.s32.totalorder %s41, 0
      %p272 = por %p270, %p271
      %p273 = scmp.ne.s32.totalorder %s261, %s262
      %p274 = scmp.eq.s32.totalorder %s42, 1
      %p275 = por %p273, %p274
      %p277 = scmp.ne.s32.totalorder %s262, %s276
      %p278 = scmp.eq.s32.totalorder %s42, 0
      %p279 = por %p277, %p278
      %s281 = sadd.s32 %s280, 1
      %p284 = scmp.eq.s32.totalorder %s36, 1
      %p285 = scmp.ne.s32.totalorder %s280, %s282
      %p286 = scmp.eq.s32.totalorder %s36, 0
      %p287 = por %p285, %p286
      %p288 = scmp.ne.s32.totalorder %s280, %s282
      %p289 = scmp.eq.s32.totalorder %s41, 1
      %p290 = por %p288, %p289
      %p291 = scmp.ne.s32.totalorder %s282, %s283
      %p292 = scmp.eq.s32.totalorder %s41, 0
      %p293 = por %p291, %p292
      %p294 = scmp.ne.s32.totalorder %s282, %s283
      %p295 = scmp.eq.s32.totalorder %s42, 1
      %p296 = por %p294, %p295
      %p298 = scmp.ne.s32.totalorder %s283, %s297
      %p299 = scmp.eq.s32.totalorder %s42, 0
      %p300 = por %p298, %p299
      %s302 = sadd.s32 %s301, 1
      %p305 = scmp.eq.s32.totalorder %s36, 1
      %p306 = scmp.ne.s32.totalorder %s301, %s303
      %p307 = scmp.eq.s32.totalorder %s36, 0
      %p308 = por %p306, %p307
      %p309 = scmp.ne.s32.totalorder %s301, %s303
      %p310 = scmp.eq.s32.totalorder %s41, 1
      %p311 = por %p309, %p310
      %p312 = scmp.ne.s32.totalorder %s303, %s304
      %p313 = scmp.eq.s32.totalorder %s41, 0
      %p314 = por %p312, %p313
      %p315 = scmp.ne.s32.totalorder %s303, %s304
      %p316 = scmp.eq.s32.totalorder %s42, 1
      %p317 = por %p315, %p316
      %p319 = scmp.ne.s32.totalorder %s304, %s318
      %p320 = scmp.eq.s32.totalorder %s42, 0
      %p321 = por %p319, %p320
      %s323 = sadd.s32 %s322, 1
      %p326 = scmp.eq.s32.totalorder %s36, 1
      %p327 = scmp.ne.s32.totalorder %s322, %s324
      %p328 = scmp.eq.s32.totalorder %s36, 0
      %p329 = por %p327, %p328
      %p330 = scmp.ne.s32.totalorder %s322, %s324
      %p331 = scmp.eq.s32.totalorder %s41, 1
      %p332 = por %p330, %p331
      %p333 = scmp.ne.s32.totalorder %s324, %s325
      %p334 = scmp.eq.s32.totalorder %s41, 0
      %p335 = por %p333, %p334
      %p336 = scmp.ne.s32.totalorder %s324, %s325
      %p337 = scmp.eq.s32.totalorder %s42, 1
      %p338 = por %p336, %p337
      %p340 = scmp.ne.s32.totalorder %s325, %s339
      %p341 = scmp.eq.s32.totalorder %s42, 0
      %p342 = por %p340, %p341
      %s344 = sadd.s32 %s343, 1
      %p347 = scmp.eq.s32.totalorder %s36, 1
      %p348 = scmp.ne.s32.totalorder %s343, %s345
      %p349 = scmp.eq.s32.totalorder %s36, 0
      %p350 = por %p348, %p349
      %p351 = scmp.ne.s32.totalorder %s343, %s345
      %p352 = scmp.eq.s32.totalorder %s41, 1
      %p353 = por %p351, %p352
      %p354 = scmp.ne.s32.totalorder %s345, %s346
      %p355 = scmp.eq.s32.totalorder %s41, 0
      %p356 = por %p354, %p355
      %p357 = scmp.ne.s32.totalorder %s345, %s346
      %p358 = scmp.eq.s32.totalorder %s42, 1
      %p359 = por %p357, %p358
      %p361 = scmp.ne.s32.totalorder %s346, %s360
      %p362 = scmp.eq.s32.totalorder %s42, 0
      %p363 = por %p361, %p362
      %s365 = sadd.s32 %s364, 1
      %p368 = scmp.eq.s32.totalorder %s36, 1
      %p369 = scmp.ne.s32.totalorder %s364, %s366
      %p370 = scmp.eq.s32.totalorder %s36, 0
      %p371 = por %p369, %p370
      %p372 = scmp.ne.s32.totalorder %s364, %s366
      %p373 = scmp.eq.s32.totalorder %s41, 1
      %p374 = por %p372, %p373
      %p375 = scmp.ne.s32.totalorder %s366, %s367
      %p376 = scmp.eq.s32.totalorder %s41, 0
      %p377 = por %p375, %p376
      %p378 = scmp.ne.s32.totalorder %s366, %s367
      %p379 = scmp.eq.s32.totalorder %s42, 1
      %p380 = por %p378, %p379
      %p382 = scmp.ne.s32.totalorder %s367, %s381
      %p383 = scmp.eq.s32.totalorder %s42, 0
      %p384 = por %p382, %p383
      %s385 = ssub.s32 %s36, %s43
      %p386 = scmp.eq.s32.totalorder %s385, 0
      %s388 = sadd.s32 %s387, 1
      %s389 = scalar_select %p386, %s387, %s388
      %p392 = pneg %p386
      %p393 = scmp.eq.s32.totalorder %s36, 1
      %p394 = por %p392, %p393
      %p395 = scmp.ne.s32.totalorder %s387, %s390
      %p396 = scmp.eq.s32.totalorder %s36, 0
      %p397 = por %p395, %p396
      %p398 = scmp.ne.s32.totalorder %s387, %s390
      %p399 = scmp.eq.s32.totalorder %s41, 1
      %p400 = por %p398, %p399
      %p401 = scmp.ne.s32.totalorder %s390, %s391
      %p402 = scmp.eq.s32.totalorder %s41, 0
      %p403 = por %p401, %p402
      %p404 = scmp.ne.s32.totalorder %s390, %s391
      %p405 = scmp.eq.s32.totalorder %s42, 1
      %p406 = por %p404, %p405
      %p408 = scmp.ne.s32.totalorder %s391, %s407
      %p409 = scmp.eq.s32.totalorder %s42, 0
      %p410 = por %p408, %p409
      %p411 = scmp.le.s32.totalorder 1, %s36
      %p412 = scmp.lt.s32.totalorder %s36, 3
      %p413 = pnand %p411, %p412
      %p414 = pneg %p413
      // Predicated region
      $region9: #{feature_extractor.1} parent=5 // pred_check
        _
      $region10: #{feature_extractor.1} parent=5 // pred_check_branch
        %416 = sbr.rel (%p413) target = $region12
      $region11: #{feature_extractor.1} parent=5 // pred_region
        %s417 = ssub.s32 %s36, 1
        // Predicated region
        $region13: #{feature_extractor.1} parent=11 // pred_check
          %p418 = pneg %p83
        $region14: #{feature_extractor.1} parent=11 // pred_check_branch
          %420 = sbr.rel (%p418) target = $region16
        $region15: #{feature_extractor.1} parent=11 // pred_region
          %s422 = ssub.s32 1152, 1152
          %423 = vsyncadd [#allocation6], %s422
          %s424 = sshll.u32 [#allocation5], 4
          %s425 = int_to_ptr.vmem [resolvable:$true] %s424
          %430 = dma.hbm_to_vmem [thread:$0]  %s1, 1152, %s425, [#allocation6], 128, 128, 8
        $region16: #{feature_extractor.1} parent=11 // pred_fallthru
          _
        // Predicated region
        $region17: #{feature_extractor.1} parent=11 // pred_check
          %p431 = pneg %p104
        $region18: #{feature_extractor.1} parent=11 // pred_check_branch
          %433 = sbr.rel (%p431) target = $region20
        $region19: #{feature_extractor.1} parent=11 // pred_region
          %s435 = ssub.s32 128, 128
          %436 = vsyncadd [#allocation6], %s435
          %s438 = sshll.u32 [#allocation7], 4
          %s439 = int_to_ptr.vmem [resolvable:$true] %s438
          %441 = dma.hbm_to_vmem [thread:$0]  %s2, 128, %s439, [#allocation6]
        $region20: #{feature_extractor.1} parent=11 // pred_fallthru
          _
        // Predicated region
        $region21: #{feature_extractor.1} parent=11 // pred_check
          %p442 = pneg %p125
        $region22: #{feature_extractor.1} parent=11 // pred_check_branch
          %444 = sbr.rel (%p442) target = $region24
        $region23: #{feature_extractor.1} parent=11 // pred_region
          %s446 = ssub.s32 1152, 1152
          %447 = vsyncadd [#allocation9], %s446
          %s448 = sshll.u32 [#allocation8], 4
          %s449 = int_to_ptr.vmem [resolvable:$true] %s448
          %454 = dma.hbm_to_vmem [thread:$0]  %s3, 1152, %s449, [#allocation9], 128, 128, 8
        $region24: #{feature_extractor.1} parent=11 // pred_fallthru
          _
        // Predicated region
        $region25: #{feature_extractor.1} parent=11 // pred_check
          %p455 = pneg %p146
        $region26: #{feature_extractor.1} parent=11 // pred_check_branch
          %457 = sbr.rel (%p455) target = $region28
        $region27: #{feature_extractor.1} parent=11 // pred_region
          %s459 = ssub.s32 128, 128
          %460 = vsyncadd [#allocation9], %s459
          %s462 = sshll.u32 [#allocation10], 4
          %s463 = int_to_ptr.vmem [resolvable:$true] %s462
          %465 = dma.hbm_to_vmem [thread:$0]  %s4, 128, %s463, [#allocation9]
        $region28: #{feature_extractor.1} parent=11 // pred_fallthru
          _
        // Predicated region
        $region29: #{feature_extractor.1} parent=11 // pred_check
          %p466 = pneg %p167
        $region30: #{feature_extractor.1} parent=11 // pred_check_branch
          %468 = sbr.rel (%p466) target = $region32
        $region31: #{feature_extractor.1} parent=11 // pred_region
          %s470 = ssub.s32 2304, 2304
          %471 = vsyncadd [#allocation12], %s470
          %s472 = sshll.u32 [#allocation11], 4
          %s473 = int_to_ptr.vmem [resolvable:$true] %s472
          %478 = dma.hbm_to_vmem [thread:$0]  %s5, 2304, %s473, [#allocation12], 128, 128, 8
        $region32: #{feature_extractor.1} parent=11 // pred_fallthru
          _
        // Predicated region
        $region33: #{feature_extractor.1} parent=11 // pred_check
          %p479 = pneg %p188
        $region34: #{feature_extractor.1} parent=11 // pred_check_branch
          %481 = sbr.rel (%p479) target = $region36
        $region35: #{feature_extractor.1} parent=11 // pred_region
          %s483 = ssub.s32 256, 256
          %484 = vsyncadd [#allocation12], %s483
          %s485 = sshll.u32 [#allocation13], 4
          %s486 = int_to_ptr.vmem [resolvable:$true] %s485
          %491 = dma.hbm_to_vmem [thread:$0]  %s6, 256, %s486, [#allocation12], 128, 128, 8
        $region36: #{feature_extractor.1} parent=11 // pred_fallthru
          _
        // Predicated region
        $region37: #{feature_extractor.1} parent=11 // pred_check
          %p492 = pneg %p209
        $region38: #{feature_extractor.1} parent=11 // pred_check_branch
          %494 = sbr.rel (%p492) target = $region40
        $region39: #{feature_extractor.1} parent=11 // pred_region
          %s496 = ssub.s32 2304, 2304
          %497 = vsyncadd [#allocation15], %s496
          %s498 = sshll.u32 [#allocation14], 4
          %s499 = int_to_ptr.vmem [resolvable:$true] %s498
          %504 = dma.hbm_to_vmem [thread:$0]  %s7, 2304, %s499, [#allocation15], 128, 128, 8
        $region40: #{feature_extractor.1} parent=11 // pred_fallthru
          _
        // Predicated region
        $region41: #{feature_extractor.1} parent=11 // pred_check
          %p505 = pneg %p230
        $region42: #{feature_extractor.1} parent=11 // pred_check_branch
          %507 = sbr.rel (%p505) target = $region44
        $region43: #{feature_extractor.1} parent=11 // pred_region
          %s509 = ssub.s32 256, 256
          %510 = vsyncadd [#allocation15], %s509
          %s511 = sshll.u32 [#allocation16], 4
          %s512 = int_to_ptr.vmem [resolvable:$true] %s511
          %517 = dma.hbm_to_vmem [thread:$0]  %s8, 256, %s512, [#allocation15], 128, 128, 8
        $region44: #{feature_extractor.1} parent=11 // pred_fallthru
          _
        // Predicated region
        $region45: #{feature_extractor.1} parent=11 // pred_check
          %p518 = pneg %p251
        $region46: #{feature_extractor.1} parent=11 // pred_check_branch
          %520 = sbr.rel (%p518) target = $region48
        $region47: #{feature_extractor.1} parent=11 // pred_region
          %s522 = ssub.s32 4608, 4608
          %523 = vsyncadd [#allocation18], %s522
          %s524 = sshll.u32 [#allocation17], 4
          %s525 = int_to_ptr.vmem [resolvable:$true] %s524
          %530 = dma.hbm_to_vmem [thread:$0]  %s9, 4608, %s525, [#allocation18], 128, 128, 8
        $region48: #{feature_extractor.1} parent=11 // pred_fallthru
          _
        // Predicated region
        $region49: #{feature_extractor.1} parent=11 // pred_check
          %p531 = pneg %p272
        $region50: #{feature_extractor.1} parent=11 // pred_check_branch
          %533 = sbr.rel (%p531) target = $region52
        $region51: #{feature_extractor.1} parent=11 // pred_region
          %s535 = ssub.s32 512, 512
          %536 = vsyncadd [#allocation18], %s535
          %s537 = sshll.u32 [#allocation19], 4
          %s538 = int_to_ptr.vmem [resolvable:$true] %s537
          %543 = dma.hbm_to_vmem [thread:$0]  %s10, 512, %s538, [#allocation18], 128, 128, 8
        $region52: #{feature_extractor.1} parent=11 // pred_fallthru
          _
        // Predicated region
        $region53: #{feature_extractor.1} parent=11 // pred_check
          %p544 = pneg %p293
        $region54: #{feature_extractor.1} parent=11 // pred_check_branch
          %546 = sbr.rel (%p544) target = $region56
        $region55: #{feature_extractor.1} parent=11 // pred_region
          %s548 = ssub.s32 73728, 73728
          %549 = vsyncadd [#allocation21], %s548
          %s550 = sshll.u32 [#allocation20], 4
          %s551 = int_to_ptr.vmem [resolvable:$true] %s550
          %556 = dma.hbm_to_vmem [thread:$0]  %s11, 73728, %s551, [#allocation21], 256, 256, 16
        $region56: #{feature_extractor.1} parent=11 // pred_fallthru
          _
        // Predicated region
        $region57: #{feature_extractor.1} parent=11 // pred_check
          %p557 = pneg %p314
        $region58: #{feature_extractor.1} parent=11 // pred_check_branch
          %559 = sbr.rel (%p557) target = $region60
        $region59: #{feature_extractor.1} parent=11 // pred_region
          %s561 = ssub.s32 9216, 9216
          %562 = vsyncadd [#allocation21], %s561
          %s563 = sshll.u32 [#allocation22], 4
          %s564 = int_to_ptr.vmem [resolvable:$true] %s563
          %569 = dma.hbm_to_vmem [thread:$0]  %s12, 9216, %s564, [#allocation21], 128, 128, 8
        $region60: #{feature_extractor.1} parent=11 // pred_fallthru
          _
        // Predicated region
        $region61: #{feature_extractor.1} parent=11 // pred_check
          %p570 = pneg %p335
        $region62: #{feature_extractor.1} parent=11 // pred_check_branch
          %572 = sbr.rel (%p570) target = $region64
        $region63: #{feature_extractor.1} parent=11 // pred_region
          %s574 = ssub.s32 2304, 2304
          %575 = vsyncadd [#allocation24], %s574
          %s576 = sshll.u32 [#allocation23], 4
          %s577 = int_to_ptr.vmem [resolvable:$true] %s576
          %582 = dma.hbm_to_vmem [thread:$0]  %s13, 2304, %s577, [#allocation24], 128, 128, 8
        $region64: #{feature_extractor.1} parent=11 // pred_fallthru
          _
        // Predicated region
        $region65: #{feature_extractor.1} parent=11 // pred_check
          %p583 = pneg %p356
        $region66: #{feature_extractor.1} parent=11 // pred_check_branch
          %585 = sbr.rel (%p583) target = $region68
        $region67: #{feature_extractor.1} parent=11 // pred_region
          %s587 = ssub.s32 4096, 4096
          %588 = vsyncadd [#allocation24], %s587
          %s589 = sshll.u32 [#allocation25], 4
          %s590 = int_to_ptr.vmem [resolvable:$true] %s589
          %595 = dma.hbm_to_vmem [thread:$0]  %s14, 4096, %s590, [#allocation24], 128, 128, 8
        $region68: #{feature_extractor.1} parent=11 // pred_fallthru
          _
        // Predicated region
        $region69: #{feature_extractor.1} parent=11 // pred_check
          %p596 = pneg %p377
        $region70: #{feature_extractor.1} parent=11 // pred_check_branch
          %598 = sbr.rel (%p596) target = $region72
        $region71: #{feature_extractor.1} parent=11 // pred_region
          %s600 = ssub.s32 1024, 1024
          %601 = vsyncadd [#allocation27], %s600
          %s602 = sshll.u32 [#allocation26], 4
          %s603 = int_to_ptr.vmem [resolvable:$true] %s602
          %608 = dma.hbm_to_vmem [thread:$0]  %s15, 1024, %s603, [#allocation27], 128, 128, 8
        $region72: #{feature_extractor.1} parent=11 // pred_fallthru
          _
      $region12: #{feature_extractor.1} parent=5 // pred_fallthru
        _
      %p609 = scmp.lt.s32.totalorder %s36, 2
      // Predicated region
      $region73: #{feature_extractor.1} parent=5 // pred_check
        %p610 = pneg %p609
      $region74: #{feature_extractor.1} parent=5 // pred_check_branch
        %612 = sbr.rel (%p610) target = $region76
      $region75: #{feature_extractor.1} parent=5 // pred_region
        // Predicated region
        $region77: #{feature_extractor.1} parent=75 // pred_check
          %p613 = pneg %p56
        $region78: #{feature_extractor.1} parent=75 // pred_check_branch
          %615 = sbr.rel (%p613) target = $region80
        $region79: #{feature_extractor.1} parent=75 // pred_region
          %s616 = sand.u32 %s46, 1
          %s617 = scalar_lea.sflag [#allocation3], %s616
          %s618 = sand.u32 %s46, 1
          %s619 = smul.addr %s618, 8
          %s620 = scalar_lea.vmem [#allocation2], %s619
          %s622 = ssub.s32 128, 128
          %623 = vsyncadd %s617, %s622
          %s624 = smul.addr %s36, 2
          %s625 = smul.addr %s624, 64
          %s626 = scalar_lea.hbm %s0, %s625
          %s628 = sshll.u32 %s620, 4
          %s629 = int_to_ptr.vmem [resolvable:$true] %s628
          %631 = dma.hbm_to_vmem [thread:$0]  %s626, 128, %s629, %s617
        $region80: #{feature_extractor.1} parent=75 // pred_fallthru
          _
      $region76: #{feature_extractor.1} parent=5 // pred_fallthru
        _
      %p632 = scmp.le.s32.totalorder 1, %s36
      %p633 = scmp.lt.s32.totalorder %s36, 3
      %p634 = pnand %p632, %p633
      %p635 = pneg %p634
      // Predicated region
      $region81: #{feature_extractor.1} parent=5 // pred_check
        _
      $region82: #{feature_extractor.1} parent=5 // pred_check_branch
        %637 = sbr.rel (%p634) target = $region84
      $region83: #{feature_extractor.1} parent=5 // pred_region
        %s638 = ssub.s32 %s36, 1
        %s639 = sand.u32 %s49, 1
        %s640 = scalar_lea.sflag [#allocation3], %s639
        %s641 = sand.u32 %s49, 1
        %s642 = smul.addr %s641, 8
        %s643 = scalar_lea.vmem [#allocation2], %s642
        // Predicated region
        $region85: #{feature_extractor.1} parent=83 // pred_check
          %p644 = pneg %p62
        $region86: #{feature_extractor.1} parent=83 // pred_check_branch
          %646 = sbr.rel (%p644) target = $region88
        $region87: #{feature_extractor.1} parent=83 // pred_region
          %647 = dma.done %s640, 128
        $region88: #{feature_extractor.1} parent=83 // pred_fallthru
          _
        // Predicated region
        $region89: #{feature_extractor.1} parent=83 // pred_check
          %p648 = pneg %p83
        $region90: #{feature_extractor.1} parent=83 // pred_check_branch
          %650 = sbr.rel (%p648) target = $region92
        $region91: #{feature_extractor.1} parent=83 // pred_region
          %651 = dma.done [#allocation6], 1152
        $region92: #{feature_extractor.1} parent=83 // pred_fallthru
          _
        // Predicated region
        $region93: #{feature_extractor.1} parent=83 // pred_check
          %p652 = pneg %p104
        $region94: #{feature_extractor.1} parent=83 // pred_check_branch
          %654 = sbr.rel (%p652) target = $region96
        $region95: #{feature_extractor.1} parent=83 // pred_region
          %655 = dma.done [#allocation6], 128
        $region96: #{feature_extractor.1} parent=83 // pred_fallthru
          _
        // Predicated region
        $region97: #{feature_extractor.1} parent=83 // pred_check
          %p656 = pneg %p125
        $region98: #{feature_extractor.1} parent=83 // pred_check_branch
          %658 = sbr.rel (%p656) target = $region100
        $region99: #{feature_extractor.1} parent=83 // pred_region
          %659 = dma.done [#allocation9], 1152
        $region100: #{feature_extractor.1} parent=83 // pred_fallthru
          _
        // Predicated region
        $region101: #{feature_extractor.1} parent=83 // pred_check
          %p660 = pneg %p146
        $region102: #{feature_extractor.1} parent=83 // pred_check_branch
          %662 = sbr.rel (%p660) target = $region104
        $region103: #{feature_extractor.1} parent=83 // pred_region
          %663 = dma.done [#allocation9], 128
        $region104: #{feature_extractor.1} parent=83 // pred_fallthru
          _
        // Predicated region
        $region105: #{feature_extractor.1} parent=83 // pred_check
          %p664 = pneg %p167
        $region106: #{feature_extractor.1} parent=83 // pred_check_branch
          %666 = sbr.rel (%p664) target = $region108
        $region107: #{feature_extractor.1} parent=83 // pred_region
          %667 = dma.done [#allocation12], 2304
        $region108: #{feature_extractor.1} parent=83 // pred_fallthru
          _
        // Predicated region
        $region109: #{feature_extractor.1} parent=83 // pred_check
          %p668 = pneg %p188
        $region110: #{feature_extractor.1} parent=83 // pred_check_branch
          %670 = sbr.rel (%p668) target = $region112
        $region111: #{feature_extractor.1} parent=83 // pred_region
          %671 = dma.done [#allocation12], 256
        $region112: #{feature_extractor.1} parent=83 // pred_fallthru
          _
        // Predicated region
        $region113: #{feature_extractor.1} parent=83 // pred_check
          %p672 = pneg %p209
        $region114: #{feature_extractor.1} parent=83 // pred_check_branch
          %674 = sbr.rel (%p672) target = $region116
        $region115: #{feature_extractor.1} parent=83 // pred_region
          %675 = dma.done [#allocation15], 2304
        $region116: #{feature_extractor.1} parent=83 // pred_fallthru
          _
        // Predicated region
        $region117: #{feature_extractor.1} parent=83 // pred_check
          %p676 = pneg %p230
        $region118: #{feature_extractor.1} parent=83 // pred_check_branch
          %678 = sbr.rel (%p676) target = $region120
        $region119: #{feature_extractor.1} parent=83 // pred_region
          %679 = dma.done [#allocation15], 256
        $region120: #{feature_extractor.1} parent=83 // pred_fallthru
          _
        // Predicated region
        $region121: #{feature_extractor.1} parent=83 // pred_check
          %p680 = pneg %p251
        $region122: #{feature_extractor.1} parent=83 // pred_check_branch
          %682 = sbr.rel (%p680) target = $region124
        $region123: #{feature_extractor.1} parent=83 // pred_region
          %683 = dma.done [#allocation18], 4608
        $region124: #{feature_extractor.1} parent=83 // pred_fallthru
          _
        // Predicated region
        $region125: #{feature_extractor.1} parent=83 // pred_check
          %p684 = pneg %p272
        $region126: #{feature_extractor.1} parent=83 // pred_check_branch
          %686 = sbr.rel (%p684) target = $region128
        $region127: #{feature_extractor.1} parent=83 // pred_region
          %687 = dma.done [#allocation18], 512
        $region128: #{feature_extractor.1} parent=83 // pred_fallthru
          _
        // Predicated region
        $region129: #{feature_extractor.1} parent=83 // pred_check
          %p688 = pneg %p293
        $region130: #{feature_extractor.1} parent=83 // pred_check_branch
          %690 = sbr.rel (%p688) target = $region132
        $region131: #{feature_extractor.1} parent=83 // pred_region
          %691 = dma.done [#allocation21], 73728
        $region132: #{feature_extractor.1} parent=83 // pred_fallthru
          _
        // Predicated region
        $region133: #{feature_extractor.1} parent=83 // pred_check
          %p692 = pneg %p314
        $region134: #{feature_extractor.1} parent=83 // pred_check_branch
          %694 = sbr.rel (%p692) target = $region136
        $region135: #{feature_extractor.1} parent=83 // pred_region
          %695 = dma.done [#allocation21], 9216
        $region136: #{feature_extractor.1} parent=83 // pred_fallthru
          _
        // Predicated region
        $region137: #{feature_extractor.1} parent=83 // pred_check
          %p696 = pneg %p335
        $region138: #{feature_extractor.1} parent=83 // pred_check_branch
          %698 = sbr.rel (%p696) target = $region140
        $region139: #{feature_extractor.1} parent=83 // pred_region
          %699 = dma.done [#allocation24], 2304
        $region140: #{feature_extractor.1} parent=83 // pred_fallthru
          _
        // Predicated region
        $region141: #{feature_extractor.1} parent=83 // pred_check
          %p700 = pneg %p356
        $region142: #{feature_extractor.1} parent=83 // pred_check_branch
          %702 = sbr.rel (%p700) target = $region144
        $region143: #{feature_extractor.1} parent=83 // pred_region
          %703 = dma.done [#allocation24], 4096
        $region144: #{feature_extractor.1} parent=83 // pred_fallthru
          _
        // Predicated region
        $region145: #{feature_extractor.1} parent=83 // pred_check
          %p704 = pneg %p377
        $region146: #{feature_extractor.1} parent=83 // pred_check_branch
          %706 = sbr.rel (%p704) target = $region148
        $region147: #{feature_extractor.1} parent=83 // pred_region
          %707 = dma.done [#allocation27], 1024
        $region148: #{feature_extractor.1} parent=83 // pred_fallthru
          _
        %s708 = sand.u32 %s49, 1
        %s709 = scalar_lea.sflag [#allocation3], %s708
        %s710 = sand.u32 %s49, 1
        %s711 = smul.addr %s710, 8
        %s712 = scalar_lea.vmem [#allocation2], %s711
        %p713 = pneg %p62
        %p714 = pneg %p59
        %p715 = pneg %p83
        %p716 = pneg %p80
        %p717 = pneg %p104
        %p718 = pneg %p101
        %p719 = pneg %p125
        %p720 = pneg %p122
        %p721 = pneg %p146
        %p722 = pneg %p143
        %p723 = pneg %p167
        %p724 = pneg %p164
        %p725 = pneg %p188
        %p726 = pneg %p185
        %p727 = pneg %p209
        %p728 = pneg %p206
        %p729 = pneg %p230
        %p730 = pneg %p227
        %p731 = pneg %p251
        %p732 = pneg %p248
        %p733 = pneg %p272
        %p734 = pneg %p269
        %p735 = pneg %p293
        %p736 = pneg %p290
        %p737 = pneg %p314
        %p738 = pneg %p311
        %p739 = pneg %p335
        %p740 = pneg %p332
        %p741 = pneg %p356
        %p742 = pneg %p353
        %p743 = pneg %p377
        %p744 = pneg %p374
        %p745 = pneg %p403
        %p746 = pneg %p400
        %s747 = sand.u32 %s390, 1
        %s748 = scalar_lea.sflag [#allocation4], %s747
        %s749 = sand.u32 %s390, 1
        %s750 = smul.addr %s749, 32
        %s751 = scalar_lea.vmem [#allocation28], %s750
        %v752 = vld [vmem:[%s643] sm:$0x77]
        %v753 = vld [vmem:[#allocation20] sm:$0xff]
        %v754 = vld [vmem:[#allocation20 + $0x8] sm:$0xff]
        %v755 = vld [vmem:[#allocation20 + $0x10] sm:$0xff]
        %v756 = vld [vmem:[#allocation20 + $0x18] sm:$0xff]
        %v757 = vld [vmem:[#allocation20 + $0x20] sm:$0xff]
        %v758 = vld [vmem:[#allocation20 + $0x28] sm:$0xff]
        %v759 = vld [vmem:[#allocation20 + $0x30] sm:$0xff]
        %v760 = vld [vmem:[#allocation20 + $0x38] sm:$0xff]
        %v761 = vld [vmem:[#allocation20 + $0x40] sm:$0xff]
        %v762 = vld [vmem:[#allocation20 + $0x48] sm:$0xff]
        %v763 = vld [vmem:[#allocation20 + $0x50] sm:$0xff]
        %v764 = vld [vmem:[#allocation20 + $0x58] sm:$0xff]
        %v765 = vld [vmem:[#allocation20 + $0x60] sm:$0xff]
        %v766 = vld [vmem:[#allocation20 + $0x68] sm:$0xff]
        %v767 = vld [vmem:[#allocation20 + $0x70] sm:$0xff]
        %v768 = vld [vmem:[#allocation20 + $0x78] sm:$0xff]
        %v769 = vld [vmem:[#allocation20 + $0x80] sm:$0xff]
        %v770 = vld [vmem:[#allocation20 + $0x88] sm:$0xff]
        %v771 = vld [vmem:[#allocation20 + $0x90] sm:$0xff]
        %v772 = vld [vmem:[#allocation20 + $0x98] sm:$0xff]
        %v773 = vld [vmem:[#allocation20 + $0xa0] sm:$0xff]
        %v774 = vld [vmem:[#allocation20 + $0xa8] sm:$0xff]
        %v775 = vld [vmem:[#allocation20 + $0xb0] sm:$0xff]
        %v776 = vld [vmem:[#allocation20 + $0xb8] sm:$0xff]
        %v777 = vld [vmem:[#allocation20 + $0xc0] sm:$0xff]
        %v778 = vld [vmem:[#allocation20 + $0xc8] sm:$0xff]
        %v779 = vld [vmem:[#allocation20 + $0xd0] sm:$0xff]
        %v780 = vld [vmem:[#allocation20 + $0xd8] sm:$0xff]
        %v781 = vld [vmem:[#allocation20 + $0xe0] sm:$0xff]
        %v782 = vld [vmem:[#allocation20 + $0xe8] sm:$0xff]
        %v783 = vld [vmem:[#allocation20 + $0xf0] sm:$0xff]
        %v784 = vld [vmem:[#allocation20 + $0xf8] sm:$0xff]
        %v785 = vld [vmem:[#allocation20 + $0x100] sm:$0xff]
        %v786 = vld [vmem:[#allocation20 + $0x108] sm:$0xff]
        %v787 = vld [vmem:[#allocation20 + $0x110] sm:$0xff]
        %v788 = vld [vmem:[#allocation20 + $0x118] sm:$0xff]
        %v789 = vld [vmem:[#allocation20 + $0x120] sm:$0xff]
        %v790 = vld [vmem:[#allocation20 + $0x128] sm:$0xff]
        %v791 = vld [vmem:[#allocation20 + $0x130] sm:$0xff]
        %v792 = vld [vmem:[#allocation20 + $0x138] sm:$0xff]
        %v793 = vld [vmem:[#allocation20 + $0x140] sm:$0xff]
        %v794 = vld [vmem:[#allocation20 + $0x148] sm:$0xff]
        %v795 = vld [vmem:[#allocation20 + $0x150] sm:$0xff]
        %v796 = vld [vmem:[#allocation20 + $0x158] sm:$0xff]
        %v797 = vld [vmem:[#allocation20 + $0x160] sm:$0xff]
        %v798 = vld [vmem:[#allocation20 + $0x168] sm:$0xff]
        %v799 = vld [vmem:[#allocation20 + $0x170] sm:$0xff]
        %v800 = vld [vmem:[#allocation20 + $0x178] sm:$0xff]
        %v801 = vld [vmem:[#allocation20 + $0x180] sm:$0xff]
        %v802 = vld [vmem:[#allocation20 + $0x188] sm:$0xff]
        %v803 = vld [vmem:[#allocation20 + $0x190] sm:$0xff]
        %v804 = vld [vmem:[#allocation20 + $0x198] sm:$0xff]
        %v805 = vld [vmem:[#allocation20 + $0x1a0] sm:$0xff]
        %v806 = vld [vmem:[#allocation20 + $0x1a8] sm:$0xff]
        %v807 = vld [vmem:[#allocation20 + $0x1b0] sm:$0xff]
        %v808 = vld [vmem:[#allocation20 + $0x1b8] sm:$0xff]
        %v809 = vld [vmem:[#allocation20 + $0x1c0] sm:$0xff]
        %v810 = vld [vmem:[#allocation20 + $0x1c8] sm:$0xff]
        %v811 = vld [vmem:[#allocation20 + $0x1d0] sm:$0xff]
        %v812 = vld [vmem:[#allocation20 + $0x1d8] sm:$0xff]
        %v813 = vld [vmem:[#allocation20 + $0x1e0] sm:$0xff]
        %v814 = vld [vmem:[#allocation20 + $0x1e8] sm:$0xff]
        %v815 = vld [vmem:[#allocation20 + $0x1f0] sm:$0xff]
        %v816 = vld [vmem:[#allocation20 + $0x1f8] sm:$0xff]
        %v818 = vcombine.high %v752, %v752
        %820 = vmatprep.subr.mxu0 %v754
        %821 = vmatpush1.msra.mxu0 %v753
        %822 = vmatprep.subr.mxu0 %v756
        %823 = vmatpush1.msra.mxu0 %v755
        %824 = vmatprep.subr.mxu0 %v758
        %825 = vmatpush1.msra.mxu0 %v757
        %826 = vmatprep.subr.mxu0 %v760
        %827 = vmatpush1.msra.mxu0 %v759
        %828 = vmatprep.subr.mxu0 %v762
        %829 = vmatpush1.msra.mxu0 %v761
        %830 = vmatprep.subr.mxu0 %v764
        %831 = vmatpush1.msra.mxu0 %v763
        %832 = vmatprep.subr.mxu0 %v766
        %833 = vmatpush1.msra.mxu0 %v765
        %834 = vmatprep.subr.mxu0 %v768
        %835 = vmatpush1.msra.mxu0 %v767
        %836 = vmatprep.subr.mxu0 %v770
        %837 = vmatpush1.msra.mxu0 %v769
        %838 = vmatprep.subr.mxu0 %v772
        %839 = vmatpush1.msra.mxu0 %v771
        %840 = vmatprep.subr.mxu0 %v774
        %841 = vmatpush1.msra.mxu0 %v773
        %842 = vmatprep.subr.mxu0 %v776
        %843 = vmatpush1.msra.mxu0 %v775
        %844 = vmatprep.subr.mxu0 %v778
        %845 = vmatpush1.msra.mxu0 %v777
        %846 = vmatprep.subr.mxu0 %v780
        %847 = vmatpush1.msra.mxu0 %v779
        %848 = vmatprep.subr.mxu0 %v782
        %849 = vmatpush1.msra.mxu0 %v781
        %850 = vmatprep.subr.mxu0 %v784
        %851 = vmatpush1.msra.mxu0 %v783
        %852 = vmatprep.subr.mxu0 %v786
        %853 = vmatpush1.msra.mxu0 %v785
        %854 = vmatprep.subr.mxu0 %v788
        %855 = vmatpush1.msra.mxu0 %v787
        %856 = vmatprep.subr.mxu0 %v790
        %857 = vmatpush1.msra.mxu0 %v789
        %858 = vmatprep.subr.mxu0 %v792
        %859 = vmatpush1.msra.mxu0 %v791
        %860 = vmatprep.subr.mxu0 %v794
        %861 = vmatpush1.msra.mxu0 %v793
        %862 = vmatprep.subr.mxu0 %v796
        %863 = vmatpush1.msra.mxu0 %v795
        %864 = vmatprep.subr.mxu0 %v798
        %865 = vmatpush1.msra.mxu0 %v797
        %866 = vmatprep.subr.mxu0 %v800
        %867 = vmatpush1.msra.mxu0 %v799
        %868 = vmatprep.subr.mxu0 %v802
        %869 = vmatpush1.msra.mxu0 %v801
        %870 = vmatprep.subr.mxu0 %v804
        %871 = vmatpush1.msra.mxu0 %v803
        %872 = vmatprep.subr.mxu0 %v806
        %873 = vmatpush1.msra.mxu0 %v805
        %874 = vmatprep.subr.mxu0 %v808
        %875 = vmatpush1.msra.mxu0 %v807
        %876 = vmatprep.subr.mxu0 %v810
        %877 = vmatpush1.msra.mxu0 %v809
        %878 = vmatprep.subr.mxu0 %v812
        %879 = vmatpush1.msra.mxu0 %v811
        %880 = vmatprep.subr.mxu0 %v814
        %881 = vmatpush1.msra.mxu0 %v813
        %882 = vmatprep.subr.mxu0 %v816
        %883 = vmatpush1.msra.mxu0 %v815
        %884 = vmatprep.mubr.f32.mxu0 %v818
        %885 = vmatmul.mubr.f32.gmra.mrb[0].mxu0 %v752
        %v886 = vpop.f32.mrb[0].mxu0
        %v887 = vadd.f32 0.0, %v886
        %v888 = vpop.f32.mrb[0].mxu0
        %v889 = vadd.f32 0.0, %v888
        %890 = vdwg.mxu0
        %v891 = vld [vmem:[#allocation5] sm:$0xff]
        %v892 = vld [vmem:[#allocation20 + $0x200] sm:$0xff]
        %v893 = vld [vmem:[#allocation20 + $0x208] sm:$0xff]
        %v894 = vld [vmem:[#allocation20 + $0x210] sm:$0xff]
        %v895 = vld [vmem:[#allocation20 + $0x218] sm:$0xff]
        %v896 = vld [vmem:[#allocation20 + $0x220] sm:$0xff]
        %v897 = vld [vmem:[#allocation20 + $0x228] sm:$0xff]
        %v898 = vld [vmem:[#allocation20 + $0x230] sm:$0xff]
        %v899 = vld [vmem:[#allocation20 + $0x238] sm:$0xff]
        %v900 = vld [vmem:[#allocation20 + $0x240] sm:$0xff]
        %v901 = vld [vmem:[#allocation20 + $0x248] sm:$0xff]
        %v902 = vld [vmem:[#allocation20 + $0x250] sm:$0xff]
        %v903 = vld [vmem:[#allocation20 + $0x258] sm:$0xff]
        %v904 = vld [vmem:[#allocation20 + $0x260] sm:$0xff]
        %v905 = vld [vmem:[#allocation20 + $0x268] sm:$0xff]
        %v906 = vld [vmem:[#allocation20 + $0x270] sm:$0xff]
        %v907 = vld [vmem:[#allocation20 + $0x278] sm:$0xff]
        %v908 = vld [vmem:[#allocation20 + $0x280] sm:$0xff]
        %v909 = vld [vmem:[#allocation20 + $0x288] sm:$0xff]
        %v910 = vld [vmem:[#allocation20 + $0x290] sm:$0xff]
        %v911 = vld [vmem:[#allocation20 + $0x298] sm:$0xff]
        %v912 = vld [vmem:[#allocation20 + $0x2a0] sm:$0xff]
        %v913 = vld [vmem:[#allocation20 + $0x2a8] sm:$0xff]
        %v914 = vld [vmem:[#allocation20 + $0x2b0] sm:$0xff]
        %v915 = vld [vmem:[#allocation20 + $0x2b8] sm:$0xff]
        %v916 = vld [vmem:[#allocation20 + $0x2c0] sm:$0xff]
        %v917 = vld [vmem:[#allocation20 + $0x2c8] sm:$0xff]
        %v918 = vld [vmem:[#allocation20 + $0x2d0] sm:$0xff]
        %v919 = vld [vmem:[#allocation20 + $0x2d8] sm:$0xff]
        %v920 = vld [vmem:[#allocation20 + $0x2e0] sm:$0xff]
        %v921 = vld [vmem:[#allocation20 + $0x2e8] sm:$0xff]
        %v922 = vld [vmem:[#allocation20 + $0x2f0] sm:$0xff]
        %v923 = vld [vmem:[#allocation20 + $0x2f8] sm:$0xff]
        %v924 = vld [vmem:[#allocation20 + $0x300] sm:$0xff]
        %v925 = vld [vmem:[#allocation20 + $0x308] sm:$0xff]
        %v926 = vld [vmem:[#allocation20 + $0x310] sm:$0xff]
        %v927 = vld [vmem:[#allocation20 + $0x318] sm:$0xff]
        %v928 = vld [vmem:[#allocation20 + $0x320] sm:$0xff]
        %v929 = vld [vmem:[#allocation20 + $0x328] sm:$0xff]
        %v930 = vld [vmem:[#allocation20 + $0x330] sm:$0xff]
        %v931 = vld [vmem:[#allocation20 + $0x338] sm:$0xff]
        %v932 = vld [vmem:[#allocation20 + $0x340] sm:$0xff]
        %v933 = vld [vmem:[#allocation20 + $0x348] sm:$0xff]
        %v934 = vld [vmem:[#allocation20 + $0x350] sm:$0xff]
        %v935 = vld [vmem:[#allocation20 + $0x358] sm:$0xff]
        %v936 = vld [vmem:[#allocation20 + $0x360] sm:$0xff]
        %v937 = vld [vmem:[#allocation20 + $0x368] sm:$0xff]
        %v938 = vld [vmem:[#allocation20 + $0x370] sm:$0xff]
        %v939 = vld [vmem:[#allocation20 + $0x378] sm:$0xff]
        %v940 = vld [vmem:[#allocation20 + $0x380] sm:$0xff]
        %v941 = vld [vmem:[#allocation20 + $0x388] sm:$0xff]
        %v942 = vld [vmem:[#allocation20 + $0x390] sm:$0xff]
        %v943 = vld [vmem:[#allocation20 + $0x398] sm:$0xff]
        %v944 = vld [vmem:[#allocation20 + $0x3a0] sm:$0xff]
        %v945 = vld [vmem:[#allocation20 + $0x3a8] sm:$0xff]
        %v946 = vld [vmem:[#allocation20 + $0x3b0] sm:$0xff]
        %v947 = vld [vmem:[#allocation20 + $0x3b8] sm:$0xff]
        %v948 = vld [vmem:[#allocation20 + $0x3c0] sm:$0xff]
        %v949 = vld [vmem:[#allocation20 + $0x3c8] sm:$0xff]
        %v950 = vld [vmem:[#allocation20 + $0x3d0] sm:$0xff]
        %v951 = vld [vmem:[#allocation20 + $0x3d8] sm:$0xff]
        %v952 = vld [vmem:[#allocation20 + $0x3e0] sm:$0xff]
        %v953 = vld [vmem:[#allocation20 + $0x3e8] sm:$0xff]
        %v954 = vld [vmem:[#allocation20 + $0x3f0] sm:$0xff]
        %v955 = vld [vmem:[#allocation20 + $0x3f8] sm:$0xff]
        %956 = vmatprep.subr.mxu0 %v893
        %957 = vmatpush1.msra.mxu0 %v892
        %958 = vmatprep.subr.mxu0 %v895
        %959 = vmatpush1.msra.mxu0 %v894
        %960 = vmatprep.subr.mxu0 %v897
        %961 = vmatpush1.msra.mxu0 %v896
        %962 = vmatprep.subr.mxu0 %v899
        %963 = vmatpush1.msra.mxu0 %v898
        %964 = vmatprep.subr.mxu0 %v901
        %965 = vmatpush1.msra.mxu0 %v900
        %966 = vmatprep.subr.mxu0 %v903
        %967 = vmatpush1.msra.mxu0 %v902
        %968 = vmatprep.subr.mxu0 %v905
        %969 = vmatpush1.msra.mxu0 %v904
        %970 = vmatprep.subr.mxu0 %v907
        %971 = vmatpush1.msra.mxu0 %v906
        %972 = vmatprep.subr.mxu0 %v909
        %973 = vmatpush1.msra.mxu0 %v908
        %974 = vmatprep.subr.mxu0 %v911
        %975 = vmatpush1.msra.mxu0 %v910
        %976 = vmatprep.subr.mxu0 %v913
        %977 = vmatpush1.msra.mxu0 %v912
        %978 = vmatprep.subr.mxu0 %v915
        %979 = vmatpush1.msra.mxu0 %v914
        %980 = vmatprep.subr.mxu0 %v917
        %981 = vmatpush1.msra.mxu0 %v916
        %982 = vmatprep.subr.mxu0 %v919
        %983 = vmatpush1.msra.mxu0 %v918
        %984 = vmatprep.subr.mxu0 %v921
        %985 = vmatpush1.msra.mxu0 %v920
        %986 = vmatprep.subr.mxu0 %v923
        %987 = vmatpush1.msra.mxu0 %v922
        %988 = vmatprep.subr.mxu0 %v925
        %989 = vmatpush1.msra.mxu0 %v924
        %990 = vmatprep.subr.mxu0 %v927
        %991 = vmatpush1.msra.mxu0 %v926
        %992 = vmatprep.subr.mxu0 %v929
        %993 = vmatpush1.msra.mxu0 %v928
        %994 = vmatprep.subr.mxu0 %v931
        %995 = vmatpush1.msra.mxu0 %v930
        %996 = vmatprep.subr.mxu0 %v933
        %997 = vmatpush1.msra.mxu0 %v932
        %998 = vmatprep.subr.mxu0 %v935
        %999 = vmatpush1.msra.mxu0 %v934
        %1000 = vmatprep.subr.mxu0 %v937
        %1001 = vmatpush1.msra.mxu0 %v936
        %1002 = vmatprep.subr.mxu0 %v939
        %1003 = vmatpush1.msra.mxu0 %v938
        %1004 = vmatprep.subr.mxu0 %v941
        %1005 = vmatpush1.msra.mxu0 %v940
        %1006 = vmatprep.subr.mxu0 %v943
        %1007 = vmatpush1.msra.mxu0 %v942
        %1008 = vmatprep.subr.mxu0 %v945
        %1009 = vmatpush1.msra.mxu0 %v944
        %1010 = vmatprep.subr.mxu0 %v947
        %1011 = vmatpush1.msra.mxu0 %v946
        %1012 = vmatprep.subr.mxu0 %v949
        %1013 = vmatpush1.msra.mxu0 %v948
        %1014 = vmatprep.subr.mxu0 %v951
        %1015 = vmatpush1.msra.mxu0 %v950
        %1016 = vmatprep.subr.mxu0 %v953
        %1017 = vmatpush1.msra.mxu0 %v952
        %1018 = vmatprep.subr.mxu0 %v955
        %1019 = vmatpush1.msra.mxu0 %v954
        %1020 = vmatprep.mubr.f32.mxu0 %v818
        %1021 = vmatmul.mubr.f32.gmra.mrb[0].mxu0 %v752
        %v1022 = vpop.f32.mrb[0].mxu0
        %v1023 = vadd.f32 0.0, %v1022
        %v1024 = vpop.f32.mrb[0].mxu0
        %v1025 = vadd.f32 0.0, %v1024
        %1026 = vdwg.mxu0
        %v1027 = vld [vmem:[#allocation5 + $0x8] sm:$0xff]
        %vm1028 = vcmask 23552
        %v1030 = vsel %vm1028, %v1027, 0
        %vm1032 = vcmask 1042432
        %v1034 = vsel %vm1032, %v1023, 0
        %v1037 = vsel %vm1032, %v1025, 0
        %1039 = vmatprep.subr.mxu0 %v1037
        %1040 = vmatpush1.msra.mxu0 %v1034
        %1041 = vmatprep.subr.mxu0 0.0
        %1042 = vmatpush1.msra.mxu0 0.0
        %1043 = vmatprep.subr.mxu0 0.0
        %1044 = vmatpush1.msra.mxu0 0.0
        %1045 = vmatprep.subr.mxu0 0.0
        %1046 = vmatpush1.msra.mxu0 0.0
        %1047 = vmatprep.subr.mxu0 0.0
        %1048 = vmatpush1.msra.mxu0 0.0
        %1049 = vmatprep.subr.mxu0 0.0
        %1050 = vmatpush1.msra.mxu0 0.0
        %1051 = vmatprep.subr.mxu0 0.0
        %1052 = vmatpush1.msra.mxu0 0.0
        %1053 = vmatprep.subr.mxu0 0.0
        %1054 = vmatpush1.msra.mxu0 0.0
        %1055 = vmatprep.subr.mxu0 0.0
        %1056 = vmatpush1.msra.mxu0 0.0
        %1057 = vmatprep.subr.mxu0 0.0
        %1058 = vmatpush1.msra.mxu0 0.0
        %1059 = vmatprep.subr.mxu0 0.0
        %1060 = vmatpush1.msra.mxu0 0.0
        %1061 = vmatprep.subr.mxu0 0.0
        %1062 = vmatpush1.msra.mxu0 0.0
        %1063 = vmatprep.subr.mxu0 0.0
        %1064 = vmatpush1.msra.mxu0 0.0
        %1065 = vmatprep.subr.mxu0 0.0
        %1066 = vmatpush1.msra.mxu0 0.0
        %1067 = vmatprep.subr.mxu0 0.0
        %1068 = vmatpush1.msra.mxu0 0.0
        %1069 = vmatprep.subr.mxu0 0.0
        %1070 = vmatpush1.msra.mxu0 0.0
        %1071 = vmatprep.subr.mxu0 0.0
        %1072 = vmatpush1.msra.mxu0 0.0
        %1073 = vmatprep.subr.mxu0 0.0
        %1074 = vmatpush1.msra.mxu0 0.0
        %1075 = vmatprep.subr.mxu0 0.0
        %1076 = vmatpush1.msra.mxu0 0.0
        %1077 = vmatprep.subr.mxu0 0.0
        %1078 = vmatpush1.msra.mxu0 0.0
        %1079 = vmatprep.subr.mxu0 0.0
        %1080 = vmatpush1.msra.mxu0 0.0
        %1081 = vmatprep.subr.mxu0 0.0
        %1082 = vmatpush1.msra.mxu0 0.0
        %1083 = vmatprep.subr.mxu0 0.0
        %1084 = vmatpush1.msra.mxu0 0.0
        %1085 = vmatprep.subr.mxu0 0.0
        %1086 = vmatpush1.msra.mxu0 0.0
        %1087 = vmatprep.subr.mxu0 0.0
        %1088 = vmatpush1.msra.mxu0 0.0
        %1089 = vmatprep.subr.mxu0 0.0
        %1090 = vmatpush1.msra.mxu0 0.0
        %1091 = vmatprep.subr.mxu0 0.0
        %1092 = vmatpush1.msra.mxu0 0.0
        %1093 = vmatprep.subr.mxu0 0.0
        %1094 = vmatpush1.msra.mxu0 0.0
        %1095 = vmatprep.subr.mxu0 0.0
        %1096 = vmatpush1.msra.mxu0 0.0
        %1097 = vmatprep.subr.mxu0 0.0
        %1098 = vmatpush1.msra.mxu0 0.0
        %1099 = vmatprep.subr.mxu0 0.0
        %1100 = vmatpush1.msra.mxu0 0.0
        %1101 = vmatprep.subr.mxu0 0.0
        %1102 = vmatpush1.msra.mxu0 0.0
        %1103 = vmatprep.mubr.f32.mxu0 0.0
        %1104 = vmatmul.mubr.f32.gmra.mrb[0].mxu0 %v1030
        %v1105 = vpop.f32.mrb[0].mxu0
        %v1106 = vadd.f32 0.0, %v1105
        %v1107 = vpop.f32.mrb[0].mxu0
        %v1108 = vadd.f32 0.0, %v1107
        %1109 = vdwg.mxu0
        %v1111 = vsel %vm1028, %v891, 0
        %v1114 = vsel %vm1032, %v887, 0
        %v1117 = vsel %vm1032, %v889, 0
        %1119 = vmatprep.subr.mxu0 %v1117
        %1120 = vmatpush1.msra.mxu0 %v1114
        %1121 = vmatprep.subr.mxu0 0.0
        %1122 = vmatpush1.msra.mxu0 0.0
        %1123 = vmatprep.subr.mxu0 0.0
        %1124 = vmatpush1.msra.mxu0 0.0
        %1125 = vmatprep.subr.mxu0 0.0
        %1126 = vmatpush1.msra.mxu0 0.0
        %1127 = vmatprep.subr.mxu0 0.0
        %1128 = vmatpush1.msra.mxu0 0.0
        %1129 = vmatprep.subr.mxu0 0.0
        %1130 = vmatpush1.msra.mxu0 0.0
        %1131 = vmatprep.subr.mxu0 0.0
        %1132 = vmatpush1.msra.mxu0 0.0
        %1133 = vmatprep.subr.mxu0 0.0
        %1134 = vmatpush1.msra.mxu0 0.0
        %1135 = vmatprep.subr.mxu0 0.0
        %1136 = vmatpush1.msra.mxu0 0.0
        %1137 = vmatprep.subr.mxu0 0.0
        %1138 = vmatpush1.msra.mxu0 0.0
        %1139 = vmatprep.subr.mxu0 0.0
        %1140 = vmatpush1.msra.mxu0 0.0
        %1141 = vmatprep.subr.mxu0 0.0
        %1142 = vmatpush1.msra.mxu0 0.0
        %1143 = vmatprep.subr.mxu0 0.0
        %1144 = vmatpush1.msra.mxu0 0.0
        %1145 = vmatprep.subr.mxu0 0.0
        %1146 = vmatpush1.msra.mxu0 0.0
        %1147 = vmatprep.subr.mxu0 0.0
        %1148 = vmatpush1.msra.mxu0 0.0
        %1149 = vmatprep.subr.mxu0 0.0
        %1150 = vmatpush1.msra.mxu0 0.0
        %1151 = vmatprep.subr.mxu0 0.0
        %1152 = vmatpush1.msra.mxu0 0.0
        %1153 = vmatprep.subr.mxu0 0.0
        %1154 = vmatpush1.msra.mxu0 0.0
        %1155 = vmatprep.subr.mxu0 0.0
        %1156 = vmatpush1.msra.mxu0 0.0
        %1157 = vmatprep.subr.mxu0 0.0
        %1158 = vmatpush1.msra.mxu0 0.0
        %1159 = vmatprep.subr.mxu0 0.0
        %1160 = vmatpush1.msra.mxu0 0.0
        %1161 = vmatprep.subr.mxu0 0.0
        %1162 = vmatpush1.msra.mxu0 0.0
        %1163 = vmatprep.subr.mxu0 0.0
        %1164 = vmatpush1.msra.mxu0 0.0
        %1165 = vmatprep.subr.mxu0 0.0
        %1166 = vmatpush1.msra.mxu0 0.0
        %1167 = vmatprep.subr.mxu0 0.0
        %1168 = vmatpush1.msra.mxu0 0.0
        %1169 = vmatprep.subr.mxu0 0.0
        %1170 = vmatpush1.msra.mxu0 0.0
        %1171 = vmatprep.subr.mxu0 0.0
        %1172 = vmatpush1.msra.mxu0 0.0
        %1173 = vmatprep.subr.mxu0 0.0
        %1174 = vmatpush1.msra.mxu0 0.0
        %1175 = vmatprep.subr.mxu0 0.0
        %1176 = vmatpush1.msra.mxu0 0.0
        %1177 = vmatprep.subr.mxu0 0.0
        %1178 = vmatpush1.msra.mxu0 0.0
        %1179 = vmatprep.subr.mxu0 0.0
        %1180 = vmatpush1.msra.mxu0 0.0
        %1181 = vmatprep.subr.mxu0 0.0
        %1182 = vmatpush1.msra.mxu0 0.0
        %1183 = vmatprep.mubr.f32.mxu0 0.0
        %1184 = vmatmul.mubr.f32.gmra.mrb[0].mxu0 %v1111
        %v1185 = vpop.f32.mrb[0].mxu0
        %v1186 = vadd.f32 %v1106, %v1185
        %v1187 = vpop.f32.mrb[0].mxu0
        %v1188 = vadd.f32 %v1108, %v1187
        %1189 = vdwg.mxu0
        %v1190 = vld [vmem:[#allocation20 + $0x400] sm:$0xff]
        %v1191 = vld [vmem:[#allocation20 + $0x408] sm:$0xff]
        %v1192 = vld [vmem:[#allocation20 + $0x410] sm:$0xff]
        %v1193 = vld [vmem:[#allocation20 + $0x418] sm:$0xff]
        %v1194 = vld [vmem:[#allocation20 + $0x420] sm:$0xff]
        %v1195 = vld [vmem:[#allocation20 + $0x428] sm:$0xff]
        %v1196 = vld [vmem:[#allocation20 + $0x430] sm:$0xff]
        %v1197 = vld [vmem:[#allocation20 + $0x438] sm:$0xff]
        %v1198 = vld [vmem:[#allocation20 + $0x440] sm:$0xff]
        %v1199 = vld [vmem:[#allocation20 + $0x448] sm:$0xff]
        %v1200 = vld [vmem:[#allocation20 + $0x450] sm:$0xff]
        %v1201 = vld [vmem:[#allocation20 + $0x458] sm:$0xff]
        %v1202 = vld [vmem:[#allocation20 + $0x460] sm:$0xff]
        %v1203 = vld [vmem:[#allocation20 + $0x468] sm:$0xff]
        %v1204 = vld [vmem:[#allocation20 + $0x470] sm:$0xff]
        %v1205 = vld [vmem:[#allocation20 + $0x478] sm:$0xff]
        %v1206 = vld [vmem:[#allocation20 + $0x480] sm:$0xff]
        %v1207 = vld [vmem:[#allocation20 + $0x488] sm:$0xff]
        %v1208 = vld [vmem:[#allocation20 + $0x490] sm:$0xff]
        %v1209 = vld [vmem:[#allocation20 + $0x498] sm:$0xff]
        %v1210 = vld [vmem:[#allocation20 + $0x4a0] sm:$0xff]
        %v1211 = vld [vmem:[#allocation20 + $0x4a8] sm:$0xff]
        %v1212 = vld [vmem:[#allocation20 + $0x4b0] sm:$0xff]
        %v1213 = vld [vmem:[#allocation20 + $0x4b8] sm:$0xff]
        %v1214 = vld [vmem:[#allocation20 + $0x4c0] sm:$0xff]
        %v1215 = vld [vmem:[#allocation20 + $0x4c8] sm:$0xff]
        %v1216 = vld [vmem:[#allocation20 + $0x4d0] sm:$0xff]
        %v1217 = vld [vmem:[#allocation20 + $0x4d8] sm:$0xff]
        %v1218 = vld [vmem:[#allocation20 + $0x4e0] sm:$0xff]
        %v1219 = vld [vmem:[#allocation20 + $0x4e8] sm:$0xff]
        %v1220 = vld [vmem:[#allocation20 + $0x4f0] sm:$0xff]
        %v1221 = vld [vmem:[#allocation20 + $0x4f8] sm:$0xff]
        %v1222 = vld [vmem:[#allocation20 + $0x500] sm:$0xff]
        %v1223 = vld [vmem:[#allocation20 + $0x508] sm:$0xff]
        %v1224 = vld [vmem:[#allocation20 + $0x510] sm:$0xff]
        %v1225 = vld [vmem:[#allocation20 + $0x518] sm:$0xff]
        %v1226 = vld [vmem:[#allocation20 + $0x520] sm:$0xff]
        %v1227 = vld [vmem:[#allocation20 + $0x528] sm:$0xff]
        %v1228 = vld [vmem:[#allocation20 + $0x530] sm:$0xff]
        %v1229 = vld [vmem:[#allocation20 + $0x538] sm:$0xff]
        %v1230 = vld [vmem:[#allocation20 + $0x540] sm:$0xff]
        %v1231 = vld [vmem:[#allocation20 + $0x548] sm:$0xff]
        %v1232 = vld [vmem:[#allocation20 + $0x550] sm:$0xff]
        %v1233 = vld [vmem:[#allocation20 + $0x558] sm:$0xff]
        %v1234 = vld [vmem:[#allocation20 + $0x560] sm:$0xff]
        %v1235 = vld [vmem:[#allocation20 + $0x568] sm:$0xff]
        %v1236 = vld [vmem:[#allocation20 + $0x570] sm:$0xff]
        %v1237 = vld [vmem:[#allocation20 + $0x578] sm:$0xff]
        %v1238 = vld [vmem:[#allocation20 + $0x580] sm:$0xff]
        %v1239 = vld [vmem:[#allocation20 + $0x588] sm:$0xff]
        %v1240 = vld [vmem:[#allocation20 + $0x590] sm:$0xff]
        %v1241 = vld [vmem:[#allocation20 + $0x598] sm:$0xff]
        %v1242 = vld [vmem:[#allocation20 + $0x5a0] sm:$0xff]
        %v1243 = vld [vmem:[#allocation20 + $0x5a8] sm:$0xff]
        %v1244 = vld [vmem:[#allocation20 + $0x5b0] sm:$0xff]
        %v1245 = vld [vmem:[#allocation20 + $0x5b8] sm:$0xff]
        %v1246 = vld [vmem:[#allocation20 + $0x5c0] sm:$0xff]
        %v1247 = vld [vmem:[#allocation20 + $0x5c8] sm:$0xff]
        %v1248 = vld [vmem:[#allocation20 + $0x5d0] sm:$0xff]
        %v1249 = vld [vmem:[#allocation20 + $0x5d8] sm:$0xff]
        %v1250 = vld [vmem:[#allocation20 + $0x5e0] sm:$0xff]
        %v1251 = vld [vmem:[#allocation20 + $0x5e8] sm:$0xff]
        %v1252 = vld [vmem:[#allocation20 + $0x5f0] sm:$0xff]
        %v1253 = vld [vmem:[#allocation20 + $0x5f8] sm:$0xff]
        %1254 = vmatprep.subr.mxu0 %v1191
        %1255 = vmatpush1.msra.mxu0 %v1190
        %1256 = vmatprep.subr.mxu0 %v1193
        %1257 = vmatpush1.msra.mxu0 %v1192
        %1258 = vmatprep.subr.mxu0 %v1195
        %1259 = vmatpush1.msra.mxu0 %v1194
        %1260 = vmatprep.subr.mxu0 %v1197
        %1261 = vmatpush1.msra.mxu0 %v1196
        %1262 = vmatprep.subr.mxu0 %v1199
        %1263 = vmatpush1.msra.mxu0 %v1198
        %1264 = vmatprep.subr.mxu0 %v1201
        %1265 = vmatpush1.msra.mxu0 %v1200
        %1266 = vmatprep.subr.mxu0 %v1203
        %1267 = vmatpush1.msra.mxu0 %v1202
        %1268 = vmatprep.subr.mxu0 %v1205
        %1269 = vmatpush1.msra.mxu0 %v1204
        %1270 = vmatprep.subr.mxu0 %v1207
        %1271 = vmatpush1.msra.mxu0 %v1206
        %1272 = vmatprep.subr.mxu0 %v1209
        %1273 = vmatpush1.msra.mxu0 %v1208
        %1274 = vmatprep.subr.mxu0 %v1211
        %1275 = vmatpush1.msra.mxu0 %v1210
        %1276 = vmatprep.subr.mxu0 %v1213
        %1277 = vmatpush1.msra.mxu0 %v1212
        %1278 = vmatprep.subr.mxu0 %v1215
        %1279 = vmatpush1.msra.mxu0 %v1214
        %1280 = vmatprep.subr.mxu0 %v1217
        %1281 = vmatpush1.msra.mxu0 %v1216
        %1282 = vmatprep.subr.mxu0 %v1219
        %1283 = vmatpush1.msra.mxu0 %v1218
        %1284 = vmatprep.subr.mxu0 %v1221
        %1285 = vmatpush1.msra.mxu0 %v1220
        %1286 = vmatprep.subr.mxu0 %v1223
        %1287 = vmatpush1.msra.mxu0 %v1222
        %1288 = vmatprep.subr.mxu0 %v1225
        %1289 = vmatpush1.msra.mxu0 %v1224
        %1290 = vmatprep.subr.mxu0 %v1227
        %1291 = vmatpush1.msra.mxu0 %v1226
        %1292 = vmatprep.subr.mxu0 %v1229
        %1293 = vmatpush1.msra.mxu0 %v1228
        %1294 = vmatprep.subr.mxu0 %v1231
        %1295 = vmatpush1.msra.mxu0 %v1230
        %1296 = vmatprep.subr.mxu0 %v1233
        %1297 = vmatpush1.msra.mxu0 %v1232
        %1298 = vmatprep.subr.mxu0 %v1235
        %1299 = vmatpush1.msra.mxu0 %v1234
        %1300 = vmatprep.subr.mxu0 %v1237
        %1301 = vmatpush1.msra.mxu0 %v1236
        %1302 = vmatprep.subr.mxu0 %v1239
        %1303 = vmatpush1.msra.mxu0 %v1238
        %1304 = vmatprep.subr.mxu0 %v1241
        %1305 = vmatpush1.msra.mxu0 %v1240
        %1306 = vmatprep.subr.mxu0 %v1243
        %1307 = vmatpush1.msra.mxu0 %v1242
        %1308 = vmatprep.subr.mxu0 %v1245
        %1309 = vmatpush1.msra.mxu0 %v1244
        %1310 = vmatprep.subr.mxu0 %v1247
        %1311 = vmatpush1.msra.mxu0 %v1246
        %1312 = vmatprep.subr.mxu0 %v1249
        %1313 = vmatpush1.msra.mxu0 %v1248
        %1314 = vmatprep.subr.mxu0 %v1251
        %1315 = vmatpush1.msra.mxu0 %v1250
        %1316 = vmatprep.subr.mxu0 %v1253
        %1317 = vmatpush1.msra.mxu0 %v1252
        %1318 = vmatprep.mubr.f32.mxu0 %v818
        %1319 = vmatmul.mubr.f32.gmra.mrb[0].mxu0 %v752
        %v1320 = vpop.f32.mrb[0].mxu0
        %v1321 = vadd.f32 0.0, %v1320
        %v1322 = vpop.f32.mrb[0].mxu0
        %v1323 = vadd.f32 0.0, %v1322
        %1324 = vdwg.mxu0
        %v1325 = vld [vmem:[#allocation5 + $0x10] sm:$0xff]
        %v1327 = vsel %vm1028, %v1325, 0
        %v1330 = vsel %vm1032, %v1321, 0
        %v1333 = vsel %vm1032, %v1323, 0
        %1335 = vmatprep.subr.mxu0 %v1333
        %1336 = vmatpush1.msra.mxu0 %v1330
        %1337 = vmatprep.subr.mxu0 0.0
        %1338 = vmatpush1.msra.mxu0 0.0
        %1339 = vmatprep.subr.mxu0 0.0
        %1340 = vmatpush1.msra.mxu0 0.0
        %1341 = vmatprep.subr.mxu0 0.0
        %1342 = vmatpush1.msra.mxu0 0.0
        %1343 = vmatprep.subr.mxu0 0.0
        %1344 = vmatpush1.msra.mxu0 0.0
        %1345 = vmatprep.subr.mxu0 0.0
        %1346 = vmatpush1.msra.mxu0 0.0
        %1347 = vmatprep.subr.mxu0 0.0
        %1348 = vmatpush1.msra.mxu0 0.0
        %1349 = vmatprep.subr.mxu0 0.0
        %1350 = vmatpush1.msra.mxu0 0.0
        %1351 = vmatprep.subr.mxu0 0.0
        %1352 = vmatpush1.msra.mxu0 0.0
        %1353 = vmatprep.subr.mxu0 0.0
        %1354 = vmatpush1.msra.mxu0 0.0
        %1355 = vmatprep.subr.mxu0 0.0
        %1356 = vmatpush1.msra.mxu0 0.0
        %1357 = vmatprep.subr.mxu0 0.0
        %1358 = vmatpush1.msra.mxu0 0.0
        %1359 = vmatprep.subr.mxu0 0.0
        %1360 = vmatpush1.msra.mxu0 0.0
        %1361 = vmatprep.subr.mxu0 0.0
        %1362 = vmatpush1.msra.mxu0 0.0
        %1363 = vmatprep.subr.mxu0 0.0
        %1364 = vmatpush1.msra.mxu0 0.0
        %1365 = vmatprep.subr.mxu0 0.0
        %1366 = vmatpush1.msra.mxu0 0.0
        %1367 = vmatprep.subr.mxu0 0.0
        %1368 = vmatpush1.msra.mxu0 0.0
        %1369 = vmatprep.subr.mxu0 0.0
        %1370 = vmatpush1.msra.mxu0 0.0
        %1371 = vmatprep.subr.mxu0 0.0
        %1372 = vmatpush1.msra.mxu0 0.0
        %1373 = vmatprep.subr.mxu0 0.0
        %1374 = vmatpush1.msra.mxu0 0.0
        %1375 = vmatprep.subr.mxu0 0.0
        %1376 = vmatpush1.msra.mxu0 0.0
        %1377 = vmatprep.subr.mxu0 0.0
        %1378 = vmatpush1.msra.mxu0 0.0
        %1379 = vmatprep.subr.mxu0 0.0
        %1380 = vmatpush1.msra.mxu0 0.0
        %1381 = vmatprep.subr.mxu0 0.0
        %1382 = vmatpush1.msra.mxu0 0.0
        %1383 = vmatprep.subr.mxu0 0.0
        %1384 = vmatpush1.msra.mxu0 0.0
        %1385 = vmatprep.subr.mxu0 0.0
        %1386 = vmatpush1.msra.mxu0 0.0
        %1387 = vmatprep.subr.mxu0 0.0
        %1388 = vmatpush1.msra.mxu0 0.0
        %1389 = vmatprep.subr.mxu0 0.0
        %1390 = vmatpush1.msra.mxu0 0.0
        %1391 = vmatprep.subr.mxu0 0.0
        %1392 = vmatpush1.msra.mxu0 0.0
        %1393 = vmatprep.subr.mxu0 0.0
        %1394 = vmatpush1.msra.mxu0 0.0
        %1395 = vmatprep.subr.mxu0 0.0
        %1396 = vmatpush1.msra.mxu0 0.0
        %1397 = vmatprep.subr.mxu0 0.0
        %1398 = vmatpush1.msra.mxu0 0.0
        %1399 = vmatprep.mubr.f32.mxu0 0.0
        %1400 = vmatmul.mubr.f32.gmra.mrb[0].mxu0 %v1327
        %v1401 = vpop.f32.mrb[0].mxu0
        %v1402 = vadd.f32 0.0, %v1401
        %v1403 = vpop.f32.mrb[0].mxu0
        %v1404 = vadd.f32 0.0, %v1403
        %1405 = vdwg.mxu0
        %v1406 = vadd.f32 %v1186, %v1402
        %v1407 = vadd.f32 %v1188, %v1404
        %v1408 = vld [vmem:[#allocation20 + $0x600] sm:$0xff]
        %v1409 = vld [vmem:[#allocation20 + $0x608] sm:$0xff]
        %v1410 = vld [vmem:[#allocation20 + $0x610] sm:$0xff]
        %v1411 = vld [vmem:[#allocation20 + $0x618] sm:$0xff]
        %v1412 = vld [vmem:[#allocation20 + $0x620] sm:$0xff]
        %v1413 = vld [vmem:[#allocation20 + $0x628] sm:$0xff]
        %v1414 = vld [vmem:[#allocation20 + $0x630] sm:$0xff]
        %v1415 = vld [vmem:[#allocation20 + $0x638] sm:$0xff]
        %v1416 = vld [vmem:[#allocation20 + $0x640] sm:$0xff]
        %v1417 = vld [vmem:[#allocation20 + $0x648] sm:$0xff]
        %v1418 = vld [vmem:[#allocation20 + $0x650] sm:$0xff]
        %v1419 = vld [vmem:[#allocation20 + $0x658] sm:$0xff]
        %v1420 = vld [vmem:[#allocation20 + $0x660] sm:$0xff]
        %v1421 = vld [vmem:[#allocation20 + $0x668] sm:$0xff]
        %v1422 = vld [vmem:[#allocation20 + $0x670] sm:$0xff]
        %v1423 = vld [vmem:[#allocation20 + $0x678] sm:$0xff]
        %v1424 = vld [vmem:[#allocation20 + $0x680] sm:$0xff]
        %v1425 = vld [vmem:[#allocation20 + $0x688] sm:$0xff]
        %v1426 = vld [vmem:[#allocation20 + $0x690] sm:$0xff]
        %v1427 = vld [vmem:[#allocation20 + $0x698] sm:$0xff]
        %v1428 = vld [vmem:[#allocation20 + $0x6a0] sm:$0xff]
        %v1429 = vld [vmem:[#allocation20 + $0x6a8] sm:$0xff]
        %v1430 = vld [vmem:[#allocation20 + $0x6b0] sm:$0xff]
        %v1431 = vld [vmem:[#allocation20 + $0x6b8] sm:$0xff]
        %v1432 = vld [vmem:[#allocation20 + $0x6c0] sm:$0xff]
        %v1433 = vld [vmem:[#allocation20 + $0x6c8] sm:$0xff]
        %v1434 = vld [vmem:[#allocation20 + $0x6d0] sm:$0xff]
        %v1435 = vld [vmem:[#allocation20 + $0x6d8] sm:$0xff]
        %v1436 = vld [vmem:[#allocation20 + $0x6e0] sm:$0xff]
        %v1437 = vld [vmem:[#allocation20 + $0x6e8] sm:$0xff]
        %v1438 = vld [vmem:[#allocation20 + $0x6f0] sm:$0xff]
        %v1439 = vld [vmem:[#allocation20 + $0x6f8] sm:$0xff]
        %v1440 = vld [vmem:[#allocation20 + $0x700] sm:$0xff]
        %v1441 = vld [vmem:[#allocation20 + $0x708] sm:$0xff]
        %v1442 = vld [vmem:[#allocation20 + $0x710] sm:$0xff]
        %v1443 = vld [vmem:[#allocation20 + $0x718] sm:$0xff]
        %v1444 = vld [vmem:[#allocation20 + $0x720] sm:$0xff]
        %v1445 = vld [vmem:[#allocation20 + $0x728] sm:$0xff]
        %v1446 = vld [vmem:[#allocation20 + $0x730] sm:$0xff]
        %v1447 = vld [vmem:[#allocation20 + $0x738] sm:$0xff]
        %v1448 = vld [vmem:[#allocation20 + $0x740] sm:$0xff]
        %v1449 = vld [vmem:[#allocation20 + $0x748] sm:$0xff]
        %v1450 = vld [vmem:[#allocation20 + $0x750] sm:$0xff]
        %v1451 = vld [vmem:[#allocation20 + $0x758] sm:$0xff]
        %v1452 = vld [vmem:[#allocation20 + $0x760] sm:$0xff]
        %v1453 = vld [vmem:[#allocation20 + $0x768] sm:$0xff]
        %v1454 = vld [vmem:[#allocation20 + $0x770] sm:$0xff]
        %v1455 = vld [vmem:[#allocation20 + $0x778] sm:$0xff]
        %v1456 = vld [vmem:[#allocation20 + $0x780] sm:$0xff]
        %v1457 = vld [vmem:[#allocation20 + $0x788] sm:$0xff]
        %v1458 = vld [vmem:[#allocation20 + $0x790] sm:$0xff]
        %v1459 = vld [vmem:[#allocation20 + $0x798] sm:$0xff]
        %v1460 = vld [vmem:[#allocation20 + $0x7a0] sm:$0xff]
        %v1461 = vld [vmem:[#allocation20 + $0x7a8] sm:$0xff]
        %v1462 = vld [vmem:[#allocation20 + $0x7b0] sm:$0xff]
        %v1463 = vld [vmem:[#allocation20 + $0x7b8] sm:$0xff]
        %v1464 = vld [vmem:[#allocation20 + $0x7c0] sm:$0xff]
        %v1465 = vld [vmem:[#allocation20 + $0x7c8] sm:$0xff]
        %v1466 = vld [vmem:[#allocation20 + $0x7d0] sm:$0xff]
        %v1467 = vld [vmem:[#allocation20 + $0x7d8] sm:$0xff]
        %v1468 = vld [vmem:[#allocation20 + $0x7e0] sm:$0xff]
        %v1469 = vld [vmem:[#allocation20 + $0x7e8] sm:$0xff]
        %v1470 = vld [vmem:[#allocation20 + $0x7f0] sm:$0xff]
        %v1471 = vld [vmem:[#allocation20 + $0x7f8] sm:$0xff]
        %1472 = vmatprep.subr.mxu0 %v1409
        %1473 = vmatpush1.msra.mxu0 %v1408
        %1474 = vmatprep.subr.mxu0 %v1411
        %1475 = vmatpush1.msra.mxu0 %v1410
        %1476 = vmatprep.subr.mxu0 %v1413
        %1477 = vmatpush1.msra.mxu0 %v1412
        %1478 = vmatprep.subr.mxu0 %v1415
        %1479 = vmatpush1.msra.mxu0 %v1414
        %1480 = vmatprep.subr.mxu0 %v1417
        %1481 = vmatpush1.msra.mxu0 %v1416
        %1482 = vmatprep.subr.mxu0 %v1419
        %1483 = vmatpush1.msra.mxu0 %v1418
        %1484 = vmatprep.subr.mxu0 %v1421
        %1485 = vmatpush1.msra.mxu0 %v1420
        %1486 = vmatprep.subr.mxu0 %v1423
        %1487 = vmatpush1.msra.mxu0 %v1422
        %1488 = vmatprep.subr.mxu0 %v1425
        %1489 = vmatpush1.msra.mxu0 %v1424
        %1490 = vmatprep.subr.mxu0 %v1427
        %1491 = vmatpush1.msra.mxu0 %v1426
        %1492 = vmatprep.subr.mxu0 %v1429
        %1493 = vmatpush1.msra.mxu0 %v1428
        %1494 = vmatprep.subr.mxu0 %v1431
        %1495 = vmatpush1.msra.mxu0 %v1430
        %1496 = vmatprep.subr.mxu0 %v1433
        %1497 = vmatpush1.msra.mxu0 %v1432
        %1498 = vmatprep.subr.mxu0 %v1435
        %1499 = vmatpush1.msra.mxu0 %v1434
        %1500 = vmatprep.subr.mxu0 %v1437
        %1501 = vmatpush1.msra.mxu0 %v1436
        %1502 = vmatprep.subr.mxu0 %v1439
        %1503 = vmatpush1.msra.mxu0 %v1438
        %1504 = vmatprep.subr.mxu0 %v1441
        %1505 = vmatpush1.msra.mxu0 %v1440
        %1506 = vmatprep.subr.mxu0 %v1443
        %1507 = vmatpush1.msra.mxu0 %v1442
        %1508 = vmatprep.subr.mxu0 %v1445
        %1509 = vmatpush1.msra.mxu0 %v1444
        %1510 = vmatprep.subr.mxu0 %v1447
        %1511 = vmatpush1.msra.mxu0 %v1446
        %1512 = vmatprep.subr.mxu0 %v1449
        %1513 = vmatpush1.msra.mxu0 %v1448
        %1514 = vmatprep.subr.mxu0 %v1451
        %1515 = vmatpush1.msra.mxu0 %v1450
        %1516 = vmatprep.subr.mxu0 %v1453
        %1517 = vmatpush1.msra.mxu0 %v1452
        %1518 = vmatprep.subr.mxu0 %v1455
        %1519 = vmatpush1.msra.mxu0 %v1454
        %1520 = vmatprep.subr.mxu0 %v1457
        %1521 = vmatpush1.msra.mxu0 %v1456
        %1522 = vmatprep.subr.mxu0 %v1459
        %1523 = vmatpush1.msra.mxu0 %v1458
        %1524 = vmatprep.subr.mxu0 %v1461
        %1525 = vmatpush1.msra.mxu0 %v1460
        %1526 = vmatprep.subr.mxu0 %v1463
        %1527 = vmatpush1.msra.mxu0 %v1462
        %1528 = vmatprep.subr.mxu0 %v1465
        %1529 = vmatpush1.msra.mxu0 %v1464
        %1530 = vmatprep.subr.mxu0 %v1467
        %1531 = vmatpush1.msra.mxu0 %v1466
        %1532 = vmatprep.subr.mxu0 %v1469
        %1533 = vmatpush1.msra.mxu0 %v1468
        %1534 = vmatprep.subr.mxu0 %v1471
        %1535 = vmatpush1.msra.mxu0 %v1470
        %1536 = vmatprep.mubr.f32.mxu0 %v818
        %1537 = vmatmul.mubr.f32.gmra.mrb[0].mxu0 %v752
        %v1538 = vpop.f32.mrb[0].mxu0
        %v1539 = vadd.f32 0.0, %v1538
        %v1540 = vpop.f32.mrb[0].mxu0
        %v1541 = vadd.f32 0.0, %v1540
        %1542 = vdwg.mxu0
        %v1543 = vld [vmem:[#allocation5 + $0x18] sm:$0xff]
        %v1545 = vsel %vm1028, %v1543, 0
        %v1548 = vsel %vm1032, %v1539, 0
        %v1551 = vsel %vm1032, %v1541, 0
        %1553 = vmatprep.subr.mxu0 %v1551
        %1554 = vmatpush1.msra.mxu0 %v1548
        %1555 = vmatprep.subr.mxu0 0.0
        %1556 = vmatpush1.msra.mxu0 0.0
        %1557 = vmatprep.subr.mxu0 0.0
        %1558 = vmatpush1.msra.mxu0 0.0
        %1559 = vmatprep.subr.mxu0 0.0
        %1560 = vmatpush1.msra.mxu0 0.0
        %1561 = vmatprep.subr.mxu0 0.0
        %1562 = vmatpush1.msra.mxu0 0.0
        %1563 = vmatprep.subr.mxu0 0.0
        %1564 = vmatpush1.msra.mxu0 0.0
        %1565 = vmatprep.subr.mxu0 0.0
        %1566 = vmatpush1.msra.mxu0 0.0
        %1567 = vmatprep.subr.mxu0 0.0
        %1568 = vmatpush1.msra.mxu0 0.0
        %1569 = vmatprep.subr.mxu0 0.0
        %1570 = vmatpush1.msra.mxu0 0.0
        %1571 = vmatprep.subr.mxu0 0.0
        %1572 = vmatpush1.msra.mxu0 0.0
        %1573 = vmatprep.subr.mxu0 0.0
        %1574 = vmatpush1.msra.mxu0 0.0
        %1575 = vmatprep.subr.mxu0 0.0
        %1576 = vmatpush1.msra.mxu0 0.0
        %1577 = vmatprep.subr.mxu0 0.0
        %1578 = vmatpush1.msra.mxu0 0.0
        %1579 = vmatprep.subr.mxu0 0.0
        %1580 = vmatpush1.msra.mxu0 0.0
        %1581 = vmatprep.subr.mxu0 0.0
        %1582 = vmatpush1.msra.mxu0 0.0
        %1583 = vmatprep.subr.mxu0 0.0
        %1584 = vmatpush1.msra.mxu0 0.0
        %1585 = vmatprep.subr.mxu0 0.0
        %1586 = vmatpush1.msra.mxu0 0.0
        %1587 = vmatprep.subr.mxu0 0.0
        %1588 = vmatpush1.msra.mxu0 0.0
        %1589 = vmatprep.subr.mxu0 0.0
        %1590 = vmatpush1.msra.mxu0 0.0
        %1591 = vmatprep.subr.mxu0 0.0
        %1592 = vmatpush1.msra.mxu0 0.0
        %1593 = vmatprep.subr.mxu0 0.0
        %1594 = vmatpush1.msra.mxu0 0.0
        %1595 = vmatprep.subr.mxu0 0.0
        %1596 = vmatpush1.msra.mxu0 0.0
        %1597 = vmatprep.subr.mxu0 0.0
        %1598 = vmatpush1.msra.mxu0 0.0
        %1599 = vmatprep.subr.mxu0 0.0
        %1600 = vmatpush1.msra.mxu0 0.0
        %1601 = vmatprep.subr.mxu0 0.0
        %1602 = vmatpush1.msra.mxu0 0.0
        %1603 = vmatprep.subr.mxu0 0.0
        %1604 = vmatpush1.msra.mxu0 0.0
        %1605 = vmatprep.subr.mxu0 0.0
        %1606 = vmatpush1.msra.mxu0 0.0
        %1607 = vmatprep.subr.mxu0 0.0
        %1608 = vmatpush1.msra.mxu0 0.0
        %1609 = vmatprep.subr.mxu0 0.0
        %1610 = vmatpush1.msra.mxu0 0.0
        %1611 = vmatprep.subr.mxu0 0.0
        %1612 = vmatpush1.msra.mxu0 0.0
        %1613 = vmatprep.subr.mxu0 0.0
        %1614 = vmatpush1.msra.mxu0 0.0
        %1615 = vmatprep.subr.mxu0 0.0
        %1616 = vmatpush1.msra.mxu0 0.0
        %1617 = vmatprep.mubr.f32.mxu0 0.0
        %1618 = vmatmul.mubr.f32.gmra.mrb[0].mxu0 %v1545
        %v1619 = vpop.f32.mrb[0].mxu0
        %v1620 = vadd.f32 0.0, %v1619
        %v1621 = vpop.f32.mrb[0].mxu0
        %v1622 = vadd.f32 0.0, %v1621
        %1623 = vdwg.mxu0
        %v1624 = vadd.f32 %v1406, %v1620
        %v1625 = vadd.f32 %v1407, %v1622
        %v1626 = vld [vmem:[#allocation20 + $0x800] sm:$0xff]
        %v1627 = vld [vmem:[#allocation20 + $0x808] sm:$0xff]
        %v1628 = vld [vmem:[#allocation20 + $0x810] sm:$0xff]
        %v1629 = vld [vmem:[#allocation20 + $0x818] sm:$0xff]
        %v1630 = vld [vmem:[#allocation20 + $0x820] sm:$0xff]
        %v1631 = vld [vmem:[#allocation20 + $0x828] sm:$0xff]
        %v1632 = vld [vmem:[#allocation20 + $0x830] sm:$0xff]
        %v1633 = vld [vmem:[#allocation20 + $0x838] sm:$0xff]
        %v1634 = vld [vmem:[#allocation20 + $0x840] sm:$0xff]
        %v1635 = vld [vmem:[#allocation20 + $0x848] sm:$0xff]
        %v1636 = vld [vmem:[#allocation20 + $0x850] sm:$0xff]
        %v1637 = vld [vmem:[#allocation20 + $0x858] sm:$0xff]
        %v1638 = vld [vmem:[#allocation20 + $0x860] sm:$0xff]
        %v1639 = vld [vmem:[#allocation20 + $0x868] sm:$0xff]
        %v1640 = vld [vmem:[#allocation20 + $0x870] sm:$0xff]
        %v1641 = vld [vmem:[#allocation20 + $0x878] sm:$0xff]
        %v1642 = vld [vmem:[#allocation20 + $0x880] sm:$0xff]
        %v1643 = vld [vmem:[#allocation20 + $0x888] sm:$0xff]
        %v1644 = vld [vmem:[#allocation20 + $0x890] sm:$0xff]
        %v1645 = vld [vmem:[#allocation20 + $0x898] sm:$0xff]
        %v1646 = vld [vmem:[#allocation20 + $0x8a0] sm:$0xff]
        %v1647 = vld [vmem:[#allocation20 + $0x8a8] sm:$0xff]
        %v1648 = vld [vmem:[#allocation20 + $0x8b0] sm:$0xff]
        %v1649 = vld [vmem:[#allocation20 + $0x8b8] sm:$0xff]
        %v1650 = vld [vmem:[#allocation20 + $0x8c0] sm:$0xff]
        %v1651 = vld [vmem:[#allocation20 + $0x8c8] sm:$0xff]
        %v1652 = vld [vmem:[#allocation20 + $0x8d0] sm:$0xff]
        %v1653 = vld [vmem:[#allocation20 + $0x8d8] sm:$0xff]
        %v1654 = vld [vmem:[#allocation20 + $0x8e0] sm:$0xff]
        %v1655 = vld [vmem:[#allocation20 + $0x8e8] sm:$0xff]
        %v1656 = vld [vmem:[#allocation20 + $0x8f0] sm:$0xff]
        %v1657 = vld [vmem:[#allocation20 + $0x8f8] sm:$0xff]
        %v1658 = vld [vmem:[#allocation20 + $0x900] sm:$0xff]
        %v1659 = vld [vmem:[#allocation20 + $0x908] sm:$0xff]
        %v1660 = vld [vmem:[#allocation20 + $0x910] sm:$0xff]
        %v1661 = vld [vmem:[#allocation20 + $0x918] sm:$0xff]
        %v1662 = vld [vmem:[#allocation20 + $0x920] sm:$0xff]
        %v1663 = vld [vmem:[#allocation20 + $0x928] sm:$0xff]
        %v1664 = vld [vmem:[#allocation20 + $0x930] sm:$0xff]
        %v1665 = vld [vmem:[#allocation20 + $0x938] sm:$0xff]
        %v1666 = vld [vmem:[#allocation20 + $0x940] sm:$0xff]
        %v1667 = vld [vmem:[#allocation20 + $0x948] sm:$0xff]
        %v1668 = vld [vmem:[#allocation20 + $0x950] sm:$0xff]
        %v1669 = vld [vmem:[#allocation20 + $0x958] sm:$0xff]
        %v1670 = vld [vmem:[#allocation20 + $0x960] sm:$0xff]
        %v1671 = vld [vmem:[#allocation20 + $0x968] sm:$0xff]
        %v1672 = vld [vmem:[#allocation20 + $0x970] sm:$0xff]
        %v1673 = vld [vmem:[#allocation20 + $0x978] sm:$0xff]
        %v1674 = vld [vmem:[#allocation20 + $0x980] sm:$0xff]
        %v1675 = vld [vmem:[#allocation20 + $0x988] sm:$0xff]
        %v1676 = vld [vmem:[#allocation20 + $0x990] sm:$0xff]
        %v1677 = vld [vmem:[#allocation20 + $0x998] sm:$0xff]
        %v1678 = vld [vmem:[#allocation20 + $0x9a0] sm:$0xff]
        %v1679 = vld [vmem:[#allocation20 + $0x9a8] sm:$0xff]
        %v1680 = vld [vmem:[#allocation20 + $0x9b0] sm:$0xff]
        %v1681 = vld [vmem:[#allocation20 + $0x9b8] sm:$0xff]
        %v1682 = vld [vmem:[#allocation20 + $0x9c0] sm:$0xff]
        %v1683 = vld [vmem:[#allocation20 + $0x9c8] sm:$0xff]
        %v1684 = vld [vmem:[#allocation20 + $0x9d0] sm:$0xff]
        %v1685 = vld [vmem:[#allocation20 + $0x9d8] sm:$0xff]
        %v1686 = vld [vmem:[#allocation20 + $0x9e0] sm:$0xff]
        %v1687 = vld [vmem:[#allocation20 + $0x9e8] sm:$0xff]
        %v1688 = vld [vmem:[#allocation20 + $0x9f0] sm:$0xff]
        %v1689 = vld [vmem:[#allocation20 + $0x9f8] sm:$0xff]
        %1690 = vmatprep.subr.mxu0 %v1627
        %1691 = vmatpush1.msra.mxu0 %v1626
        %1692 = vmatprep.subr.mxu0 %v1629
        %1693 = vmatpush1.msra.mxu0 %v1628
        %1694 = vmatprep.subr.mxu0 %v1631
        %1695 = vmatpush1.msra.mxu0 %v1630
        %1696 = vmatprep.subr.mxu0 %v1633
        %1697 = vmatpush1.msra.mxu0 %v1632
        %1698 = vmatprep.subr.mxu0 %v1635
        %1699 = vmatpush1.msra.mxu0 %v1634
        %1700 = vmatprep.subr.mxu0 %v1637
        %1701 = vmatpush1.msra.mxu0 %v1636
        %1702 = vmatprep.subr.mxu0 %v1639
        %1703 = vmatpush1.msra.mxu0 %v1638
        %1704 = vmatprep.subr.mxu0 %v1641
        %1705 = vmatpush1.msra.mxu0 %v1640
        %1706 = vmatprep.subr.mxu0 %v1643
        %1707 = vmatpush1.msra.mxu0 %v1642
        %1708 = vmatprep.subr.mxu0 %v1645
        %1709 = vmatpush1.msra.mxu0 %v1644
        %1710 = vmatprep.subr.mxu0 %v1647
        %1711 = vmatpush1.msra.mxu0 %v1646
        %1712 = vmatprep.subr.mxu0 %v1649
        %1713 = vmatpush1.msra.mxu0 %v1648
        %1714 = vmatprep.subr.mxu0 %v1651
        %1715 = vmatpush1.msra.mxu0 %v1650
        %1716 = vmatprep.subr.mxu0 %v1653
        %1717 = vmatpush1.msra.mxu0 %v1652
        %1718 = vmatprep.subr.mxu0 %v1655
        %1719 = vmatpush1.msra.mxu0 %v1654
        %1720 = vmatprep.subr.mxu0 %v1657
        %1721 = vmatpush1.msra.mxu0 %v1656
        %1722 = vmatprep.subr.mxu0 %v1659
        %1723 = vmatpush1.msra.mxu0 %v1658
        %1724 = vmatprep.subr.mxu0 %v1661
        %1725 = vmatpush1.msra.mxu0 %v1660
        %1726 = vmatprep.subr.mxu0 %v1663
        %1727 = vmatpush1.msra.mxu0 %v1662
        %1728 = vmatprep.subr.mxu0 %v1665
        %1729 = vmatpush1.msra.mxu0 %v1664
        %1730 = vmatprep.subr.mxu0 %v1667
        %1731 = vmatpush1.msra.mxu0 %v1666
        %1732 = vmatprep.subr.mxu0 %v1669
        %1733 = vmatpush1.msra.mxu0 %v1668
        %1734 = vmatprep.subr.mxu0 %v1671
        %1735 = vmatpush1.msra.mxu0 %v1670
        %1736 = vmatprep.subr.mxu0 %v1673
        %1737 = vmatpush1.msra.mxu0 %v1672
        %1738 = vmatprep.subr.mxu0 %v1675
        %1739 = vmatpush1.msra.mxu0 %v1674
        %1740 = vmatprep.subr.mxu0 %v1677
        %1741 = vmatpush1.msra.mxu0 %v1676
        %1742 = vmatprep.subr.mxu0 %v1679
        %1743 = vmatpush1.msra.mxu0 %v1678
        %1744 = vmatprep.subr.mxu0 %v1681
        %1745 = vmatpush1.msra.mxu0 %v1680
        %1746 = vmatprep.subr.mxu0 %v1683
        %1747 = vmatpush1.msra.mxu0 %v1682
        %1748 = vmatprep.subr.mxu0 %v1685
        %1749 = vmatpush1.msra.mxu0 %v1684
        %1750 = vmatprep.subr.mxu0 %v1687
        %1751 = vmatpush1.msra.mxu0 %v1686
        %1752 = vmatprep.subr.mxu0 %v1689
        %1753 = vmatpush1.msra.mxu0 %v1688
        %1754 = vmatprep.mubr.f32.mxu0 %v818
        %1755 = vmatmul.mubr.f32.gmra.mrb[0].mxu0 %v752
        %v1756 = vpop.f32.mrb[0].mxu0
        %v1757 = vadd.f32 0.0, %v1756
        %v1758 = vpop.f32.mrb[0].mxu0
        %v1759 = vadd.f32 0.0, %v1758
        %1760 = vdwg.mxu0
        %v1761 = vld [vmem:[#allocation5 + $0x20] sm:$0xff]
        %v1763 = vsel %vm1028, %v1761, 0
        %v1766 = vsel %vm1032, %v1757, 0
        %v1769 = vsel %vm1032, %v1759, 0
        %1771 = vmatprep.subr.mxu0 %v1769
        %1772 = vmatpush1.msra.mxu0 %v1766
        %1773 = vmatprep.subr.mxu0 0.0
        %1774 = vmatpush1.msra.mxu0 0.0
        %1775 = vmatprep.subr.mxu0 0.0
        %1776 = vmatpush1.msra.mxu0 0.0
        %1777 = vmatprep.subr.mxu0 0.0
        %1778 = vmatpush1.msra.mxu0 0.0
        %1779 = vmatprep.subr.mxu0 0.0
        %1780 = vmatpush1.msra.mxu0 0.0
        %1781 = vmatprep.subr.mxu0 0.0
        %1782 = vmatpush1.msra.mxu0 0.0
        %1783 = vmatprep.subr.mxu0 0.0
        %1784 = vmatpush1.msra.mxu0 0.0
        %1785 = vmatprep.subr.mxu0 0.0
        %1786 = vmatpush1.msra.mxu0 0.0
        %1787 = vmatprep.subr.mxu0 0.0
        %1788 = vmatpush1.msra.mxu0 0.0
        %1789 = vmatprep.subr.mxu0 0.0
        %1790 = vmatpush1.msra.mxu0 0.0
        %1791 = vmatprep.subr.mxu0 0.0
        %1792 = vmatpush1.msra.mxu0 0.0
        %1793 = vmatprep.subr.mxu0 0.0
        %1794 = vmatpush1.msra.mxu0 0.0
        %1795 = vmatprep.subr.mxu0 0.0
        %1796 = vmatpush1.msra.mxu0 0.0
        %1797 = vmatprep.subr.mxu0 0.0
        %1798 = vmatpush1.msra.mxu0 0.0
        %1799 = vmatprep.subr.mxu0 0.0
        %1800 = vmatpush1.msra.mxu0 0.0
        %1801 = vmatprep.subr.mxu0 0.0
        %1802 = vmatpush1.msra.mxu0 0.0
        %1803 = vmatprep.subr.mxu0 0.0
        %1804 = vmatpush1.msra.mxu0 0.0
        %1805 = vmatprep.subr.mxu0 0.0
        %1806 = vmatpush1.msra.mxu0 0.0
        %1807 = vmatprep.subr.mxu0 0.0
        %1808 = vmatpush1.msra.mxu0 0.0
        %1809 = vmatprep.subr.mxu0 0.0
        %1810 = vmatpush1.msra.mxu0 0.0
        %1811 = vmatprep.subr.mxu0 0.0
        %1812 = vmatpush1.msra.mxu0 0.0
        %1813 = vmatprep.subr.mxu0 0.0
        %1814 = vmatpush1.msra.mxu0 0.0
        %1815 = vmatprep.subr.mxu0 0.0
        %1816 = vmatpush1.msra.mxu0 0.0
        %1817 = vmatprep.subr.mxu0 0.0
        %1818 = vmatpush1.msra.mxu0 0.0
        %1819 = vmatprep.subr.mxu0 0.0
        %1820 = vmatpush1.msra.mxu0 0.0
        %1821 = vmatprep.subr.mxu0 0.0
        %1822 = vmatpush1.msra.mxu0 0.0
        %1823 = vmatprep.subr.mxu0 0.0
        %1824 = vmatpush1.msra.mxu0 0.0
        %1825 = vmatprep.subr.mxu0 0.0
        %1826 = vmatpush1.msra.mxu0 0.0
        %1827 = vmatprep.subr.mxu0 0.0
        %1828 = vmatpush1.msra.mxu0 0.0
        %1829 = vmatprep.subr.mxu0 0.0
        %1830 = vmatpush1.msra.mxu0 0.0
        %1831 = vmatprep.subr.mxu0 0.0
        %1832 = vmatpush1.msra.mxu0 0.0
        %1833 = vmatprep.subr.mxu0 0.0
        %1834 = vmatpush1.msra.mxu0 0.0
        %1835 = vmatprep.mubr.f32.mxu0 0.0
        %1836 = vmatmul.mubr.f32.gmra.mrb[0].mxu0 %v1763
        %v1837 = vpop.f32.mrb[0].mxu0
        %v1838 = vadd.f32 0.0, %v1837
        %v1839 = vpop.f32.mrb[0].mxu0
        %v1840 = vadd.f32 0.0, %v1839
        %1841 = vdwg.mxu0
        %v1842 = vadd.f32 %v1624, %v1838
        %v1843 = vadd.f32 %v1625, %v1840
        %v1844 = vld [vmem:[#allocation20 + $0xa00] sm:$0xff]
        %v1845 = vld [vmem:[#allocation20 + $0xa08] sm:$0xff]
        %v1846 = vld [vmem:[#allocation20 + $0xa10] sm:$0xff]
        %v1847 = vld [vmem:[#allocation20 + $0xa18] sm:$0xff]
        %v1848 = vld [vmem:[#allocation20 + $0xa20] sm:$0xff]
        %v1849 = vld [vmem:[#allocation20 + $0xa28] sm:$0xff]
        %v1850 = vld [vmem:[#allocation20 + $0xa30] sm:$0xff]
        %v1851 = vld [vmem:[#allocation20 + $0xa38] sm:$0xff]
        %v1852 = vld [vmem:[#allocation20 + $0xa40] sm:$0xff]
        %v1853 = vld [vmem:[#allocation20 + $0xa48] sm:$0xff]
        %v1854 = vld [vmem:[#allocation20 + $0xa50] sm:$0xff]
        %v1855 = vld [vmem:[#allocation20 + $0xa58] sm:$0xff]
        %v1856 = vld [vmem:[#allocation20 + $0xa60] sm:$0xff]
        %v1857 = vld [vmem:[#allocation20 + $0xa68] sm:$0xff]
        %v1858 = vld [vmem:[#allocation20 + $0xa70] sm:$0xff]
        %v1859 = vld [vmem:[#allocation20 + $0xa78] sm:$0xff]
        %v1860 = vld [vmem:[#allocation20 + $0xa80] sm:$0xff]
        %v1861 = vld [vmem:[#allocation20 + $0xa88] sm:$0xff]
        %v1862 = vld [vmem:[#allocation20 + $0xa90] sm:$0xff]
        %v1863 = vld [vmem:[#allocation20 + $0xa98] sm:$0xff]
        %v1864 = vld [vmem:[#allocation20 + $0xaa0] sm:$0xff]
        %v1865 = vld [vmem:[#allocation20 + $0xaa8] sm:$0xff]
        %v1866 = vld [vmem:[#allocation20 + $0xab0] sm:$0xff]
        %v1867 = vld [vmem:[#allocation20 + $0xab8] sm:$0xff]
        %v1868 = vld [vmem:[#allocation20 + $0xac0] sm:$0xff]
        %v1869 = vld [vmem:[#allocation20 + $0xac8] sm:$0xff]
        %v1870 = vld [vmem:[#allocation20 + $0xad0] sm:$0xff]
        %v1871 = vld [vmem:[#allocation20 + $0xad8] sm:$0xff]
        %v1872 = vld [vmem:[#allocation20 + $0xae0] sm:$0xff]
        %v1873 = vld [vmem:[#allocation20 + $0xae8] sm:$0xff]
        %v1874 = vld [vmem:[#allocation20 + $0xaf0] sm:$0xff]
        %v1875 = vld [vmem:[#allocation20 + $0xaf8] sm:$0xff]
        %v1876 = vld [vmem:[#allocation20 + $0xb00] sm:$0xff]
        %v1877 = vld [vmem:[#allocation20 + $0xb08] sm:$0xff]
        %v1878 = vld [vmem:[#allocation20 + $0xb10] sm:$0xff]
        %v1879 = vld [vmem:[#allocation20 + $0xb18] sm:$0xff]
        %v1880 = vld [vmem:[#allocation20 + $0xb20] sm:$0xff]
        %v1881 = vld [vmem:[#allocation20 + $0xb28] sm:$0xff]
        %v1882 = vld [vmem:[#allocation20 + $0xb30] sm:$0xff]
        %v1883 = vld [vmem:[#allocation20 + $0xb38] sm:$0xff]
        %v1884 = vld [vmem:[#allocation20 + $0xb40] sm:$0xff]
        %v1885 = vld [vmem:[#allocation20 + $0xb48] sm:$0xff]
        %v1886 = vld [vmem:[#allocation20 + $0xb50] sm:$0xff]
        %v1887 = vld [vmem:[#allocation20 + $0xb58] sm:$0xff]
        %v1888 = vld [vmem:[#allocation20 + $0xb60] sm:$0xff]
        %v1889 = vld [vmem:[#allocation20 + $0xb68] sm:$0xff]
        %v1890 = vld [vmem:[#allocation20 + $0xb70] sm:$0xff]
        %v1891 = vld [vmem:[#allocation20 + $0xb78] sm:$0xff]
        %v1892 = vld [vmem:[#allocation20 + $0xb80] sm:$0xff]
        %v1893 = vld [vmem:[#allocation20 + $0xb88] sm:$0xff]
        %v1894 = vld [vmem:[#allocation20 + $0xb90] sm:$0xff]
        %v1895 = vld [vmem:[#allocation20 + $0xb98] sm:$0xff]
        %v1896 = vld [vmem:[#allocation20 + $0xba0] sm:$0xff]
        %v1897 = vld [vmem:[#allocation20 + $0xba8] sm:$0xff]
        %v1898 = vld [vmem:[#allocation20 + $0xbb0] sm:$0xff]
        %v1899 = vld [vmem:[#allocation20 + $0xbb8] sm:$0xff]
        %v1900 = vld [vmem:[#allocation20 + $0xbc0] sm:$0xff]
        %v1901 = vld [vmem:[#allocation20 + $0xbc8] sm:$0xff]
        %v1902 = vld [vmem:[#allocation20 + $0xbd0] sm:$0xff]
        %v1903 = vld [vmem:[#allocation20 + $0xbd8] sm:$0xff]
        %v1904 = vld [vmem:[#allocation20 + $0xbe0] sm:$0xff]
        %v1905 = vld [vmem:[#allocation20 + $0xbe8] sm:$0xff]
        %v1906 = vld [vmem:[#allocation20 + $0xbf0] sm:$0xff]
        %v1907 = vld [vmem:[#allocation20 + $0xbf8] sm:$0xff]
        %1908 = vmatprep.subr.mxu0 %v1845
        %1909 = vmatpush1.msra.mxu0 %v1844
        %1910 = vmatprep.subr.mxu0 %v1847
        %1911 = vmatpush1.msra.mxu0 %v1846
        %1912 = vmatprep.subr.mxu0 %v1849
        %1913 = vmatpush1.msra.mxu0 %v1848
        %1914 = vmatprep.subr.mxu0 %v1851
        %1915 = vmatpush1.msra.mxu0 %v1850
        %1916 = vmatprep.subr.mxu0 %v1853
        %1917 = vmatpush1.msra.mxu0 %v1852
        %1918 = vmatprep.subr.mxu0 %v1855
        %1919 = vmatpush1.msra.mxu0 %v1854
        %1920 = vmatprep.subr.mxu0 %v1857
        %1921 = vmatpush1.msra.mxu0 %v1856
        %1922 = vmatprep.subr.mxu0 %v1859
        %1923 = vmatpush1.msra.mxu0 %v1858
        %1924 = vmatprep.subr.mxu0 %v1861
        %1925 = vmatpush1.msra.mxu0 %v1860
        %1926 = vmatprep.subr.mxu0 %v1863
        %1927 = vmatpush1.msra.mxu0 %v1862
        %1928 = vmatprep.subr.mxu0 %v1865
        %1929 = vmatpush1.msra.mxu0 %v1864
        %1930 = vmatprep.subr.mxu0 %v1867
        %1931 = vmatpush1.msra.mxu0 %v1866
        %1932 = vmatprep.subr.mxu0 %v1869
        %1933 = vmatpush1.msra.mxu0 %v1868
        %1934 = vmatprep.subr.mxu0 %v1871
        %1935 = vmatpush1.msra.mxu0 %v1870
        %1936 = vmatprep.subr.mxu0 %v1873
        %1937 = vmatpush1.msra.mxu0 %v1872
        %1938 = vmatprep.subr.mxu0 %v1875
        %1939 = vmatpush1.msra.mxu0 %v1874
        %1940 = vmatprep.subr.mxu0 %v1877
        %1941 = vmatpush1.msra.mxu0 %v1876
        %1942 = vmatprep.subr.mxu0 %v1879
        %1943 = vmatpush1.msra.mxu0 %v1878
        %1944 = vmatprep.subr.mxu0 %v1881
        %1945 = vmatpush1.msra.mxu0 %v1880
        %1946 = vmatprep.subr.mxu0 %v1883
        %1947 = vmatpush1.msra.mxu0 %v1882
        %1948 = vmatprep.subr.mxu0 %v1885
        %1949 = vmatpush1.msra.mxu0 %v1884
        %1950 = vmatprep.subr.mxu0 %v1887
        %1951 = vmatpush1.msra.mxu0 %v1886
        %1952 = vmatprep.subr.mxu0 %v1889
        %1953 = vmatpush1.msra.mxu0 %v1888
        %1954 = vmatprep.subr.mxu0 %v1891
        %1955 = vmatpush1.msra.mxu0 %v1890
        %1956 = vmatprep.subr.mxu0 %v1893
        %1957 = vmatpush1.msra.mxu0 %v1892
        %1958 = vmatprep.subr.mxu0 %v1895
        %1959 = vmatpush1.msra.mxu0 %v1894
        %1960 = vmatprep.subr.mxu0 %v1897
        %1961 = vmatpush1.msra.mxu0 %v1896
        %1962 = vmatprep.subr.mxu0 %v1899
        %1963 = vmatpush1.msra.mxu0 %v1898
        %1964 = vmatprep.subr.mxu0 %v1901
        %1965 = vmatpush1.msra.mxu0 %v1900
        %1966 = vmatprep.subr.mxu0 %v1903
        %1967 = vmatpush1.msra.mxu0 %v1902
        %1968 = vmatprep.subr.mxu0 %v1905
        %1969 = vmatpush1.msra.mxu0 %v1904
        %1970 = vmatprep.subr.mxu0 %v1907
        %1971 = vmatpush1.msra.mxu0 %v1906
        %1972 = vmatprep.mubr.f32.mxu0 %v818
        %1973 = vmatmul.mubr.f32.gmra.mrb[0].mxu0 %v752
        %v1974 = vpop.f32.mrb[0].mxu0
        %v1975 = vadd.f32 0.0, %v1974
        %v1976 = vpop.f32.mrb[0].mxu0
        %v1977 = vadd.f32 0.0, %v1976
        %1978 = vdwg.mxu0
        %v1979 = vld [vmem:[#allocation5 + $0x28] sm:$0xff]
        %v1981 = vsel %vm1028, %v1979, 0
        %v1984 = vsel %vm1032, %v1975, 0
        %v1987 = vsel %vm1032, %v1977, 0
        %1989 = vmatprep.subr.mxu0 %v1987
        %1990 = vmatpush1.msra.mxu0 %v1984
        %1991 = vmatprep.subr.mxu0 0.0
        %1992 = vmatpush1.msra.mxu0 0.0
        %1993 = vmatprep.subr.mxu0 0.0
        %1994 = vmatpush1.msra.mxu0 0.0
        %1995 = vmatprep.subr.mxu0 0.0
        %1996 = vmatpush1.msra.mxu0 0.0
        %1997 = vmatprep.subr.mxu0 0.0
        %1998 = vmatpush1.msra.mxu0 0.0
        %1999 = vmatprep.subr.mxu0 0.0
        %2000 = vmatpush1.msra.mxu0 0.0
        %2001 = vmatprep.subr.mxu0 0.0
        %2002 = vmatpush1.msra.mxu0 0.0
        %2003 = vmatprep.subr.mxu0 0.0
        %2004 = vmatpush1.msra.mxu0 0.0
        %2005 = vmatprep.subr.mxu0 0.0
        %2006 = vmatpush1.msra.mxu0 0.0
        %2007 = vmatprep.subr.mxu0 0.0
        %2008 = vmatpush1.msra.mxu0 0.0
        %2009 = vmatprep.subr.mxu0 0.0
        %2010 = vmatpush1.msra.mxu0 0.0
        %2011 = vmatprep.subr.mxu0 0.0
        %2012 = vmatpush1.msra.mxu0 0.0
        %2013 = vmatprep.subr.mxu0 0.0
        %2014 = vmatpush1.msra.mxu0 0.0
        %2015 = vmatprep.subr.mxu0 0.0
        %2016 = vmatpush1.msra.mxu0 0.0
        %2017 = vmatprep.subr.mxu0 0.0
        %2018 = vmatpush1.msra.mxu0 0.0
        %2019 = vmatprep.subr.mxu0 0.0
        %2020 = vmatpush1.msra.mxu0 0.0
        %2021 = vmatprep.subr.mxu0 0.0
        %2022 = vmatpush1.msra.mxu0 0.0
        %2023 = vmatprep.subr.mxu0 0.0
        %2024 = vmatpush1.msra.mxu0 0.0
        %2025 = vmatprep.subr.mxu0 0.0
        %2026 = vmatpush1.msra.mxu0 0.0
        %2027 = vmatprep.subr.mxu0 0.0
        %2028 = vmatpush1.msra.mxu0 0.0
        %2029 = vmatprep.subr.mxu0 0.0
        %2030 = vmatpush1.msra.mxu0 0.0
        %2031 = vmatprep.subr.mxu0 0.0
        %2032 = vmatpush1.msra.mxu0 0.0
        %2033 = vmatprep.subr.mxu0 0.0
        %2034 = vmatpush1.msra.mxu0 0.0
        %2035 = vmatprep.subr.mxu0 0.0
        %2036 = vmatpush1.msra.mxu0 0.0
        %2037 = vmatprep.subr.mxu0 0.0
        %2038 = vmatpush1.msra.mxu0 0.0
        %2039 = vmatprep.subr.mxu0 0.0
        %2040 = vmatpush1.msra.mxu0 0.0
        %2041 = vmatprep.subr.mxu0 0.0
        %2042 = vmatpush1.msra.mxu0 0.0
        %2043 = vmatprep.subr.mxu0 0.0
        %2044 = vmatpush1.msra.mxu0 0.0
        %2045 = vmatprep.subr.mxu0 0.0
        %2046 = vmatpush1.msra.mxu0 0.0
        %2047 = vmatprep.subr.mxu0 0.0
        %2048 = vmatpush1.msra.mxu0 0.0
        %2049 = vmatprep.subr.mxu0 0.0
        %2050 = vmatpush1.msra.mxu0 0.0
        %2051 = vmatprep.subr.mxu0 0.0
        %2052 = vmatpush1.msra.mxu0 0.0
        %2053 = vmatprep.mubr.f32.mxu0 0.0
        %2054 = vmatmul.mubr.f32.gmra.mrb[0].mxu0 %v1981
        %v2055 = vpop.f32.mrb[0].mxu0
        %v2056 = vadd.f32 0.0, %v2055
        %v2057 = vpop.f32.mrb[0].mxu0
        %v2058 = vadd.f32 0.0, %v2057
        %2059 = vdwg.mxu0
        %v2060 = vadd.f32 %v1842, %v2056
        %v2061 = vadd.f32 %v1843, %v2058
        %v2062 = vld [vmem:[#allocation20 + $0xc00] sm:$0xff]
        %v2063 = vld [vmem:[#allocation20 + $0xc08] sm:$0xff]
        %v2064 = vld [vmem:[#allocation20 + $0xc10] sm:$0xff]
        %v2065 = vld [vmem:[#allocation20 + $0xc18] sm:$0xff]
        %v2066 = vld [vmem:[#allocation20 + $0xc20] sm:$0xff]
        %v2067 = vld [vmem:[#allocation20 + $0xc28] sm:$0xff]
        %v2068 = vld [vmem:[#allocation20 + $0xc30] sm:$0xff]
        %v2069 = vld [vmem:[#allocation20 + $0xc38] sm:$0xff]
        %v2070 = vld [vmem:[#allocation20 + $0xc40] sm:$0xff]
        %v2071 = vld [vmem:[#allocation20 + $0xc48] sm:$0xff]
        %v2072 = vld [vmem:[#allocation20 + $0xc50] sm:$0xff]
        %v2073 = vld [vmem:[#allocation20 + $0xc58] sm:$0xff]
        %v2074 = vld [vmem:[#allocation20 + $0xc60] sm:$0xff]
        %v2075 = vld [vmem:[#allocation20 + $0xc68] sm:$0xff]
        %v2076 = vld [vmem:[#allocation20 + $0xc70] sm:$0xff]
        %v2077 = vld [vmem:[#allocation20 + $0xc78] sm:$0xff]
        %v2078 = vld [vmem:[#allocation20 + $0xc80] sm:$0xff]
        %v2079 = vld [vmem:[#allocation20 + $0xc88] sm:$0xff]
        %v2080 = vld [vmem:[#allocation20 + $0xc90] sm:$0xff]
        %v2081 = vld [vmem:[#allocation20 + $0xc98] sm:$0xff]
        %v2082 = vld [vmem:[#allocation20 + $0xca0] sm:$0xff]
        %v2083 = vld [vmem:[#allocation20 + $0xca8] sm:$0xff]
        %v2084 = vld [vmem:[#allocation20 + $0xcb0] sm:$0xff]
        %v2085 = vld [vmem:[#allocation20 + $0xcb8] sm:$0xff]
        %v2086 = vld [vmem:[#allocation20 + $0xcc0] sm:$0xff]
        %v2087 = vld [vmem:[#allocation20 + $0xcc8] sm:$0xff]
        %v2088 = vld [vmem:[#allocation20 + $0xcd0] sm:$0xff]
        %v2089 = vld [vmem:[#allocation20 + $0xcd8] sm:$0xff]
        %v2090 = vld [vmem:[#allocation20 + $0xce0] sm:$0xff]
        %v2091 = vld [vmem:[#allocation20 + $0xce8] sm:$0xff]
        %v2092 = vld [vmem:[#allocation20 + $0xcf0] sm:$0xff]
        %v2093 = vld [vmem:[#allocation20 + $0xcf8] sm:$0xff]
        %v2094 = vld [vmem:[#allocation20 + $0xd00] sm:$0xff]
        %v2095 = vld [vmem:[#allocation20 + $0xd08] sm:$0xff]
        %v2096 = vld [vmem:[#allocation20 + $0xd10] sm:$0xff]
        %v2097 = vld [vmem:[#allocation20 + $0xd18] sm:$0xff]
        %v2098 = vld [vmem:[#allocation20 + $0xd20] sm:$0xff]
        %v2099 = vld [vmem:[#allocation20 + $0xd28] sm:$0xff]
        %v2100 = vld [vmem:[#allocation20 + $0xd30] sm:$0xff]
        %v2101 = vld [vmem:[#allocation20 + $0xd38] sm:$0xff]
        %v2102 = vld [vmem:[#allocation20 + $0xd40] sm:$0xff]
        %v2103 = vld [vmem:[#allocation20 + $0xd48] sm:$0xff]
        %v2104 = vld [vmem:[#allocation20 + $0xd50] sm:$0xff]
        %v2105 = vld [vmem:[#allocation20 + $0xd58] sm:$0xff]
        %v2106 = vld [vmem:[#allocation20 + $0xd60] sm:$0xff]
        %v2107 = vld [vmem:[#allocation20 + $0xd68] sm:$0xff]
        %v2108 = vld [vmem:[#allocation20 + $0xd70] sm:$0xff]
        %v2109 = vld [vmem:[#allocation20 + $0xd78] sm:$0xff]
        %v2110 = vld [vmem:[#allocation20 + $0xd80] sm:$0xff]
        %v2111 = vld [vmem:[#allocation20 + $0xd88] sm:$0xff]
        %v2112 = vld [vmem:[#allocation20 + $0xd90] sm:$0xff]
        %v2113 = vld [vmem:[#allocation20 + $0xd98] sm:$0xff]
        %v2114 = vld [vmem:[#allocation20 + $0xda0] sm:$0xff]
        %v2115 = vld [vmem:[#allocation20 + $0xda8] sm:$0xff]
        %v2116 = vld [vmem:[#allocation20 + $0xdb0] sm:$0xff]
        %v2117 = vld [vmem:[#allocation20 + $0xdb8] sm:$0xff]
        %v2118 = vld [vmem:[#allocation20 + $0xdc0] sm:$0xff]
        %v2119 = vld [vmem:[#allocation20 + $0xdc8] sm:$0xff]
        %v2120 = vld [vmem:[#allocation20 + $0xdd0] sm:$0xff]
        %v2121 = vld [vmem:[#allocation20 + $0xdd8] sm:$0xff]
        %v2122 = vld [vmem:[#allocation20 + $0xde0] sm:$0xff]
        %v2123 = vld [vmem:[#allocation20 + $0xde8] sm:$0xff]
        %v2124 = vld [vmem:[#allocation20 + $0xdf0] sm:$0xff]
        %v2125 = vld [vmem:[#allocation20 + $0xdf8] sm:$0xff]
        %2126 = vmatprep.subr.mxu0 %v2063
        %2127 = vmatpush1.msra.mxu0 %v2062
        %2128 = vmatprep.subr.mxu0 %v2065
        %2129 = vmatpush1.msra.mxu0 %v2064
        %2130 = vmatprep.subr.mxu0 %v2067
        %2131 = vmatpush1.msra.mxu0 %v2066
        %2132 = vmatprep.subr.mxu0 %v2069
        %2133 = vmatpush1.msra.mxu0 %v2068
        %2134 = vmatprep.subr.mxu0 %v2071
        %2135 = vmatpush1.msra.mxu0 %v2070
        %2136 = vmatprep.subr.mxu0 %v2073
        %2137 = vmatpush1.msra.mxu0 %v2072
        %2138 = vmatprep.subr.mxu0 %v2075
        %2139 = vmatpush1.msra.mxu0 %v2074
        %2140 = vmatprep.subr.mxu0 %v2077
        %2141 = vmatpush1.msra.mxu0 %v2076
        %2142 = vmatprep.subr.mxu0 %v2079
        %2143 = vmatpush1.msra.mxu0 %v2078
        %2144 = vmatprep.subr.mxu0 %v2081
        %2145 = vmatpush1.msra.mxu0 %v2080
        %2146 = vmatprep.subr.mxu0 %v2083
        %2147 = vmatpush1.msra.mxu0 %v2082
        %2148 = vmatprep.subr.mxu0 %v2085
        %2149 = vmatpush1.msra.mxu0 %v2084
        %2150 = vmatprep.subr.mxu0 %v2087
        %2151 = vmatpush1.msra.mxu0 %v2086
        %2152 = vmatprep.subr.mxu0 %v2089
        %2153 = vmatpush1.msra.mxu0 %v2088
        %2154 = vmatprep.subr.mxu0 %v2091
        %2155 = vmatpush1.msra.mxu0 %v2090
        %2156 = vmatprep.subr.mxu0 %v2093
        %2157 = vmatpush1.msra.mxu0 %v2092
        %2158 = vmatprep.subr.mxu0 %v2095
        %2159 = vmatpush1.msra.mxu0 %v2094
        %2160 = vmatprep.subr.mxu0 %v2097
        %2161 = vmatpush1.msra.mxu0 %v2096
        %2162 = vmatprep.subr.mxu0 %v2099
        %2163 = vmatpush1.msra.mxu0 %v2098
        %2164 = vmatprep.subr.mxu0 %v2101
        %2165 = vmatpush1.msra.mxu0 %v2100
        %2166 = vmatprep.subr.mxu0 %v2103
        %2167 = vmatpush1.msra.mxu0 %v2102
        %2168 = vmatprep.subr.mxu0 %v2105
        %2169 = vmatpush1.msra.mxu0 %v2104
        %2170 = vmatprep.subr.mxu0 %v2107
        %2171 = vmatpush1.msra.mxu0 %v2106
        %2172 = vmatprep.subr.mxu0 %v2109
        %2173 = vmatpush1.msra.mxu0 %v2108
        %2174 = vmatprep.subr.mxu0 %v2111
        %2175 = vmatpush1.msra.mxu0 %v2110
        %2176 = vmatprep.subr.mxu0 %v2113
        %2177 = vmatpush1.msra.mxu0 %v2112
        %2178 = vmatprep.subr.mxu0 %v2115
        %2179 = vmatpush1.msra.mxu0 %v2114
        %2180 = vmatprep.subr.mxu0 %v2117
        %2181 = vmatpush1.msra.mxu0 %v2116
        %2182 = vmatprep.subr.mxu0 %v2119
        %2183 = vmatpush1.msra.mxu0 %v2118
        %2184 = vmatprep.subr.mxu0 %v2121
        %2185 = vmatpush1.msra.mxu0 %v2120
        %2186 = vmatprep.subr.mxu0 %v2123
        %2187 = vmatpush1.msra.mxu0 %v2122
        %2188 = vmatprep.subr.mxu0 %v2125
        %2189 = vmatpush1.msra.mxu0 %v2124
        %2190 = vmatprep.mubr.f32.mxu0 %v818
        %2191 = vmatmul.mubr.f32.gmra.mrb[0].mxu0 %v752
        %v2192 = vpop.f32.mrb[0].mxu0
        %v2193 = vadd.f32 0.0, %v2192
        %v2194 = vpop.f32.mrb[0].mxu0
        %v2195 = vadd.f32 0.0, %v2194
        %2196 = vdwg.mxu0
        %v2197 = vld [vmem:[#allocation5 + $0x30] sm:$0xff]
        %v2199 = vsel %vm1028, %v2197, 0
        %v2202 = vsel %vm1032, %v2193, 0
        %v2205 = vsel %vm1032, %v2195, 0
        %2207 = vmatprep.subr.mxu0 %v2205
        %2208 = vmatpush1.msra.mxu0 %v2202
        %2209 = vmatprep.subr.mxu0 0.0
        %2210 = vmatpush1.msra.mxu0 0.0
        %2211 = vmatprep.subr.mxu0 0.0
        %2212 = vmatpush1.msra.mxu0 0.0
        %2213 = vmatprep.subr.mxu0 0.0
        %2214 = vmatpush1.msra.mxu0 0.0
        %2215 = vmatprep.subr.mxu0 0.0
        %2216 = vmatpush1.msra.mxu0 0.0
        %2217 = vmatprep.subr.mxu0 0.0
        %2218 = vmatpush1.msra.mxu0 0.0
        %2219 = vmatprep.subr.mxu0 0.0
        %2220 = vmatpush1.msra.mxu0 0.0
        %2221 = vmatprep.subr.mxu0 0.0
        %2222 = vmatpush1.msra.mxu0 0.0
        %2223 = vmatprep.subr.mxu0 0.0
        %2224 = vmatpush1.msra.mxu0 0.0
        %2225 = vmatprep.subr.mxu0 0.0
        %2226 = vmatpush1.msra.mxu0 0.0
        %2227 = vmatprep.subr.mxu0 0.0
        %2228 = vmatpush1.msra.mxu0 0.0
        %2229 = vmatprep.subr.mxu0 0.0
        %2230 = vmatpush1.msra.mxu0 0.0
        %2231 = vmatprep.subr.mxu0 0.0
        %2232 = vmatpush1.msra.mxu0 0.0
        %2233 = vmatprep.subr.mxu0 0.0
        %2234 = vmatpush1.msra.mxu0 0.0
        %2235 = vmatprep.subr.mxu0 0.0
        %2236 = vmatpush1.msra.mxu0 0.0
        %2237 = vmatprep.subr.mxu0 0.0
        %2238 = vmatpush1.msra.mxu0 0.0
        %2239 = vmatprep.subr.mxu0 0.0
        %2240 = vmatpush1.msra.mxu0 0.0
        %2241 = vmatprep.subr.mxu0 0.0
        %2242 = vmatpush1.msra.mxu0 0.0
        %2243 = vmatprep.subr.mxu0 0.0
        %2244 = vmatpush1.msra.mxu0 0.0
        %2245 = vmatprep.subr.mxu0 0.0
        %2246 = vmatpush1.msra.mxu0 0.0
        %2247 = vmatprep.subr.mxu0 0.0
        %2248 = vmatpush1.msra.mxu0 0.0
        %2249 = vmatprep.subr.mxu0 0.0
        %2250 = vmatpush1.msra.mxu0 0.0
        %2251 = vmatprep.subr.mxu0 0.0
        %2252 = vmatpush1.msra.mxu0 0.0
        %2253 = vmatprep.subr.mxu0 0.0
        %2254 = vmatpush1.msra.mxu0 0.0
        %2255 = vmatprep.subr.mxu0 0.0
        %2256 = vmatpush1.msra.mxu0 0.0
        %2257 = vmatprep.subr.mxu0 0.0
        %2258 = vmatpush1.msra.mxu0 0.0
        %2259 = vmatprep.subr.mxu0 0.0
        %2260 = vmatpush1.msra.mxu0 0.0
        %2261 = vmatprep.subr.mxu0 0.0
        %2262 = vmatpush1.msra.mxu0 0.0
        %2263 = vmatprep.subr.mxu0 0.0
        %2264 = vmatpush1.msra.mxu0 0.0
        %2265 = vmatprep.subr.mxu0 0.0
        %2266 = vmatpush1.msra.mxu0 0.0
        %2267 = vmatprep.subr.mxu0 0.0
        %2268 = vmatpush1.msra.mxu0 0.0
        %2269 = vmatprep.subr.mxu0 0.0
        %2270 = vmatpush1.msra.mxu0 0.0
        %2271 = vmatprep.mubr.f32.mxu0 0.0
        %2272 = vmatmul.mubr.f32.gmra.mrb[0].mxu0 %v2199
        %v2273 = vpop.f32.mrb[0].mxu0
        %v2274 = vadd.f32 0.0, %v2273
        %v2275 = vpop.f32.mrb[0].mxu0
        %v2276 = vadd.f32 0.0, %v2275
        %2277 = vdwg.mxu0
        %v2278 = vadd.f32 %v2060, %v2274
        %v2279 = vadd.f32 %v2061, %v2276
        %v2280 = vld [vmem:[#allocation20 + $0xe00] sm:$0xff]
        %v2281 = vld [vmem:[#allocation20 + $0xe08] sm:$0xff]
        %v2282 = vld [vmem:[#allocation20 + $0xe10] sm:$0xff]
        %v2283 = vld [vmem:[#allocation20 + $0xe18] sm:$0xff]
        %v2284 = vld [vmem:[#allocation20 + $0xe20] sm:$0xff]
        %v2285 = vld [vmem:[#allocation20 + $0xe28] sm:$0xff]
        %v2286 = vld [vmem:[#allocation20 + $0xe30] sm:$0xff]
        %v2287 = vld [vmem:[#allocation20 + $0xe38] sm:$0xff]
        %v2288 = vld [vmem:[#allocation20 + $0xe40] sm:$0xff]
        %v2289 = vld [vmem:[#allocation20 + $0xe48] sm:$0xff]
        %v2290 = vld [vmem:[#allocation20 + $0xe50] sm:$0xff]
        %v2291 = vld [vmem:[#allocation20 + $0xe58] sm:$0xff]
        %v2292 = vld [vmem:[#allocation20 + $0xe60] sm:$0xff]
        %v2293 = vld [vmem:[#allocation20 + $0xe68] sm:$0xff]
        %v2294 = vld [vmem:[#allocation20 + $0xe70] sm:$0xff]
        %v2295 = vld [vmem:[#allocation20 + $0xe78] sm:$0xff]
        %v2296 = vld [vmem:[#allocation20 + $0xe80] sm:$0xff]
        %v2297 = vld [vmem:[#allocation20 + $0xe88] sm:$0xff]
        %v2298 = vld [vmem:[#allocation20 + $0xe90] sm:$0xff]
        %v2299 = vld [vmem:[#allocation20 + $0xe98] sm:$0xff]
        %v2300 = vld [vmem:[#allocation20 + $0xea0] sm:$0xff]
        %v2301 = vld [vmem:[#allocation20 + $0xea8] sm:$0xff]
        %v2302 = vld [vmem:[#allocation20 + $0xeb0] sm:$0xff]
        %v2303 = vld [vmem:[#allocation20 + $0xeb8] sm:$0xff]
        %v2304 = vld [vmem:[#allocation20 + $0xec0] sm:$0xff]
        %v2305 = vld [vmem:[#allocation20 + $0xec8] sm:$0xff]
        %v2306 = vld [vmem:[#allocation20 + $0xed0] sm:$0xff]
        %v2307 = vld [vmem:[#allocation20 + $0xed8] sm:$0xff]
        %v2308 = vld [vmem:[#allocation20 + $0xee0] sm:$0xff]
        %v2309 = vld [vmem:[#allocation20 + $0xee8] sm:$0xff]
        %v2310 = vld [vmem:[#allocation20 + $0xef0] sm:$0xff]
        %v2311 = vld [vmem:[#allocation20 + $0xef8] sm:$0xff]
        %v2312 = vld [vmem:[#allocation20 + $0xf00] sm:$0xff]
        %v2313 = vld [vmem:[#allocation20 + $0xf08] sm:$0xff]
        %v2314 = vld [vmem:[#allocation20 + $0xf10] sm:$0xff]
        %v2315 = vld [vmem:[#allocation20 + $0xf18] sm:$0xff]
        %v2316 = vld [vmem:[#allocation20 + $0xf20] sm:$0xff]
        %v2317 = vld [vmem:[#allocation20 + $0xf28] sm:$0xff]
        %v2318 = vld [vmem:[#allocation20 + $0xf30] sm:$0xff]
        %v2319 = vld [vmem:[#allocation20 + $0xf38] sm:$0xff]
        %v2320 = vld [vmem:[#allocation20 + $0xf40] sm:$0xff]
        %v2321 = vld [vmem:[#allocation20 + $0xf48] sm:$0xff]
        %v2322 = vld [vmem:[#allocation20 + $0xf50] sm:$0xff]
        %v2323 = vld [vmem:[#allocation20 + $0xf58] sm:$0xff]
        %v2324 = vld [vmem:[#allocation20 + $0xf60] sm:$0xff]
        %v2325 = vld [vmem:[#allocation20 + $0xf68] sm:$0xff]
        %v2326 = vld [vmem:[#allocation20 + $0xf70] sm:$0xff]
        %v2327 = vld [vmem:[#allocation20 + $0xf78] sm:$0xff]
        %v2328 = vld [vmem:[#allocation20 + $0xf80] sm:$0xff]
        %v2329 = vld [vmem:[#allocation20 + $0xf88] sm:$0xff]
        %v2330 = vld [vmem:[#allocation20 + $0xf90] sm:$0xff]
        %v2331 = vld [vmem:[#allocation20 + $0xf98] sm:$0xff]
        %v2332 = vld [vmem:[#allocation20 + $0xfa0] sm:$0xff]
        %v2333 = vld [vmem:[#allocation20 + $0xfa8] sm:$0xff]
        %v2334 = vld [vmem:[#allocation20 + $0xfb0] sm:$0xff]
        %v2335 = vld [vmem:[#allocation20 + $0xfb8] sm:$0xff]
        %v2336 = vld [vmem:[#allocation20 + $0xfc0] sm:$0xff]
        %v2337 = vld [vmem:[#allocation20 + $0xfc8] sm:$0xff]
        %v2338 = vld [vmem:[#allocation20 + $0xfd0] sm:$0xff]
        %v2339 = vld [vmem:[#allocation20 + $0xfd8] sm:$0xff]
        %v2340 = vld [vmem:[#allocation20 + $0xfe0] sm:$0xff]
        %v2341 = vld [vmem:[#allocation20 + $0xfe8] sm:$0xff]
        %v2342 = vld [vmem:[#allocation20 + $0xff0] sm:$0xff]
        %v2343 = vld [vmem:[#allocation20 + $0xff8] sm:$0xff]
        %2344 = vmatprep.subr.mxu0 %v2281
        %2345 = vmatpush1.msra.mxu0 %v2280
        %2346 = vmatprep.subr.mxu0 %v2283
        %2347 = vmatpush1.msra.mxu0 %v2282
        %2348 = vmatprep.subr.mxu0 %v2285
        %2349 = vmatpush1.msra.mxu0 %v2284
        %2350 = vmatprep.subr.mxu0 %v2287
        %2351 = vmatpush1.msra.mxu0 %v2286
        %2352 = vmatprep.subr.mxu0 %v2289
        %2353 = vmatpush1.msra.mxu0 %v2288
        %2354 = vmatprep.subr.mxu0 %v2291
        %2355 = vmatpush1.msra.mxu0 %v2290
        %2356 = vmatprep.subr.mxu0 %v2293
        %2357 = vmatpush1.msra.mxu0 %v2292
        %2358 = vmatprep.subr.mxu0 %v2295
        %2359 = vmatpush1.msra.mxu0 %v2294
        %2360 = vmatprep.subr.mxu0 %v2297
        %2361 = vmatpush1.msra.mxu0 %v2296
        %2362 = vmatprep.subr.mxu0 %v2299
        %2363 = vmatpush1.msra.mxu0 %v2298
        %2364 = vmatprep.subr.mxu0 %v2301
        %2365 = vmatpush1.msra.mxu0 %v2300
        %2366 = vmatprep.subr.mxu0 %v2303
        %2367 = vmatpush1.msra.mxu0 %v2302
        %2368 = vmatprep.subr.mxu0 %v2305
        %2369 = vmatpush1.msra.mxu0 %v2304
        %2370 = vmatprep.subr.mxu0 %v2307
        %2371 = vmatpush1.msra.mxu0 %v2306
        %2372 = vmatprep.subr.mxu0 %v2309
        %2373 = vmatpush1.msra.mxu0 %v2308
        %2374 = vmatprep.subr.mxu0 %v2311
        %2375 = vmatpush1.msra.mxu0 %v2310
        %2376 = vmatprep.subr.mxu0 %v2313
        %2377 = vmatpush1.msra.mxu0 %v2312
        %2378 = vmatprep.subr.mxu0 %v2315
        %2379 = vmatpush1.msra.mxu0 %v2314
        %2380 = vmatprep.subr.mxu0 %v2317
        %2381 = vmatpush1.msra.mxu0 %v2316
        %2382 = vmatprep.subr.mxu0 %v2319
        %2383 = vmatpush1.msra.mxu0 %v2318
        %2384 = vmatprep.subr.mxu0 %v2321
        %2385 = vmatpush1.msra.mxu0 %v2320
        %2386 = vmatprep.subr.mxu0 %v2323
        %2387 = vmatpush1.msra.mxu0 %v2322
        %2388 = vmatprep.subr.mxu0 %v2325
        %2389 = vmatpush1.msra.mxu0 %v2324
        %2390 = vmatprep.subr.mxu0 %v2327
        %2391 = vmatpush1.msra.mxu0 %v2326
        %2392 = vmatprep.subr.mxu0 %v2329
        %2393 = vmatpush1.msra.mxu0 %v2328
        %2394 = vmatprep.subr.mxu0 %v2331
        %2395 = vmatpush1.msra.mxu0 %v2330
        %2396 = vmatprep.subr.mxu0 %v2333
        %2397 = vmatpush1.msra.mxu0 %v2332
        %2398 = vmatprep.subr.mxu0 %v2335
        %2399 = vmatpush1.msra.mxu0 %v2334
        %2400 = vmatprep.subr.mxu0 %v2337
        %2401 = vmatpush1.msra.mxu0 %v2336
        %2402 = vmatprep.subr.mxu0 %v2339
        %2403 = vmatpush1.msra.mxu0 %v2338
        %2404 = vmatprep.subr.mxu0 %v2341
        %2405 = vmatpush1.msra.mxu0 %v2340
        %2406 = vmatprep.subr.mxu0 %v2343
        %2407 = vmatpush1.msra.mxu0 %v2342
        %2408 = vmatprep.mubr.f32.mxu0 %v818
        %2409 = vmatmul.mubr.f32.gmra.mrb[0].mxu0 %v752
        %v2410 = vpop.f32.mrb[0].mxu0
        %v2411 = vadd.f32 0.0, %v2410
        %v2412 = vpop.f32.mrb[0].mxu0
        %v2413 = vadd.f32 0.0, %v2412
        %2414 = vdwg.mxu0
        %v2415 = vld [vmem:[#allocation5 + $0x38] sm:$0xff]
        %v2417 = vsel %vm1028, %v2415, 0
        %v2420 = vsel %vm1032, %v2411, 0
        %v2423 = vsel %vm1032, %v2413, 0
        %2425 = vmatprep.subr.mxu0 %v2423
        %2426 = vmatpush1.msra.mxu0 %v2420
        %2427 = vmatprep.subr.mxu0 0.0
        %2428 = vmatpush1.msra.mxu0 0.0
        %2429 = vmatprep.subr.mxu0 0.0
        %2430 = vmatpush1.msra.mxu0 0.0
        %2431 = vmatprep.subr.mxu0 0.0
        %2432 = vmatpush1.msra.mxu0 0.0
        %2433 = vmatprep.subr.mxu0 0.0
        %2434 = vmatpush1.msra.mxu0 0.0
        %2435 = vmatprep.subr.mxu0 0.0
        %2436 = vmatpush1.msra.mxu0 0.0
        %2437 = vmatprep.subr.mxu0 0.0
        %2438 = vmatpush1.msra.mxu0 0.0
        %2439 = vmatprep.subr.mxu0 0.0
        %2440 = vmatpush1.msra.mxu0 0.0
        %2441 = vmatprep.subr.mxu0 0.0
        %2442 = vmatpush1.msra.mxu0 0.0
        %2443 = vmatprep.subr.mxu0 0.0
        %2444 = vmatpush1.msra.mxu0 0.0
        %2445 = vmatprep.subr.mxu0 0.0
        %2446 = vmatpush1.msra.mxu0 0.0
        %2447 = vmatprep.subr.mxu0 0.0
        %2448 = vmatpush1.msra.mxu0 0.0
        %2449 = vmatprep.subr.mxu0 0.0
        %2450 = vmatpush1.msra.mxu0 0.0
        %2451 = vmatprep.subr.mxu0 0.0
        %2452 = vmatpush1.msra.mxu0 0.0
        %2453 = vmatprep.subr.mxu0 0.0
        %2454 = vmatpush1.msra.mxu0 0.0
        %2455 = vmatprep.subr.mxu0 0.0
        %2456 = vmatpush1.msra.mxu0 0.0
        %2457 = vmatprep.subr.mxu0 0.0
        %2458 = vmatpush1.msra.mxu0 0.0
        %2459 = vmatprep.subr.mxu0 0.0
        %2460 = vmatpush1.msra.mxu0 0.0
        %2461 = vmatprep.subr.mxu0 0.0
        %2462 = vmatpush1.msra.mxu0 0.0
        %2463 = vmatprep.subr.mxu0 0.0
        %2464 = vmatpush1.msra.mxu0 0.0
        %2465 = vmatprep.subr.mxu0 0.0
        %2466 = vmatpush1.msra.mxu0 0.0
        %2467 = vmatprep.subr.mxu0 0.0
        %2468 = vmatpush1.msra.mxu0 0.0
        %2469 = vmatprep.subr.mxu0 0.0
        %2470 = vmatpush1.msra.mxu0 0.0
        %2471 = vmatprep.subr.mxu0 0.0
        %2472 = vmatpush1.msra.mxu0 0.0
        %2473 = vmatprep.subr.mxu0 0.0
        %2474 = vmatpush1.msra.mxu0 0.0
        %2475 = vmatprep.subr.mxu0 0.0
        %2476 = vmatpush1.msra.mxu0 0.0
        %2477 = vmatprep.subr.mxu0 0.0
        %2478 = vmatpush1.msra.mxu0 0.0
        %2479 = vmatprep.subr.mxu0 0.0
        %2480 = vmatpush1.msra.mxu0 0.0
        %2481 = vmatprep.subr.mxu0 0.0
        %2482 = vmatpush1.msra.mxu0 0.0
        %2483 = vmatprep.subr.mxu0 0.0
        %2484 = vmatpush1.msra.mxu0 0.0
        %2485 = vmatprep.subr.mxu0 0.0
        %2486 = vmatpush1.msra.mxu0 0.0
        %2487 = vmatprep.subr.mxu0 0.0
        %2488 = vmatpush1.msra.mxu0 0.0
        %2489 = vmatprep.mubr.f32.mxu0 0.0
        %2490 = vmatmul.mubr.f32.gmra.mrb[0].mxu0 %v2417
        %v2491 = vpop.f32.mrb[0].mxu0
        %v2492 = vadd.f32 0.0, %v2491
        %v2493 = vpop.f32.mrb[0].mxu0
        %v2494 = vadd.f32 0.0, %v2493
        %2495 = vdwg.mxu0
        %v2496 = vadd.f32 %v2278, %v2492
        %v2497 = vadd.f32 %v2279, %v2494
        %v2498 = vld [vmem:[#allocation20 + $0x1000] sm:$0xff]
        %v2499 = vld [vmem:[#allocation20 + $0x1008] sm:$0xff]
        %v2500 = vld [vmem:[#allocation20 + $0x1010] sm:$0xff]
        %v2501 = vld [vmem:[#allocation20 + $0x1018] sm:$0xff]
        %v2502 = vld [vmem:[#allocation20 + $0x1020] sm:$0xff]
        %v2503 = vld [vmem:[#allocation20 + $0x1028] sm:$0xff]
        %v2504 = vld [vmem:[#allocation20 + $0x1030] sm:$0xff]
        %v2505 = vld [vmem:[#allocation20 + $0x1038] sm:$0xff]
        %v2506 = vld [vmem:[#allocation20 + $0x1040] sm:$0xff]
        %v2507 = vld [vmem:[#allocation20 + $0x1048] sm:$0xff]
        %v2508 = vld [vmem:[#allocation20 + $0x1050] sm:$0xff]
        %v2509 = vld [vmem:[#allocation20 + $0x1058] sm:$0xff]
        %v2510 = vld [vmem:[#allocation20 + $0x1060] sm:$0xff]
        %v2511 = vld [vmem:[#allocation20 + $0x1068] sm:$0xff]
        %v2512 = vld [vmem:[#allocation20 + $0x1070] sm:$0xff]
        %v2513 = vld [vmem:[#allocation20 + $0x1078] sm:$0xff]
        %v2514 = vld [vmem:[#allocation20 + $0x1080] sm:$0xff]
        %v2515 = vld [vmem:[#allocation20 + $0x1088] sm:$0xff]
        %v2516 = vld [vmem:[#allocation20 + $0x1090] sm:$0xff]
        %v2517 = vld [vmem:[#allocation20 + $0x1098] sm:$0xff]
        %v2518 = vld [vmem:[#allocation20 + $0x10a0] sm:$0xff]
        %v2519 = vld [vmem:[#allocation20 + $0x10a8] sm:$0xff]
        %v2520 = vld [vmem:[#allocation20 + $0x10b0] sm:$0xff]
        %v2521 = vld [vmem:[#allocation20 + $0x10b8] sm:$0xff]
        %v2522 = vld [vmem:[#allocation20 + $0x10c0] sm:$0xff]
        %v2523 = vld [vmem:[#allocation20 + $0x10c8] sm:$0xff]
        %v2524 = vld [vmem:[#allocation20 + $0x10d0] sm:$0xff]
        %v2525 = vld [vmem:[#allocation20 + $0x10d8] sm:$0xff]
        %v2526 = vld [vmem:[#allocation20 + $0x10e0] sm:$0xff]
        %v2527 = vld [vmem:[#allocation20 + $0x10e8] sm:$0xff]
        %v2528 = vld [vmem:[#allocation20 + $0x10f0] sm:$0xff]
        %v2529 = vld [vmem:[#allocation20 + $0x10f8] sm:$0xff]
        %v2530 = vld [vmem:[#allocation20 + $0x1100] sm:$0xff]
        %v2531 = vld [vmem:[#allocation20 + $0x1108] sm:$0xff]
        %v2532 = vld [vmem:[#allocation20 + $0x1110] sm:$0xff]
        %v2533 = vld [vmem:[#allocation20 + $0x1118] sm:$0xff]
        %v2534 = vld [vmem:[#allocation20 + $0x1120] sm:$0xff]
        %v2535 = vld [vmem:[#allocation20 + $0x1128] sm:$0xff]
        %v2536 = vld [vmem:[#allocation20 + $0x1130] sm:$0xff]
        %v2537 = vld [vmem:[#allocation20 + $0x1138] sm:$0xff]
        %v2538 = vld [vmem:[#allocation20 + $0x1140] sm:$0xff]
        %v2539 = vld [vmem:[#allocation20 + $0x1148] sm:$0xff]
        %v2540 = vld [vmem:[#allocation20 + $0x1150] sm:$0xff]
        %v2541 = vld [vmem:[#allocation20 + $0x1158] sm:$0xff]
        %v2542 = vld [vmem:[#allocation20 + $0x1160] sm:$0xff]
        %v2543 = vld [vmem:[#allocation20 + $0x1168] sm:$0xff]
        %v2544 = vld [vmem:[#allocation20 + $0x1170] sm:$0xff]
        %v2545 = vld [vmem:[#allocation20 + $0x1178] sm:$0xff]
        %v2546 = vld [vmem:[#allocation20 + $0x1180] sm:$0xff]
        %v2547 = vld [vmem:[#allocation20 + $0x1188] sm:$0xff]
        %v2548 = vld [vmem:[#allocation20 + $0x1190] sm:$0xff]
        %v2549 = vld [vmem:[#allocation20 + $0x1198] sm:$0xff]
        %v2550 = vld [vmem:[#allocation20 + $0x11a0] sm:$0xff]
        %v2551 = vld [vmem:[#allocation20 + $0x11a8] sm:$0xff]
        %v2552 = vld [vmem:[#allocation20 + $0x11b0] sm:$0xff]
        %v2553 = vld [vmem:[#allocation20 + $0x11b8] sm:$0xff]
        %v2554 = vld [vmem:[#allocation20 + $0x11c0] sm:$0xff]
        %v2555 = vld [vmem:[#allocation20 + $0x11c8] sm:$0xff]
        %v2556 = vld [vmem:[#allocation20 + $0x11d0] sm:$0xff]
        %v2557 = vld [vmem:[#allocation20 + $0x11d8] sm:$0xff]
        %v2558 = vld [vmem:[#allocation20 + $0x11e0] sm:$0xff]
        %v2559 = vld [vmem:[#allocation20 + $0x11e8] sm:$0xff]
        %v2560 = vld [vmem:[#allocation20 + $0x11f0] sm:$0xff]
        %v2561 = vld [vmem:[#allocation20 + $0x11f8] sm:$0xff]
        %2562 = vmatprep.subr.mxu0 %v2499
        %2563 = vmatpush1.msra.mxu0 %v2498
        %2564 = vmatprep.subr.mxu0 %v2501
        %2565 = vmatpush1.msra.mxu0 %v2500
        %2566 = vmatprep.subr.mxu0 %v2503
        %2567 = vmatpush1.msra.mxu0 %v2502
        %2568 = vmatprep.subr.mxu0 %v2505
        %2569 = vmatpush1.msra.mxu0 %v2504
        %2570 = vmatprep.subr.mxu0 %v2507
        %2571 = vmatpush1.msra.mxu0 %v2506
        %2572 = vmatprep.subr.mxu0 %v2509
        %2573 = vmatpush1.msra.mxu0 %v2508
        %2574 = vmatprep.subr.mxu0 %v2511
        %2575 = vmatpush1.msra.mxu0 %v2510
        %2576 = vmatprep.subr.mxu0 %v2513
        %2577 = vmatpush1.msra.mxu0 %v2512
        %2578 = vmatprep.subr.mxu0 %v2515
        %2579 = vmatpush1.msra.mxu0 %v2514
        %2580 = vmatprep.subr.mxu0 %v2517
        %2581 = vmatpush1.msra.mxu0 %v2516
        %2582 = vmatprep.subr.mxu0 %v2519
        %2583 = vmatpush1.msra.mxu0 %v2518
        %2584 = vmatprep.subr.mxu0 %v2521
        %2585 = vmatpush1.msra.mxu0 %v2520
        %2586 = vmatprep.subr.mxu0 %v2523
        %2587 = vmatpush1.msra.mxu0 %v2522
        %2588 = vmatprep.subr.mxu0 %v2525
        %2589 = vmatpush1.msra.mxu0 %v2524
        %2590 = vmatprep.subr.mxu0 %v2527
        %2591 = vmatpush1.msra.mxu0 %v2526
        %2592 = vmatprep.subr.mxu0 %v2529
        %2593 = vmatpush1.msra.mxu0 %v2528
        %2594 = vmatprep.subr.mxu0 %v2531
        %2595 = vmatpush1.msra.mxu0 %v2530
        %2596 = vmatprep.subr.mxu0 %v2533
        %2597 = vmatpush1.msra.mxu0 %v2532
        %2598 = vmatprep.subr.mxu0 %v2535
        %2599 = vmatpush1.msra.mxu0 %v2534
        %2600 = vmatprep.subr.mxu0 %v2537
        %2601 = vmatpush1.msra.mxu0 %v2536
        %2602 = vmatprep.subr.mxu0 %v2539
        %2603 = vmatpush1.msra.mxu0 %v2538
        %2604 = vmatprep.subr.mxu0 %v2541
        %2605 = vmatpush1.msra.mxu0 %v2540
        %2606 = vmatprep.subr.mxu0 %v2543
        %2607 = vmatpush1.msra.mxu0 %v2542
        %2608 = vmatprep.subr.mxu0 %v2545
        %2609 = vmatpush1.msra.mxu0 %v2544
        %2610 = vmatprep.subr.mxu0 %v2547
        %2611 = vmatpush1.msra.mxu0 %v2546
        %2612 = vmatprep.subr.mxu0 %v2549
        %2613 = vmatpush1.msra.mxu0 %v2548
        %2614 = vmatprep.subr.mxu0 %v2551
        %2615 = vmatpush1.msra.mxu0 %v2550
        %2616 = vmatprep.subr.mxu0 %v2553
        %2617 = vmatpush1.msra.mxu0 %v2552
        %2618 = vmatprep.subr.mxu0 %v2555
        %2619 = vmatpush1.msra.mxu0 %v2554
        %2620 = vmatprep.subr.mxu0 %v2557
        %2621 = vmatpush1.msra.mxu0 %v2556
        %2622 = vmatprep.subr.mxu0 %v2559
        %2623 = vmatpush1.msra.mxu0 %v2558
        %2624 = vmatprep.subr.mxu0 %v2561
        %2625 = vmatpush1.msra.mxu0 %v2560
        %2626 = vmatprep.mubr.f32.mxu0 %v818
        %2627 = vmatmul.mubr.f32.gmra.mrb[0].mxu0 %v752
        %v2628 = vpop.f32.mrb[0].mxu0
        %v2629 = vadd.f32 0.0, %v2628
        %v2630 = vpop.f32.mrb[0].mxu0
        %v2631 = vadd.f32 0.0, %v2630
        %2632 = vdwg.mxu0
        %v2633 = vld [vmem:[#allocation5 + $0x40] sm:$0xff]
        %v2635 = vsel %vm1028, %v2633, 0
        %v2638 = vsel %vm1032, %v2629, 0
        %v2641 = vsel %vm1032, %v2631, 0
        %2643 = vmatprep.subr.mxu0 %v2641
        %2644 = vmatpush1.msra.mxu0 %v2638
        %2645 = vmatprep.subr.mxu0 0.0
        %2646 = vmatpush1.msra.mxu0 0.0
        %2647 = vmatprep.subr.mxu0 0.0
        %2648 = vmatpush1.msra.mxu0 0.0
        %2649 = vmatprep.subr.mxu0 0.0
        %2650 = vmatpush1.msra.mxu0 0.0
        %2651 = vmatprep.subr.mxu0 0.0
        %2652 = vmatpush1.msra.mxu0 0.0
        %2653 = vmatprep.subr.mxu0 0.0
        %2654 = vmatpush1.msra.mxu0 0.0
        %2655 = vmatprep.subr.mxu0 0.0
        %2656 = vmatpush1.msra.mxu0 0.0
        %2657 = vmatprep.subr.mxu0 0.0
        %2658 = vmatpush1.msra.mxu0 0.0
        %2659 = vmatprep.subr.mxu0 0.0
        %2660 = vmatpush1.msra.mxu0 0.0
        %2661 = vmatprep.subr.mxu0 0.0
        %2662 = vmatpush1.msra.mxu0 0.0
        %2663 = vmatprep.subr.mxu0 0.0
        %2664 = vmatpush1.msra.mxu0 0.0
        %2665 = vmatprep.subr.mxu0 0.0
        %2666 = vmatpush1.msra.mxu0 0.0
        %2667 = vmatprep.subr.mxu0 0.0
        %2668 = vmatpush1.msra.mxu0 0.0
        %2669 = vmatprep.subr.mxu0 0.0
        %2670 = vmatpush1.msra.mxu0 0.0
        %2671 = vmatprep.subr.mxu0 0.0
        %2672 = vmatpush1.msra.mxu0 0.0
        %2673 = vmatprep.subr.mxu0 0.0
        %2674 = vmatpush1.msra.mxu0 0.0
        %2675 = vmatprep.subr.mxu0 0.0
        %2676 = vmatpush1.msra.mxu0 0.0
        %2677 = vmatprep.subr.mxu0 0.0
        %2678 = vmatpush1.msra.mxu0 0.0
        %2679 = vmatprep.subr.mxu0 0.0
        %2680 = vmatpush1.msra.mxu0 0.0
        %2681 = vmatprep.subr.mxu0 0.0
        %2682 = vmatpush1.msra.mxu0 0.0
        %2683 = vmatprep.subr.mxu0 0.0
        %2684 = vmatpush1.msra.mxu0 0.0
        %2685 = vmatprep.subr.mxu0 0.0
        %2686 = vmatpush1.msra.mxu0 0.0
        %2687 = vmatprep.subr.mxu0 0.0
        %2688 = vmatpush1.msra.mxu0 0.0
        %2689 = vmatprep.subr.mxu0 0.0
        %2690 = vmatpush1.msra.mxu0 0.0
        %2691 = vmatprep.subr.mxu0 0.0
        %2692 = vmatpush1.msra.mxu0 0.0
        %2693 = vmatprep.subr.mxu0 0.0
        %2694 = vmatpush1.msra.mxu0 0.0
        %2695 = vmatprep.subr.mxu0 0.0
        %2696 = vmatpush1.msra.mxu0 0.0
        %2697 = vmatprep.subr.mxu0 0.0
        %2698 = vmatpush1.msra.mxu0 0.0
        %2699 = vmatprep.subr.mxu0 0.0
        %2700 = vmatpush1.msra.mxu0 0.0
        %2701 = vmatprep.subr.mxu0 0.0
        %2702 = vmatpush1.msra.mxu0 0.0
        %2703 = vmatprep.subr.mxu0 0.0
        %2704 = vmatpush1.msra.mxu0 0.0
        %2705 = vmatprep.subr.mxu0 0.0
        %2706 = vmatpush1.msra.mxu0 0.0
        %2707 = vmatprep.mubr.f32.mxu0 0.0
        %2708 = vmatmul.mubr.f32.gmra.mrb[0].mxu0 %v2635
        %v2709 = vpop.f32.mrb[0].mxu0
        %v2710 = vadd.f32 0.0, %v2709
        %v2711 = vpop.f32.mrb[0].mxu0
        %v2712 = vadd.f32 0.0, %v2711
        %2713 = vdwg.mxu0
        %v2714 = vadd.f32 %v2496, %v2710
        %v2715 = vadd.f32 %v2497, %v2712
        %v2716 = vld [vmem:[#allocation7] sm:$0xff]
        %2718 = vset.pattern.permute.xlu0 0
        %2719 = vperm.xlu0 %2718, %v2716
        %v2720 = vpop.permute.xlu0 %2719
        %v2722 = vadd.f32 %v2714, %v2720
        %v2723 = vadd.f32 %v2715, %v2720
        %v2724 = vmax.f32 %v2722, 0.0
        %v2725 = vmax.f32 %v2723, 0.0
        %2726 = vmatprep.subr.mxu0 %v754
        %2727 = vmatpush1.msra.mxu0 %v753
        %2728 = vmatprep.subr.mxu0 %v756
        %2729 = vmatpush1.msra.mxu0 %v755
        %2730 = vmatprep.subr.mxu0 %v758
        %2731 = vmatpush1.msra.mxu0 %v757
        %2732 = vmatprep.subr.mxu0 %v760
        %2733 = vmatpush1.msra.mxu0 %v759
        %2734 = vmatprep.subr.mxu0 %v762
        %2735 = vmatpush1.msra.mxu0 %v761
        %2736 = vmatprep.subr.mxu0 %v764
        %2737 = vmatpush1.msra.mxu0 %v763
        %2738 = vmatprep.subr.mxu0 %v766
        %2739 = vmatpush1.msra.mxu0 %v765
        %2740 = vmatprep.subr.mxu0 %v768
        %2741 = vmatpush1.msra.mxu0 %v767
        %2742 = vmatprep.subr.mxu0 %v770
        %2743 = vmatpush1.msra.mxu0 %v769
        %2744 = vmatprep.subr.mxu0 %v772
        %2745 = vmatpush1.msra.mxu0 %v771
        %2746 = vmatprep.subr.mxu0 %v774
        %2747 = vmatpush1.msra.mxu0 %v773
        %2748 = vmatprep.subr.mxu0 %v776
        %2749 = vmatpush1.msra.mxu0 %v775
        %2750 = vmatprep.subr.mxu0 %v778
        %2751 = vmatpush1.msra.mxu0 %v777
        %2752 = vmatprep.subr.mxu0 %v780
        %2753 = vmatpush1.msra.mxu0 %v779
        %2754 = vmatprep.subr.mxu0 %v782
        %2755 = vmatpush1.msra.mxu0 %v781
        %2756 = vmatprep.subr.mxu0 %v784
        %2757 = vmatpush1.msra.mxu0 %v783
        %2758 = vmatprep.subr.mxu0 %v786
        %2759 = vmatpush1.msra.mxu0 %v785
        %2760 = vmatprep.subr.mxu0 %v788
        %2761 = vmatpush1.msra.mxu0 %v787
        %2762 = vmatprep.subr.mxu0 %v790
        %2763 = vmatpush1.msra.mxu0 %v789
        %2764 = vmatprep.subr.mxu0 %v792
        %2765 = vmatpush1.msra.mxu0 %v791
        %2766 = vmatprep.subr.mxu0 %v794
        %2767 = vmatpush1.msra.mxu0 %v793
        %2768 = vmatprep.subr.mxu0 %v796
        %2769 = vmatpush1.msra.mxu0 %v795
        %2770 = vmatprep.subr.mxu0 %v798
        %2771 = vmatpush1.msra.mxu0 %v797
        %2772 = vmatprep.subr.mxu0 %v800
        %2773 = vmatpush1.msra.mxu0 %v799
        %2774 = vmatprep.subr.mxu0 %v802
        %2775 = vmatpush1.msra.mxu0 %v801
        %2776 = vmatprep.subr.mxu0 %v804
        %2777 = vmatpush1.msra.mxu0 %v803
        %2778 = vmatprep.subr.mxu0 %v806
        %2779 = vmatpush1.msra.mxu0 %v805
        %2780 = vmatprep.subr.mxu0 %v808
        %2781 = vmatpush1.msra.mxu0 %v807
        %2782 = vmatprep.subr.mxu0 %v810
        %2783 = vmatpush1.msra.mxu0 %v809
        %2784 = vmatprep.subr.mxu0 %v812
        %2785 = vmatpush1.msra.mxu0 %v811
        %2786 = vmatprep.subr.mxu0 %v814
        %2787 = vmatpush1.msra.mxu0 %v813
        %2788 = vmatprep.subr.mxu0 %v816
        %2789 = vmatpush1.msra.mxu0 %v815
        %2790 = vmatprep.mubr.f32.mxu0 %v2725
        %2791 = vmatmul.mubr.f32.gmra.mrb[0].mxu0 %v2724
        %v2792 = vpop.f32.mrb[0].mxu0
        %v2793 = vadd.f32 0.0, %v2792
        %v2794 = vpop.f32.mrb[0].mxu0
        %v2795 = vadd.f32 0.0, %v2794
        %2796 = vdwg.mxu0
        %v2797 = vld [vmem:[#allocation8] sm:$0xff]
        %2798 = vmatprep.subr.mxu0 %v893
        %2799 = vmatpush1.msra.mxu0 %v892
        %2800 = vmatprep.subr.mxu0 %v895
        %2801 = vmatpush1.msra.mxu0 %v894
        %2802 = vmatprep.subr.mxu0 %v897
        %2803 = vmatpush1.msra.mxu0 %v896
        %2804 = vmatprep.subr.mxu0 %v899
        %2805 = vmatpush1.msra.mxu0 %v898
        %2806 = vmatprep.subr.mxu0 %v901
        %2807 = vmatpush1.msra.mxu0 %v900
        %2808 = vmatprep.subr.mxu0 %v903
        %2809 = vmatpush1.msra.mxu0 %v902
        %2810 = vmatprep.subr.mxu0 %v905
        %2811 = vmatpush1.msra.mxu0 %v904
        %2812 = vmatprep.subr.mxu0 %v907
        %2813 = vmatpush1.msra.mxu0 %v906
        %2814 = vmatprep.subr.mxu0 %v909
        %2815 = vmatpush1.msra.mxu0 %v908
        %2816 = vmatprep.subr.mxu0 %v911
        %2817 = vmatpush1.msra.mxu0 %v910
        %2818 = vmatprep.subr.mxu0 %v913
        %2819 = vmatpush1.msra.mxu0 %v912
        %2820 = vmatprep.subr.mxu0 %v915
        %2821 = vmatpush1.msra.mxu0 %v914
        %2822 = vmatprep.subr.mxu0 %v917
        %2823 = vmatpush1.msra.mxu0 %v916
        %2824 = vmatprep.subr.mxu0 %v919
        %2825 = vmatpush1.msra.mxu0 %v918
        %2826 = vmatprep.subr.mxu0 %v921
        %2827 = vmatpush1.msra.mxu0 %v920
        %2828 = vmatprep.subr.mxu0 %v923
        %2829 = vmatpush1.msra.mxu0 %v922
        %2830 = vmatprep.subr.mxu0 %v925
        %2831 = vmatpush1.msra.mxu0 %v924
        %2832 = vmatprep.subr.mxu0 %v927
        %2833 = vmatpush1.msra.mxu0 %v926
        %2834 = vmatprep.subr.mxu0 %v929
        %2835 = vmatpush1.msra.mxu0 %v928
        %2836 = vmatprep.subr.mxu0 %v931
        %2837 = vmatpush1.msra.mxu0 %v930
        %2838 = vmatprep.subr.mxu0 %v933
        %2839 = vmatpush1.msra.mxu0 %v932
        %2840 = vmatprep.subr.mxu0 %v935
        %2841 = vmatpush1.msra.mxu0 %v934
        %2842 = vmatprep.subr.mxu0 %v937
        %2843 = vmatpush1.msra.mxu0 %v936
        %2844 = vmatprep.subr.mxu0 %v939
        %2845 = vmatpush1.msra.mxu0 %v938
        %2846 = vmatprep.subr.mxu0 %v941
        %2847 = vmatpush1.msra.mxu0 %v940
        %2848 = vmatprep.subr.mxu0 %v943
        %2849 = vmatpush1.msra.mxu0 %v942
        %2850 = vmatprep.subr.mxu0 %v945
        %2851 = vmatpush1.msra.mxu0 %v944
        %2852 = vmatprep.subr.mxu0 %v947
        %2853 = vmatpush1.msra.mxu0 %v946
        %2854 = vmatprep.subr.mxu0 %v949
        %2855 = vmatpush1.msra.mxu0 %v948
        %2856 = vmatprep.subr.mxu0 %v951
        %2857 = vmatpush1.msra.mxu0 %v950
        %2858 = vmatprep.subr.mxu0 %v953
        %2859 = vmatpush1.msra.mxu0 %v952
        %2860 = vmatprep.subr.mxu0 %v955
        %2861 = vmatpush1.msra.mxu0 %v954
        %2862 = vmatprep.mubr.f32.mxu0 %v2725
        %2863 = vmatmul.mubr.f32.gmra.mrb[0].mxu0 %v2724
        %v2864 = vpop.f32.mrb[0].mxu0
        %v2865 = vadd.f32 0.0, %v2864
        %v2866 = vpop.f32.mrb[0].mxu0
        %v2867 = vadd.f32 0.0, %v2866
        %2868 = vdwg.mxu0
        %v2869 = vld [vmem:[#allocation8 + $0x8] sm:$0xff]
        %vm2870 = vcmask 64512
        %v2872 = vsel %vm2870, %v2869, 0
        %2874 = vmatprep.subr.mxu0 %v2867
        %2875 = vmatpush1.msra.mxu0 %v2865
        %2876 = vmatprep.subr.mxu0 0.0
        %2877 = vmatpush1.msra.mxu0 0.0
        %2878 = vmatprep.subr.mxu0 0.0
        %2879 = vmatpush1.msra.mxu0 0.0
        %2880 = vmatprep.subr.mxu0 0.0
        %2881 = vmatpush1.msra.mxu0 0.0
        %2882 = vmatprep.subr.mxu0 0.0
        %2883 = vmatpush1.msra.mxu0 0.0
        %2884 = vmatprep.subr.mxu0 0.0
        %2885 = vmatpush1.msra.mxu0 0.0
        %2886 = vmatprep.subr.mxu0 0.0
        %2887 = vmatpush1.msra.mxu0 0.0
        %2888 = vmatprep.subr.mxu0 0.0
        %2889 = vmatpush1.msra.mxu0 0.0
        %2890 = vmatprep.subr.mxu0 0.0
        %2891 = vmatpush1.msra.mxu0 0.0
        %2892 = vmatprep.subr.mxu0 0.0
        %2893 = vmatpush1.msra.mxu0 0.0
        %2894 = vmatprep.subr.mxu0 0.0
        %2895 = vmatpush1.msra.mxu0 0.0
        %2896 = vmatprep.subr.mxu0 0.0
        %2897 = vmatpush1.msra.mxu0 0.0
        %2898 = vmatprep.subr.mxu0 0.0
        %2899 = vmatpush1.msra.mxu0 0.0
        %2900 = vmatprep.subr.mxu0 0.0
        %2901 = vmatpush1.msra.mxu0 0.0
        %2902 = vmatprep.subr.mxu0 0.0
        %2903 = vmatpush1.msra.mxu0 0.0
        %2904 = vmatprep.subr.mxu0 0.0
        %2905 = vmatpush1.msra.mxu0 0.0
        %2906 = vmatprep.subr.mxu0 0.0
        %2907 = vmatpush1.msra.mxu0 0.0
        %2908 = vmatprep.subr.mxu0 0.0
        %2909 = vmatpush1.msra.mxu0 0.0
        %2910 = vmatprep.subr.mxu0 0.0
        %2911 = vmatpush1.msra.mxu0 0.0
        %2912 = vmatprep.subr.mxu0 0.0
        %2913 = vmatpush1.msra.mxu0 0.0
        %2914 = vmatprep.subr.mxu0 0.0
        %2915 = vmatpush1.msra.mxu0 0.0
        %2916 = vmatprep.subr.mxu0 0.0
        %2917 = vmatpush1.msra.mxu0 0.0
        %2918 = vmatprep.subr.mxu0 0.0
        %2919 = vmatpush1.msra.mxu0 0.0
        %2920 = vmatprep.subr.mxu0 0.0
        %2921 = vmatpush1.msra.mxu0 0.0
        %2922 = vmatprep.subr.mxu0 0.0
        %2923 = vmatpush1.msra.mxu0 0.0
        %2924 = vmatprep.subr.mxu0 0.0
        %2925 = vmatpush1.msra.mxu0 0.0
        %2926 = vmatprep.subr.mxu0 0.0
        %2927 = vmatpush1.msra.mxu0 0.0
        %2928 = vmatprep.subr.mxu0 0.0
        %2929 = vmatpush1.msra.mxu0 0.0
        %2930 = vmatprep.subr.mxu0 0.0
        %2931 = vmatpush1.msra.mxu0 0.0
        %2932 = vmatprep.subr.mxu0 0.0
        %2933 = vmatpush1.msra.mxu0 0.0
        %2934 = vmatprep.subr.mxu0 0.0
        %2935 = vmatpush1.msra.mxu0 0.0
        %2936 = vmatprep.subr.mxu0 0.0
        %2937 = vmatpush1.msra.mxu0 0.0
        %2938 = vmatprep.mubr.f32.mxu0 0.0
        %2939 = vmatmul.mubr.f32.gmra.mrb[0].mxu0 %v2872
        %v2940 = vpop.f32.mrb[0].mxu0
        %v2941 = vadd.f32 0.0, %v2940
        %v2942 = vpop.f32.mrb[0].mxu0
        %v2943 = vadd.f32 0.0, %v2942
        %2944 = vdwg.mxu0
        %v2946 = vsel %vm2870, %v2797, 0
        %2948 = vmatprep.subr.mxu0 %v2795
        %2949 = vmatpush1.msra.mxu0 %v2793
        %2950 = vmatprep.subr.mxu0 0.0
        %2951 = vmatpush1.msra.mxu0 0.0
        %2952 = vmatprep.subr.mxu0 0.0
        %2953 = vmatpush1.msra.mxu0 0.0
        %2954 = vmatprep.subr.mxu0 0.0
        %2955 = vmatpush1.msra.mxu0 0.0
        %2956 = vmatprep.subr.mxu0 0.0
        %2957 = vmatpush1.msra.mxu0 0.0
        %2958 = vmatprep.subr.mxu0 0.0
        %2959 = vmatpush1.msra.mxu0 0.0
        %2960 = vmatprep.subr.mxu0 0.0
        %2961 = vmatpush1.msra.mxu0 0.0
        %2962 = vmatprep.subr.mxu0 0.0
        %2963 = vmatpush1.msra.mxu0 0.0
        %2964 = vmatprep.subr.mxu0 0.0
        %2965 = vmatpush1.msra.mxu0 0.0
        %2966 = vmatprep.subr.mxu0 0.0
        %2967 = vmatpush1.msra.mxu0 0.0
        %2968 = vmatprep.subr.mxu0 0.0
        %2969 = vmatpush1.msra.mxu0 0.0
        %2970 = vmatprep.subr.mxu0 0.0
        %2971 = vmatpush1.msra.mxu0 0.0
        %2972 = vmatprep.subr.mxu0 0.0
        %2973 = vmatpush1.msra.mxu0 0.0
        %2974 = vmatprep.subr.mxu0 0.0
        %2975 = vmatpush1.msra.mxu0 0.0
        %2976 = vmatprep.subr.mxu0 0.0
        %2977 = vmatpush1.msra.mxu0 0.0
        %2978 = vmatprep.subr.mxu0 0.0
        %2979 = vmatpush1.msra.mxu0 0.0
        %2980 = vmatprep.subr.mxu0 0.0
        %2981 = vmatpush1.msra.mxu0 0.0
        %2982 = vmatprep.subr.mxu0 0.0
        %2983 = vmatpush1.msra.mxu0 0.0
        %2984 = vmatprep.subr.mxu0 0.0
        %2985 = vmatpush1.msra.mxu0 0.0
        %2986 = vmatprep.subr.mxu0 0.0
        %2987 = vmatpush1.msra.mxu0 0.0
        %2988 = vmatprep.subr.mxu0 0.0
        %2989 = vmatpush1.msra.mxu0 0.0
        %2990 = vmatprep.subr.mxu0 0.0
        %2991 = vmatpush1.msra.mxu0 0.0
        %2992 = vmatprep.subr.mxu0 0.0
        %2993 = vmatpush1.msra.mxu0 0.0
        %2994 = vmatprep.subr.mxu0 0.0
        %2995 = vmatpush1.msra.mxu0 0.0
        %2996 = vmatprep.subr.mxu0 0.0
        %2997 = vmatpush1.msra.mxu0 0.0
        %2998 = vmatprep.subr.mxu0 0.0
        %2999 = vmatpush1.msra.mxu0 0.0
        %3000 = vmatprep.subr.mxu0 0.0
        %3001 = vmatpush1.msra.mxu0 0.0
        %3002 = vmatprep.subr.mxu0 0.0
        %3003 = vmatpush1.msra.mxu0 0.0
        %3004 = vmatprep.subr.mxu0 0.0
        %3005 = vmatpush1.msra.mxu0 0.0
        %3006 = vmatprep.subr.mxu0 0.0
        %3007 = vmatpush1.msra.mxu0 0.0
        %3008 = vmatprep.subr.mxu0 0.0
        %3009 = vmatpush1.msra.mxu0 0.0
        %3010 = vmatprep.subr.mxu0 0.0
        %3011 = vmatpush1.msra.mxu0 0.0
        %3012 = vmatprep.mubr.f32.mxu0 0.0
        %3013 = vmatmul.mubr.f32.gmra.mrb[0].mxu0 %v2946
        %v3014 = vpop.f32.mrb[0].mxu0
        %v3015 = vadd.f32 %v2941, %v3014
        %v3016 = vpop.f32.mrb[0].mxu0
        %v3017 = vadd.f32 %v2943, %v3016
        %3018 = vdwg.mxu0
        %3019 = vmatprep.subr.mxu0 %v1191
        %3020 = vmatpush1.msra.mxu0 %v1190
        %3021 = vmatprep.subr.mxu0 %v1193
        %3022 = vmatpush1.msra.mxu0 %v1192
        %3023 = vmatprep.subr.mxu0 %v1195
        %3024 = vmatpush1.msra.mxu0 %v1194
        %3025 = vmatprep.subr.mxu0 %v1197
        %3026 = vmatpush1.msra.mxu0 %v1196
        %3027 = vmatprep.subr.mxu0 %v1199
        %3028 = vmatpush1.msra.mxu0 %v1198
        %3029 = vmatprep.subr.mxu0 %v1201
        %3030 = vmatpush1.msra.mxu0 %v1200
        %3031 = vmatprep.subr.mxu0 %v1203
        %3032 = vmatpush1.msra.mxu0 %v1202
        %3033 = vmatprep.subr.mxu0 %v1205
        %3034 = vmatpush1.msra.mxu0 %v1204
        %3035 = vmatprep.subr.mxu0 %v1207
        %3036 = vmatpush1.msra.mxu0 %v1206
        %3037 = vmatprep.subr.mxu0 %v1209
        %3038 = vmatpush1.msra.mxu0 %v1208
        %3039 = vmatprep.subr.mxu0 %v1211
        %3040 = vmatpush1.msra.mxu0 %v1210
        %3041 = vmatprep.subr.mxu0 %v1213
        %3042 = vmatpush1.msra.mxu0 %v1212
        %3043 = vmatprep.subr.mxu0 %v1215
        %3044 = vmatpush1.msra.mxu0 %v1214
        %3045 = vmatprep.subr.mxu0 %v1217
        %3046 = vmatpush1.msra.mxu0 %v1216
        %3047 = vmatprep.subr.mxu0 %v1219
        %3048 = vmatpush1.msra.mxu0 %v1218
        %3049 = vmatprep.subr.mxu0 %v1221
        %3050 = vmatpush1.msra.mxu0 %v1220
        %3051 = vmatprep.subr.mxu0 %v1223
        %3052 = vmatpush1.msra.mxu0 %v1222
        %3053 = vmatprep.subr.mxu0 %v1225
        %3054 = vmatpush1.msra.mxu0 %v1224
        %3055 = vmatprep.subr.mxu0 %v1227
        %3056 = vmatpush1.msra.mxu0 %v1226
        %3057 = vmatprep.subr.mxu0 %v1229
        %3058 = vmatpush1.msra.mxu0 %v1228
        %3059 = vmatprep.subr.mxu0 %v1231
        %3060 = vmatpush1.msra.mxu0 %v1230
        %3061 = vmatprep.subr.mxu0 %v1233
        %3062 = vmatpush1.msra.mxu0 %v1232
        %3063 = vmatprep.subr.mxu0 %v1235
        %3064 = vmatpush1.msra.mxu0 %v1234
        %3065 = vmatprep.subr.mxu0 %v1237
        %3066 = vmatpush1.msra.mxu0 %v1236
        %3067 = vmatprep.subr.mxu0 %v1239
        %3068 = vmatpush1.msra.mxu0 %v1238
        %3069 = vmatprep.subr.mxu0 %v1241
        %3070 = vmatpush1.msra.mxu0 %v1240
        %3071 = vmatprep.subr.mxu0 %v1243
        %3072 = vmatpush1.msra.mxu0 %v1242
        %3073 = vmatprep.subr.mxu0 %v1245
        %3074 = vmatpush1.msra.mxu0 %v1244
        %3075 = vmatprep.subr.mxu0 %v1247
        %3076 = vmatpush1.msra.mxu0 %v1246
        %3077 = vmatprep.subr.mxu0 %v1249
        %3078 = vmatpush1.msra.mxu0 %v1248
        %3079 = vmatprep.subr.mxu0 %v1251
        %3080 = vmatpush1.msra.mxu0 %v1250
        %3081 = vmatprep.subr.mxu0 %v1253
        %3082 = vmatpush1.msra.mxu0 %v1252
        %3083 = vmatprep.mubr.f32.mxu0 %v2725
        %3084 = vmatmul.mubr.f32.gmra.mrb[0].mxu0 %v2724
        %v3085 = vpop.f32.mrb[0].mxu0
        %v3086 = vadd.f32 0.0, %v3085
        %v3087 = vpop.f32.mrb[0].mxu0
        %v3088 = vadd.f32 0.0, %v3087
        %3089 = vdwg.mxu0
        %v3090 = vld [vmem:[#allocation8 + $0x10] sm:$0xff]
        %v3092 = vsel %vm2870, %v3090, 0
        %3094 = vmatprep.subr.mxu0 %v3088
        %3095 = vmatpush1.msra.mxu0 %v3086
        %3096 = vmatprep.subr.mxu0 0.0
        %3097 = vmatpush1.msra.mxu0 0.0
        %3098 = vmatprep.subr.mxu0 0.0
        %3099 = vmatpush1.msra.mxu0 0.0
        %3100 = vmatprep.subr.mxu0 0.0
        %3101 = vmatpush1.msra.mxu0 0.0
        %3102 = vmatprep.subr.mxu0 0.0
        %3103 = vmatpush1.msra.mxu0 0.0
        %3104 = vmatprep.subr.mxu0 0.0
        %3105 = vmatpush1.msra.mxu0 0.0
        %3106 = vmatprep.subr.mxu0 0.0
        %3107 = vmatpush1.msra.mxu0 0.0
        %3108 = vmatprep.subr.mxu0 0.0
        %3109 = vmatpush1.msra.mxu0 0.0
        %3110 = vmatprep.subr.mxu0 0.0
        %3111 = vmatpush1.msra.mxu0 0.0
        %3112 = vmatprep.subr.mxu0 0.0
        %3113 = vmatpush1.msra.mxu0 0.0
        %3114 = vmatprep.subr.mxu0 0.0
        %3115 = vmatpush1.msra.mxu0 0.0
        %3116 = vmatprep.subr.mxu0 0.0
        %3117 = vmatpush1.msra.mxu0 0.0
        %3118 = vmatprep.subr.mxu0 0.0
        %3119 = vmatpush1.msra.mxu0 0.0
        %3120 = vmatprep.subr.mxu0 0.0
        %3121 = vmatpush1.msra.mxu0 0.0
        %3122 = vmatprep.subr.mxu0 0.0
        %3123 = vmatpush1.msra.mxu0 0.0
        %3124 = vmatprep.subr.mxu0 0.0
        %3125 = vmatpush1.msra.mxu0 0.0
        %3126 = vmatprep.subr.mxu0 0.0
        %3127 = vmatpush1.msra.mxu0 0.0
        %3128 = vmatprep.subr.mxu0 0.0
        %3129 = vmatpush1.msra.mxu0 0.0
        %3130 = vmatprep.subr.mxu0 0.0
        %3131 = vmatpush1.msra.mxu0 0.0
        %3132 = vmatprep.subr.mxu0 0.0
        %3133 = vmatpush1.msra.mxu0 0.0
        %3134 = vmatprep.subr.mxu0 0.0
        %3135 = vmatpush1.msra.mxu0 0.0
        %3136 = vmatprep.subr.mxu0 0.0
        %3137 = vmatpush1.msra.mxu0 0.0
        %3138 = vmatprep.subr.mxu0 0.0
        %3139 = vmatpush1.msra.mxu0 0.0
        %3140 = vmatprep.subr.mxu0 0.0
        %3141 = vmatpush1.msra.mxu0 0.0
        %3142 = vmatprep.subr.mxu0 0.0
        %3143 = vmatpush1.msra.mxu0 0.0
        %3144 = vmatprep.subr.mxu0 0.0
        %3145 = vmatpush1.msra.mxu0 0.0
        %3146 = vmatprep.subr.mxu0 0.0
        %3147 = vmatpush1.msra.mxu0 0.0
        %3148 = vmatprep.subr.mxu0 0.0
        %3149 = vmatpush1.msra.mxu0 0.0
        %3150 = vmatprep.subr.mxu0 0.0
        %3151 = vmatpush1.msra.mxu0 0.0
        %3152 = vmatprep.subr.mxu0 0.0
        %3153 = vmatpush1.msra.mxu0 0.0
        %3154 = vmatprep.subr.mxu0 0.0
        %3155 = vmatpush1.msra.mxu0 0.0
        %3156 = vmatprep.subr.mxu0 0.0
        %3157 = vmatpush1.msra.mxu0 0.0
        %3158 = vmatprep.mubr.f32.mxu0 0.0
        %3159 = vmatmul.mubr.f32.gmra.mrb[0].mxu0 %v3092
        %v3160 = vpop.f32.mrb[0].mxu0
        %v3161 = vadd.f32 0.0, %v3160
        %v3162 = vpop.f32.mrb[0].mxu0
        %v3163 = vadd.f32 0.0, %v3162
        %3164 = vdwg.mxu0
        %v3165 = vadd.f32 %v3015, %v3161
        %v3166 = vadd.f32 %v3017, %v3163
        %3167 = vmatprep.subr.mxu0 %v1409
        %3168 = vmatpush1.msra.mxu0 %v1408
        %3169 = vmatprep.subr.mxu0 %v1411
        %3170 = vmatpush1.msra.mxu0 %v1410
        %3171 = vmatprep.subr.mxu0 %v1413
        %3172 = vmatpush1.msra.mxu0 %v1412
        %3173 = vmatprep.subr.mxu0 %v1415
        %3174 = vmatpush1.msra.mxu0 %v1414
        %3175 = vmatprep.subr.mxu0 %v1417
        %3176 = vmatpush1.msra.mxu0 %v1416
        %3177 = vmatprep.subr.mxu0 %v1419
        %3178 = vmatpush1.msra.mxu0 %v1418
        %3179 = vmatprep.subr.mxu0 %v1421
        %3180 = vmatpush1.msra.mxu0 %v1420
        %3181 = vmatprep.subr.mxu0 %v1423
        %3182 = vmatpush1.msra.mxu0 %v1422
        %3183 = vmatprep.subr.mxu0 %v1425
        %3184 = vmatpush1.msra.mxu0 %v1424
        %3185 = vmatprep.subr.mxu0 %v1427
        %3186 = vmatpush1.msra.mxu0 %v1426
        %3187 = vmatprep.subr.mxu0 %v1429
        %3188 = vmatpush1.msra.mxu0 %v1428
        %3189 = vmatprep.subr.mxu0 %v1431
        %3190 = vmatpush1.msra.mxu0 %v1430
        %3191 = vmatprep.subr.mxu0 %v1433
        %3192 = vmatpush1.msra.mxu0 %v1432
        %3193 = vmatprep.subr.mxu0 %v1435
        %3194 = vmatpush1.msra.mxu0 %v1434
        %3195 = vmatprep.subr.mxu0 %v1437
        %3196 = vmatpush1.msra.mxu0 %v1436
        %3197 = vmatprep.subr.mxu0 %v1439
        %3198 = vmatpush1.msra.mxu0 %v1438
        %3199 = vmatprep.subr.mxu0 %v1441
        %3200 = vmatpush1.msra.mxu0 %v1440
        %3201 = vmatprep.subr.mxu0 %v1443
        %3202 = vmatpush1.msra.mxu0 %v1442
        %3203 = vmatprep.subr.mxu0 %v1445
        %3204 = vmatpush1.msra.mxu0 %v1444
        %3205 = vmatprep.subr.mxu0 %v1447
        %3206 = vmatpush1.msra.mxu0 %v1446
        %3207 = vmatprep.subr.mxu0 %v1449
        %3208 = vmatpush1.msra.mxu0 %v1448
        %3209 = vmatprep.subr.mxu0 %v1451
        %3210 = vmatpush1.msra.mxu0 %v1450
        %3211 = vmatprep.subr.mxu0 %v1453
        %3212 = vmatpush1.msra.mxu0 %v1452
        %3213 = vmatprep.subr.mxu0 %v1455
        %3214 = vmatpush1.msra.mxu0 %v1454
        %3215 = vmatprep.subr.mxu0 %v1457
        %3216 = vmatpush1.msra.mxu0 %v1456
        %3217 = vmatprep.subr.mxu0 %v1459
        %3218 = vmatpush1.msra.mxu0 %v1458
        %3219 = vmatprep.subr.mxu0 %v1461
        %3220 = vmatpush1.msra.mxu0 %v1460
        %3221 = vmatprep.subr.mxu0 %v1463
        %3222 = vmatpush1.msra.mxu0 %v1462
        %3223 = vmatprep.subr.mxu0 %v1465
        %3224 = vmatpush1.msra.mxu0 %v1464
        %3225 = vmatprep.subr.mxu0 %v1467
        %3226 = vmatpush1.msra.mxu0 %v1466
        %3227 = vmatprep.subr.mxu0 %v1469
        %3228 = vmatpush1.msra.mxu0 %v1468
        %3229 = vmatprep.subr.mxu0 %v1471
        %3230 = vmatpush1.msra.mxu0 %v1470
        %3231 = vmatprep.mubr.f32.mxu0 %v2725
        %3232 = vmatmul.mubr.f32.gmra.mrb[0].mxu0 %v2724
        %v3233 = vpop.f32.mrb[0].mxu0
        %v3234 = vadd.f32 0.0, %v3233
        %v3235 = vpop.f32.mrb[0].mxu0
        %v3236 = vadd.f32 0.0, %v3235
        %3237 = vdwg.mxu0
        %v3238 = vld [vmem:[#allocation8 + $0x18] sm:$0xff]
        %v3240 = vsel %vm2870, %v3238, 0
        %3242 = vmatprep.subr.mxu0 %v3236
        %3243 = vmatpush1.msra.mxu0 %v3234
        %3244 = vmatprep.subr.mxu0 0.0
        %3245 = vmatpush1.msra.mxu0 0.0
        %3246 = vmatprep.subr.mxu0 0.0
        %3247 = vmatpush1.msra.mxu0 0.0
        %3248 = vmatprep.subr.mxu0 0.0
        %3249 = vmatpush1.msra.mxu0 0.0
        %3250 = vmatprep.subr.mxu0 0.0
        %3251 = vmatpush1.msra.mxu0 0.0
        %3252 = vmatprep.subr.mxu0 0.0
        %3253 = vmatpush1.msra.mxu0 0.0
        %3254 = vmatprep.subr.mxu0 0.0
        %3255 = vmatpush1.msra.mxu0 0.0
        %3256 = vmatprep.subr.mxu0 0.0
        %3257 = vmatpush1.msra.mxu0 0.0
        %3258 = vmatprep.subr.mxu0 0.0
        %3259 = vmatpush1.msra.mxu0 0.0
        %3260 = vmatprep.subr.mxu0 0.0
        %3261 = vmatpush1.msra.mxu0 0.0
        %3262 = vmatprep.subr.mxu0 0.0
        %3263 = vmatpush1.msra.mxu0 0.0
        %3264 = vmatprep.subr.mxu0 0.0
        %3265 = vmatpush1.msra.mxu0 0.0
        %3266 = vmatprep.subr.mxu0 0.0
        %3267 = vmatpush1.msra.mxu0 0.0
        %3268 = vmatprep.subr.mxu0 0.0
        %3269 = vmatpush1.msra.mxu0 0.0
        %3270 = vmatprep.subr.mxu0 0.0
        %3271 = vmatpush1.msra.mxu0 0.0
        %3272 = vmatprep.subr.mxu0 0.0
        %3273 = vmatpush1.msra.mxu0 0.0
        %3274 = vmatprep.subr.mxu0 0.0
        %3275 = vmatpush1.msra.mxu0 0.0
        %3276 = vmatprep.subr.mxu0 0.0
        %3277 = vmatpush1.msra.mxu0 0.0
        %3278 = vmatprep.subr.mxu0 0.0
        %3279 = vmatpush1.msra.mxu0 0.0
        %3280 = vmatprep.subr.mxu0 0.0
        %3281 = vmatpush1.msra.mxu0 0.0
        %3282 = vmatprep.subr.mxu0 0.0
        %3283 = vmatpush1.msra.mxu0 0.0
        %3284 = vmatprep.subr.mxu0 0.0
        %3285 = vmatpush1.msra.mxu0 0.0
        %3286 = vmatprep.subr.mxu0 0.0
        %3287 = vmatpush1.msra.mxu0 0.0
        %3288 = vmatprep.subr.mxu0 0.0
        %3289 = vmatpush1.msra.mxu0 0.0
        %3290 = vmatprep.subr.mxu0 0.0
        %3291 = vmatpush1.msra.mxu0 0.0
        %3292 = vmatprep.subr.mxu0 0.0
        %3293 = vmatpush1.msra.mxu0 0.0
        %3294 = vmatprep.subr.mxu0 0.0
        %3295 = vmatpush1.msra.mxu0 0.0
        %3296 = vmatprep.subr.mxu0 0.0
        %3297 = vmatpush1.msra.mxu0 0.0
        %3298 = vmatprep.subr.mxu0 0.0
        %3299 = vmatpush1.msra.mxu0 0.0
        %3300 = vmatprep.subr.mxu0 0.0
        %3301 = vmatpush1.msra.mxu0 0.0
        %3302 = vmatprep.subr.mxu0 0.0
        %3303 = vmatpush1.msra.mxu0 0.0
        %3304 = vmatprep.subr.mxu0 0.0
        %3305 = vmatpush1.msra.mxu0 0.0
        %3306 = vmatprep.mubr.f32.mxu0 0.0
        %3307 = vmatmul.mubr.f32.gmra.mrb[0].mxu0 %v3240
        %v3308 = vpop.f32.mrb[0].mxu0
        %v3309 = vadd.f32 0.0, %v3308
        %v3310 = vpop.f32.mrb[0].mxu0
        %v3311 = vadd.f32 0.0, %v3310
        %3312 = vdwg.mxu0
        %v3313 = vadd.f32 %v3165, %v3309
        %v3314 = vadd.f32 %v3166, %v3311
        %3315 = vmatprep.subr.mxu0 %v1627
        %3316 = vmatpush1.msra.mxu0 %v1626
        %3317 = vmatprep.subr.mxu0 %v1629
        %3318 = vmatpush1.msra.mxu0 %v1628
        %3319 = vmatprep.subr.mxu0 %v1631
        %3320 = vmatpush1.msra.mxu0 %v1630
        %3321 = vmatprep.subr.mxu0 %v1633
        %3322 = vmatpush1.msra.mxu0 %v1632
        %3323 = vmatprep.subr.mxu0 %v1635
        %3324 = vmatpush1.msra.mxu0 %v1634
        %3325 = vmatprep.subr.mxu0 %v1637
        %3326 = vmatpush1.msra.mxu0 %v1636
        %3327 = vmatprep.subr.mxu0 %v1639
        %3328 = vmatpush1.msra.mxu0 %v1638
        %3329 = vmatprep.subr.mxu0 %v1641
        %3330 = vmatpush1.msra.mxu0 %v1640
        %3331 = vmatprep.subr.mxu0 %v1643
        %3332 = vmatpush1.msra.mxu0 %v1642
        %3333 = vmatprep.subr.mxu0 %v1645
        %3334 = vmatpush1.msra.mxu0 %v1644
        %3335 = vmatprep.subr.mxu0 %v1647
        %3336 = vmatpush1.msra.mxu0 %v1646
        %3337 = vmatprep.subr.mxu0 %v1649
        %3338 = vmatpush1.msra.mxu0 %v1648
        %3339 = vmatprep.subr.mxu0 %v1651
        %3340 = vmatpush1.msra.mxu0 %v1650
        %3341 = vmatprep.subr.mxu0 %v1653
        %3342 = vmatpush1.msra.mxu0 %v1652
        %3343 = vmatprep.subr.mxu0 %v1655
        %3344 = vmatpush1.msra.mxu0 %v1654
        %3345 = vmatprep.subr.mxu0 %v1657
        %3346 = vmatpush1.msra.mxu0 %v1656
        %3347 = vmatprep.subr.mxu0 %v1659
        %3348 = vmatpush1.msra.mxu0 %v1658
        %3349 = vmatprep.subr.mxu0 %v1661
        %3350 = vmatpush1.msra.mxu0 %v1660
        %3351 = vmatprep.subr.mxu0 %v1663
        %3352 = vmatpush1.msra.mxu0 %v1662
        %3353 = vmatprep.subr.mxu0 %v1665
        %3354 = vmatpush1.msra.mxu0 %v1664
        %3355 = vmatprep.subr.mxu0 %v1667
        %3356 = vmatpush1.msra.mxu0 %v1666
        %3357 = vmatprep.subr.mxu0 %v1669
        %3358 = vmatpush1.msra.mxu0 %v1668
        %3359 = vmatprep.subr.mxu0 %v1671
        %3360 = vmatpush1.msra.mxu0 %v1670
        %3361 = vmatprep.subr.mxu0 %v1673
        %3362 = vmatpush1.msra.mxu0 %v1672
        %3363 = vmatprep.subr.mxu0 %v1675
        %3364 = vmatpush1.msra.mxu0 %v1674
        %3365 = vmatprep.subr.mxu0 %v1677
        %3366 = vmatpush1.msra.mxu0 %v1676
        %3367 = vmatprep.subr.mxu0 %v1679
        %3368 = vmatpush1.msra.mxu0 %v1678
        %3369 = vmatprep.subr.mxu0 %v1681
        %3370 = vmatpush1.msra.mxu0 %v1680
        %3371 = vmatprep.subr.mxu0 %v1683
        %3372 = vmatpush1.msra.mxu0 %v1682
        %3373 = vmatprep.subr.mxu0 %v1685
        %3374 = vmatpush1.msra.mxu0 %v1684
        %3375 = vmatprep.subr.mxu0 %v1687
        %3376 = vmatpush1.msra.mxu0 %v1686
        %3377 = vmatprep.subr.mxu0 %v1689
        %3378 = vmatpush1.msra.mxu0 %v1688
        %3379 = vmatprep.mubr.f32.mxu0 %v2725
        %3380 = vmatmul.mubr.f32.gmra.mrb[0].mxu0 %v2724
        %v3381 = vpop.f32.mrb[0].mxu0
        %v3382 = vadd.f32 0.0, %v3381
        %v3383 = vpop.f32.mrb[0].mxu0
        %v3384 = vadd.f32 0.0, %v3383
        %3385 = vdwg.mxu0
        %v3386 = vld [vmem:[#allocation8 + $0x20] sm:$0xff]
        %v3388 = vsel %vm2870, %v3386, 0
        %3390 = vmatprep.subr.mxu0 %v3384
        %3391 = vmatpush1.msra.mxu0 %v3382
        %3392 = vmatprep.subr.mxu0 0.0
        %3393 = vmatpush1.msra.mxu0 0.0
        %3394 = vmatprep.subr.mxu0 0.0
        %3395 = vmatpush1.msra.mxu0 0.0
        %3396 = vmatprep.subr.mxu0 0.0
        %3397 = vmatpush1.msra.mxu0 0.0
        %3398 = vmatprep.subr.mxu0 0.0
        %3399 = vmatpush1.msra.mxu0 0.0
        %3400 = vmatprep.subr.mxu0 0.0
        %3401 = vmatpush1.msra.mxu0 0.0
        %3402 = vmatprep.subr.mxu0 0.0
        %3403 = vmatpush1.msra.mxu0 0.0
        %3404 = vmatprep.subr.mxu0 0.0
        %3405 = vmatpush1.msra.mxu0 0.0
        %3406 = vmatprep.subr.mxu0 0.0
        %3407 = vmatpush1.msra.mxu0 0.0
        %3408 = vmatprep.subr.mxu0 0.0
        %3409 = vmatpush1.msra.mxu0 0.0
        %3410 = vmatprep.subr.mxu0 0.0
        %3411 = vmatpush1.msra.mxu0 0.0
        %3412 = vmatprep.subr.mxu0 0.0
        %3413 = vmatpush1.msra.mxu0 0.0
        %3414 = vmatprep.subr.mxu0 0.0
        %3415 = vmatpush1.msra.mxu0 0.0
        %3416 = vmatprep.subr.mxu0 0.0
        %3417 = vmatpush1.msra.mxu0 0.0
        %3418 = vmatprep.subr.mxu0 0.0
        %3419 = vmatpush1.msra.mxu0 0.0
        %3420 = vmatprep.subr.mxu0 0.0
        %3421 = vmatpush1.msra.mxu0 0.0
        %3422 = vmatprep.subr.mxu0 0.0
        %3423 = vmatpush1.msra.mxu0 0.0
        %3424 = vmatprep.subr.mxu0 0.0
        %3425 = vmatpush1.msra.mxu0 0.0
        %3426 = vmatprep.subr.mxu0 0.0
        %3427 = vmatpush1.msra.mxu0 0.0
        %3428 = vmatprep.subr.mxu0 0.0
        %3429 = vmatpush1.msra.mxu0 0.0
        %3430 = vmatprep.subr.mxu0 0.0
        %3431 = vmatpush1.msra.mxu0 0.0
        %3432 = vmatprep.subr.mxu0 0.0
        %3433 = vmatpush1.msra.mxu0 0.0
        %3434 = vmatprep.subr.mxu0 0.0
        %3435 = vmatpush1.msra.mxu0 0.0
        %3436 = vmatprep.subr.mxu0 0.0
        %3437 = vmatpush1.msra.mxu0 0.0
        %3438 = vmatprep.subr.mxu0 0.0
        %3439 = vmatpush1.msra.mxu0 0.0
        %3440 = vmatprep.subr.mxu0 0.0
        %3441 = vmatpush1.msra.mxu0 0.0
        %3442 = vmatprep.subr.mxu0 0.0
        %3443 = vmatpush1.msra.mxu0 0.0
        %3444 = vmatprep.subr.mxu0 0.0
        %3445 = vmatpush1.msra.mxu0 0.0
        %3446 = vmatprep.subr.mxu0 0.0
        %3447 = vmatpush1.msra.mxu0 0.0
        %3448 = vmatprep.subr.mxu0 0.0
        %3449 = vmatpush1.msra.mxu0 0.0
        %3450 = vmatprep.subr.mxu0 0.0
        %3451 = vmatpush1.msra.mxu0 0.0
        %3452 = vmatprep.subr.mxu0 0.0
        %3453 = vmatpush1.msra.mxu0 0.0
        %3454 = vmatprep.mubr.f32.mxu0 0.0
        %3455 = vmatmul.mubr.f32.gmra.mrb[0].mxu0 %v3388
        %v3456 = vpop.f32.mrb[0].mxu0
        %v3457 = vadd.f32 0.0, %v3456
        %v3458 = vpop.f32.mrb[0].mxu0
        %v3459 = vadd.f32 0.0, %v3458
        %3460 = vdwg.mxu0
        %v3461 = vadd.f32 %v3313, %v3457
        %v3462 = vadd.f32 %v3314, %v3459
        %3463 = vmatprep.subr.mxu0 %v1845
        %3464 = vmatpush1.msra.mxu0 %v1844
        %3465 = vmatprep.subr.mxu0 %v1847
        %3466 = vmatpush1.msra.mxu0 %v1846
        %3467 = vmatprep.subr.mxu0 %v1849
        %3468 = vmatpush1.msra.mxu0 %v1848
        %3469 = vmatprep.subr.mxu0 %v1851
        %3470 = vmatpush1.msra.mxu0 %v1850
        %3471 = vmatprep.subr.mxu0 %v1853
        %3472 = vmatpush1.msra.mxu0 %v1852
        %3473 = vmatprep.subr.mxu0 %v1855
        %3474 = vmatpush1.msra.mxu0 %v1854
        %3475 = vmatprep.subr.mxu0 %v1857
        %3476 = vmatpush1.msra.mxu0 %v1856
        %3477 = vmatprep.subr.mxu0 %v1859
        %3478 = vmatpush1.msra.mxu0 %v1858
        %3479 = vmatprep.subr.mxu0 %v1861
        %3480 = vmatpush1.msra.mxu0 %v1860
        %3481 = vmatprep.subr.mxu0 %v1863
        %3482 = vmatpush1.msra.mxu0 %v1862
        %3483 = vmatprep.subr.mxu0 %v1865
        %3484 = vmatpush1.msra.mxu0 %v1864
        %3485 = vmatprep.subr.mxu0 %v1867
        %3486 = vmatpush1.msra.mxu0 %v1866
        %3487 = vmatprep.subr.mxu0 %v1869
        %3488 = vmatpush1.msra.mxu0 %v1868
        %3489 = vmatprep.subr.mxu0 %v1871
        %3490 = vmatpush1.msra.mxu0 %v1870
        %3491 = vmatprep.subr.mxu0 %v1873
        %3492 = vmatpush1.msra.mxu0 %v1872
        %3493 = vmatprep.subr.mxu0 %v1875
        %3494 = vmatpush1.msra.mxu0 %v1874
        %3495 = vmatprep.subr.mxu0 %v1877
        %3496 = vmatpush1.msra.mxu0 %v1876
        %3497 = vmatprep.subr.mxu0 %v1879
        %3498 = vmatpush1.msra.mxu0 %v1878
        %3499 = vmatprep.subr.mxu0 %v1881
        %3500 = vmatpush1.msra.mxu0 %v1880
        %3501 = vmatprep.subr.mxu0 %v1883
        %3502 = vmatpush1.msra.mxu0 %v1882
        %3503 = vmatprep.subr.mxu0 %v1885
        %3504 = vmatpush1.msra.mxu0 %v1884
        %3505 = vmatprep.subr.mxu0 %v1887
        %3506 = vmatpush1.msra.mxu0 %v1886
        %3507 = vmatprep.subr.mxu0 %v1889
        %3508 = vmatpush1.msra.mxu0 %v1888
        %3509 = vmatprep.subr.mxu0 %v1891
        %3510 = vmatpush1.msra.mxu0 %v1890
        %3511 = vmatprep.subr.mxu0 %v1893
        %3512 = vmatpush1.msra.mxu0 %v1892
        %3513 = vmatprep.subr.mxu0 %v1895
        %3514 = vmatpush1.msra.mxu0 %v1894
        %3515 = vmatprep.subr.mxu0 %v1897
        %3516 = vmatpush1.msra.mxu0 %v1896
        %3517 = vmatprep.subr.mxu0 %v1899
        %3518 = vmatpush1.msra.mxu0 %v1898
        %3519 = vmatprep.subr.mxu0 %v1901
        %3520 = vmatpush1.msra.mxu0 %v1900
        %3521 = vmatprep.subr.mxu0 %v1903
        %3522 = vmatpush1.msra.mxu0 %v1902
        %3523 = vmatprep.subr.mxu0 %v1905
        %3524 = vmatpush1.msra.mxu0 %v1904
        %3525 = vmatprep.subr.mxu0 %v1907
        %3526 = vmatpush1.msra.mxu0 %v1906
        %3527 = vmatprep.mubr.f32.mxu0 %v2725
        %3528 = vmatmul.mubr.f32.gmra.mrb[0].mxu0 %v2724
        %v3529 = vpop.f32.mrb[0].mxu0
        %v3530 = vadd.f32 0.0, %v3529
        %v3531 = vpop.f32.mrb[0].mxu0
        %v3532 = vadd.f32 0.0, %v3531
        %3533 = vdwg.mxu0
        %v3534 = vld [vmem:[#allocation8 + $0x28] sm:$0xff]
        %v3536 = vsel %vm2870, %v3534, 0
        %3538 = vmatprep.subr.mxu0 %v3532
        %3539 = vmatpush1.msra.mxu0 %v3530
        %3540 = vmatprep.subr.mxu0 0.0
        %3541 = vmatpush1.msra.mxu0 0.0
        %3542 = vmatprep.subr.mxu0 0.0
        %3543 = vmatpush1.msra.mxu0 0.0
        %3544 = vmatprep.subr.mxu0 0.0
        %3545 = vmatpush1.msra.mxu0 0.0
        %3546 = vmatprep.subr.mxu0 0.0
        %3547 = vmatpush1.msra.mxu0 0.0
        %3548 = vmatprep.subr.mxu0 0.0
        %3549 = vmatpush1.msra.mxu0 0.0
        %3550 = vmatprep.subr.mxu0 0.0
        %3551 = vmatpush1.msra.mxu0 0.0
        %3552 = vmatprep.subr.mxu0 0.0
        %3553 = vmatpush1.msra.mxu0 0.0
        %3554 = vmatprep.subr.mxu0 0.0
        %3555 = vmatpush1.msra.mxu0 0.0
        %3556 = vmatprep.subr.mxu0 0.0
        %3557 = vmatpush1.msra.mxu0 0.0
        %3558 = vmatprep.subr.mxu0 0.0
        %3559 = vmatpush1.msra.mxu0 0.0
        %3560 = vmatprep.subr.mxu0 0.0
        %3561 = vmatpush1.msra.mxu0 0.0
        %3562 = vmatprep.subr.mxu0 0.0
        %3563 = vmatpush1.msra.mxu0 0.0
        %3564 = vmatprep.subr.mxu0 0.0
        %3565 = vmatpush1.msra.mxu0 0.0
        %3566 = vmatprep.subr.mxu0 0.0
        %3567 = vmatpush1.msra.mxu0 0.0
        %3568 = vmatprep.subr.mxu0 0.0
        %3569 = vmatpush1.msra.mxu0 0.0
        %3570 = vmatprep.subr.mxu0 0.0
        %3571 = vmatpush1.msra.mxu0 0.0
        %3572 = vmatprep.subr.mxu0 0.0
        %3573 = vmatpush1.msra.mxu0 0.0
        %3574 = vmatprep.subr.mxu0 0.0
        %3575 = vmatpush1.msra.mxu0 0.0
        %3576 = vmatprep.subr.mxu0 0.0
        %3577 = vmatpush1.msra.mxu0 0.0
        %3578 = vmatprep.subr.mxu0 0.0
        %3579 = vmatpush1.msra.mxu0 0.0
        %3580 = vmatprep.subr.mxu0 0.0
        %3581 = vmatpush1.msra.mxu0 0.0
        %3582 = vmatprep.subr.mxu0 0.0
        %3583 = vmatpush1.msra.mxu0 0.0
        %3584 = vmatprep.subr.mxu0 0.0
        %3585 = vmatpush1.msra.mxu0 0.0
        %3586 = vmatprep.subr.mxu0 0.0
        %3587 = vmatpush1.msra.mxu0 0.0
        %3588 = vmatprep.subr.mxu0 0.0
        %3589 = vmatpush1.msra.mxu0 0.0
        %3590 = vmatprep.subr.mxu0 0.0
        %3591 = vmatpush1.msra.mxu0 0.0
        %3592 = vmatprep.subr.mxu0 0.0
        %3593 = vmatpush1.msra.mxu0 0.0
        %3594 = vmatprep.subr.mxu0 0.0
        %3595 = vmatpush1.msra.mxu0 0.0
        %3596 = vmatprep.subr.mxu0 0.0
        %3597 = vmatpush1.msra.mxu0 0.0
        %3598 = vmatprep.subr.mxu0 0.0
        %3599 = vmatpush1.msra.mxu0 0.0
        %3600 = vmatprep.subr.mxu0 0.0
        %3601 = vmatpush1.msra.mxu0 0.0
        %3602 = vmatprep.mubr.f32.mxu0 0.0
        %3603 = vmatmul.mubr.f32.gmra.mrb[0].mxu0 %v3536
        %v3604 = vpop.f32.mrb[0].mxu0
        %v3605 = vadd.f32 0.0, %v3604
        %v3606 = vpop.f32.mrb[0].mxu0
        %v3607 = vadd.f32 0.0, %v3606
        %3608 = vdwg.mxu0
        %v3609 = vadd.f32 %v3461, %v3605
        %v3610 = vadd.f32 %v3462, %v3607
        %3611 = vmatprep.subr.mxu0 %v2063
        %3612 = vmatpush1.msra.mxu0 %v2062
        %3613 = vmatprep.subr.mxu0 %v2065
        %3614 = vmatpush1.msra.mxu0 %v2064
        %3615 = vmatprep.subr.mxu0 %v2067
        %3616 = vmatpush1.msra.mxu0 %v2066
        %3617 = vmatprep.subr.mxu0 %v2069
        %3618 = vmatpush1.msra.mxu0 %v2068
        %3619 = vmatprep.subr.mxu0 %v2071
        %3620 = vmatpush1.msra.mxu0 %v2070
        %3621 = vmatprep.subr.mxu0 %v2073
        %3622 = vmatpush1.msra.mxu0 %v2072
        %3623 = vmatprep.subr.mxu0 %v2075
        %3624 = vmatpush1.msra.mxu0 %v2074
        %3625 = vmatprep.subr.mxu0 %v2077
        %3626 = vmatpush1.msra.mxu0 %v2076
        %3627 = vmatprep.subr.mxu0 %v2079
        %3628 = vmatpush1.msra.mxu0 %v2078
        %3629 = vmatprep.subr.mxu0 %v2081
        %3630 = vmatpush1.msra.mxu0 %v2080
        %3631 = vmatprep.subr.mxu0 %v2083
        %3632 = vmatpush1.msra.mxu0 %v2082
        %3633 = vmatprep.subr.mxu0 %v2085
        %3634 = vmatpush1.msra.mxu0 %v2084
        %3635 = vmatprep.subr.mxu0 %v2087
        %3636 = vmatpush1.msra.mxu0 %v2086
        %3637 = vmatprep.subr.mxu0 %v2089
        %3638 = vmatpush1.msra.mxu0 %v2088
        %3639 = vmatprep.subr.mxu0 %v2091
        %3640 = vmatpush1.msra.mxu0 %v2090
        %3641 = vmatprep.subr.mxu0 %v2093
        %3642 = vmatpush1.msra.mxu0 %v2092
        %3643 = vmatprep.subr.mxu0 %v2095
        %3644 = vmatpush1.msra.mxu0 %v2094
        %3645 = vmatprep.subr.mxu0 %v2097
        %3646 = vmatpush1.msra.mxu0 %v2096
        %3647 = vmatprep.subr.mxu0 %v2099
        %3648 = vmatpush1.msra.mxu0 %v2098
        %3649 = vmatprep.subr.mxu0 %v2101
        %3650 = vmatpush1.msra.mxu0 %v2100
        %3651 = vmatprep.subr.mxu0 %v2103
        %3652 = vmatpush1.msra.mxu0 %v2102
        %3653 = vmatprep.subr.mxu0 %v2105
        %3654 = vmatpush1.msra.mxu0 %v2104
        %3655 = vmatprep.subr.mxu0 %v2107
        %3656 = vmatpush1.msra.mxu0 %v2106
        %3657 = vmatprep.subr.mxu0 %v2109
        %3658 = vmatpush1.msra.mxu0 %v2108
        %3659 = vmatprep.subr.mxu0 %v2111
        %3660 = vmatpush1.msra.mxu0 %v2110
        %3661 = vmatprep.subr.mxu0 %v2113
        %3662 = vmatpush1.msra.mxu0 %v2112
        %3663 = vmatprep.subr.mxu0 %v2115
        %3664 = vmatpush1.msra.mxu0 %v2114
        %3665 = vmatprep.subr.mxu0 %v2117
        %3666 = vmatpush1.msra.mxu0 %v2116
        %3667 = vmatprep.subr.mxu0 %v2119
        %3668 = vmatpush1.msra.mxu0 %v2118
        %3669 = vmatprep.subr.mxu0 %v2121
        %3670 = vmatpush1.msra.mxu0 %v2120
        %3671 = vmatprep.subr.mxu0 %v2123
        %3672 = vmatpush1.msra.mxu0 %v2122
        %3673 = vmatprep.subr.mxu0 %v2125
        %3674 = vmatpush1.msra.mxu0 %v2124
        %3675 = vmatprep.mubr.f32.mxu0 %v2725
        %3676 = vmatmul.mubr.f32.gmra.mrb[0].mxu0 %v2724
        %v3677 = vpop.f32.mrb[0].mxu0
        %v3678 = vadd.f32 0.0, %v3677
        %v3679 = vpop.f32.mrb[0].mxu0
        %v3680 = vadd.f32 0.0, %v3679
        %3681 = vdwg.mxu0
        %v3682 = vld [vmem:[#allocation8 + $0x30] sm:$0xff]
        %v3684 = vsel %vm2870, %v3682, 0
        %3686 = vmatprep.subr.mxu0 %v3680
        %3687 = vmatpush1.msra.mxu0 %v3678
        %3688 = vmatprep.subr.mxu0 0.0
        %3689 = vmatpush1.msra.mxu0 0.0
        %3690 = vmatprep.subr.mxu0 0.0
        %3691 = vmatpush1.msra.mxu0 0.0
        %3692 = vmatprep.subr.mxu0 0.0
        %3693 = vmatpush1.msra.mxu0 0.0
        %3694 = vmatprep.subr.mxu0 0.0
        %3695 = vmatpush1.msra.mxu0 0.0
        %3696 = vmatprep.subr.mxu0 0.0
        %3697 = vmatpush1.msra.mxu0 0.0
        %3698 = vmatprep.subr.mxu0 0.0
        %3699 = vmatpush1.msra.mxu0 0.0
        %3700 = vmatprep.subr.mxu0 0.0
        %3701 = vmatpush1.msra.mxu0 0.0
        %3702 = vmatprep.subr.mxu0 0.0
        %3703 = vmatpush1.msra.mxu0 0.0
        %3704 = vmatprep.subr.mxu0 0.0
        %3705 = vmatpush1.msra.mxu0 0.0
        %3706 = vmatprep.subr.mxu0 0.0
        %3707 = vmatpush1.msra.mxu0 0.0
        %3708 = vmatprep.subr.mxu0 0.0
        %3709 = vmatpush1.msra.mxu0 0.0
        %3710 = vmatprep.subr.mxu0 0.0
        %3711 = vmatpush1.msra.mxu0 0.0
        %3712 = vmatprep.subr.mxu0 0.0
        %3713 = vmatpush1.msra.mxu0 0.0
        %3714 = vmatprep.subr.mxu0 0.0
        %3715 = vmatpush1.msra.mxu0 0.0
        %3716 = vmatprep.subr.mxu0 0.0
        %3717 = vmatpush1.msra.mxu0 0.0
        %3718 = vmatprep.subr.mxu0 0.0
        %3719 = vmatpush1.msra.mxu0 0.0
        %3720 = vmatprep.subr.mxu0 0.0
        %3721 = vmatpush1.msra.mxu0 0.0
        %3722 = vmatprep.subr.mxu0 0.0
        %3723 = vmatpush1.msra.mxu0 0.0
        %3724 = vmatprep.subr.mxu0 0.0
        %3725 = vmatpush1.msra.mxu0 0.0
        %3726 = vmatprep.subr.mxu0 0.0
        %3727 = vmatpush1.msra.mxu0 0.0
        %3728 = vmatprep.subr.mxu0 0.0
        %3729 = vmatpush1.msra.mxu0 0.0
        %3730 = vmatprep.subr.mxu0 0.0
        %3731 = vmatpush1.msra.mxu0 0.0
        %3732 = vmatprep.subr.mxu0 0.0
        %3733 = vmatpush1.msra.mxu0 0.0
        %3734 = vmatprep.subr.mxu0 0.0
        %3735 = vmatpush1.msra.mxu0 0.0
        %3736 = vmatprep.subr.mxu0 0.0
        %3737 = vmatpush1.msra.mxu0 0.0
        %3738 = vmatprep.subr.mxu0 0.0
        %3739 = vmatpush1.msra.mxu0 0.0
        %3740 = vmatprep.subr.mxu0 0.0
        %3741 = vmatpush1.msra.mxu0 0.0
        %3742 = vmatprep.subr.mxu0 0.0
        %3743 = vmatpush1.msra.mxu0 0.0
        %3744 = vmatprep.subr.mxu0 0.0
        %3745 = vmatpush1.msra.mxu0 0.0
        %3746 = vmatprep.subr.mxu0 0.0
        %3747 = vmatpush1.msra.mxu0 0.0
        %3748 = vmatprep.subr.mxu0 0.0
        %3749 = vmatpush1.msra.mxu0 0.0
        %3750 = vmatprep.mubr.f32.mxu0 0.0
        %3751 = vmatmul.mubr.f32.gmra.mrb[0].mxu0 %v3684
        %v3752 = vpop.f32.mrb[0].mxu0
        %v3753 = vadd.f32 0.0, %v3752
        %v3754 = vpop.f32.mrb[0].mxu0
        %v3755 = vadd.f32 0.0, %v3754
        %3756 = vdwg.mxu0
        %v3757 = vadd.f32 %v3609, %v3753
        %v3758 = vadd.f32 %v3610, %v3755
        %3759 = vmatprep.subr.mxu0 %v2281
        %3760 = vmatpush1.msra.mxu0 %v2280
        %3761 = vmatprep.subr.mxu0 %v2283
        %3762 = vmatpush1.msra.mxu0 %v2282
        %3763 = vmatprep.subr.mxu0 %v2285
        %3764 = vmatpush1.msra.mxu0 %v2284
        %3765 = vmatprep.subr.mxu0 %v2287
        %3766 = vmatpush1.msra.mxu0 %v2286
        %3767 = vmatprep.subr.mxu0 %v2289
        %3768 = vmatpush1.msra.mxu0 %v2288
        %3769 = vmatprep.subr.mxu0 %v2291
        %3770 = vmatpush1.msra.mxu0 %v2290
        %3771 = vmatprep.subr.mxu0 %v2293
        %3772 = vmatpush1.msra.mxu0 %v2292
        %3773 = vmatprep.subr.mxu0 %v2295
        %3774 = vmatpush1.msra.mxu0 %v2294
        %3775 = vmatprep.subr.mxu0 %v2297
        %3776 = vmatpush1.msra.mxu0 %v2296
        %3777 = vmatprep.subr.mxu0 %v2299
        %3778 = vmatpush1.msra.mxu0 %v2298
        %3779 = vmatprep.subr.mxu0 %v2301
        %3780 = vmatpush1.msra.mxu0 %v2300
        %3781 = vmatprep.subr.mxu0 %v2303
        %3782 = vmatpush1.msra.mxu0 %v2302
        %3783 = vmatprep.subr.mxu0 %v2305
        %3784 = vmatpush1.msra.mxu0 %v2304
        %3785 = vmatprep.subr.mxu0 %v2307
        %3786 = vmatpush1.msra.mxu0 %v2306
        %3787 = vmatprep.subr.mxu0 %v2309
        %3788 = vmatpush1.msra.mxu0 %v2308
        %3789 = vmatprep.subr.mxu0 %v2311
        %3790 = vmatpush1.msra.mxu0 %v2310
        %3791 = vmatprep.subr.mxu0 %v2313
        %3792 = vmatpush1.msra.mxu0 %v2312
        %3793 = vmatprep.subr.mxu0 %v2315
        %3794 = vmatpush1.msra.mxu0 %v2314
        %3795 = vmatprep.subr.mxu0 %v2317
        %3796 = vmatpush1.msra.mxu0 %v2316
        %3797 = vmatprep.subr.mxu0 %v2319
        %3798 = vmatpush1.msra.mxu0 %v2318
        %3799 = vmatprep.subr.mxu0 %v2321
        %3800 = vmatpush1.msra.mxu0 %v2320
        %3801 = vmatprep.subr.mxu0 %v2323
        %3802 = vmatpush1.msra.mxu0 %v2322
        %3803 = vmatprep.subr.mxu0 %v2325
        %3804 = vmatpush1.msra.mxu0 %v2324
        %3805 = vmatprep.subr.mxu0 %v2327
        %3806 = vmatpush1.msra.mxu0 %v2326
        %3807 = vmatprep.subr.mxu0 %v2329
        %3808 = vmatpush1.msra.mxu0 %v2328
        %3809 = vmatprep.subr.mxu0 %v2331
        %3810 = vmatpush1.msra.mxu0 %v2330
        %3811 = vmatprep.subr.mxu0 %v2333
        %3812 = vmatpush1.msra.mxu0 %v2332
        %3813 = vmatprep.subr.mxu0 %v2335
        %3814 = vmatpush1.msra.mxu0 %v2334
        %3815 = vmatprep.subr.mxu0 %v2337
        %3816 = vmatpush1.msra.mxu0 %v2336
        %3817 = vmatprep.subr.mxu0 %v2339
        %3818 = vmatpush1.msra.mxu0 %v2338
        %3819 = vmatprep.subr.mxu0 %v2341
        %3820 = vmatpush1.msra.mxu0 %v2340
        %3821 = vmatprep.subr.mxu0 %v2343
        %3822 = vmatpush1.msra.mxu0 %v2342
        %3823 = vmatprep.mubr.f32.mxu0 %v2725
        %3824 = vmatmul.mubr.f32.gmra.mrb[0].mxu0 %v2724
        %v3825 = vpop.f32.mrb[0].mxu0
        %v3826 = vadd.f32 0.0, %v3825
        %v3827 = vpop.f32.mrb[0].mxu0
        %v3828 = vadd.f32 0.0, %v3827
        %3829 = vdwg.mxu0
        %v3830 = vld [vmem:[#allocation8 + $0x38] sm:$0xff]
        %v3832 = vsel %vm2870, %v3830, 0
        %3834 = vmatprep.subr.mxu0 %v3828
        %3835 = vmatpush1.msra.mxu0 %v3826
        %3836 = vmatprep.subr.mxu0 0.0
        %3837 = vmatpush1.msra.mxu0 0.0
        %3838 = vmatprep.subr.mxu0 0.0
        %3839 = vmatpush1.msra.mxu0 0.0
        %3840 = vmatprep.subr.mxu0 0.0
        %3841 = vmatpush1.msra.mxu0 0.0
        %3842 = vmatprep.subr.mxu0 0.0
        %3843 = vmatpush1.msra.mxu0 0.0
        %3844 = vmatprep.subr.mxu0 0.0
        %3845 = vmatpush1.msra.mxu0 0.0
        %3846 = vmatprep.subr.mxu0 0.0
        %3847 = vmatpush1.msra.mxu0 0.0
        %3848 = vmatprep.subr.mxu0 0.0
        %3849 = vmatpush1.msra.mxu0 0.0
        %3850 = vmatprep.subr.mxu0 0.0
        %3851 = vmatpush1.msra.mxu0 0.0
        %3852 = vmatprep.subr.mxu0 0.0
        %3853 = vmatpush1.msra.mxu0 0.0
        %3854 = vmatprep.subr.mxu0 0.0
        %3855 = vmatpush1.msra.mxu0 0.0
        %3856 = vmatprep.subr.mxu0 0.0
        %3857 = vmatpush1.msra.mxu0 0.0
        %3858 = vmatprep.subr.mxu0 0.0
        %3859 = vmatpush1.msra.mxu0 0.0
        %3860 = vmatprep.subr.mxu0 0.0
        %3861 = vmatpush1.msra.mxu0 0.0
        %3862 = vmatprep.subr.mxu0 0.0
        %3863 = vmatpush1.msra.mxu0 0.0
        %3864 = vmatprep.subr.mxu0 0.0
        %3865 = vmatpush1.msra.mxu0 0.0
        %3866 = vmatprep.subr.mxu0 0.0
        %3867 = vmatpush1.msra.mxu0 0.0
        %3868 = vmatprep.subr.mxu0 0.0
        %3869 = vmatpush1.msra.mxu0 0.0
        %3870 = vmatprep.subr.mxu0 0.0
        %3871 = vmatpush1.msra.mxu0 0.0
        %3872 = vmatprep.subr.mxu0 0.0
        %3873 = vmatpush1.msra.mxu0 0.0
        %3874 = vmatprep.subr.mxu0 0.0
        %3875 = vmatpush1.msra.mxu0 0.0
        %3876 = vmatprep.subr.mxu0 0.0
        %3877 = vmatpush1.msra.mxu0 0.0
        %3878 = vmatprep.subr.mxu0 0.0
        %3879 = vmatpush1.msra.mxu0 0.0
        %3880 = vmatprep.subr.mxu0 0.0
        %3881 = vmatpush1.msra.mxu0 0.0
        %3882 = vmatprep.subr.mxu0 0.0
        %3883 = vmatpush1.msra.mxu0 0.0
        %3884 = vmatprep.subr.mxu0 0.0
        %3885 = vmatpush1.msra.mxu0 0.0
        %3886 = vmatprep.subr.mxu0 0.0
        %3887 = vmatpush1.msra.mxu0 0.0
        %3888 = vmatprep.subr.mxu0 0.0
        %3889 = vmatpush1.msra.mxu0 0.0
        %3890 = vmatprep.subr.mxu0 0.0
        %3891 = vmatpush1.msra.mxu0 0.0
        %3892 = vmatprep.subr.mxu0 0.0
        %3893 = vmatpush1.msra.mxu0 0.0
        %3894 = vmatprep.subr.mxu0 0.0
        %3895 = vmatpush1.msra.mxu0 0.0
        %3896 = vmatprep.subr.mxu0 0.0
        %3897 = vmatpush1.msra.mxu0 0.0
        %3898 = vmatprep.mubr.f32.mxu0 0.0
        %3899 = vmatmul.mubr.f32.gmra.mrb[0].mxu0 %v3832
        %v3900 = vpop.f32.mrb[0].mxu0
        %v3901 = vadd.f32 0.0, %v3900
        %v3902 = vpop.f32.mrb[0].mxu0
        %v3903 = vadd.f32 0.0, %v3902
        %3904 = vdwg.mxu0
        %v3905 = vadd.f32 %v3757, %v3901
        %v3906 = vadd.f32 %v3758, %v3903
        %3907 = vmatprep.subr.mxu0 %v2499
        %3908 = vmatpush1.msra.mxu0 %v2498
        %3909 = vmatprep.subr.mxu0 %v2501
        %3910 = vmatpush1.msra.mxu0 %v2500
        %3911 = vmatprep.subr.mxu0 %v2503
        %3912 = vmatpush1.msra.mxu0 %v2502
        %3913 = vmatprep.subr.mxu0 %v2505
        %3914 = vmatpush1.msra.mxu0 %v2504
        %3915 = vmatprep.subr.mxu0 %v2507
        %3916 = vmatpush1.msra.mxu0 %v2506
        %3917 = vmatprep.subr.mxu0 %v2509
        %3918 = vmatpush1.msra.mxu0 %v2508
        %3919 = vmatprep.subr.mxu0 %v2511
        %3920 = vmatpush1.msra.mxu0 %v2510
        %3921 = vmatprep.subr.mxu0 %v2513
        %3922 = vmatpush1.msra.mxu0 %v2512
        %3923 = vmatprep.subr.mxu0 %v2515
        %3924 = vmatpush1.msra.mxu0 %v2514
        %3925 = vmatprep.subr.mxu0 %v2517
        %3926 = vmatpush1.msra.mxu0 %v2516
        %3927 = vmatprep.subr.mxu0 %v2519
        %3928 = vmatpush1.msra.mxu0 %v2518
        %3929 = vmatprep.subr.mxu0 %v2521
        %3930 = vmatpush1.msra.mxu0 %v2520
        %3931 = vmatprep.subr.mxu0 %v2523
        %3932 = vmatpush1.msra.mxu0 %v2522
        %3933 = vmatprep.subr.mxu0 %v2525
        %3934 = vmatpush1.msra.mxu0 %v2524
        %3935 = vmatprep.subr.mxu0 %v2527
        %3936 = vmatpush1.msra.mxu0 %v2526
        %3937 = vmatprep.subr.mxu0 %v2529
        %3938 = vmatpush1.msra.mxu0 %v2528
        %3939 = vmatprep.subr.mxu0 %v2531
        %3940 = vmatpush1.msra.mxu0 %v2530
        %3941 = vmatprep.subr.mxu0 %v2533
        %3942 = vmatpush1.msra.mxu0 %v2532
        %3943 = vmatprep.subr.mxu0 %v2535
        %3944 = vmatpush1.msra.mxu0 %v2534
        %3945 = vmatprep.subr.mxu0 %v2537
        %3946 = vmatpush1.msra.mxu0 %v2536
        %3947 = vmatprep.subr.mxu0 %v2539
        %3948 = vmatpush1.msra.mxu0 %v2538
        %3949 = vmatprep.subr.mxu0 %v2541
        %3950 = vmatpush1.msra.mxu0 %v2540
        %3951 = vmatprep.subr.mxu0 %v2543
        %3952 = vmatpush1.msra.mxu0 %v2542
        %3953 = vmatprep.subr.mxu0 %v2545
        %3954 = vmatpush1.msra.mxu0 %v2544
        %3955 = vmatprep.subr.mxu0 %v2547
        %3956 = vmatpush1.msra.mxu0 %v2546
        %3957 = vmatprep.subr.mxu0 %v2549
        %3958 = vmatpush1.msra.mxu0 %v2548
        %3959 = vmatprep.subr.mxu0 %v2551
        %3960 = vmatpush1.msra.mxu0 %v2550
        %3961 = vmatprep.subr.mxu0 %v2553
        %3962 = vmatpush1.msra.mxu0 %v2552
        %3963 = vmatprep.subr.mxu0 %v2555
        %3964 = vmatpush1.msra.mxu0 %v2554
        %3965 = vmatprep.subr.mxu0 %v2557
        %3966 = vmatpush1.msra.mxu0 %v2556
        %3967 = vmatprep.subr.mxu0 %v2559
        %3968 = vmatpush1.msra.mxu0 %v2558
        %3969 = vmatprep.subr.mxu0 %v2561
        %3970 = vmatpush1.msra.mxu0 %v2560
        %3971 = vmatprep.mubr.f32.mxu0 %v2725
        %3972 = vmatmul.mubr.f32.gmra.mrb[0].mxu0 %v2724
        %v3973 = vpop.f32.mrb[0].mxu0
        %v3974 = vadd.f32 0.0, %v3973
        %v3975 = vpop.f32.mrb[0].mxu0
        %v3976 = vadd.f32 0.0, %v3975
        %3977 = vdwg.mxu0
        %v3978 = vld [vmem:[#allocation8 + $0x40] sm:$0xff]
        %v3980 = vsel %vm2870, %v3978, 0
        %3982 = vmatprep.subr.mxu0 %v3976
        %3983 = vmatpush1.msra.mxu0 %v3974
        %3984 = vmatprep.subr.mxu0 0.0
        %3985 = vmatpush1.msra.mxu0 0.0
        %3986 = vmatprep.subr.mxu0 0.0
        %3987 = vmatpush1.msra.mxu0 0.0
        %3988 = vmatprep.subr.mxu0 0.0
        %3989 = vmatpush1.msra.mxu0 0.0
        %3990 = vmatprep.subr.mxu0 0.0
        %3991 = vmatpush1.msra.mxu0 0.0
        %3992 = vmatprep.subr.mxu0 0.0
        %3993 = vmatpush1.msra.mxu0 0.0
        %3994 = vmatprep.subr.mxu0 0.0
        %3995 = vmatpush1.msra.mxu0 0.0
        %3996 = vmatprep.subr.mxu0 0.0
        %3997 = vmatpush1.msra.mxu0 0.0
        %3998 = vmatprep.subr.mxu0 0.0
        %3999 = vmatpush1.msra.mxu0 0.0
        %4000 = vmatprep.subr.mxu0 0.0
        %4001 = vmatpush1.msra.mxu0 0.0
        %4002 = vmatprep.subr.mxu0 0.0
        %4003 = vmatpush1.msra.mxu0 0.0
        %4004 = vmatprep.subr.mxu0 0.0
        %4005 = vmatpush1.msra.mxu0 0.0
        %4006 = vmatprep.subr.mxu0 0.0
        %4007 = vmatpush1.msra.mxu0 0.0
        %4008 = vmatprep.subr.mxu0 0.0
        %4009 = vmatpush1.msra.mxu0 0.0
        %4010 = vmatprep.subr.mxu0 0.0
        %4011 = vmatpush1.msra.mxu0 0.0
        %4012 = vmatprep.subr.mxu0 0.0
        %4013 = vmatpush1.msra.mxu0 0.0
        %4014 = vmatprep.subr.mxu0 0.0
        %4015 = vmatpush1.msra.mxu0 0.0
        %4016 = vmatprep.subr.mxu0 0.0
        %4017 = vmatpush1.msra.mxu0 0.0
        %4018 = vmatprep.subr.mxu0 0.0
        %4019 = vmatpush1.msra.mxu0 0.0
        %4020 = vmatprep.subr.mxu0 0.0
        %4021 = vmatpush1.msra.mxu0 0.0
        %4022 = vmatprep.subr.mxu0 0.0
        %4023 = vmatpush1.msra.mxu0 0.0
        %4024 = vmatprep.subr.mxu0 0.0
        %4025 = vmatpush1.msra.mxu0 0.0
        %4026 = vmatprep.subr.mxu0 0.0
        %4027 = vmatpush1.msra.mxu0 0.0
        %4028 = vmatprep.subr.mxu0 0.0
        %4029 = vmatpush1.msra.mxu0 0.0
        %4030 = vmatprep.subr.mxu0 0.0
        %4031 = vmatpush1.msra.mxu0 0.0
        %4032 = vmatprep.subr.mxu0 0.0
        %4033 = vmatpush1.msra.mxu0 0.0
        %4034 = vmatprep.subr.mxu0 0.0
        %4035 = vmatpush1.msra.mxu0 0.0
        %4036 = vmatprep.subr.mxu0 0.0
        %4037 = vmatpush1.msra.mxu0 0.0
        %4038 = vmatprep.subr.mxu0 0.0
        %4039 = vmatpush1.msra.mxu0 0.0
        %4040 = vmatprep.subr.mxu0 0.0
        %4041 = vmatpush1.msra.mxu0 0.0
        %4042 = vmatprep.subr.mxu0 0.0
        %4043 = vmatpush1.msra.mxu0 0.0
        %4044 = vmatprep.subr.mxu0 0.0
        %4045 = vmatpush1.msra.mxu0 0.0
        %4046 = vmatprep.mubr.f32.mxu0 0.0
        %4047 = vmatmul.mubr.f32.gmra.mrb[0].mxu0 %v3980
        %v4048 = vpop.f32.mrb[0].mxu0
        %v4049 = vadd.f32 0.0, %v4048
        %v4050 = vpop.f32.mrb[0].mxu0
        %v4051 = vadd.f32 0.0, %v4050
        %4052 = vdwg.mxu0
        %v4053 = vadd.f32 %v3905, %v4049
        %v4054 = vadd.f32 %v3906, %v4051
        %v4055 = vld [vmem:[#allocation10] sm:$0xff]
        %4057 = vset.pattern.permute.xlu0 0
        %4058 = vperm.xlu0 %4057, %v4055
        %v4059 = vpop.permute.xlu0 %4058
        %v4061 = vadd.f32 %v4053, %v4059
        %v4062 = vadd.f32 %v4054, %v4059
        %v4063 = vmax.f32 %v4061, 0.0
        %v4064 = vmax.f32 %v4062, 0.0
        %4065 = vmatprep.subr.mxu0 %v1845
        %4066 = vmatpush1.msra.mxu0 %v1844
        %4067 = vmatprep.subr.mxu0 %v1847
        %4068 = vmatpush1.msra.mxu0 %v1846
        %4069 = vmatprep.subr.mxu0 %v1849
        %4070 = vmatpush1.msra.mxu0 %v1848
        %4071 = vmatprep.subr.mxu0 %v1851
        %4072 = vmatpush1.msra.mxu0 %v1850
        %4073 = vmatprep.subr.mxu0 %v1853
        %4074 = vmatpush1.msra.mxu0 %v1852
        %4075 = vmatprep.subr.mxu0 %v1855
        %4076 = vmatpush1.msra.mxu0 %v1854
        %4077 = vmatprep.subr.mxu0 %v1857
        %4078 = vmatpush1.msra.mxu0 %v1856
        %4079 = vmatprep.subr.mxu0 %v1859
        %4080 = vmatpush1.msra.mxu0 %v1858
        %4081 = vmatprep.subr.mxu0 %v1861
        %4082 = vmatpush1.msra.mxu0 %v1860
        %4083 = vmatprep.subr.mxu0 %v1863
        %4084 = vmatpush1.msra.mxu0 %v1862
        %4085 = vmatprep.subr.mxu0 %v1865
        %4086 = vmatpush1.msra.mxu0 %v1864
        %4087 = vmatprep.subr.mxu0 %v1867
        %4088 = vmatpush1.msra.mxu0 %v1866
        %4089 = vmatprep.subr.mxu0 %v1869
        %4090 = vmatpush1.msra.mxu0 %v1868
        %4091 = vmatprep.subr.mxu0 %v1871
        %4092 = vmatpush1.msra.mxu0 %v1870
        %4093 = vmatprep.subr.mxu0 %v1873
        %4094 = vmatpush1.msra.mxu0 %v1872
        %4095 = vmatprep.subr.mxu0 %v1875
        %4096 = vmatpush1.msra.mxu0 %v1874
        %4097 = vmatprep.subr.mxu0 %v1877
        %4098 = vmatpush1.msra.mxu0 %v1876
        %4099 = vmatprep.subr.mxu0 %v1879
        %4100 = vmatpush1.msra.mxu0 %v1878
        %4101 = vmatprep.subr.mxu0 %v1881
        %4102 = vmatpush1.msra.mxu0 %v1880
        %4103 = vmatprep.subr.mxu0 %v1883
        %4104 = vmatpush1.msra.mxu0 %v1882
        %4105 = vmatprep.subr.mxu0 %v1885
        %4106 = vmatpush1.msra.mxu0 %v1884
        %4107 = vmatprep.subr.mxu0 %v1887
        %4108 = vmatpush1.msra.mxu0 %v1886
        %4109 = vmatprep.subr.mxu0 %v1889
        %4110 = vmatpush1.msra.mxu0 %v1888
        %4111 = vmatprep.subr.mxu0 %v1891
        %4112 = vmatpush1.msra.mxu0 %v1890
        %4113 = vmatprep.subr.mxu0 %v1893
        %4114 = vmatpush1.msra.mxu0 %v1892
        %4115 = vmatprep.subr.mxu0 %v1895
        %4116 = vmatpush1.msra.mxu0 %v1894
        %4117 = vmatprep.subr.mxu0 %v1897
        %4118 = vmatpush1.msra.mxu0 %v1896
        %4119 = vmatprep.subr.mxu0 %v1899
        %4120 = vmatpush1.msra.mxu0 %v1898
        %4121 = vmatprep.subr.mxu0 %v1901
        %4122 = vmatpush1.msra.mxu0 %v1900
        %4123 = vmatprep.subr.mxu0 %v1903
        %4124 = vmatpush1.msra.mxu0 %v1902
        %4125 = vmatprep.subr.mxu0 %v1905
        %4126 = vmatpush1.msra.mxu0 %v1904
        %4127 = vmatprep.subr.mxu0 %v1907
        %4128 = vmatpush1.msra.mxu0 %v1906
        %4129 = vmatprep.mubr.f32.mxu0 %v4064
        %4130 = vmatmul.mubr.f32.gmra.mrb[0].mxu0 %v4063
        %v4131 = vpop.f32.mrb[0].mxu0
        %v4132 = vadd.f32 0.0, %v4131
        %v4133 = vpop.f32.mrb[0].mxu0
        %v4134 = vadd.f32 0.0, %v4133
        %4135 = vdwg.mxu0
        %v4136 = vmax.f32 %v4063, %v4132
        %v4137 = vmax.f32 %v4064, %v4134
        %4138 = vmatprep.subr.mxu0 %v2281
        %4139 = vmatpush1.msra.mxu0 %v2280
        %4140 = vmatprep.subr.mxu0 %v2283
        %4141 = vmatpush1.msra.mxu0 %v2282
        %4142 = vmatprep.subr.mxu0 %v2285
        %4143 = vmatpush1.msra.mxu0 %v2284
        %4144 = vmatprep.subr.mxu0 %v2287
        %4145 = vmatpush1.msra.mxu0 %v2286
        %4146 = vmatprep.subr.mxu0 %v2289
        %4147 = vmatpush1.msra.mxu0 %v2288
        %4148 = vmatprep.subr.mxu0 %v2291
        %4149 = vmatpush1.msra.mxu0 %v2290
        %4150 = vmatprep.subr.mxu0 %v2293
        %4151 = vmatpush1.msra.mxu0 %v2292
        %4152 = vmatprep.subr.mxu0 %v2295
        %4153 = vmatpush1.msra.mxu0 %v2294
        %4154 = vmatprep.subr.mxu0 %v2297
        %4155 = vmatpush1.msra.mxu0 %v2296
        %4156 = vmatprep.subr.mxu0 %v2299
        %4157 = vmatpush1.msra.mxu0 %v2298
        %4158 = vmatprep.subr.mxu0 %v2301
        %4159 = vmatpush1.msra.mxu0 %v2300
        %4160 = vmatprep.subr.mxu0 %v2303
        %4161 = vmatpush1.msra.mxu0 %v2302
        %4162 = vmatprep.subr.mxu0 %v2305
        %4163 = vmatpush1.msra.mxu0 %v2304
        %4164 = vmatprep.subr.mxu0 %v2307
        %4165 = vmatpush1.msra.mxu0 %v2306
        %4166 = vmatprep.subr.mxu0 %v2309
        %4167 = vmatpush1.msra.mxu0 %v2308
        %4168 = vmatprep.subr.mxu0 %v2311
        %4169 = vmatpush1.msra.mxu0 %v2310
        %4170 = vmatprep.subr.mxu0 %v2313
        %4171 = vmatpush1.msra.mxu0 %v2312
        %4172 = vmatprep.subr.mxu0 %v2315
        %4173 = vmatpush1.msra.mxu0 %v2314
        %4174 = vmatprep.subr.mxu0 %v2317
        %4175 = vmatpush1.msra.mxu0 %v2316
        %4176 = vmatprep.subr.mxu0 %v2319
        %4177 = vmatpush1.msra.mxu0 %v2318
        %4178 = vmatprep.subr.mxu0 %v2321
        %4179 = vmatpush1.msra.mxu0 %v2320
        %4180 = vmatprep.subr.mxu0 %v2323
        %4181 = vmatpush1.msra.mxu0 %v2322
        %4182 = vmatprep.subr.mxu0 %v2325
        %4183 = vmatpush1.msra.mxu0 %v2324
        %4184 = vmatprep.subr.mxu0 %v2327
        %4185 = vmatpush1.msra.mxu0 %v2326
        %4186 = vmatprep.subr.mxu0 %v2329
        %4187 = vmatpush1.msra.mxu0 %v2328
        %4188 = vmatprep.subr.mxu0 %v2331
        %4189 = vmatpush1.msra.mxu0 %v2330
        %4190 = vmatprep.subr.mxu0 %v2333
        %4191 = vmatpush1.msra.mxu0 %v2332
        %4192 = vmatprep.subr.mxu0 %v2335
        %4193 = vmatpush1.msra.mxu0 %v2334
        %4194 = vmatprep.subr.mxu0 %v2337
        %4195 = vmatpush1.msra.mxu0 %v2336
        %4196 = vmatprep.subr.mxu0 %v2339
        %4197 = vmatpush1.msra.mxu0 %v2338
        %4198 = vmatprep.subr.mxu0 %v2341
        %4199 = vmatpush1.msra.mxu0 %v2340
        %4200 = vmatprep.subr.mxu0 %v2343
        %4201 = vmatpush1.msra.mxu0 %v2342
        %4202 = vmatprep.mubr.f32.mxu0 %v4137
        %4203 = vmatmul.mubr.f32.gmra.mrb[0].mxu0 %v4136
        %v4204 = vpop.f32.mrb[0].mxu0
        %v4205 = vadd.f32 0.0, %v4204
        %v4206 = vpop.f32.mrb[0].mxu0
        %v4207 = vadd.f32 0.0, %v4206
        %4208 = vdwg.mxu0
        %v4209 = vmax.f32 %v4136, %v4205
        %v4210 = vmax.f32 %v4137, %v4207
        %v4211 = vld [vmem:[#allocation25] sm:$0xff]
        %v4212 = vld [vmem:[#allocation25 + $0x8] sm:$0xff]
        %v4213 = vld [vmem:[#allocation25 + $0x10] sm:$0xff]
        %v4214 = vld [vmem:[#allocation25 + $0x18] sm:$0xff]
        %v4215 = vld [vmem:[#allocation25 + $0x20] sm:$0xff]
        %v4216 = vld [vmem:[#allocation25 + $0x28] sm:$0xff]
        %v4217 = vld [vmem:[#allocation25 + $0x30] sm:$0xff]
        %v4218 = vld [vmem:[#allocation25 + $0x38] sm:$0xff]
        %v4219 = vld [vmem:[#allocation25 + $0x40] sm:$0xff]
        %v4220 = vld [vmem:[#allocation25 + $0x48] sm:$0xff]
        %v4221 = vld [vmem:[#allocation25 + $0x50] sm:$0xff]
        %v4222 = vld [vmem:[#allocation25 + $0x58] sm:$0xff]
        %v4223 = vld [vmem:[#allocation25 + $0x60] sm:$0xff]
        %v4224 = vld [vmem:[#allocation25 + $0x68] sm:$0xff]
        %v4225 = vld [vmem:[#allocation25 + $0x70] sm:$0xff]
        %v4226 = vld [vmem:[#allocation25 + $0x78] sm:$0xff]
        %v4227 = vld [vmem:[#allocation25 + $0x80] sm:$0xff]
        %v4228 = vld [vmem:[#allocation25 + $0x88] sm:$0xff]
        %v4229 = vld [vmem:[#allocation25 + $0x90] sm:$0xff]
        %v4230 = vld [vmem:[#allocation25 + $0x98] sm:$0xff]
        %v4231 = vld [vmem:[#allocation25 + $0xa0] sm:$0xff]
        %v4232 = vld [vmem:[#allocation25 + $0xa8] sm:$0xff]
        %v4233 = vld [vmem:[#allocation25 + $0xb0] sm:$0xff]
        %v4234 = vld [vmem:[#allocation25 + $0xb8] sm:$0xff]
        %v4235 = vld [vmem:[#allocation25 + $0xc0] sm:$0xff]
        %v4236 = vld [vmem:[#allocation25 + $0xc8] sm:$0xff]
        %v4237 = vld [vmem:[#allocation25 + $0xd0] sm:$0xff]
        %v4238 = vld [vmem:[#allocation25 + $0xd8] sm:$0xff]
        %v4239 = vld [vmem:[#allocation25 + $0xe0] sm:$0xff]
        %v4240 = vld [vmem:[#allocation25 + $0xe8] sm:$0xff]
        %v4241 = vld [vmem:[#allocation25 + $0xf0] sm:$0xff]
        %v4242 = vld [vmem:[#allocation25 + $0xf8] sm:$0xff]
        %4243 = vmatprep.subr.mxu0 0.0
        %4244 = vmatpush1.msra.mxu0 %v4211
        %4245 = vmatprep.subr.mxu0 0.0
        %4246 = vmatpush1.msra.mxu0 %v4212
        %4247 = vmatprep.subr.mxu0 0.0
        %4248 = vmatpush1.msra.mxu0 %v4213
        %4249 = vmatprep.subr.mxu0 0.0
        %4250 = vmatpush1.msra.mxu0 %v4214
        %4251 = vmatprep.subr.mxu0 0.0
        %4252 = vmatpush1.msra.mxu0 %v4215
        %4253 = vmatprep.subr.mxu0 0.0
        %4254 = vmatpush1.msra.mxu0 %v4216
        %4255 = vmatprep.subr.mxu0 0.0
        %4256 = vmatpush1.msra.mxu0 %v4217
        %4257 = vmatprep.subr.mxu0 0.0
        %4258 = vmatpush1.msra.mxu0 %v4218
        %4259 = vmatprep.subr.mxu0 0.0
        %4260 = vmatpush1.msra.mxu0 %v4219
        %4261 = vmatprep.subr.mxu0 0.0
        %4262 = vmatpush1.msra.mxu0 %v4220
        %4263 = vmatprep.subr.mxu0 0.0
        %4264 = vmatpush1.msra.mxu0 %v4221
        %4265 = vmatprep.subr.mxu0 0.0
        %4266 = vmatpush1.msra.mxu0 %v4222
        %4267 = vmatprep.subr.mxu0 0.0
        %4268 = vmatpush1.msra.mxu0 %v4223
        %4269 = vmatprep.subr.mxu0 0.0
        %4270 = vmatpush1.msra.mxu0 %v4224
        %4271 = vmatprep.subr.mxu0 0.0
        %4272 = vmatpush1.msra.mxu0 %v4225
        %4273 = vmatprep.subr.mxu0 0.0
        %4274 = vmatpush1.msra.mxu0 %v4226
        %4275 = vmatprep.subr.mxu0 0.0
        %4276 = vmatpush1.msra.mxu0 %v4227
        %4277 = vmatprep.subr.mxu0 0.0
        %4278 = vmatpush1.msra.mxu0 %v4228
        %4279 = vmatprep.subr.mxu0 0.0
        %4280 = vmatpush1.msra.mxu0 %v4229
        %4281 = vmatprep.subr.mxu0 0.0
        %4282 = vmatpush1.msra.mxu0 %v4230
        %4283 = vmatprep.subr.mxu0 0.0
        %4284 = vmatpush1.msra.mxu0 %v4231
        %4285 = vmatprep.subr.mxu0 0.0
        %4286 = vmatpush1.msra.mxu0 %v4232
        %4287 = vmatprep.subr.mxu0 0.0
        %4288 = vmatpush1.msra.mxu0 %v4233
        %4289 = vmatprep.subr.mxu0 0.0
        %4290 = vmatpush1.msra.mxu0 %v4234
        %4291 = vmatprep.subr.mxu0 0.0
        %4292 = vmatpush1.msra.mxu0 %v4235
        %4293 = vmatprep.subr.mxu0 0.0
        %4294 = vmatpush1.msra.mxu0 %v4236
        %4295 = vmatprep.subr.mxu0 0.0
        %4296 = vmatpush1.msra.mxu0 %v4237
        %4297 = vmatprep.subr.mxu0 0.0
        %4298 = vmatpush1.msra.mxu0 %v4238
        %4299 = vmatprep.subr.mxu0 0.0
        %4300 = vmatpush1.msra.mxu0 %v4239
        %4301 = vmatprep.subr.mxu0 0.0
        %4302 = vmatpush1.msra.mxu0 %v4240
        %4303 = vmatprep.subr.mxu0 0.0
        %4304 = vmatpush1.msra.mxu0 %v4241
        %4305 = vmatprep.subr.mxu0 0.0
        %4306 = vmatpush1.msra.mxu0 %v4242
        %4307 = vmatprep.mubr.f32.mxu0 %v4210
        %4308 = vmatmul.mubr.f32.gmra.mrb[0].mxu0 %v4209
        %v4309 = vpop.f32.mrb[0].mxu0
        %v4310 = vadd.f32 0.0, %v4309
        %v4311 = vpop.f32.mrb[0].mxu0
        %4312 = vdwg.mxu0
        %v4313 = vld [vmem:[#allocation22] sm:$0xff]
        %v4314 = vld [vmem:[#allocation22 + $0x8] sm:$0xff]
        %v4315 = vld [vmem:[#allocation22 + $0x10] sm:$0xff]
        %v4316 = vld [vmem:[#allocation22 + $0x18] sm:$0xff]
        %v4317 = vld [vmem:[#allocation22 + $0x20] sm:$0xff]
        %v4318 = vld [vmem:[#allocation22 + $0x28] sm:$0xff]
        %v4319 = vld [vmem:[#allocation22 + $0x30] sm:$0xff]
        %v4320 = vld [vmem:[#allocation22 + $0x38] sm:$0xff]
        %vm4321 = vcmask 523264
        %v4323 = vsel %vm4321, %v4310, 0
        %4325 = vmatprep.subr.mxu0 0.0
        %4326 = vmatpush1.msra.mxu0 %v4313
        %4327 = vmatprep.subr.mxu0 0.0
        %4328 = vmatpush1.msra.mxu0 %v4314
        %4329 = vmatprep.subr.mxu0 0.0
        %4330 = vmatpush1.msra.mxu0 %v4315
        %4331 = vmatprep.subr.mxu0 0.0
        %4332 = vmatpush1.msra.mxu0 %v4316
        %4333 = vmatprep.subr.mxu0 0.0
        %4334 = vmatpush1.msra.mxu0 %v4317
        %4335 = vmatprep.subr.mxu0 0.0
        %4336 = vmatpush1.msra.mxu0 %v4318
        %4337 = vmatprep.subr.mxu0 0.0
        %4338 = vmatpush1.msra.mxu0 %v4319
        %4339 = vmatprep.subr.mxu0 0.0
        %4340 = vmatpush1.msra.mxu0 %v4320
        %4341 = vmatprep.subr.mxu0 0.0
        %4342 = vmatpush1.msra.mxu0 0.0
        %4343 = vmatprep.subr.mxu0 0.0
        %4344 = vmatpush1.msra.mxu0 0.0
        %4345 = vmatprep.subr.mxu0 0.0
        %4346 = vmatpush1.msra.mxu0 0.0
        %4347 = vmatprep.subr.mxu0 0.0
        %4348 = vmatpush1.msra.mxu0 0.0
        %4349 = vmatprep.subr.mxu0 0.0
        %4350 = vmatpush1.msra.mxu0 0.0
        %4351 = vmatprep.subr.mxu0 0.0
        %4352 = vmatpush1.msra.mxu0 0.0
        %4353 = vmatprep.subr.mxu0 0.0
        %4354 = vmatpush1.msra.mxu0 0.0
        %4355 = vmatprep.subr.mxu0 0.0
        %4356 = vmatpush1.msra.mxu0 0.0
        %4357 = vmatprep.subr.mxu0 0.0
        %4358 = vmatpush1.msra.mxu0 0.0
        %4359 = vmatprep.subr.mxu0 0.0
        %4360 = vmatpush1.msra.mxu0 0.0
        %4361 = vmatprep.subr.mxu0 0.0
        %4362 = vmatpush1.msra.mxu0 0.0
        %4363 = vmatprep.subr.mxu0 0.0
        %4364 = vmatpush1.msra.mxu0 0.0
        %4365 = vmatprep.subr.mxu0 0.0
        %4366 = vmatpush1.msra.mxu0 0.0
        %4367 = vmatprep.subr.mxu0 0.0
        %4368 = vmatpush1.msra.mxu0 0.0
        %4369 = vmatprep.subr.mxu0 0.0
        %4370 = vmatpush1.msra.mxu0 0.0
        %4371 = vmatprep.subr.mxu0 0.0
        %4372 = vmatpush1.msra.mxu0 0.0
        %4373 = vmatprep.subr.mxu0 0.0
        %4374 = vmatpush1.msra.mxu0 0.0
        %4375 = vmatprep.subr.mxu0 0.0
        %4376 = vmatpush1.msra.mxu0 0.0
        %4377 = vmatprep.subr.mxu0 0.0
        %4378 = vmatpush1.msra.mxu0 0.0
        %4379 = vmatprep.subr.mxu0 0.0
        %4380 = vmatpush1.msra.mxu0 0.0
        %4381 = vmatprep.subr.mxu0 0.0
        %4382 = vmatpush1.msra.mxu0 0.0
        %4383 = vmatprep.subr.mxu0 0.0
        %4384 = vmatpush1.msra.mxu0 0.0
        %4385 = vmatprep.subr.mxu0 0.0
        %4386 = vmatpush1.msra.mxu0 0.0
        %4387 = vmatprep.subr.mxu0 0.0
        %4388 = vmatpush1.msra.mxu0 0.0
        %4389 = vmatprep.mubr.f32.mxu0 0.0
        %4390 = vmatmul.mubr.f32.gmra.mrb[0].mxu0 %v4323
        %v4391 = vpop.f32.mrb[0].mxu0
        %v4392 = vadd.f32 0.0, %v4391
        %v4393 = vpop.f32.mrb[0].mxu0
        %4394 = vdwg.mxu0
        %v4395 = vld [vmem:[#allocation11] sm:$0xff]
        %v4396 = vld [vmem:[#allocation11 + $0x8] sm:$0xff]
        %v4397 = vld [vmem:[#allocation22 + $0x40] sm:$0xff]
        %v4398 = vld [vmem:[#allocation22 + $0x48] sm:$0xff]
        %v4399 = vld [vmem:[#allocation22 + $0x50] sm:$0xff]
        %v4400 = vld [vmem:[#allocation22 + $0x58] sm:$0xff]
        %v4401 = vld [vmem:[#allocation22 + $0x60] sm:$0xff]
        %v4402 = vld [vmem:[#allocation22 + $0x68] sm:$0xff]
        %v4403 = vld [vmem:[#allocation22 + $0x70] sm:$0xff]
        %v4404 = vld [vmem:[#allocation22 + $0x78] sm:$0xff]
        %4405 = vmatprep.subr.mxu0 0.0
        %4406 = vmatpush1.msra.mxu0 %v4397
        %4407 = vmatprep.subr.mxu0 0.0
        %4408 = vmatpush1.msra.mxu0 %v4398
        %4409 = vmatprep.subr.mxu0 0.0
        %4410 = vmatpush1.msra.mxu0 %v4399
        %4411 = vmatprep.subr.mxu0 0.0
        %4412 = vmatpush1.msra.mxu0 %v4400
        %4413 = vmatprep.subr.mxu0 0.0
        %4414 = vmatpush1.msra.mxu0 %v4401
        %4415 = vmatprep.subr.mxu0 0.0
        %4416 = vmatpush1.msra.mxu0 %v4402
        %4417 = vmatprep.subr.mxu0 0.0
        %4418 = vmatpush1.msra.mxu0 %v4403
        %4419 = vmatprep.subr.mxu0 0.0
        %4420 = vmatpush1.msra.mxu0 %v4404
        %4421 = vmatprep.subr.mxu0 0.0
        %4422 = vmatpush1.msra.mxu0 0.0
        %4423 = vmatprep.subr.mxu0 0.0
        %4424 = vmatpush1.msra.mxu0 0.0
        %4425 = vmatprep.subr.mxu0 0.0
        %4426 = vmatpush1.msra.mxu0 0.0
        %4427 = vmatprep.subr.mxu0 0.0
        %4428 = vmatpush1.msra.mxu0 0.0
        %4429 = vmatprep.subr.mxu0 0.0
        %4430 = vmatpush1.msra.mxu0 0.0
        %4431 = vmatprep.subr.mxu0 0.0
        %4432 = vmatpush1.msra.mxu0 0.0
        %4433 = vmatprep.subr.mxu0 0.0
        %4434 = vmatpush1.msra.mxu0 0.0
        %4435 = vmatprep.subr.mxu0 0.0
        %4436 = vmatpush1.msra.mxu0 0.0
        %4437 = vmatprep.subr.mxu0 0.0
        %4438 = vmatpush1.msra.mxu0 0.0
        %4439 = vmatprep.subr.mxu0 0.0
        %4440 = vmatpush1.msra.mxu0 0.0
        %4441 = vmatprep.subr.mxu0 0.0
        %4442 = vmatpush1.msra.mxu0 0.0
        %4443 = vmatprep.subr.mxu0 0.0
        %4444 = vmatpush1.msra.mxu0 0.0
        %4445 = vmatprep.subr.mxu0 0.0
        %4446 = vmatpush1.msra.mxu0 0.0
        %4447 = vmatprep.subr.mxu0 0.0
        %4448 = vmatpush1.msra.mxu0 0.0
        %4449 = vmatprep.subr.mxu0 0.0
        %4450 = vmatpush1.msra.mxu0 0.0
        %4451 = vmatprep.subr.mxu0 0.0
        %4452 = vmatpush1.msra.mxu0 0.0
        %4453 = vmatprep.subr.mxu0 0.0
        %4454 = vmatpush1.msra.mxu0 0.0
        %4455 = vmatprep.subr.mxu0 0.0
        %4456 = vmatpush1.msra.mxu0 0.0
        %4457 = vmatprep.subr.mxu0 0.0
        %4458 = vmatpush1.msra.mxu0 0.0
        %4459 = vmatprep.subr.mxu0 0.0
        %4460 = vmatpush1.msra.mxu0 0.0
        %4461 = vmatprep.subr.mxu0 0.0
        %4462 = vmatpush1.msra.mxu0 0.0
        %4463 = vmatprep.subr.mxu0 0.0
        %4464 = vmatpush1.msra.mxu0 0.0
        %4465 = vmatprep.subr.mxu0 0.0
        %4466 = vmatpush1.msra.mxu0 0.0
        %4467 = vmatprep.subr.mxu0 0.0
        %4468 = vmatpush1.msra.mxu0 0.0
        %4469 = vmatprep.mubr.f32.mxu0 0.0
        %4470 = vmatmul.mubr.f32.gmra.mrb[0].mxu0 %v4323
        %v4471 = vpop.f32.mrb[0].mxu0
        %v4472 = vadd.f32 0.0, %v4471
        %v4473 = vpop.f32.mrb[0].mxu0
        %4474 = vdwg.mxu0
        %v4475 = vld [vmem:[#allocation11 + $0x10] sm:$0xff]
        %v4476 = vld [vmem:[#allocation11 + $0x18] sm:$0xff]
        %v4478 = vsel %vm2870, %v4475, 0
        %v4481 = vsel %vm2870, %v4476, 0
        %4483 = vmatprep.subr.mxu0 0.0
        %4484 = vmatpush1.msra.mxu0 %v4472
        %4485 = vmatprep.subr.mxu0 0.0
        %4486 = vmatpush1.msra.mxu0 0.0
        %4487 = vmatprep.subr.mxu0 0.0
        %4488 = vmatpush1.msra.mxu0 0.0
        %4489 = vmatprep.subr.mxu0 0.0
        %4490 = vmatpush1.msra.mxu0 0.0
        %4491 = vmatprep.subr.mxu0 0.0
        %4492 = vmatpush1.msra.mxu0 0.0
        %4493 = vmatprep.subr.mxu0 0.0
        %4494 = vmatpush1.msra.mxu0 0.0
        %4495 = vmatprep.subr.mxu0 0.0
        %4496 = vmatpush1.msra.mxu0 0.0
        %4497 = vmatprep.subr.mxu0 0.0
        %4498 = vmatpush1.msra.mxu0 0.0
        %4499 = vmatprep.subr.mxu0 0.0
        %4500 = vmatpush1.msra.mxu0 0.0
        %4501 = vmatprep.subr.mxu0 0.0
        %4502 = vmatpush1.msra.mxu0 0.0
        %4503 = vmatprep.subr.mxu0 0.0
        %4504 = vmatpush1.msra.mxu0 0.0
        %4505 = vmatprep.subr.mxu0 0.0
        %4506 = vmatpush1.msra.mxu0 0.0
        %4507 = vmatprep.subr.mxu0 0.0
        %4508 = vmatpush1.msra.mxu0 0.0
        %4509 = vmatprep.subr.mxu0 0.0
        %4510 = vmatpush1.msra.mxu0 0.0
        %4511 = vmatprep.subr.mxu0 0.0
        %4512 = vmatpush1.msra.mxu0 0.0
        %4513 = vmatprep.subr.mxu0 0.0
        %4514 = vmatpush1.msra.mxu0 0.0
        %4515 = vmatprep.subr.mxu0 0.0
        %4516 = vmatpush1.msra.mxu0 0.0
        %4517 = vmatprep.subr.mxu0 0.0
        %4518 = vmatpush1.msra.mxu0 0.0
        %4519 = vmatprep.subr.mxu0 0.0
        %4520 = vmatpush1.msra.mxu0 0.0
        %4521 = vmatprep.subr.mxu0 0.0
        %4522 = vmatpush1.msra.mxu0 0.0
        %4523 = vmatprep.subr.mxu0 0.0
        %4524 = vmatpush1.msra.mxu0 0.0
        %4525 = vmatprep.subr.mxu0 0.0
        %4526 = vmatpush1.msra.mxu0 0.0
        %4527 = vmatprep.subr.mxu0 0.0
        %4528 = vmatpush1.msra.mxu0 0.0
        %4529 = vmatprep.subr.mxu0 0.0
        %4530 = vmatpush1.msra.mxu0 0.0
        %4531 = vmatprep.subr.mxu0 0.0
        %4532 = vmatpush1.msra.mxu0 0.0
        %4533 = vmatprep.subr.mxu0 0.0
        %4534 = vmatpush1.msra.mxu0 0.0
        %4535 = vmatprep.subr.mxu0 0.0
        %4536 = vmatpush1.msra.mxu0 0.0
        %4537 = vmatprep.subr.mxu0 0.0
        %4538 = vmatpush1.msra.mxu0 0.0
        %4539 = vmatprep.subr.mxu0 0.0
        %4540 = vmatpush1.msra.mxu0 0.0
        %4541 = vmatprep.subr.mxu0 0.0
        %4542 = vmatpush1.msra.mxu0 0.0
        %4543 = vmatprep.subr.mxu0 0.0
        %4544 = vmatpush1.msra.mxu0 0.0
        %4545 = vmatprep.subr.mxu0 0.0
        %4546 = vmatpush1.msra.mxu0 0.0
        %4547 = vmatprep.mubr.f32.mxu0 0.0
        %4548 = vmatmul.mubr.f32.gmra.mrb[0].mxu0 %v4478
        %v4549 = vpop.f32.mrb[0].mxu0
        %v4550 = vadd.f32 0.0, %v4549
        %v4551 = vpop.f32.mrb[0].mxu0
        %4552 = vmatprep.mubr.f32.mxu0 0.0
        %4553 = vmatmul.mubr.f32.gmra.mrb[0].mxu0 %v4481
        %v4554 = vpop.f32.mrb[0].mxu0
        %v4555 = vadd.f32 0.0, %v4554
        %v4556 = vpop.f32.mrb[0].mxu0
        %4557 = vdwg.mxu0
        %v4559 = vsel %vm2870, %v4395, 0
        %v4562 = vsel %vm2870, %v4396, 0
        %4564 = vmatprep.subr.mxu0 0.0
        %4565 = vmatpush1.msra.mxu0 %v4392
        %4566 = vmatprep.subr.mxu0 0.0
        %4567 = vmatpush1.msra.mxu0 0.0
        %4568 = vmatprep.subr.mxu0 0.0
        %4569 = vmatpush1.msra.mxu0 0.0
        %4570 = vmatprep.subr.mxu0 0.0
        %4571 = vmatpush1.msra.mxu0 0.0
        %4572 = vmatprep.subr.mxu0 0.0
        %4573 = vmatpush1.msra.mxu0 0.0
        %4574 = vmatprep.subr.mxu0 0.0
        %4575 = vmatpush1.msra.mxu0 0.0
        %4576 = vmatprep.subr.mxu0 0.0
        %4577 = vmatpush1.msra.mxu0 0.0
        %4578 = vmatprep.subr.mxu0 0.0
        %4579 = vmatpush1.msra.mxu0 0.0
        %4580 = vmatprep.subr.mxu0 0.0
        %4581 = vmatpush1.msra.mxu0 0.0
        %4582 = vmatprep.subr.mxu0 0.0
        %4583 = vmatpush1.msra.mxu0 0.0
        %4584 = vmatprep.subr.mxu0 0.0
        %4585 = vmatpush1.msra.mxu0 0.0
        %4586 = vmatprep.subr.mxu0 0.0
        %4587 = vmatpush1.msra.mxu0 0.0
        %4588 = vmatprep.subr.mxu0 0.0
        %4589 = vmatpush1.msra.mxu0 0.0
        %4590 = vmatprep.subr.mxu0 0.0
        %4591 = vmatpush1.msra.mxu0 0.0
        %4592 = vmatprep.subr.mxu0 0.0
        %4593 = vmatpush1.msra.mxu0 0.0
        %4594 = vmatprep.subr.mxu0 0.0
        %4595 = vmatpush1.msra.mxu0 0.0
        %4596 = vmatprep.subr.mxu0 0.0
        %4597 = vmatpush1.msra.mxu0 0.0
        %4598 = vmatprep.subr.mxu0 0.0
        %4599 = vmatpush1.msra.mxu0 0.0
        %4600 = vmatprep.subr.mxu0 0.0
        %4601 = vmatpush1.msra.mxu0 0.0
        %4602 = vmatprep.subr.mxu0 0.0
        %4603 = vmatpush1.msra.mxu0 0.0
        %4604 = vmatprep.subr.mxu0 0.0
        %4605 = vmatpush1.msra.mxu0 0.0
        %4606 = vmatprep.subr.mxu0 0.0
        %4607 = vmatpush1.msra.mxu0 0.0
        %4608 = vmatprep.subr.mxu0 0.0
        %4609 = vmatpush1.msra.mxu0 0.0
        %4610 = vmatprep.subr.mxu0 0.0
        %4611 = vmatpush1.msra.mxu0 0.0
        %4612 = vmatprep.subr.mxu0 0.0
        %4613 = vmatpush1.msra.mxu0 0.0
        %4614 = vmatprep.subr.mxu0 0.0
        %4615 = vmatpush1.msra.mxu0 0.0
        %4616 = vmatprep.subr.mxu0 0.0
        %4617 = vmatpush1.msra.mxu0 0.0
        %4618 = vmatprep.subr.mxu0 0.0
        %4619 = vmatpush1.msra.mxu0 0.0
        %4620 = vmatprep.subr.mxu0 0.0
        %4621 = vmatpush1.msra.mxu0 0.0
        %4622 = vmatprep.subr.mxu0 0.0
        %4623 = vmatpush1.msra.mxu0 0.0
        %4624 = vmatprep.subr.mxu0 0.0
        %4625 = vmatpush1.msra.mxu0 0.0
        %4626 = vmatprep.subr.mxu0 0.0
        %4627 = vmatpush1.msra.mxu0 0.0
        %4628 = vmatprep.mubr.f32.mxu0 0.0
        %4629 = vmatmul.mubr.f32.gmra.mrb[0].mxu0 %v4559
        %v4630 = vpop.f32.mrb[0].mxu0
        %v4631 = vadd.f32 %v4550, %v4630
        %v4632 = vpop.f32.mrb[0].mxu0
        %4633 = vmatprep.mubr.f32.mxu0 0.0
        %4634 = vmatmul.mubr.f32.gmra.mrb[0].mxu0 %v4562
        %v4635 = vpop.f32.mrb[0].mxu0
        %v4636 = vadd.f32 %v4555, %v4635
        %v4637 = vpop.f32.mrb[0].mxu0
        %4638 = vdwg.mxu0
        %v4639 = vld [vmem:[#allocation22 + $0x80] sm:$0xff]
        %v4640 = vld [vmem:[#allocation22 + $0x88] sm:$0xff]
        %v4641 = vld [vmem:[#allocation22 + $0x90] sm:$0xff]
        %v4642 = vld [vmem:[#allocation22 + $0x98] sm:$0xff]
        %v4643 = vld [vmem:[#allocation22 + $0xa0] sm:$0xff]
        %v4644 = vld [vmem:[#allocation22 + $0xa8] sm:$0xff]
        %v4645 = vld [vmem:[#allocation22 + $0xb0] sm:$0xff]
        %v4646 = vld [vmem:[#allocation22 + $0xb8] sm:$0xff]
        %4647 = vmatprep.subr.mxu0 0.0
        %4648 = vmatpush1.msra.mxu0 %v4639
        %4649 = vmatprep.subr.mxu0 0.0
        %4650 = vmatpush1.msra.mxu0 %v4640
        %4651 = vmatprep.subr.mxu0 0.0
        %4652 = vmatpush1.msra.mxu0 %v4641
        %4653 = vmatprep.subr.mxu0 0.0
        %4654 = vmatpush1.msra.mxu0 %v4642
        %4655 = vmatprep.subr.mxu0 0.0
        %4656 = vmatpush1.msra.mxu0 %v4643
        %4657 = vmatprep.subr.mxu0 0.0
        %4658 = vmatpush1.msra.mxu0 %v4644
        %4659 = vmatprep.subr.mxu0 0.0
        %4660 = vmatpush1.msra.mxu0 %v4645
        %4661 = vmatprep.subr.mxu0 0.0
        %4662 = vmatpush1.msra.mxu0 %v4646
        %4663 = vmatprep.subr.mxu0 0.0
        %4664 = vmatpush1.msra.mxu0 0.0
        %4665 = vmatprep.subr.mxu0 0.0
        %4666 = vmatpush1.msra.mxu0 0.0
        %4667 = vmatprep.subr.mxu0 0.0
        %4668 = vmatpush1.msra.mxu0 0.0
        %4669 = vmatprep.subr.mxu0 0.0
        %4670 = vmatpush1.msra.mxu0 0.0
        %4671 = vmatprep.subr.mxu0 0.0
        %4672 = vmatpush1.msra.mxu0 0.0
        %4673 = vmatprep.subr.mxu0 0.0
        %4674 = vmatpush1.msra.mxu0 0.0
        %4675 = vmatprep.subr.mxu0 0.0
        %4676 = vmatpush1.msra.mxu0 0.0
        %4677 = vmatprep.subr.mxu0 0.0
        %4678 = vmatpush1.msra.mxu0 0.0
        %4679 = vmatprep.subr.mxu0 0.0
        %4680 = vmatpush1.msra.mxu0 0.0
        %4681 = vmatprep.subr.mxu0 0.0
        %4682 = vmatpush1.msra.mxu0 0.0
        %4683 = vmatprep.subr.mxu0 0.0
        %4684 = vmatpush1.msra.mxu0 0.0
        %4685 = vmatprep.subr.mxu0 0.0
        %4686 = vmatpush1.msra.mxu0 0.0
        %4687 = vmatprep.subr.mxu0 0.0
        %4688 = vmatpush1.msra.mxu0 0.0
        %4689 = vmatprep.subr.mxu0 0.0
        %4690 = vmatpush1.msra.mxu0 0.0
        %4691 = vmatprep.subr.mxu0 0.0
        %4692 = vmatpush1.msra.mxu0 0.0
        %4693 = vmatprep.subr.mxu0 0.0
        %4694 = vmatpush1.msra.mxu0 0.0
        %4695 = vmatprep.subr.mxu0 0.0
        %4696 = vmatpush1.msra.mxu0 0.0
        %4697 = vmatprep.subr.mxu0 0.0
        %4698 = vmatpush1.msra.mxu0 0.0
        %4699 = vmatprep.subr.mxu0 0.0
        %4700 = vmatpush1.msra.mxu0 0.0
        %4701 = vmatprep.subr.mxu0 0.0
        %4702 = vmatpush1.msra.mxu0 0.0
        %4703 = vmatprep.subr.mxu0 0.0
        %4704 = vmatpush1.msra.mxu0 0.0
        %4705 = vmatprep.subr.mxu0 0.0
        %4706 = vmatpush1.msra.mxu0 0.0
        %4707 = vmatprep.subr.mxu0 0.0
        %4708 = vmatpush1.msra.mxu0 0.0
        %4709 = vmatprep.subr.mxu0 0.0
        %4710 = vmatpush1.msra.mxu0 0.0
        %4711 = vmatprep.mubr.f32.mxu0 0.0
        %4712 = vmatmul.mubr.f32.gmra.mrb[0].mxu0 %v4323
        %v4713 = vpop.f32.mrb[0].mxu0
        %v4714 = vadd.f32 0.0, %v4713
        %v4715 = vpop.f32.mrb[0].mxu0
        %4716 = vdwg.mxu0
        %v4717 = vld [vmem:[#allocation11 + $0x20] sm:$0xff]
        %v4718 = vld [vmem:[#allocation11 + $0x28] sm:$0xff]
        %v4720 = vsel %vm2870, %v4717, 0
        %v4723 = vsel %vm2870, %v4718, 0
        %4725 = vmatprep.subr.mxu0 0.0
        %4726 = vmatpush1.msra.mxu0 %v4714
        %4727 = vmatprep.subr.mxu0 0.0
        %4728 = vmatpush1.msra.mxu0 0.0
        %4729 = vmatprep.subr.mxu0 0.0
        %4730 = vmatpush1.msra.mxu0 0.0
        %4731 = vmatprep.subr.mxu0 0.0
        %4732 = vmatpush1.msra.mxu0 0.0
        %4733 = vmatprep.subr.mxu0 0.0
        %4734 = vmatpush1.msra.mxu0 0.0
        %4735 = vmatprep.subr.mxu0 0.0
        %4736 = vmatpush1.msra.mxu0 0.0
        %4737 = vmatprep.subr.mxu0 0.0
        %4738 = vmatpush1.msra.mxu0 0.0
        %4739 = vmatprep.subr.mxu0 0.0
        %4740 = vmatpush1.msra.mxu0 0.0
        %4741 = vmatprep.subr.mxu0 0.0
        %4742 = vmatpush1.msra.mxu0 0.0
        %4743 = vmatprep.subr.mxu0 0.0
        %4744 = vmatpush1.msra.mxu0 0.0
        %4745 = vmatprep.subr.mxu0 0.0
        %4746 = vmatpush1.msra.mxu0 0.0
        %4747 = vmatprep.subr.mxu0 0.0
        %4748 = vmatpush1.msra.mxu0 0.0
        %4749 = vmatprep.subr.mxu0 0.0
        %4750 = vmatpush1.msra.mxu0 0.0
        %4751 = vmatprep.subr.mxu0 0.0
        %4752 = vmatpush1.msra.mxu0 0.0
        %4753 = vmatprep.subr.mxu0 0.0
        %4754 = vmatpush1.msra.mxu0 0.0
        %4755 = vmatprep.subr.mxu0 0.0
        %4756 = vmatpush1.msra.mxu0 0.0
        %4757 = vmatprep.subr.mxu0 0.0
        %4758 = vmatpush1.msra.mxu0 0.0
        %4759 = vmatprep.subr.mxu0 0.0
        %4760 = vmatpush1.msra.mxu0 0.0
        %4761 = vmatprep.subr.mxu0 0.0
        %4762 = vmatpush1.msra.mxu0 0.0
        %4763 = vmatprep.subr.mxu0 0.0
        %4764 = vmatpush1.msra.mxu0 0.0
        %4765 = vmatprep.subr.mxu0 0.0
        %4766 = vmatpush1.msra.mxu0 0.0
        %4767 = vmatprep.subr.mxu0 0.0
        %4768 = vmatpush1.msra.mxu0 0.0
        %4769 = vmatprep.subr.mxu0 0.0
        %4770 = vmatpush1.msra.mxu0 0.0
        %4771 = vmatprep.subr.mxu0 0.0
        %4772 = vmatpush1.msra.mxu0 0.0
        %4773 = vmatprep.subr.mxu0 0.0
        %4774 = vmatpush1.msra.mxu0 0.0
        %4775 = vmatprep.subr.mxu0 0.0
        %4776 = vmatpush1.msra.mxu0 0.0
        %4777 = vmatprep.subr.mxu0 0.0
        %4778 = vmatpush1.msra.mxu0 0.0
        %4779 = vmatprep.subr.mxu0 0.0
        %4780 = vmatpush1.msra.mxu0 0.0
        %4781 = vmatprep.subr.mxu0 0.0
        %4782 = vmatpush1.msra.mxu0 0.0
        %4783 = vmatprep.subr.mxu0 0.0
        %4784 = vmatpush1.msra.mxu0 0.0
        %4785 = vmatprep.subr.mxu0 0.0
        %4786 = vmatpush1.msra.mxu0 0.0
        %4787 = vmatprep.subr.mxu0 0.0
        %4788 = vmatpush1.msra.mxu0 0.0
        %4789 = vmatprep.mubr.f32.mxu0 0.0
        %4790 = vmatmul.mubr.f32.gmra.mrb[0].mxu0 %v4720
        %v4791 = vpop.f32.mrb[0].mxu0
        %v4792 = vadd.f32 0.0, %v4791
        %v4793 = vpop.f32.mrb[0].mxu0
        %4794 = vmatprep.mubr.f32.mxu0 0.0
        %4795 = vmatmul.mubr.f32.gmra.mrb[0].mxu0 %v4723
        %v4796 = vpop.f32.mrb[0].mxu0
        %v4797 = vadd.f32 0.0, %v4796
        %v4798 = vpop.f32.mrb[0].mxu0
        %4799 = vdwg.mxu0
        %v4800 = vadd.f32 %v4631, %v4792
        %v4801 = vadd.f32 %v4636, %v4797
        %v4802 = vld [vmem:[#allocation22 + $0xc0] sm:$0xff]
        %v4803 = vld [vmem:[#allocation22 + $0xc8] sm:$0xff]
        %v4804 = vld [vmem:[#allocation22 + $0xd0] sm:$0xff]
        %v4805 = vld [vmem:[#allocation22 + $0xd8] sm:$0xff]
        %v4806 = vld [vmem:[#allocation22 + $0xe0] sm:$0xff]
        %v4807 = vld [vmem:[#allocation22 + $0xe8] sm:$0xff]
        %v4808 = vld [vmem:[#allocation22 + $0xf0] sm:$0xff]
        %v4809 = vld [vmem:[#allocation22 + $0xf8] sm:$0xff]
        %4810 = vmatprep.subr.mxu0 0.0
        %4811 = vmatpush1.msra.mxu0 %v4802
        %4812 = vmatprep.subr.mxu0 0.0
        %4813 = vmatpush1.msra.mxu0 %v4803
        %4814 = vmatprep.subr.mxu0 0.0
        %4815 = vmatpush1.msra.mxu0 %v4804
        %4816 = vmatprep.subr.mxu0 0.0
        %4817 = vmatpush1.msra.mxu0 %v4805
        %4818 = vmatprep.subr.mxu0 0.0
        %4819 = vmatpush1.msra.mxu0 %v4806
        %4820 = vmatprep.subr.mxu0 0.0
        %4821 = vmatpush1.msra.mxu0 %v4807
        %4822 = vmatprep.subr.mxu0 0.0
        %4823 = vmatpush1.msra.mxu0 %v4808
        %4824 = vmatprep.subr.mxu0 0.0
        %4825 = vmatpush1.msra.mxu0 %v4809
        %4826 = vmatprep.subr.mxu0 0.0
        %4827 = vmatpush1.msra.mxu0 0.0
        %4828 = vmatprep.subr.mxu0 0.0
        %4829 = vmatpush1.msra.mxu0 0.0
        %4830 = vmatprep.subr.mxu0 0.0
        %4831 = vmatpush1.msra.mxu0 0.0
        %4832 = vmatprep.subr.mxu0 0.0
        %4833 = vmatpush1.msra.mxu0 0.0
        %4834 = vmatprep.subr.mxu0 0.0
        %4835 = vmatpush1.msra.mxu0 0.0
        %4836 = vmatprep.subr.mxu0 0.0
        %4837 = vmatpush1.msra.mxu0 0.0
        %4838 = vmatprep.subr.mxu0 0.0
        %4839 = vmatpush1.msra.mxu0 0.0
        %4840 = vmatprep.subr.mxu0 0.0
        %4841 = vmatpush1.msra.mxu0 0.0
        %4842 = vmatprep.subr.mxu0 0.0
        %4843 = vmatpush1.msra.mxu0 0.0
        %4844 = vmatprep.subr.mxu0 0.0
        %4845 = vmatpush1.msra.mxu0 0.0
        %4846 = vmatprep.subr.mxu0 0.0
        %4847 = vmatpush1.msra.mxu0 0.0
        %4848 = vmatprep.subr.mxu0 0.0
        %4849 = vmatpush1.msra.mxu0 0.0
        %4850 = vmatprep.subr.mxu0 0.0
        %4851 = vmatpush1.msra.mxu0 0.0
        %4852 = vmatprep.subr.mxu0 0.0
        %4853 = vmatpush1.msra.mxu0 0.0
        %4854 = vmatprep.subr.mxu0 0.0
        %4855 = vmatpush1.msra.mxu0 0.0
        %4856 = vmatprep.subr.mxu0 0.0
        %4857 = vmatpush1.msra.mxu0 0.0
        %4858 = vmatprep.subr.mxu0 0.0
        %4859 = vmatpush1.msra.mxu0 0.0
        %4860 = vmatprep.subr.mxu0 0.0
        %4861 = vmatpush1.msra.mxu0 0.0
        %4862 = vmatprep.subr.mxu0 0.0
        %4863 = vmatpush1.msra.mxu0 0.0
        %4864 = vmatprep.subr.mxu0 0.0
        %4865 = vmatpush1.msra.mxu0 0.0
        %4866 = vmatprep.subr.mxu0 0.0
        %4867 = vmatpush1.msra.mxu0 0.0
        %4868 = vmatprep.subr.mxu0 0.0
        %4869 = vmatpush1.msra.mxu0 0.0
        %4870 = vmatprep.subr.mxu0 0.0
        %4871 = vmatpush1.msra.mxu0 0.0
        %4872 = vmatprep.subr.mxu0 0.0
        %4873 = vmatpush1.msra.mxu0 0.0
        %4874 = vmatprep.mubr.f32.mxu0 0.0
        %4875 = vmatmul.mubr.f32.gmra.mrb[0].mxu0 %v4323
        %v4876 = vpop.f32.mrb[0].mxu0
        %v4877 = vadd.f32 0.0, %v4876
        %v4878 = vpop.f32.mrb[0].mxu0
        %4879 = vdwg.mxu0
        %v4880 = vld [vmem:[#allocation11 + $0x30] sm:$0xff]
        %v4881 = vld [vmem:[#allocation11 + $0x38] sm:$0xff]
        %v4883 = vsel %vm2870, %v4880, 0
        %v4886 = vsel %vm2870, %v4881, 0
        %4888 = vmatprep.subr.mxu0 0.0
        %4889 = vmatpush1.msra.mxu0 %v4877
        %4890 = vmatprep.subr.mxu0 0.0
        %4891 = vmatpush1.msra.mxu0 0.0
        %4892 = vmatprep.subr.mxu0 0.0
        %4893 = vmatpush1.msra.mxu0 0.0
        %4894 = vmatprep.subr.mxu0 0.0
        %4895 = vmatpush1.msra.mxu0 0.0
        %4896 = vmatprep.subr.mxu0 0.0
        %4897 = vmatpush1.msra.mxu0 0.0
        %4898 = vmatprep.subr.mxu0 0.0
        %4899 = vmatpush1.msra.mxu0 0.0
        %4900 = vmatprep.subr.mxu0 0.0
        %4901 = vmatpush1.msra.mxu0 0.0
        %4902 = vmatprep.subr.mxu0 0.0
        %4903 = vmatpush1.msra.mxu0 0.0
        %4904 = vmatprep.subr.mxu0 0.0
        %4905 = vmatpush1.msra.mxu0 0.0
        %4906 = vmatprep.subr.mxu0 0.0
        %4907 = vmatpush1.msra.mxu0 0.0
        %4908 = vmatprep.subr.mxu0 0.0
        %4909 = vmatpush1.msra.mxu0 0.0
        %4910 = vmatprep.subr.mxu0 0.0
        %4911 = vmatpush1.msra.mxu0 0.0
        %4912 = vmatprep.subr.mxu0 0.0
        %4913 = vmatpush1.msra.mxu0 0.0
        %4914 = vmatprep.subr.mxu0 0.0
        %4915 = vmatpush1.msra.mxu0 0.0
        %4916 = vmatprep.subr.mxu0 0.0
        %4917 = vmatpush1.msra.mxu0 0.0
        %4918 = vmatprep.subr.mxu0 0.0
        %4919 = vmatpush1.msra.mxu0 0.0
        %4920 = vmatprep.subr.mxu0 0.0
        %4921 = vmatpush1.msra.mxu0 0.0
        %4922 = vmatprep.subr.mxu0 0.0
        %4923 = vmatpush1.msra.mxu0 0.0
        %4924 = vmatprep.subr.mxu0 0.0
        %4925 = vmatpush1.msra.mxu0 0.0
        %4926 = vmatprep.subr.mxu0 0.0
        %4927 = vmatpush1.msra.mxu0 0.0
        %4928 = vmatprep.subr.mxu0 0.0
        %4929 = vmatpush1.msra.mxu0 0.0
        %4930 = vmatprep.subr.mxu0 0.0
        %4931 = vmatpush1.msra.mxu0 0.0
        %4932 = vmatprep.subr.mxu0 0.0
        %4933 = vmatpush1.msra.mxu0 0.0
        %4934 = vmatprep.subr.mxu0 0.0
        %4935 = vmatpush1.msra.mxu0 0.0
        %4936 = vmatprep.subr.mxu0 0.0
        %4937 = vmatpush1.msra.mxu0 0.0
        %4938 = vmatprep.subr.mxu0 0.0
        %4939 = vmatpush1.msra.mxu0 0.0
        %4940 = vmatprep.subr.mxu0 0.0
        %4941 = vmatpush1.msra.mxu0 0.0
        %4942 = vmatprep.subr.mxu0 0.0
        %4943 = vmatpush1.msra.mxu0 0.0
        %4944 = vmatprep.subr.mxu0 0.0
        %4945 = vmatpush1.msra.mxu0 0.0
        %4946 = vmatprep.subr.mxu0 0.0
        %4947 = vmatpush1.msra.mxu0 0.0
        %4948 = vmatprep.subr.mxu0 0.0
        %4949 = vmatpush1.msra.mxu0 0.0
        %4950 = vmatprep.subr.mxu0 0.0
        %4951 = vmatpush1.msra.mxu0 0.0
        %4952 = vmatprep.mubr.f32.mxu0 0.0
        %4953 = vmatmul.mubr.f32.gmra.mrb[0].mxu0 %v4883
        %v4954 = vpop.f32.mrb[0].mxu0
        %v4955 = vadd.f32 0.0, %v4954
        %v4956 = vpop.f32.mrb[0].mxu0
        %4957 = vmatprep.mubr.f32.mxu0 0.0
        %4958 = vmatmul.mubr.f32.gmra.mrb[0].mxu0 %v4886
        %v4959 = vpop.f32.mrb[0].mxu0
        %v4960 = vadd.f32 0.0, %v4959
        %v4961 = vpop.f32.mrb[0].mxu0
        %4962 = vdwg.mxu0
        %v4963 = vadd.f32 %v4800, %v4955
        %v4964 = vadd.f32 %v4801, %v4960
        %v4965 = vld [vmem:[#allocation22 + $0x100] sm:$0xff]
        %v4966 = vld [vmem:[#allocation22 + $0x108] sm:$0xff]
        %v4967 = vld [vmem:[#allocation22 + $0x110] sm:$0xff]
        %v4968 = vld [vmem:[#allocation22 + $0x118] sm:$0xff]
        %v4969 = vld [vmem:[#allocation22 + $0x120] sm:$0xff]
        %v4970 = vld [vmem:[#allocation22 + $0x128] sm:$0xff]
        %v4971 = vld [vmem:[#allocation22 + $0x130] sm:$0xff]
        %v4972 = vld [vmem:[#allocation22 + $0x138] sm:$0xff]
        %4973 = vmatprep.subr.mxu0 0.0
        %4974 = vmatpush1.msra.mxu0 %v4965
        %4975 = vmatprep.subr.mxu0 0.0
        %4976 = vmatpush1.msra.mxu0 %v4966
        %4977 = vmatprep.subr.mxu0 0.0
        %4978 = vmatpush1.msra.mxu0 %v4967
        %4979 = vmatprep.subr.mxu0 0.0
        %4980 = vmatpush1.msra.mxu0 %v4968
        %4981 = vmatprep.subr.mxu0 0.0
        %4982 = vmatpush1.msra.mxu0 %v4969
        %4983 = vmatprep.subr.mxu0 0.0
        %4984 = vmatpush1.msra.mxu0 %v4970
        %4985 = vmatprep.subr.mxu0 0.0
        %4986 = vmatpush1.msra.mxu0 %v4971
        %4987 = vmatprep.subr.mxu0 0.0
        %4988 = vmatpush1.msra.mxu0 %v4972
        %4989 = vmatprep.subr.mxu0 0.0
        %4990 = vmatpush1.msra.mxu0 0.0
        %4991 = vmatprep.subr.mxu0 0.0
        %4992 = vmatpush1.msra.mxu0 0.0
        %4993 = vmatprep.subr.mxu0 0.0
        %4994 = vmatpush1.msra.mxu0 0.0
        %4995 = vmatprep.subr.mxu0 0.0
        %4996 = vmatpush1.msra.mxu0 0.0
        %4997 = vmatprep.subr.mxu0 0.0
        %4998 = vmatpush1.msra.mxu0 0.0
        %4999 = vmatprep.subr.mxu0 0.0
        %5000 = vmatpush1.msra.mxu0 0.0
        %5001 = vmatprep.subr.mxu0 0.0
        %5002 = vmatpush1.msra.mxu0 0.0
        %5003 = vmatprep.subr.mxu0 0.0
        %5004 = vmatpush1.msra.mxu0 0.0
        %5005 = vmatprep.subr.mxu0 0.0
        %5006 = vmatpush1.msra.mxu0 0.0
        %5007 = vmatprep.subr.mxu0 0.0
        %5008 = vmatpush1.msra.mxu0 0.0
        %5009 = vmatprep.subr.mxu0 0.0
        %5010 = vmatpush1.msra.mxu0 0.0
        %5011 = vmatprep.subr.mxu0 0.0
        %5012 = vmatpush1.msra.mxu0 0.0
        %5013 = vmatprep.subr.mxu0 0.0
        %5014 = vmatpush1.msra.mxu0 0.0
        %5015 = vmatprep.subr.mxu0 0.0
        %5016 = vmatpush1.msra.mxu0 0.0
        %5017 = vmatprep.subr.mxu0 0.0
        %5018 = vmatpush1.msra.mxu0 0.0
        %5019 = vmatprep.subr.mxu0 0.0
        %5020 = vmatpush1.msra.mxu0 0.0
        %5021 = vmatprep.subr.mxu0 0.0
        %5022 = vmatpush1.msra.mxu0 0.0
        %5023 = vmatprep.subr.mxu0 0.0
        %5024 = vmatpush1.msra.mxu0 0.0
        %5025 = vmatprep.subr.mxu0 0.0
        %5026 = vmatpush1.msra.mxu0 0.0
        %5027 = vmatprep.subr.mxu0 0.0
        %5028 = vmatpush1.msra.mxu0 0.0
        %5029 = vmatprep.subr.mxu0 0.0
        %5030 = vmatpush1.msra.mxu0 0.0
        %5031 = vmatprep.subr.mxu0 0.0
        %5032 = vmatpush1.msra.mxu0 0.0
        %5033 = vmatprep.subr.mxu0 0.0
        %5034 = vmatpush1.msra.mxu0 0.0
        %5035 = vmatprep.subr.mxu0 0.0
        %5036 = vmatpush1.msra.mxu0 0.0
        %5037 = vmatprep.mubr.f32.mxu0 0.0
        %5038 = vmatmul.mubr.f32.gmra.mrb[0].mxu0 %v4323
        %v5039 = vpop.f32.mrb[0].mxu0
        %v5040 = vadd.f32 0.0, %v5039
        %v5041 = vpop.f32.mrb[0].mxu0
        %5042 = vdwg.mxu0
        %v5043 = vld [vmem:[#allocation11 + $0x40] sm:$0xff]
        %v5044 = vld [vmem:[#allocation11 + $0x48] sm:$0xff]
        %v5046 = vsel %vm2870, %v5043, 0
        %v5049 = vsel %vm2870, %v5044, 0
        %5051 = vmatprep.subr.mxu0 0.0
        %5052 = vmatpush1.msra.mxu0 %v5040
        %5053 = vmatprep.subr.mxu0 0.0
        %5054 = vmatpush1.msra.mxu0 0.0
        %5055 = vmatprep.subr.mxu0 0.0
        %5056 = vmatpush1.msra.mxu0 0.0
        %5057 = vmatprep.subr.mxu0 0.0
        %5058 = vmatpush1.msra.mxu0 0.0
        %5059 = vmatprep.subr.mxu0 0.0
        %5060 = vmatpush1.msra.mxu0 0.0
        %5061 = vmatprep.subr.mxu0 0.0
        %5062 = vmatpush1.msra.mxu0 0.0
        %5063 = vmatprep.subr.mxu0 0.0
        %5064 = vmatpush1.msra.mxu0 0.0
        %5065 = vmatprep.subr.mxu0 0.0
        %5066 = vmatpush1.msra.mxu0 0.0
        %5067 = vmatprep.subr.mxu0 0.0
        %5068 = vmatpush1.msra.mxu0 0.0
        %5069 = vmatprep.subr.mxu0 0.0
        %5070 = vmatpush1.msra.mxu0 0.0
        %5071 = vmatprep.subr.mxu0 0.0
        %5072 = vmatpush1.msra.mxu0 0.0
        %5073 = vmatprep.subr.mxu0 0.0
        %5074 = vmatpush1.msra.mxu0 0.0
        %5075 = vmatprep.subr.mxu0 0.0
        %5076 = vmatpush1.msra.mxu0 0.0
        %5077 = vmatprep.subr.mxu0 0.0
        %5078 = vmatpush1.msra.mxu0 0.0
        %5079 = vmatprep.subr.mxu0 0.0
        %5080 = vmatpush1.msra.mxu0 0.0
        %5081 = vmatprep.subr.mxu0 0.0
        %5082 = vmatpush1.msra.mxu0 0.0
        %5083 = vmatprep.subr.mxu0 0.0
        %5084 = vmatpush1.msra.mxu0 0.0
        %5085 = vmatprep.subr.mxu0 0.0
        %5086 = vmatpush1.msra.mxu0 0.0
        %5087 = vmatprep.subr.mxu0 0.0
        %5088 = vmatpush1.msra.mxu0 0.0
        %5089 = vmatprep.subr.mxu0 0.0
        %5090 = vmatpush1.msra.mxu0 0.0
        %5091 = vmatprep.subr.mxu0 0.0
        %5092 = vmatpush1.msra.mxu0 0.0
        %5093 = vmatprep.subr.mxu0 0.0
        %5094 = vmatpush1.msra.mxu0 0.0
        %5095 = vmatprep.subr.mxu0 0.0
        %5096 = vmatpush1.msra.mxu0 0.0
        %5097 = vmatprep.subr.mxu0 0.0
        %5098 = vmatpush1.msra.mxu0 0.0
        %5099 = vmatprep.subr.mxu0 0.0
        %5100 = vmatpush1.msra.mxu0 0.0
        %5101 = vmatprep.subr.mxu0 0.0
        %5102 = vmatpush1.msra.mxu0 0.0
        %5103 = vmatprep.subr.mxu0 0.0
        %5104 = vmatpush1.msra.mxu0 0.0
        %5105 = vmatprep.subr.mxu0 0.0
        %5106 = vmatpush1.msra.mxu0 0.0
        %5107 = vmatprep.subr.mxu0 0.0
        %5108 = vmatpush1.msra.mxu0 0.0
        %5109 = vmatprep.subr.mxu0 0.0
        %5110 = vmatpush1.msra.mxu0 0.0
        %5111 = vmatprep.subr.mxu0 0.0
        %5112 = vmatpush1.msra.mxu0 0.0
        %5113 = vmatprep.subr.mxu0 0.0
        %5114 = vmatpush1.msra.mxu0 0.0
        %5115 = vmatprep.mubr.f32.mxu0 0.0
        %5116 = vmatmul.mubr.f32.gmra.mrb[0].mxu0 %v5046
        %v5117 = vpop.f32.mrb[0].mxu0
        %v5118 = vadd.f32 0.0, %v5117
        %v5119 = vpop.f32.mrb[0].mxu0
        %5120 = vmatprep.mubr.f32.mxu0 0.0
        %5121 = vmatmul.mubr.f32.gmra.mrb[0].mxu0 %v5049
        %v5122 = vpop.f32.mrb[0].mxu0
        %v5123 = vadd.f32 0.0, %v5122
        %v5124 = vpop.f32.mrb[0].mxu0
        %5125 = vdwg.mxu0
        %v5126 = vadd.f32 %v4963, %v5118
        %v5127 = vadd.f32 %v4964, %v5123
        %v5128 = vld [vmem:[#allocation22 + $0x140] sm:$0xff]
        %v5129 = vld [vmem:[#allocation22 + $0x148] sm:$0xff]
        %v5130 = vld [vmem:[#allocation22 + $0x150] sm:$0xff]
        %v5131 = vld [vmem:[#allocation22 + $0x158] sm:$0xff]
        %v5132 = vld [vmem:[#allocation22 + $0x160] sm:$0xff]
        %v5133 = vld [vmem:[#allocation22 + $0x168] sm:$0xff]
        %v5134 = vld [vmem:[#allocation22 + $0x170] sm:$0xff]
        %v5135 = vld [vmem:[#allocation22 + $0x178] sm:$0xff]
        %5136 = vmatprep.subr.mxu0 0.0
        %5137 = vmatpush1.msra.mxu0 %v5128
        %5138 = vmatprep.subr.mxu0 0.0
        %5139 = vmatpush1.msra.mxu0 %v5129
        %5140 = vmatprep.subr.mxu0 0.0
        %5141 = vmatpush1.msra.mxu0 %v5130
        %5142 = vmatprep.subr.mxu0 0.0
        %5143 = vmatpush1.msra.mxu0 %v5131
        %5144 = vmatprep.subr.mxu0 0.0
        %5145 = vmatpush1.msra.mxu0 %v5132
        %5146 = vmatprep.subr.mxu0 0.0
        %5147 = vmatpush1.msra.mxu0 %v5133
        %5148 = vmatprep.subr.mxu0 0.0
        %5149 = vmatpush1.msra.mxu0 %v5134
        %5150 = vmatprep.subr.mxu0 0.0
        %5151 = vmatpush1.msra.mxu0 %v5135
        %5152 = vmatprep.subr.mxu0 0.0
        %5153 = vmatpush1.msra.mxu0 0.0
        %5154 = vmatprep.subr.mxu0 0.0
        %5155 = vmatpush1.msra.mxu0 0.0
        %5156 = vmatprep.subr.mxu0 0.0
        %5157 = vmatpush1.msra.mxu0 0.0
        %5158 = vmatprep.subr.mxu0 0.0
        %5159 = vmatpush1.msra.mxu0 0.0
        %5160 = vmatprep.subr.mxu0 0.0
        %5161 = vmatpush1.msra.mxu0 0.0
        %5162 = vmatprep.subr.mxu0 0.0
        %5163 = vmatpush1.msra.mxu0 0.0
        %5164 = vmatprep.subr.mxu0 0.0
        %5165 = vmatpush1.msra.mxu0 0.0
        %5166 = vmatprep.subr.mxu0 0.0
        %5167 = vmatpush1.msra.mxu0 0.0
        %5168 = vmatprep.subr.mxu0 0.0
        %5169 = vmatpush1.msra.mxu0 0.0
        %5170 = vmatprep.subr.mxu0 0.0
        %5171 = vmatpush1.msra.mxu0 0.0
        %5172 = vmatprep.subr.mxu0 0.0
        %5173 = vmatpush1.msra.mxu0 0.0
        %5174 = vmatprep.subr.mxu0 0.0
        %5175 = vmatpush1.msra.mxu0 0.0
        %5176 = vmatprep.subr.mxu0 0.0
        %5177 = vmatpush1.msra.mxu0 0.0
        %5178 = vmatprep.subr.mxu0 0.0
        %5179 = vmatpush1.msra.mxu0 0.0
        %5180 = vmatprep.subr.mxu0 0.0
        %5181 = vmatpush1.msra.mxu0 0.0
        %5182 = vmatprep.subr.mxu0 0.0
        %5183 = vmatpush1.msra.mxu0 0.0
        %5184 = vmatprep.subr.mxu0 0.0
        %5185 = vmatpush1.msra.mxu0 0.0
        %5186 = vmatprep.subr.mxu0 0.0
        %5187 = vmatpush1.msra.mxu0 0.0
        %5188 = vmatprep.subr.mxu0 0.0
        %5189 = vmatpush1.msra.mxu0 0.0
        %5190 = vmatprep.subr.mxu0 0.0
        %5191 = vmatpush1.msra.mxu0 0.0
        %5192 = vmatprep.subr.mxu0 0.0
        %5193 = vmatpush1.msra.mxu0 0.0
        %5194 = vmatprep.subr.mxu0 0.0
        %5195 = vmatpush1.msra.mxu0 0.0
        %5196 = vmatprep.subr.mxu0 0.0
        %5197 = vmatpush1.msra.mxu0 0.0
        %5198 = vmatprep.subr.mxu0 0.0
        %5199 = vmatpush1.msra.mxu0 0.0
        %5200 = vmatprep.mubr.f32.mxu0 0.0
        %5201 = vmatmul.mubr.f32.gmra.mrb[0].mxu0 %v4323
        %v5202 = vpop.f32.mrb[0].mxu0
        %v5203 = vadd.f32 0.0, %v5202
        %v5204 = vpop.f32.mrb[0].mxu0
        %5205 = vdwg.mxu0
        %v5206 = vld [vmem:[#allocation11 + $0x50] sm:$0xff]
        %v5207 = vld [vmem:[#allocation11 + $0x58] sm:$0xff]
        %v5209 = vsel %vm2870, %v5206, 0
        %v5212 = vsel %vm2870, %v5207, 0
        %5214 = vmatprep.subr.mxu0 0.0
        %5215 = vmatpush1.msra.mxu0 %v5203
        %5216 = vmatprep.subr.mxu0 0.0
        %5217 = vmatpush1.msra.mxu0 0.0
        %5218 = vmatprep.subr.mxu0 0.0
        %5219 = vmatpush1.msra.mxu0 0.0
        %5220 = vmatprep.subr.mxu0 0.0
        %5221 = vmatpush1.msra.mxu0 0.0
        %5222 = vmatprep.subr.mxu0 0.0
        %5223 = vmatpush1.msra.mxu0 0.0
        %5224 = vmatprep.subr.mxu0 0.0
        %5225 = vmatpush1.msra.mxu0 0.0
        %5226 = vmatprep.subr.mxu0 0.0
        %5227 = vmatpush1.msra.mxu0 0.0
        %5228 = vmatprep.subr.mxu0 0.0
        %5229 = vmatpush1.msra.mxu0 0.0
        %5230 = vmatprep.subr.mxu0 0.0
        %5231 = vmatpush1.msra.mxu0 0.0
        %5232 = vmatprep.subr.mxu0 0.0
        %5233 = vmatpush1.msra.mxu0 0.0
        %5234 = vmatprep.subr.mxu0 0.0
        %5235 = vmatpush1.msra.mxu0 0.0
        %5236 = vmatprep.subr.mxu0 0.0
        %5237 = vmatpush1.msra.mxu0 0.0
        %5238 = vmatprep.subr.mxu0 0.0
        %5239 = vmatpush1.msra.mxu0 0.0
        %5240 = vmatprep.subr.mxu0 0.0
        %5241 = vmatpush1.msra.mxu0 0.0
        %5242 = vmatprep.subr.mxu0 0.0
        %5243 = vmatpush1.msra.mxu0 0.0
        %5244 = vmatprep.subr.mxu0 0.0
        %5245 = vmatpush1.msra.mxu0 0.0
        %5246 = vmatprep.subr.mxu0 0.0
        %5247 = vmatpush1.msra.mxu0 0.0
        %5248 = vmatprep.subr.mxu0 0.0
        %5249 = vmatpush1.msra.mxu0 0.0
        %5250 = vmatprep.subr.mxu0 0.0
        %5251 = vmatpush1.msra.mxu0 0.0
        %5252 = vmatprep.subr.mxu0 0.0
        %5253 = vmatpush1.msra.mxu0 0.0
        %5254 = vmatprep.subr.mxu0 0.0
        %5255 = vmatpush1.msra.mxu0 0.0
        %5256 = vmatprep.subr.mxu0 0.0
        %5257 = vmatpush1.msra.mxu0 0.0
        %5258 = vmatprep.subr.mxu0 0.0
        %5259 = vmatpush1.msra.mxu0 0.0
        %5260 = vmatprep.subr.mxu0 0.0
        %5261 = vmatpush1.msra.mxu0 0.0
        %5262 = vmatprep.subr.mxu0 0.0
        %5263 = vmatpush1.msra.mxu0 0.0
        %5264 = vmatprep.subr.mxu0 0.0
        %5265 = vmatpush1.msra.mxu0 0.0
        %5266 = vmatprep.subr.mxu0 0.0
        %5267 = vmatpush1.msra.mxu0 0.0
        %5268 = vmatprep.subr.mxu0 0.0
        %5269 = vmatpush1.msra.mxu0 0.0
        %5270 = vmatprep.subr.mxu0 0.0
        %5271 = vmatpush1.msra.mxu0 0.0
        %5272 = vmatprep.subr.mxu0 0.0
        %5273 = vmatpush1.msra.mxu0 0.0
        %5274 = vmatprep.subr.mxu0 0.0
        %5275 = vmatpush1.msra.mxu0 0.0
        %5276 = vmatprep.subr.mxu0 0.0
        %5277 = vmatpush1.msra.mxu0 0.0
        %5278 = vmatprep.mubr.f32.mxu0 0.0
        %5279 = vmatmul.mubr.f32.gmra.mrb[0].mxu0 %v5209
        %v5280 = vpop.f32.mrb[0].mxu0
        %v5281 = vadd.f32 0.0, %v5280
        %v5282 = vpop.f32.mrb[0].mxu0
        %5283 = vmatprep.mubr.f32.mxu0 0.0
        %5284 = vmatmul.mubr.f32.gmra.mrb[0].mxu0 %v5212
        %v5285 = vpop.f32.mrb[0].mxu0
        %v5286 = vadd.f32 0.0, %v5285
        %v5287 = vpop.f32.mrb[0].mxu0
        %5288 = vdwg.mxu0
        %v5289 = vadd.f32 %v5126, %v5281
        %v5290 = vadd.f32 %v5127, %v5286
        %v5291 = vld [vmem:[#allocation22 + $0x180] sm:$0xff]
        %v5292 = vld [vmem:[#allocation22 + $0x188] sm:$0xff]
        %v5293 = vld [vmem:[#allocation22 + $0x190] sm:$0xff]
        %v5294 = vld [vmem:[#allocation22 + $0x198] sm:$0xff]
        %v5295 = vld [vmem:[#allocation22 + $0x1a0] sm:$0xff]
        %v5296 = vld [vmem:[#allocation22 + $0x1a8] sm:$0xff]
        %v5297 = vld [vmem:[#allocation22 + $0x1b0] sm:$0xff]
        %v5298 = vld [vmem:[#allocation22 + $0x1b8] sm:$0xff]
        %5299 = vmatprep.subr.mxu0 0.0
        %5300 = vmatpush1.msra.mxu0 %v5291
        %5301 = vmatprep.subr.mxu0 0.0
        %5302 = vmatpush1.msra.mxu0 %v5292
        %5303 = vmatprep.subr.mxu0 0.0
        %5304 = vmatpush1.msra.mxu0 %v5293
        %5305 = vmatprep.subr.mxu0 0.0
        %5306 = vmatpush1.msra.mxu0 %v5294
        %5307 = vmatprep.subr.mxu0 0.0
        %5308 = vmatpush1.msra.mxu0 %v5295
        %5309 = vmatprep.subr.mxu0 0.0
        %5310 = vmatpush1.msra.mxu0 %v5296
        %5311 = vmatprep.subr.mxu0 0.0
        %5312 = vmatpush1.msra.mxu0 %v5297
        %5313 = vmatprep.subr.mxu0 0.0
        %5314 = vmatpush1.msra.mxu0 %v5298
        %5315 = vmatprep.subr.mxu0 0.0
        %5316 = vmatpush1.msra.mxu0 0.0
        %5317 = vmatprep.subr.mxu0 0.0
        %5318 = vmatpush1.msra.mxu0 0.0
        %5319 = vmatprep.subr.mxu0 0.0
        %5320 = vmatpush1.msra.mxu0 0.0
        %5321 = vmatprep.subr.mxu0 0.0
        %5322 = vmatpush1.msra.mxu0 0.0
        %5323 = vmatprep.subr.mxu0 0.0
        %5324 = vmatpush1.msra.mxu0 0.0
        %5325 = vmatprep.subr.mxu0 0.0
        %5326 = vmatpush1.msra.mxu0 0.0
        %5327 = vmatprep.subr.mxu0 0.0
        %5328 = vmatpush1.msra.mxu0 0.0
        %5329 = vmatprep.subr.mxu0 0.0
        %5330 = vmatpush1.msra.mxu0 0.0
        %5331 = vmatprep.subr.mxu0 0.0
        %5332 = vmatpush1.msra.mxu0 0.0
        %5333 = vmatprep.subr.mxu0 0.0
        %5334 = vmatpush1.msra.mxu0 0.0
        %5335 = vmatprep.subr.mxu0 0.0
        %5336 = vmatpush1.msra.mxu0 0.0
        %5337 = vmatprep.subr.mxu0 0.0
        %5338 = vmatpush1.msra.mxu0 0.0
        %5339 = vmatprep.subr.mxu0 0.0
        %5340 = vmatpush1.msra.mxu0 0.0
        %5341 = vmatprep.subr.mxu0 0.0
        %5342 = vmatpush1.msra.mxu0 0.0
        %5343 = vmatprep.subr.mxu0 0.0
        %5344 = vmatpush1.msra.mxu0 0.0
        %5345 = vmatprep.subr.mxu0 0.0
        %5346 = vmatpush1.msra.mxu0 0.0
        %5347 = vmatprep.subr.mxu0 0.0
        %5348 = vmatpush1.msra.mxu0 0.0
        %5349 = vmatprep.subr.mxu0 0.0
        %5350 = vmatpush1.msra.mxu0 0.0
        %5351 = vmatprep.subr.mxu0 0.0
        %5352 = vmatpush1.msra.mxu0 0.0
        %5353 = vmatprep.subr.mxu0 0.0
        %5354 = vmatpush1.msra.mxu0 0.0
        %5355 = vmatprep.subr.mxu0 0.0
        %5356 = vmatpush1.msra.mxu0 0.0
        %5357 = vmatprep.subr.mxu0 0.0
        %5358 = vmatpush1.msra.mxu0 0.0
        %5359 = vmatprep.subr.mxu0 0.0
        %5360 = vmatpush1.msra.mxu0 0.0
        %5361 = vmatprep.subr.mxu0 0.0
        %5362 = vmatpush1.msra.mxu0 0.0
        %5363 = vmatprep.mubr.f32.mxu0 0.0
        %5364 = vmatmul.mubr.f32.gmra.mrb[0].mxu0 %v4323
        %v5365 = vpop.f32.mrb[0].mxu0
        %v5366 = vadd.f32 0.0, %v5365
        %v5367 = vpop.f32.mrb[0].mxu0
        %5368 = vdwg.mxu0
        %v5369 = vld [vmem:[#allocation11 + $0x60] sm:$0xff]
        %v5370 = vld [vmem:[#allocation11 + $0x68] sm:$0xff]
        %v5372 = vsel %vm2870, %v5369, 0
        %v5375 = vsel %vm2870, %v5370, 0
        %5377 = vmatprep.subr.mxu0 0.0
        %5378 = vmatpush1.msra.mxu0 %v5366
        %5379 = vmatprep.subr.mxu0 0.0
        %5380 = vmatpush1.msra.mxu0 0.0
        %5381 = vmatprep.subr.mxu0 0.0
        %5382 = vmatpush1.msra.mxu0 0.0
        %5383 = vmatprep.subr.mxu0 0.0
        %5384 = vmatpush1.msra.mxu0 0.0
        %5385 = vmatprep.subr.mxu0 0.0
        %5386 = vmatpush1.msra.mxu0 0.0
        %5387 = vmatprep.subr.mxu0 0.0
        %5388 = vmatpush1.msra.mxu0 0.0
        %5389 = vmatprep.subr.mxu0 0.0
        %5390 = vmatpush1.msra.mxu0 0.0
        %5391 = vmatprep.subr.mxu0 0.0
        %5392 = vmatpush1.msra.mxu0 0.0
        %5393 = vmatprep.subr.mxu0 0.0
        %5394 = vmatpush1.msra.mxu0 0.0
        %5395 = vmatprep.subr.mxu0 0.0
        %5396 = vmatpush1.msra.mxu0 0.0
        %5397 = vmatprep.subr.mxu0 0.0
        %5398 = vmatpush1.msra.mxu0 0.0
        %5399 = vmatprep.subr.mxu0 0.0
        %5400 = vmatpush1.msra.mxu0 0.0
        %5401 = vmatprep.subr.mxu0 0.0
        %5402 = vmatpush1.msra.mxu0 0.0
        %5403 = vmatprep.subr.mxu0 0.0
        %5404 = vmatpush1.msra.mxu0 0.0
        %5405 = vmatprep.subr.mxu0 0.0
        %5406 = vmatpush1.msra.mxu0 0.0
        %5407 = vmatprep.subr.mxu0 0.0
        %5408 = vmatpush1.msra.mxu0 0.0
        %5409 = vmatprep.subr.mxu0 0.0
        %5410 = vmatpush1.msra.mxu0 0.0
        %5411 = vmatprep.subr.mxu0 0.0
        %5412 = vmatpush1.msra.mxu0 0.0
        %5413 = vmatprep.subr.mxu0 0.0
        %5414 = vmatpush1.msra.mxu0 0.0
        %5415 = vmatprep.subr.mxu0 0.0
        %5416 = vmatpush1.msra.mxu0 0.0
        %5417 = vmatprep.subr.mxu0 0.0
        %5418 = vmatpush1.msra.mxu0 0.0
        %5419 = vmatprep.subr.mxu0 0.0
        %5420 = vmatpush1.msra.mxu0 0.0
        %5421 = vmatprep.subr.mxu0 0.0
        %5422 = vmatpush1.msra.mxu0 0.0
        %5423 = vmatprep.subr.mxu0 0.0
        %5424 = vmatpush1.msra.mxu0 0.0
        %5425 = vmatprep.subr.mxu0 0.0
        %5426 = vmatpush1.msra.mxu0 0.0
        %5427 = vmatprep.subr.mxu0 0.0
        %5428 = vmatpush1.msra.mxu0 0.0
        %5429 = vmatprep.subr.mxu0 0.0
        %5430 = vmatpush1.msra.mxu0 0.0
        %5431 = vmatprep.subr.mxu0 0.0
        %5432 = vmatpush1.msra.mxu0 0.0
        %5433 = vmatprep.subr.mxu0 0.0
        %5434 = vmatpush1.msra.mxu0 0.0
        %5435 = vmatprep.subr.mxu0 0.0
        %5436 = vmatpush1.msra.mxu0 0.0
        %5437 = vmatprep.subr.mxu0 0.0
        %5438 = vmatpush1.msra.mxu0 0.0
        %5439 = vmatprep.subr.mxu0 0.0
        %5440 = vmatpush1.msra.mxu0 0.0
        %5441 = vmatprep.mubr.f32.mxu0 0.0
        %5442 = vmatmul.mubr.f32.gmra.mrb[0].mxu0 %v5372
        %v5443 = vpop.f32.mrb[0].mxu0
        %v5444 = vadd.f32 0.0, %v5443
        %v5445 = vpop.f32.mrb[0].mxu0
        %5446 = vmatprep.mubr.f32.mxu0 0.0
        %5447 = vmatmul.mubr.f32.gmra.mrb[0].mxu0 %v5375
        %v5448 = vpop.f32.mrb[0].mxu0
        %v5449 = vadd.f32 0.0, %v5448
        %v5450 = vpop.f32.mrb[0].mxu0
        %5451 = vdwg.mxu0
        %v5452 = vadd.f32 %v5289, %v5444
        %v5453 = vadd.f32 %v5290, %v5449
        %v5454 = vld [vmem:[#allocation22 + $0x1c0] sm:$0xff]
        %v5455 = vld [vmem:[#allocation22 + $0x1c8] sm:$0xff]
        %v5456 = vld [vmem:[#allocation22 + $0x1d0] sm:$0xff]
        %v5457 = vld [vmem:[#allocation22 + $0x1d8] sm:$0xff]
        %v5458 = vld [vmem:[#allocation22 + $0x1e0] sm:$0xff]
        %v5459 = vld [vmem:[#allocation22 + $0x1e8] sm:$0xff]
        %v5460 = vld [vmem:[#allocation22 + $0x1f0] sm:$0xff]
        %v5461 = vld [vmem:[#allocation22 + $0x1f8] sm:$0xff]
        %5462 = vmatprep.subr.mxu0 0.0
        %5463 = vmatpush1.msra.mxu0 %v5454
        %5464 = vmatprep.subr.mxu0 0.0
        %5465 = vmatpush1.msra.mxu0 %v5455
        %5466 = vmatprep.subr.mxu0 0.0
        %5467 = vmatpush1.msra.mxu0 %v5456
        %5468 = vmatprep.subr.mxu0 0.0
        %5469 = vmatpush1.msra.mxu0 %v5457
        %5470 = vmatprep.subr.mxu0 0.0
        %5471 = vmatpush1.msra.mxu0 %v5458
        %5472 = vmatprep.subr.mxu0 0.0
        %5473 = vmatpush1.msra.mxu0 %v5459
        %5474 = vmatprep.subr.mxu0 0.0
        %5475 = vmatpush1.msra.mxu0 %v5460
        %5476 = vmatprep.subr.mxu0 0.0
        %5477 = vmatpush1.msra.mxu0 %v5461
        %5478 = vmatprep.subr.mxu0 0.0
        %5479 = vmatpush1.msra.mxu0 0.0
        %5480 = vmatprep.subr.mxu0 0.0
        %5481 = vmatpush1.msra.mxu0 0.0
        %5482 = vmatprep.subr.mxu0 0.0
        %5483 = vmatpush1.msra.mxu0 0.0
        %5484 = vmatprep.subr.mxu0 0.0
        %5485 = vmatpush1.msra.mxu0 0.0
        %5486 = vmatprep.subr.mxu0 0.0
        %5487 = vmatpush1.msra.mxu0 0.0
        %5488 = vmatprep.subr.mxu0 0.0
        %5489 = vmatpush1.msra.mxu0 0.0
        %5490 = vmatprep.subr.mxu0 0.0
        %5491 = vmatpush1.msra.mxu0 0.0
        %5492 = vmatprep.subr.mxu0 0.0
        %5493 = vmatpush1.msra.mxu0 0.0
        %5494 = vmatprep.subr.mxu0 0.0
        %5495 = vmatpush1.msra.mxu0 0.0
        %5496 = vmatprep.subr.mxu0 0.0
        %5497 = vmatpush1.msra.mxu0 0.0
        %5498 = vmatprep.subr.mxu0 0.0
        %5499 = vmatpush1.msra.mxu0 0.0
        %5500 = vmatprep.subr.mxu0 0.0
        %5501 = vmatpush1.msra.mxu0 0.0
        %5502 = vmatprep.subr.mxu0 0.0
        %5503 = vmatpush1.msra.mxu0 0.0
        %5504 = vmatprep.subr.mxu0 0.0
        %5505 = vmatpush1.msra.mxu0 0.0
        %5506 = vmatprep.subr.mxu0 0.0
        %5507 = vmatpush1.msra.mxu0 0.0
        %5508 = vmatprep.subr.mxu0 0.0
        %5509 = vmatpush1.msra.mxu0 0.0
        %5510 = vmatprep.subr.mxu0 0.0
        %5511 = vmatpush1.msra.mxu0 0.0
        %5512 = vmatprep.subr.mxu0 0.0
        %5513 = vmatpush1.msra.mxu0 0.0
        %5514 = vmatprep.subr.mxu0 0.0
        %5515 = vmatpush1.msra.mxu0 0.0
        %5516 = vmatprep.subr.mxu0 0.0
        %5517 = vmatpush1.msra.mxu0 0.0
        %5518 = vmatprep.subr.mxu0 0.0
        %5519 = vmatpush1.msra.mxu0 0.0
        %5520 = vmatprep.subr.mxu0 0.0
        %5521 = vmatpush1.msra.mxu0 0.0
        %5522 = vmatprep.subr.mxu0 0.0
        %5523 = vmatpush1.msra.mxu0 0.0
        %5524 = vmatprep.subr.mxu0 0.0
        %5525 = vmatpush1.msra.mxu0 0.0
        %5526 = vmatprep.mubr.f32.mxu0 0.0
        %5527 = vmatmul.mubr.f32.gmra.mrb[0].mxu0 %v4323
        %v5528 = vpop.f32.mrb[0].mxu0
        %v5529 = vadd.f32 0.0, %v5528
        %v5530 = vpop.f32.mrb[0].mxu0
        %5531 = vdwg.mxu0
        %v5532 = vld [vmem:[#allocation11 + $0x70] sm:$0xff]
        %v5533 = vld [vmem:[#allocation11 + $0x78] sm:$0xff]
        %v5535 = vsel %vm2870, %v5532, 0
        %v5538 = vsel %vm2870, %v5533, 0
        %5540 = vmatprep.subr.mxu0 0.0
        %5541 = vmatpush1.msra.mxu0 %v5529
        %5542 = vmatprep.subr.mxu0 0.0
        %5543 = vmatpush1.msra.mxu0 0.0
        %5544 = vmatprep.subr.mxu0 0.0
        %5545 = vmatpush1.msra.mxu0 0.0
        %5546 = vmatprep.subr.mxu0 0.0
        %5547 = vmatpush1.msra.mxu0 0.0
        %5548 = vmatprep.subr.mxu0 0.0
        %5549 = vmatpush1.msra.mxu0 0.0
        %5550 = vmatprep.subr.mxu0 0.0
        %5551 = vmatpush1.msra.mxu0 0.0
        %5552 = vmatprep.subr.mxu0 0.0
        %5553 = vmatpush1.msra.mxu0 0.0
        %5554 = vmatprep.subr.mxu0 0.0
        %5555 = vmatpush1.msra.mxu0 0.0
        %5556 = vmatprep.subr.mxu0 0.0
        %5557 = vmatpush1.msra.mxu0 0.0
        %5558 = vmatprep.subr.mxu0 0.0
        %5559 = vmatpush1.msra.mxu0 0.0
        %5560 = vmatprep.subr.mxu0 0.0
        %5561 = vmatpush1.msra.mxu0 0.0
        %5562 = vmatprep.subr.mxu0 0.0
        %5563 = vmatpush1.msra.mxu0 0.0
        %5564 = vmatprep.subr.mxu0 0.0
        %5565 = vmatpush1.msra.mxu0 0.0
        %5566 = vmatprep.subr.mxu0 0.0
        %5567 = vmatpush1.msra.mxu0 0.0
        %5568 = vmatprep.subr.mxu0 0.0
        %5569 = vmatpush1.msra.mxu0 0.0
        %5570 = vmatprep.subr.mxu0 0.0
        %5571 = vmatpush1.msra.mxu0 0.0
        %5572 = vmatprep.subr.mxu0 0.0
        %5573 = vmatpush1.msra.mxu0 0.0
        %5574 = vmatprep.subr.mxu0 0.0
        %5575 = vmatpush1.msra.mxu0 0.0
        %5576 = vmatprep.subr.mxu0 0.0
        %5577 = vmatpush1.msra.mxu0 0.0
        %5578 = vmatprep.subr.mxu0 0.0
        %5579 = vmatpush1.msra.mxu0 0.0
        %5580 = vmatprep.subr.mxu0 0.0
        %5581 = vmatpush1.msra.mxu0 0.0
        %5582 = vmatprep.subr.mxu0 0.0
        %5583 = vmatpush1.msra.mxu0 0.0
        %5584 = vmatprep.subr.mxu0 0.0
        %5585 = vmatpush1.msra.mxu0 0.0
        %5586 = vmatprep.subr.mxu0 0.0
        %5587 = vmatpush1.msra.mxu0 0.0
        %5588 = vmatprep.subr.mxu0 0.0
        %5589 = vmatpush1.msra.mxu0 0.0
        %5590 = vmatprep.subr.mxu0 0.0
        %5591 = vmatpush1.msra.mxu0 0.0
        %5592 = vmatprep.subr.mxu0 0.0
        %5593 = vmatpush1.msra.mxu0 0.0
        %5594 = vmatprep.subr.mxu0 0.0
        %5595 = vmatpush1.msra.mxu0 0.0
        %5596 = vmatprep.subr.mxu0 0.0
        %5597 = vmatpush1.msra.mxu0 0.0
        %5598 = vmatprep.subr.mxu0 0.0
        %5599 = vmatpush1.msra.mxu0 0.0
        %5600 = vmatprep.subr.mxu0 0.0
        %5601 = vmatpush1.msra.mxu0 0.0
        %5602 = vmatprep.subr.mxu0 0.0
        %5603 = vmatpush1.msra.mxu0 0.0
        %5604 = vmatprep.mubr.f32.mxu0 0.0
        %5605 = vmatmul.mubr.f32.gmra.mrb[0].mxu0 %v5535
        %v5606 = vpop.f32.mrb[0].mxu0
        %v5607 = vadd.f32 0.0, %v5606
        %v5608 = vpop.f32.mrb[0].mxu0
        %5609 = vmatprep.mubr.f32.mxu0 0.0
        %5610 = vmatmul.mubr.f32.gmra.mrb[0].mxu0 %v5538
        %v5611 = vpop.f32.mrb[0].mxu0
        %v5612 = vadd.f32 0.0, %v5611
        %v5613 = vpop.f32.mrb[0].mxu0
        %5614 = vdwg.mxu0
        %v5615 = vadd.f32 %v5452, %v5607
        %v5616 = vadd.f32 %v5453, %v5612
        %v5617 = vld [vmem:[#allocation22 + $0x200] sm:$0xff]
        %v5618 = vld [vmem:[#allocation22 + $0x208] sm:$0xff]
        %v5619 = vld [vmem:[#allocation22 + $0x210] sm:$0xff]
        %v5620 = vld [vmem:[#allocation22 + $0x218] sm:$0xff]
        %v5621 = vld [vmem:[#allocation22 + $0x220] sm:$0xff]
        %v5622 = vld [vmem:[#allocation22 + $0x228] sm:$0xff]
        %v5623 = vld [vmem:[#allocation22 + $0x230] sm:$0xff]
        %v5624 = vld [vmem:[#allocation22 + $0x238] sm:$0xff]
        %5625 = vmatprep.subr.mxu0 0.0
        %5626 = vmatpush1.msra.mxu0 %v5617
        %5627 = vmatprep.subr.mxu0 0.0
        %5628 = vmatpush1.msra.mxu0 %v5618
        %5629 = vmatprep.subr.mxu0 0.0
        %5630 = vmatpush1.msra.mxu0 %v5619
        %5631 = vmatprep.subr.mxu0 0.0
        %5632 = vmatpush1.msra.mxu0 %v5620
        %5633 = vmatprep.subr.mxu0 0.0
        %5634 = vmatpush1.msra.mxu0 %v5621
        %5635 = vmatprep.subr.mxu0 0.0
        %5636 = vmatpush1.msra.mxu0 %v5622
        %5637 = vmatprep.subr.mxu0 0.0
        %5638 = vmatpush1.msra.mxu0 %v5623
        %5639 = vmatprep.subr.mxu0 0.0
        %5640 = vmatpush1.msra.mxu0 %v5624
        %5641 = vmatprep.subr.mxu0 0.0
        %5642 = vmatpush1.msra.mxu0 0.0
        %5643 = vmatprep.subr.mxu0 0.0
        %5644 = vmatpush1.msra.mxu0 0.0
        %5645 = vmatprep.subr.mxu0 0.0
        %5646 = vmatpush1.msra.mxu0 0.0
        %5647 = vmatprep.subr.mxu0 0.0
        %5648 = vmatpush1.msra.mxu0 0.0
        %5649 = vmatprep.subr.mxu0 0.0
        %5650 = vmatpush1.msra.mxu0 0.0
        %5651 = vmatprep.subr.mxu0 0.0
        %5652 = vmatpush1.msra.mxu0 0.0
        %5653 = vmatprep.subr.mxu0 0.0
        %5654 = vmatpush1.msra.mxu0 0.0
        %5655 = vmatprep.subr.mxu0 0.0
        %5656 = vmatpush1.msra.mxu0 0.0
        %5657 = vmatprep.subr.mxu0 0.0
        %5658 = vmatpush1.msra.mxu0 0.0
        %5659 = vmatprep.subr.mxu0 0.0
        %5660 = vmatpush1.msra.mxu0 0.0
        %5661 = vmatprep.subr.mxu0 0.0
        %5662 = vmatpush1.msra.mxu0 0.0
        %5663 = vmatprep.subr.mxu0 0.0
        %5664 = vmatpush1.msra.mxu0 0.0
        %5665 = vmatprep.subr.mxu0 0.0
        %5666 = vmatpush1.msra.mxu0 0.0
        %5667 = vmatprep.subr.mxu0 0.0
        %5668 = vmatpush1.msra.mxu0 0.0
        %5669 = vmatprep.subr.mxu0 0.0
        %5670 = vmatpush1.msra.mxu0 0.0
        %5671 = vmatprep.subr.mxu0 0.0
        %5672 = vmatpush1.msra.mxu0 0.0
        %5673 = vmatprep.subr.mxu0 0.0
        %5674 = vmatpush1.msra.mxu0 0.0
        %5675 = vmatprep.subr.mxu0 0.0
        %5676 = vmatpush1.msra.mxu0 0.0
        %5677 = vmatprep.subr.mxu0 0.0
        %5678 = vmatpush1.msra.mxu0 0.0
        %5679 = vmatprep.subr.mxu0 0.0
        %5680 = vmatpush1.msra.mxu0 0.0
        %5681 = vmatprep.subr.mxu0 0.0
        %5682 = vmatpush1.msra.mxu0 0.0
        %5683 = vmatprep.subr.mxu0 0.0
        %5684 = vmatpush1.msra.mxu0 0.0
        %5685 = vmatprep.subr.mxu0 0.0
        %5686 = vmatpush1.msra.mxu0 0.0
        %5687 = vmatprep.subr.mxu0 0.0
        %5688 = vmatpush1.msra.mxu0 0.0
        %5689 = vmatprep.mubr.f32.mxu0 0.0
        %5690 = vmatmul.mubr.f32.gmra.mrb[0].mxu0 %v4323
        %v5691 = vpop.f32.mrb[0].mxu0
        %v5692 = vadd.f32 0.0, %v5691
        %v5693 = vpop.f32.mrb[0].mxu0
        %5694 = vdwg.mxu0
        %v5695 = vld [vmem:[#allocation11 + $0x80] sm:$0xff]
        %v5696 = vld [vmem:[#allocation11 + $0x88] sm:$0xff]
        %v5698 = vsel %vm2870, %v5695, 0
        %v5701 = vsel %vm2870, %v5696, 0
        %5703 = vmatprep.subr.mxu0 0.0
        %5704 = vmatpush1.msra.mxu0 %v5692
        %5705 = vmatprep.subr.mxu0 0.0
        %5706 = vmatpush1.msra.mxu0 0.0
        %5707 = vmatprep.subr.mxu0 0.0
        %5708 = vmatpush1.msra.mxu0 0.0
        %5709 = vmatprep.subr.mxu0 0.0
        %5710 = vmatpush1.msra.mxu0 0.0
        %5711 = vmatprep.subr.mxu0 0.0
        %5712 = vmatpush1.msra.mxu0 0.0
        %5713 = vmatprep.subr.mxu0 0.0
        %5714 = vmatpush1.msra.mxu0 0.0
        %5715 = vmatprep.subr.mxu0 0.0
        %5716 = vmatpush1.msra.mxu0 0.0
        %5717 = vmatprep.subr.mxu0 0.0
        %5718 = vmatpush1.msra.mxu0 0.0
        %5719 = vmatprep.subr.mxu0 0.0
        %5720 = vmatpush1.msra.mxu0 0.0
        %5721 = vmatprep.subr.mxu0 0.0
        %5722 = vmatpush1.msra.mxu0 0.0
        %5723 = vmatprep.subr.mxu0 0.0
        %5724 = vmatpush1.msra.mxu0 0.0
        %5725 = vmatprep.subr.mxu0 0.0
        %5726 = vmatpush1.msra.mxu0 0.0
        %5727 = vmatprep.subr.mxu0 0.0
        %5728 = vmatpush1.msra.mxu0 0.0
        %5729 = vmatprep.subr.mxu0 0.0
        %5730 = vmatpush1.msra.mxu0 0.0
        %5731 = vmatprep.subr.mxu0 0.0
        %5732 = vmatpush1.msra.mxu0 0.0
        %5733 = vmatprep.subr.mxu0 0.0
        %5734 = vmatpush1.msra.mxu0 0.0
        %5735 = vmatprep.subr.mxu0 0.0
        %5736 = vmatpush1.msra.mxu0 0.0
        %5737 = vmatprep.subr.mxu0 0.0
        %5738 = vmatpush1.msra.mxu0 0.0
        %5739 = vmatprep.subr.mxu0 0.0
        %5740 = vmatpush1.msra.mxu0 0.0
        %5741 = vmatprep.subr.mxu0 0.0
        %5742 = vmatpush1.msra.mxu0 0.0
        %5743 = vmatprep.subr.mxu0 0.0
        %5744 = vmatpush1.msra.mxu0 0.0
        %5745 = vmatprep.subr.mxu0 0.0
        %5746 = vmatpush1.msra.mxu0 0.0
        %5747 = vmatprep.subr.mxu0 0.0
        %5748 = vmatpush1.msra.mxu0 0.0
        %5749 = vmatprep.subr.mxu0 0.0
        %5750 = vmatpush1.msra.mxu0 0.0
        %5751 = vmatprep.subr.mxu0 0.0
        %5752 = vmatpush1.msra.mxu0 0.0
        %5753 = vmatprep.subr.mxu0 0.0
        %5754 = vmatpush1.msra.mxu0 0.0
        %5755 = vmatprep.subr.mxu0 0.0
        %5756 = vmatpush1.msra.mxu0 0.0
        %5757 = vmatprep.subr.mxu0 0.0
        %5758 = vmatpush1.msra.mxu0 0.0
        %5759 = vmatprep.subr.mxu0 0.0
        %5760 = vmatpush1.msra.mxu0 0.0
        %5761 = vmatprep.subr.mxu0 0.0
        %5762 = vmatpush1.msra.mxu0 0.0
        %5763 = vmatprep.subr.mxu0 0.0
        %5764 = vmatpush1.msra.mxu0 0.0
        %5765 = vmatprep.subr.mxu0 0.0
        %5766 = vmatpush1.msra.mxu0 0.0
        %5767 = vmatprep.mubr.f32.mxu0 0.0
        %5768 = vmatmul.mubr.f32.gmra.mrb[0].mxu0 %v5698
        %v5769 = vpop.f32.mrb[0].mxu0
        %v5770 = vadd.f32 0.0, %v5769
        %v5771 = vpop.f32.mrb[0].mxu0
        %5772 = vmatprep.mubr.f32.mxu0 0.0
        %5773 = vmatmul.mubr.f32.gmra.mrb[0].mxu0 %v5701
        %v5774 = vpop.f32.mrb[0].mxu0
        %v5775 = vadd.f32 0.0, %v5774
        %v5776 = vpop.f32.mrb[0].mxu0
        %5777 = vdwg.mxu0
        %v5778 = vadd.f32 %v5615, %v5770
        %v5779 = vadd.f32 %v5616, %v5775
        %v5780 = vld [vmem:[#allocation13] sm:$0xff]
        %v5781 = vld [vmem:[#allocation13 + $0x8] sm:$0xff]
        %5783 = vset.pattern.permute.xlu0 0
        %5784 = vperm.xlu0 %5783, %v5780
        %v5785 = vpop.permute.xlu0 %5784
        %5788 = vset.pattern.permute.xlu0 0
        %5789 = vperm.xlu0 %5788, %v5781
        %v5790 = vpop.permute.xlu0 %5789
        %v5792 = vadd.f32 %v5778, %v5785
        %v5793 = vadd.f32 %v5779, %v5790
        %v5794 = vmax.f32 %v5792, 0.0
        %v5795 = vmax.f32 %v5793, 0.0
        %v5797 = vsel %vm4321, %v5794, 0
        %v5800 = vsel %vm4321, %v5795, 0
        %5802 = vmatprep.subr.mxu0 0.0
        %5803 = vmatpush1.msra.mxu0 %v4313
        %5804 = vmatprep.subr.mxu0 0.0
        %5805 = vmatpush1.msra.mxu0 %v4314
        %5806 = vmatprep.subr.mxu0 0.0
        %5807 = vmatpush1.msra.mxu0 %v4315
        %5808 = vmatprep.subr.mxu0 0.0
        %5809 = vmatpush1.msra.mxu0 %v4316
        %5810 = vmatprep.subr.mxu0 0.0
        %5811 = vmatpush1.msra.mxu0 %v4317
        %5812 = vmatprep.subr.mxu0 0.0
        %5813 = vmatpush1.msra.mxu0 %v4318
        %5814 = vmatprep.subr.mxu0 0.0
        %5815 = vmatpush1.msra.mxu0 %v4319
        %5816 = vmatprep.subr.mxu0 0.0
        %5817 = vmatpush1.msra.mxu0 %v4320
        %5818 = vmatprep.subr.mxu0 0.0
        %5819 = vmatpush1.msra.mxu0 0.0
        %5820 = vmatprep.subr.mxu0 0.0
        %5821 = vmatpush1.msra.mxu0 0.0
        %5822 = vmatprep.subr.mxu0 0.0
        %5823 = vmatpush1.msra.mxu0 0.0
        %5824 = vmatprep.subr.mxu0 0.0
        %5825 = vmatpush1.msra.mxu0 0.0
        %5826 = vmatprep.subr.mxu0 0.0
        %5827 = vmatpush1.msra.mxu0 0.0
        %5828 = vmatprep.subr.mxu0 0.0
        %5829 = vmatpush1.msra.mxu0 0.0
        %5830 = vmatprep.subr.mxu0 0.0
        %5831 = vmatpush1.msra.mxu0 0.0
        %5832 = vmatprep.subr.mxu0 0.0
        %5833 = vmatpush1.msra.mxu0 0.0
        %5834 = vmatprep.subr.mxu0 0.0
        %5835 = vmatpush1.msra.mxu0 0.0
        %5836 = vmatprep.subr.mxu0 0.0
        %5837 = vmatpush1.msra.mxu0 0.0
        %5838 = vmatprep.subr.mxu0 0.0
        %5839 = vmatpush1.msra.mxu0 0.0
        %5840 = vmatprep.subr.mxu0 0.0
        %5841 = vmatpush1.msra.mxu0 0.0
        %5842 = vmatprep.subr.mxu0 0.0
        %5843 = vmatpush1.msra.mxu0 0.0
        %5844 = vmatprep.subr.mxu0 0.0
        %5845 = vmatpush1.msra.mxu0 0.0
        %5846 = vmatprep.subr.mxu0 0.0
        %5847 = vmatpush1.msra.mxu0 0.0
        %5848 = vmatprep.subr.mxu0 0.0
        %5849 = vmatpush1.msra.mxu0 0.0
        %5850 = vmatprep.subr.mxu0 0.0
        %5851 = vmatpush1.msra.mxu0 0.0
        %5852 = vmatprep.subr.mxu0 0.0
        %5853 = vmatpush1.msra.mxu0 0.0
        %5854 = vmatprep.subr.mxu0 0.0
        %5855 = vmatpush1.msra.mxu0 0.0
        %5856 = vmatprep.subr.mxu0 0.0
        %5857 = vmatpush1.msra.mxu0 0.0
        %5858 = vmatprep.subr.mxu0 0.0
        %5859 = vmatpush1.msra.mxu0 0.0
        %5860 = vmatprep.subr.mxu0 0.0
        %5861 = vmatpush1.msra.mxu0 0.0
        %5862 = vmatprep.subr.mxu0 0.0
        %5863 = vmatpush1.msra.mxu0 0.0
        %5864 = vmatprep.subr.mxu0 0.0
        %5865 = vmatpush1.msra.mxu0 0.0
        %5866 = vmatprep.mubr.f32.mxu0 0.0
        %5867 = vmatmul.mubr.f32.gmra.mrb[0].mxu0 %v5797
        %v5868 = vpop.f32.mrb[0].mxu0
        %v5869 = vadd.f32 0.0, %v5868
        %v5870 = vpop.f32.mrb[0].mxu0
        %5871 = vmatprep.mubr.f32.mxu0 0.0
        %5872 = vmatmul.mubr.f32.gmra.mrb[0].mxu0 %v5800
        %v5873 = vpop.f32.mrb[0].mxu0
        %v5874 = vadd.f32 0.0, %v5873
        %v5875 = vpop.f32.mrb[0].mxu0
        %5876 = vdwg.mxu0
        %v5877 = vld [vmem:[#allocation14] sm:$0xff]
        %v5878 = vld [vmem:[#allocation14 + $0x8] sm:$0xff]
        %5879 = vmatprep.subr.mxu0 0.0
        %5880 = vmatpush1.msra.mxu0 %v4397
        %5881 = vmatprep.subr.mxu0 0.0
        %5882 = vmatpush1.msra.mxu0 %v4398
        %5883 = vmatprep.subr.mxu0 0.0
        %5884 = vmatpush1.msra.mxu0 %v4399
        %5885 = vmatprep.subr.mxu0 0.0
        %5886 = vmatpush1.msra.mxu0 %v4400
        %5887 = vmatprep.subr.mxu0 0.0
        %5888 = vmatpush1.msra.mxu0 %v4401
        %5889 = vmatprep.subr.mxu0 0.0
        %5890 = vmatpush1.msra.mxu0 %v4402
        %5891 = vmatprep.subr.mxu0 0.0
        %5892 = vmatpush1.msra.mxu0 %v4403
        %5893 = vmatprep.subr.mxu0 0.0
        %5894 = vmatpush1.msra.mxu0 %v4404
        %5895 = vmatprep.subr.mxu0 0.0
        %5896 = vmatpush1.msra.mxu0 0.0
        %5897 = vmatprep.subr.mxu0 0.0
        %5898 = vmatpush1.msra.mxu0 0.0
        %5899 = vmatprep.subr.mxu0 0.0
        %5900 = vmatpush1.msra.mxu0 0.0
        %5901 = vmatprep.subr.mxu0 0.0
        %5902 = vmatpush1.msra.mxu0 0.0
        %5903 = vmatprep.subr.mxu0 0.0
        %5904 = vmatpush1.msra.mxu0 0.0
        %5905 = vmatprep.subr.mxu0 0.0
        %5906 = vmatpush1.msra.mxu0 0.0
        %5907 = vmatprep.subr.mxu0 0.0
        %5908 = vmatpush1.msra.mxu0 0.0
        %5909 = vmatprep.subr.mxu0 0.0
        %5910 = vmatpush1.msra.mxu0 0.0
        %5911 = vmatprep.subr.mxu0 0.0
        %5912 = vmatpush1.msra.mxu0 0.0
        %5913 = vmatprep.subr.mxu0 0.0
        %5914 = vmatpush1.msra.mxu0 0.0
        %5915 = vmatprep.subr.mxu0 0.0
        %5916 = vmatpush1.msra.mxu0 0.0
        %5917 = vmatprep.subr.mxu0 0.0
        %5918 = vmatpush1.msra.mxu0 0.0
        %5919 = vmatprep.subr.mxu0 0.0
        %5920 = vmatpush1.msra.mxu0 0.0
        %5921 = vmatprep.subr.mxu0 0.0
        %5922 = vmatpush1.msra.mxu0 0.0
        %5923 = vmatprep.subr.mxu0 0.0
        %5924 = vmatpush1.msra.mxu0 0.0
        %5925 = vmatprep.subr.mxu0 0.0
        %5926 = vmatpush1.msra.mxu0 0.0
        %5927 = vmatprep.subr.mxu0 0.0
        %5928 = vmatpush1.msra.mxu0 0.0
        %5929 = vmatprep.subr.mxu0 0.0
        %5930 = vmatpush1.msra.mxu0 0.0
        %5931 = vmatprep.subr.mxu0 0.0
        %5932 = vmatpush1.msra.mxu0 0.0
        %5933 = vmatprep.subr.mxu0 0.0
        %5934 = vmatpush1.msra.mxu0 0.0
        %5935 = vmatprep.subr.mxu0 0.0
        %5936 = vmatpush1.msra.mxu0 0.0
        %5937 = vmatprep.subr.mxu0 0.0
        %5938 = vmatpush1.msra.mxu0 0.0
        %5939 = vmatprep.subr.mxu0 0.0
        %5940 = vmatpush1.msra.mxu0 0.0
        %5941 = vmatprep.subr.mxu0 0.0
        %5942 = vmatpush1.msra.mxu0 0.0
        %5943 = vmatprep.mubr.f32.mxu0 0.0
        %5944 = vmatmul.mubr.f32.gmra.mrb[0].mxu0 %v5797
        %v5945 = vpop.f32.mrb[0].mxu0
        %v5946 = vadd.f32 0.0, %v5945
        %v5947 = vpop.f32.mrb[0].mxu0
        %5948 = vmatprep.mubr.f32.mxu0 0.0
        %5949 = vmatmul.mubr.f32.gmra.mrb[0].mxu0 %v5800
        %v5950 = vpop.f32.mrb[0].mxu0
        %v5951 = vadd.f32 0.0, %v5950
        %v5952 = vpop.f32.mrb[0].mxu0
        %5953 = vdwg.mxu0
        %v5954 = vld [vmem:[#allocation14 + $0x10] sm:$0xff]
        %v5955 = vld [vmem:[#allocation14 + $0x18] sm:$0xff]
        %vm5956 = vcmask 130048
        %v5958 = vsel %vm5956, %v5954, 0
        %v5961 = vsel %vm5956, %v5955, 0
        %5963 = vmatprep.subr.mxu0 0.0
        %5964 = vmatpush1.msra.mxu0 %v5946
        %5965 = vmatprep.subr.mxu0 0.0
        %5966 = vmatpush1.msra.mxu0 %v5951
        %5967 = vmatprep.subr.mxu0 0.0
        %5968 = vmatpush1.msra.mxu0 0.0
        %5969 = vmatprep.subr.mxu0 0.0
        %5970 = vmatpush1.msra.mxu0 0.0
        %5971 = vmatprep.subr.mxu0 0.0
        %5972 = vmatpush1.msra.mxu0 0.0
        %5973 = vmatprep.subr.mxu0 0.0
        %5974 = vmatpush1.msra.mxu0 0.0
        %5975 = vmatprep.subr.mxu0 0.0
        %5976 = vmatpush1.msra.mxu0 0.0
        %5977 = vmatprep.subr.mxu0 0.0
        %5978 = vmatpush1.msra.mxu0 0.0
        %5979 = vmatprep.subr.mxu0 0.0
        %5980 = vmatpush1.msra.mxu0 0.0
        %5981 = vmatprep.subr.mxu0 0.0
        %5982 = vmatpush1.msra.mxu0 0.0
        %5983 = vmatprep.subr.mxu0 0.0
        %5984 = vmatpush1.msra.mxu0 0.0
        %5985 = vmatprep.subr.mxu0 0.0
        %5986 = vmatpush1.msra.mxu0 0.0
        %5987 = vmatprep.subr.mxu0 0.0
        %5988 = vmatpush1.msra.mxu0 0.0
        %5989 = vmatprep.subr.mxu0 0.0
        %5990 = vmatpush1.msra.mxu0 0.0
        %5991 = vmatprep.subr.mxu0 0.0
        %5992 = vmatpush1.msra.mxu0 0.0
        %5993 = vmatprep.subr.mxu0 0.0
        %5994 = vmatpush1.msra.mxu0 0.0
        %5995 = vmatprep.subr.mxu0 0.0
        %5996 = vmatpush1.msra.mxu0 0.0
        %5997 = vmatprep.subr.mxu0 0.0
        %5998 = vmatpush1.msra.mxu0 0.0
        %5999 = vmatprep.subr.mxu0 0.0
        %6000 = vmatpush1.msra.mxu0 0.0
        %6001 = vmatprep.subr.mxu0 0.0
        %6002 = vmatpush1.msra.mxu0 0.0
        %6003 = vmatprep.subr.mxu0 0.0
        %6004 = vmatpush1.msra.mxu0 0.0
        %6005 = vmatprep.subr.mxu0 0.0
        %6006 = vmatpush1.msra.mxu0 0.0
        %6007 = vmatprep.subr.mxu0 0.0
        %6008 = vmatpush1.msra.mxu0 0.0
        %6009 = vmatprep.subr.mxu0 0.0
        %6010 = vmatpush1.msra.mxu0 0.0
        %6011 = vmatprep.subr.mxu0 0.0
        %6012 = vmatpush1.msra.mxu0 0.0
        %6013 = vmatprep.subr.mxu0 0.0
        %6014 = vmatpush1.msra.mxu0 0.0
        %6015 = vmatprep.subr.mxu0 0.0
        %6016 = vmatpush1.msra.mxu0 0.0
        %6017 = vmatprep.subr.mxu0 0.0
        %6018 = vmatpush1.msra.mxu0 0.0
        %6019 = vmatprep.subr.mxu0 0.0
        %6020 = vmatpush1.msra.mxu0 0.0
        %6021 = vmatprep.subr.mxu0 0.0
        %6022 = vmatpush1.msra.mxu0 0.0
        %6023 = vmatprep.subr.mxu0 0.0
        %6024 = vmatpush1.msra.mxu0 0.0
        %6025 = vmatprep.subr.mxu0 0.0
        %6026 = vmatpush1.msra.mxu0 0.0
        %6027 = vmatprep.mubr.f32.mxu0 0.0
        %6028 = vmatmul.mubr.f32.gmra.mrb[0].mxu0 %v5958
        %v6029 = vpop.f32.mrb[0].mxu0
        %v6030 = vadd.f32 0.0, %v6029
        %v6031 = vpop.f32.mrb[0].mxu0
        %6032 = vmatprep.mubr.f32.mxu0 0.0
        %6033 = vmatmul.mubr.f32.gmra.mrb[0].mxu0 %v5961
        %v6034 = vpop.f32.mrb[0].mxu0
        %v6035 = vadd.f32 0.0, %v6034
        %v6036 = vpop.f32.mrb[0].mxu0
        %6037 = vdwg.mxu0
        %v6039 = vsel %vm5956, %v5877, 0
        %v6042 = vsel %vm5956, %v5878, 0
        %6044 = vmatprep.subr.mxu0 0.0
        %6045 = vmatpush1.msra.mxu0 %v5869
        %6046 = vmatprep.subr.mxu0 0.0
        %6047 = vmatpush1.msra.mxu0 %v5874
        %6048 = vmatprep.subr.mxu0 0.0
        %6049 = vmatpush1.msra.mxu0 0.0
        %6050 = vmatprep.subr.mxu0 0.0
        %6051 = vmatpush1.msra.mxu0 0.0
        %6052 = vmatprep.subr.mxu0 0.0
        %6053 = vmatpush1.msra.mxu0 0.0
        %6054 = vmatprep.subr.mxu0 0.0
        %6055 = vmatpush1.msra.mxu0 0.0
        %6056 = vmatprep.subr.mxu0 0.0
        %6057 = vmatpush1.msra.mxu0 0.0
        %6058 = vmatprep.subr.mxu0 0.0
        %6059 = vmatpush1.msra.mxu0 0.0
        %6060 = vmatprep.subr.mxu0 0.0
        %6061 = vmatpush1.msra.mxu0 0.0
        %6062 = vmatprep.subr.mxu0 0.0
        %6063 = vmatpush1.msra.mxu0 0.0
        %6064 = vmatprep.subr.mxu0 0.0
        %6065 = vmatpush1.msra.mxu0 0.0
        %6066 = vmatprep.subr.mxu0 0.0
        %6067 = vmatpush1.msra.mxu0 0.0
        %6068 = vmatprep.subr.mxu0 0.0
        %6069 = vmatpush1.msra.mxu0 0.0
        %6070 = vmatprep.subr.mxu0 0.0
        %6071 = vmatpush1.msra.mxu0 0.0
        %6072 = vmatprep.subr.mxu0 0.0
        %6073 = vmatpush1.msra.mxu0 0.0
        %6074 = vmatprep.subr.mxu0 0.0
        %6075 = vmatpush1.msra.mxu0 0.0
        %6076 = vmatprep.subr.mxu0 0.0
        %6077 = vmatpush1.msra.mxu0 0.0
        %6078 = vmatprep.subr.mxu0 0.0
        %6079 = vmatpush1.msra.mxu0 0.0
        %6080 = vmatprep.subr.mxu0 0.0
        %6081 = vmatpush1.msra.mxu0 0.0
        %6082 = vmatprep.subr.mxu0 0.0
        %6083 = vmatpush1.msra.mxu0 0.0
        %6084 = vmatprep.subr.mxu0 0.0
        %6085 = vmatpush1.msra.mxu0 0.0
        %6086 = vmatprep.subr.mxu0 0.0
        %6087 = vmatpush1.msra.mxu0 0.0
        %6088 = vmatprep.subr.mxu0 0.0
        %6089 = vmatpush1.msra.mxu0 0.0
        %6090 = vmatprep.subr.mxu0 0.0
        %6091 = vmatpush1.msra.mxu0 0.0
        %6092 = vmatprep.subr.mxu0 0.0
        %6093 = vmatpush1.msra.mxu0 0.0
        %6094 = vmatprep.subr.mxu0 0.0
        %6095 = vmatpush1.msra.mxu0 0.0
        %6096 = vmatprep.subr.mxu0 0.0
        %6097 = vmatpush1.msra.mxu0 0.0
        %6098 = vmatprep.subr.mxu0 0.0
        %6099 = vmatpush1.msra.mxu0 0.0
        %6100 = vmatprep.subr.mxu0 0.0
        %6101 = vmatpush1.msra.mxu0 0.0
        %6102 = vmatprep.subr.mxu0 0.0
        %6103 = vmatpush1.msra.mxu0 0.0
        %6104 = vmatprep.subr.mxu0 0.0
        %6105 = vmatpush1.msra.mxu0 0.0
        %6106 = vmatprep.subr.mxu0 0.0
        %6107 = vmatpush1.msra.mxu0 0.0
        %6108 = vmatprep.mubr.f32.mxu0 0.0
        %6109 = vmatmul.mubr.f32.gmra.mrb[0].mxu0 %v6039
        %v6110 = vpop.f32.mrb[0].mxu0
        %v6111 = vadd.f32 %v6030, %v6110
        %v6112 = vpop.f32.mrb[0].mxu0
        %6113 = vmatprep.mubr.f32.mxu0 0.0
        %6114 = vmatmul.mubr.f32.gmra.mrb[0].mxu0 %v6042
        %v6115 = vpop.f32.mrb[0].mxu0
        %v6116 = vadd.f32 %v6035, %v6115
        %v6117 = vpop.f32.mrb[0].mxu0
        %6118 = vdwg.mxu0
        %6119 = vmatprep.subr.mxu0 0.0
        %6120 = vmatpush1.msra.mxu0 %v4639
        %6121 = vmatprep.subr.mxu0 0.0
        %6122 = vmatpush1.msra.mxu0 %v4640
        %6123 = vmatprep.subr.mxu0 0.0
        %6124 = vmatpush1.msra.mxu0 %v4641
        %6125 = vmatprep.subr.mxu0 0.0
        %6126 = vmatpush1.msra.mxu0 %v4642
        %6127 = vmatprep.subr.mxu0 0.0
        %6128 = vmatpush1.msra.mxu0 %v4643
        %6129 = vmatprep.subr.mxu0 0.0
        %6130 = vmatpush1.msra.mxu0 %v4644
        %6131 = vmatprep.subr.mxu0 0.0
        %6132 = vmatpush1.msra.mxu0 %v4645
        %6133 = vmatprep.subr.mxu0 0.0
        %6134 = vmatpush1.msra.mxu0 %v4646
        %6135 = vmatprep.subr.mxu0 0.0
        %6136 = vmatpush1.msra.mxu0 0.0
        %6137 = vmatprep.subr.mxu0 0.0
        %6138 = vmatpush1.msra.mxu0 0.0
        %6139 = vmatprep.subr.mxu0 0.0
        %6140 = vmatpush1.msra.mxu0 0.0
        %6141 = vmatprep.subr.mxu0 0.0
        %6142 = vmatpush1.msra.mxu0 0.0
        %6143 = vmatprep.subr.mxu0 0.0
        %6144 = vmatpush1.msra.mxu0 0.0
        %6145 = vmatprep.subr.mxu0 0.0
        %6146 = vmatpush1.msra.mxu0 0.0
        %6147 = vmatprep.subr.mxu0 0.0
        %6148 = vmatpush1.msra.mxu0 0.0
        %6149 = vmatprep.subr.mxu0 0.0
        %6150 = vmatpush1.msra.mxu0 0.0
        %6151 = vmatprep.subr.mxu0 0.0
        %6152 = vmatpush1.msra.mxu0 0.0
        %6153 = vmatprep.subr.mxu0 0.0
        %6154 = vmatpush1.msra.mxu0 0.0
        %6155 = vmatprep.subr.mxu0 0.0
        %6156 = vmatpush1.msra.mxu0 0.0
        %6157 = vmatprep.subr.mxu0 0.0
        %6158 = vmatpush1.msra.mxu0 0.0
        %6159 = vmatprep.subr.mxu0 0.0
        %6160 = vmatpush1.msra.mxu0 0.0
        %6161 = vmatprep.subr.mxu0 0.0
        %6162 = vmatpush1.msra.mxu0 0.0
        %6163 = vmatprep.subr.mxu0 0.0
        %6164 = vmatpush1.msra.mxu0 0.0
        %6165 = vmatprep.subr.mxu0 0.0
        %6166 = vmatpush1.msra.mxu0 0.0
        %6167 = vmatprep.subr.mxu0 0.0
        %6168 = vmatpush1.msra.mxu0 0.0
        %6169 = vmatprep.subr.mxu0 0.0
        %6170 = vmatpush1.msra.mxu0 0.0
        %6171 = vmatprep.subr.mxu0 0.0
        %6172 = vmatpush1.msra.mxu0 0.0
        %6173 = vmatprep.subr.mxu0 0.0
        %6174 = vmatpush1.msra.mxu0 0.0
        %6175 = vmatprep.subr.mxu0 0.0
        %6176 = vmatpush1.msra.mxu0 0.0
        %6177 = vmatprep.subr.mxu0 0.0
        %6178 = vmatpush1.msra.mxu0 0.0
        %6179 = vmatprep.subr.mxu0 0.0
        %6180 = vmatpush1.msra.mxu0 0.0
        %6181 = vmatprep.subr.mxu0 0.0
        %6182 = vmatpush1.msra.mxu0 0.0
        %6183 = vmatprep.mubr.f32.mxu0 0.0
        %6184 = vmatmul.mubr.f32.gmra.mrb[0].mxu0 %v5797
        %v6185 = vpop.f32.mrb[0].mxu0
        %v6186 = vadd.f32 0.0, %v6185
        %v6187 = vpop.f32.mrb[0].mxu0
        %6188 = vmatprep.mubr.f32.mxu0 0.0
        %6189 = vmatmul.mubr.f32.gmra.mrb[0].mxu0 %v5800
        %v6190 = vpop.f32.mrb[0].mxu0
        %v6191 = vadd.f32 0.0, %v6190
        %v6192 = vpop.f32.mrb[0].mxu0
        %6193 = vdwg.mxu0
        %v6194 = vld [vmem:[#allocation14 + $0x20] sm:$0xff]
        %v6195 = vld [vmem:[#allocation14 + $0x28] sm:$0xff]
        %v6197 = vsel %vm5956, %v6194, 0
        %v6200 = vsel %vm5956, %v6195, 0
        %6202 = vmatprep.subr.mxu0 0.0
        %6203 = vmatpush1.msra.mxu0 %v6186
        %6204 = vmatprep.subr.mxu0 0.0
        %6205 = vmatpush1.msra.mxu0 %v6191
        %6206 = vmatprep.subr.mxu0 0.0
        %6207 = vmatpush1.msra.mxu0 0.0
        %6208 = vmatprep.subr.mxu0 0.0
        %6209 = vmatpush1.msra.mxu0 0.0
        %6210 = vmatprep.subr.mxu0 0.0
        %6211 = vmatpush1.msra.mxu0 0.0
        %6212 = vmatprep.subr.mxu0 0.0
        %6213 = vmatpush1.msra.mxu0 0.0
        %6214 = vmatprep.subr.mxu0 0.0
        %6215 = vmatpush1.msra.mxu0 0.0
        %6216 = vmatprep.subr.mxu0 0.0
        %6217 = vmatpush1.msra.mxu0 0.0
        %6218 = vmatprep.subr.mxu0 0.0
        %6219 = vmatpush1.msra.mxu0 0.0
        %6220 = vmatprep.subr.mxu0 0.0
        %6221 = vmatpush1.msra.mxu0 0.0
        %6222 = vmatprep.subr.mxu0 0.0
        %6223 = vmatpush1.msra.mxu0 0.0
        %6224 = vmatprep.subr.mxu0 0.0
        %6225 = vmatpush1.msra.mxu0 0.0
        %6226 = vmatprep.subr.mxu0 0.0
        %6227 = vmatpush1.msra.mxu0 0.0
        %6228 = vmatprep.subr.mxu0 0.0
        %6229 = vmatpush1.msra.mxu0 0.0
        %6230 = vmatprep.subr.mxu0 0.0
        %6231 = vmatpush1.msra.mxu0 0.0
        %6232 = vmatprep.subr.mxu0 0.0
        %6233 = vmatpush1.msra.mxu0 0.0
        %6234 = vmatprep.subr.mxu0 0.0
        %6235 = vmatpush1.msra.mxu0 0.0
        %6236 = vmatprep.subr.mxu0 0.0
        %6237 = vmatpush1.msra.mxu0 0.0
        %6238 = vmatprep.subr.mxu0 0.0
        %6239 = vmatpush1.msra.mxu0 0.0
        %6240 = vmatprep.subr.mxu0 0.0
        %6241 = vmatpush1.msra.mxu0 0.0
        %6242 = vmatprep.subr.mxu0 0.0
        %6243 = vmatpush1.msra.mxu0 0.0
        %6244 = vmatprep.subr.mxu0 0.0
        %6245 = vmatpush1.msra.mxu0 0.0
        %6246 = vmatprep.subr.mxu0 0.0
        %6247 = vmatpush1.msra.mxu0 0.0
        %6248 = vmatprep.subr.mxu0 0.0
        %6249 = vmatpush1.msra.mxu0 0.0
        %6250 = vmatprep.subr.mxu0 0.0
        %6251 = vmatpush1.msra.mxu0 0.0
        %6252 = vmatprep.subr.mxu0 0.0
        %6253 = vmatpush1.msra.mxu0 0.0
        %6254 = vmatprep.subr.mxu0 0.0
        %6255 = vmatpush1.msra.mxu0 0.0
        %6256 = vmatprep.subr.mxu0 0.0
        %6257 = vmatpush1.msra.mxu0 0.0
        %6258 = vmatprep.subr.mxu0 0.0
        %6259 = vmatpush1.msra.mxu0 0.0
        %6260 = vmatprep.subr.mxu0 0.0
        %6261 = vmatpush1.msra.mxu0 0.0
        %6262 = vmatprep.subr.mxu0 0.0
        %6263 = vmatpush1.msra.mxu0 0.0
        %6264 = vmatprep.subr.mxu0 0.0
        %6265 = vmatpush1.msra.mxu0 0.0
        %6266 = vmatprep.mubr.f32.mxu0 0.0
        %6267 = vmatmul.mubr.f32.gmra.mrb[0].mxu0 %v6197
        %v6268 = vpop.f32.mrb[0].mxu0
        %v6269 = vadd.f32 0.0, %v6268
        %v6270 = vpop.f32.mrb[0].mxu0
        %6271 = vmatprep.mubr.f32.mxu0 0.0
        %6272 = vmatmul.mubr.f32.gmra.mrb[0].mxu0 %v6200
        %v6273 = vpop.f32.mrb[0].mxu0
        %v6274 = vadd.f32 0.0, %v6273
        %v6275 = vpop.f32.mrb[0].mxu0
        %6276 = vdwg.mxu0
        %v6277 = vadd.f32 %v6111, %v6269
        %v6278 = vadd.f32 %v6116, %v6274
        %6279 = vmatprep.subr.mxu0 0.0
        %6280 = vmatpush1.msra.mxu0 %v4802
        %6281 = vmatprep.subr.mxu0 0.0
        %6282 = vmatpush1.msra.mxu0 %v4803
        %6283 = vmatprep.subr.mxu0 0.0
        %6284 = vmatpush1.msra.mxu0 %v4804
        %6285 = vmatprep.subr.mxu0 0.0
        %6286 = vmatpush1.msra.mxu0 %v4805
        %6287 = vmatprep.subr.mxu0 0.0
        %6288 = vmatpush1.msra.mxu0 %v4806
        %6289 = vmatprep.subr.mxu0 0.0
        %6290 = vmatpush1.msra.mxu0 %v4807
        %6291 = vmatprep.subr.mxu0 0.0
        %6292 = vmatpush1.msra.mxu0 %v4808
        %6293 = vmatprep.subr.mxu0 0.0
        %6294 = vmatpush1.msra.mxu0 %v4809
        %6295 = vmatprep.subr.mxu0 0.0
        %6296 = vmatpush1.msra.mxu0 0.0
        %6297 = vmatprep.subr.mxu0 0.0
        %6298 = vmatpush1.msra.mxu0 0.0
        %6299 = vmatprep.subr.mxu0 0.0
        %6300 = vmatpush1.msra.mxu0 0.0
        %6301 = vmatprep.subr.mxu0 0.0
        %6302 = vmatpush1.msra.mxu0 0.0
        %6303 = vmatprep.subr.mxu0 0.0
        %6304 = vmatpush1.msra.mxu0 0.0
        %6305 = vmatprep.subr.mxu0 0.0
        %6306 = vmatpush1.msra.mxu0 0.0
        %6307 = vmatprep.subr.mxu0 0.0
        %6308 = vmatpush1.msra.mxu0 0.0
        %6309 = vmatprep.subr.mxu0 0.0
        %6310 = vmatpush1.msra.mxu0 0.0
        %6311 = vmatprep.subr.mxu0 0.0
        %6312 = vmatpush1.msra.mxu0 0.0
        %6313 = vmatprep.subr.mxu0 0.0
        %6314 = vmatpush1.msra.mxu0 0.0
        %6315 = vmatprep.subr.mxu0 0.0
        %6316 = vmatpush1.msra.mxu0 0.0
        %6317 = vmatprep.subr.mxu0 0.0
        %6318 = vmatpush1.msra.mxu0 0.0
        %6319 = vmatprep.subr.mxu0 0.0
        %6320 = vmatpush1.msra.mxu0 0.0
        %6321 = vmatprep.subr.mxu0 0.0
        %6322 = vmatpush1.msra.mxu0 0.0
        %6323 = vmatprep.subr.mxu0 0.0
        %6324 = vmatpush1.msra.mxu0 0.0
        %6325 = vmatprep.subr.mxu0 0.0
        %6326 = vmatpush1.msra.mxu0 0.0
        %6327 = vmatprep.subr.mxu0 0.0
        %6328 = vmatpush1.msra.mxu0 0.0
        %6329 = vmatprep.subr.mxu0 0.0
        %6330 = vmatpush1.msra.mxu0 0.0
        %6331 = vmatprep.subr.mxu0 0.0
        %6332 = vmatpush1.msra.mxu0 0.0
        %6333 = vmatprep.subr.mxu0 0.0
        %6334 = vmatpush1.msra.mxu0 0.0
        %6335 = vmatprep.subr.mxu0 0.0
        %6336 = vmatpush1.msra.mxu0 0.0
        %6337 = vmatprep.subr.mxu0 0.0
        %6338 = vmatpush1.msra.mxu0 0.0
        %6339 = vmatprep.subr.mxu0 0.0
        %6340 = vmatpush1.msra.mxu0 0.0
        %6341 = vmatprep.subr.mxu0 0.0
        %6342 = vmatpush1.msra.mxu0 0.0
        %6343 = vmatprep.mubr.f32.mxu0 0.0
        %6344 = vmatmul.mubr.f32.gmra.mrb[0].mxu0 %v5797
        %v6345 = vpop.f32.mrb[0].mxu0
        %v6346 = vadd.f32 0.0, %v6345
        %v6347 = vpop.f32.mrb[0].mxu0
        %6348 = vmatprep.mubr.f32.mxu0 0.0
        %6349 = vmatmul.mubr.f32.gmra.mrb[0].mxu0 %v5800
        %v6350 = vpop.f32.mrb[0].mxu0
        %v6351 = vadd.f32 0.0, %v6350
        %v6352 = vpop.f32.mrb[0].mxu0
        %6353 = vdwg.mxu0
        %v6354 = vld [vmem:[#allocation14 + $0x30] sm:$0xff]
        %v6355 = vld [vmem:[#allocation14 + $0x38] sm:$0xff]
        %v6357 = vsel %vm5956, %v6354, 0
        %v6360 = vsel %vm5956, %v6355, 0
        %6362 = vmatprep.subr.mxu0 0.0
        %6363 = vmatpush1.msra.mxu0 %v6346
        %6364 = vmatprep.subr.mxu0 0.0
        %6365 = vmatpush1.msra.mxu0 %v6351
        %6366 = vmatprep.subr.mxu0 0.0
        %6367 = vmatpush1.msra.mxu0 0.0
        %6368 = vmatprep.subr.mxu0 0.0
        %6369 = vmatpush1.msra.mxu0 0.0
        %6370 = vmatprep.subr.mxu0 0.0
        %6371 = vmatpush1.msra.mxu0 0.0
        %6372 = vmatprep.subr.mxu0 0.0
        %6373 = vmatpush1.msra.mxu0 0.0
        %6374 = vmatprep.subr.mxu0 0.0
        %6375 = vmatpush1.msra.mxu0 0.0
        %6376 = vmatprep.subr.mxu0 0.0
        %6377 = vmatpush1.msra.mxu0 0.0
        %6378 = vmatprep.subr.mxu0 0.0
        %6379 = vmatpush1.msra.mxu0 0.0
        %6380 = vmatprep.subr.mxu0 0.0
        %6381 = vmatpush1.msra.mxu0 0.0
        %6382 = vmatprep.subr.mxu0 0.0
        %6383 = vmatpush1.msra.mxu0 0.0
        %6384 = vmatprep.subr.mxu0 0.0
        %6385 = vmatpush1.msra.mxu0 0.0
        %6386 = vmatprep.subr.mxu0 0.0
        %6387 = vmatpush1.msra.mxu0 0.0
        %6388 = vmatprep.subr.mxu0 0.0
        %6389 = vmatpush1.msra.mxu0 0.0
        %6390 = vmatprep.subr.mxu0 0.0
        %6391 = vmatpush1.msra.mxu0 0.0
        %6392 = vmatprep.subr.mxu0 0.0
        %6393 = vmatpush1.msra.mxu0 0.0
        %6394 = vmatprep.subr.mxu0 0.0
        %6395 = vmatpush1.msra.mxu0 0.0
        %6396 = vmatprep.subr.mxu0 0.0
        %6397 = vmatpush1.msra.mxu0 0.0
        %6398 = vmatprep.subr.mxu0 0.0
        %6399 = vmatpush1.msra.mxu0 0.0
        %6400 = vmatprep.subr.mxu0 0.0
        %6401 = vmatpush1.msra.mxu0 0.0
        %6402 = vmatprep.subr.mxu0 0.0
        %6403 = vmatpush1.msra.mxu0 0.0
        %6404 = vmatprep.subr.mxu0 0.0
        %6405 = vmatpush1.msra.mxu0 0.0
        %6406 = vmatprep.subr.mxu0 0.0
        %6407 = vmatpush1.msra.mxu0 0.0
        %6408 = vmatprep.subr.mxu0 0.0
        %6409 = vmatpush1.msra.mxu0 0.0
        %6410 = vmatprep.subr.mxu0 0.0
        %6411 = vmatpush1.msra.mxu0 0.0
        %6412 = vmatprep.subr.mxu0 0.0
        %6413 = vmatpush1.msra.mxu0 0.0
        %6414 = vmatprep.subr.mxu0 0.0
        %6415 = vmatpush1.msra.mxu0 0.0
        %6416 = vmatprep.subr.mxu0 0.0
        %6417 = vmatpush1.msra.mxu0 0.0
        %6418 = vmatprep.subr.mxu0 0.0
        %6419 = vmatpush1.msra.mxu0 0.0
        %6420 = vmatprep.subr.mxu0 0.0
        %6421 = vmatpush1.msra.mxu0 0.0
        %6422 = vmatprep.subr.mxu0 0.0
        %6423 = vmatpush1.msra.mxu0 0.0
        %6424 = vmatprep.subr.mxu0 0.0
        %6425 = vmatpush1.msra.mxu0 0.0
        %6426 = vmatprep.mubr.f32.mxu0 0.0
        %6427 = vmatmul.mubr.f32.gmra.mrb[0].mxu0 %v6357
        %v6428 = vpop.f32.mrb[0].mxu0
        %v6429 = vadd.f32 0.0, %v6428
        %v6430 = vpop.f32.mrb[0].mxu0
        %6431 = vmatprep.mubr.f32.mxu0 0.0
        %6432 = vmatmul.mubr.f32.gmra.mrb[0].mxu0 %v6360
        %v6433 = vpop.f32.mrb[0].mxu0
        %v6434 = vadd.f32 0.0, %v6433
        %v6435 = vpop.f32.mrb[0].mxu0
        %6436 = vdwg.mxu0
        %v6437 = vadd.f32 %v6277, %v6429
        %v6438 = vadd.f32 %v6278, %v6434
        %6439 = vmatprep.subr.mxu0 0.0
        %6440 = vmatpush1.msra.mxu0 %v4965
        %6441 = vmatprep.subr.mxu0 0.0
        %6442 = vmatpush1.msra.mxu0 %v4966
        %6443 = vmatprep.subr.mxu0 0.0
        %6444 = vmatpush1.msra.mxu0 %v4967
        %6445 = vmatprep.subr.mxu0 0.0
        %6446 = vmatpush1.msra.mxu0 %v4968
        %6447 = vmatprep.subr.mxu0 0.0
        %6448 = vmatpush1.msra.mxu0 %v4969
        %6449 = vmatprep.subr.mxu0 0.0
        %6450 = vmatpush1.msra.mxu0 %v4970
        %6451 = vmatprep.subr.mxu0 0.0
        %6452 = vmatpush1.msra.mxu0 %v4971
        %6453 = vmatprep.subr.mxu0 0.0
        %6454 = vmatpush1.msra.mxu0 %v4972
        %6455 = vmatprep.subr.mxu0 0.0
        %6456 = vmatpush1.msra.mxu0 0.0
        %6457 = vmatprep.subr.mxu0 0.0
        %6458 = vmatpush1.msra.mxu0 0.0
        %6459 = vmatprep.subr.mxu0 0.0
        %6460 = vmatpush1.msra.mxu0 0.0
        %6461 = vmatprep.subr.mxu0 0.0
        %6462 = vmatpush1.msra.mxu0 0.0
        %6463 = vmatprep.subr.mxu0 0.0
        %6464 = vmatpush1.msra.mxu0 0.0
        %6465 = vmatprep.subr.mxu0 0.0
        %6466 = vmatpush1.msra.mxu0 0.0
        %6467 = vmatprep.subr.mxu0 0.0
        %6468 = vmatpush1.msra.mxu0 0.0
        %6469 = vmatprep.subr.mxu0 0.0
        %6470 = vmatpush1.msra.mxu0 0.0
        %6471 = vmatprep.subr.mxu0 0.0
        %6472 = vmatpush1.msra.mxu0 0.0
        %6473 = vmatprep.subr.mxu0 0.0
        %6474 = vmatpush1.msra.mxu0 0.0
        %6475 = vmatprep.subr.mxu0 0.0
        %6476 = vmatpush1.msra.mxu0 0.0
        %6477 = vmatprep.subr.mxu0 0.0
        %6478 = vmatpush1.msra.mxu0 0.0
        %6479 = vmatprep.subr.mxu0 0.0
        %6480 = vmatpush1.msra.mxu0 0.0
        %6481 = vmatprep.subr.mxu0 0.0
        %6482 = vmatpush1.msra.mxu0 0.0
        %6483 = vmatprep.subr.mxu0 0.0
        %6484 = vmatpush1.msra.mxu0 0.0
        %6485 = vmatprep.subr.mxu0 0.0
        %6486 = vmatpush1.msra.mxu0 0.0
        %6487 = vmatprep.subr.mxu0 0.0
        %6488 = vmatpush1.msra.mxu0 0.0
        %6489 = vmatprep.subr.mxu0 0.0
        %6490 = vmatpush1.msra.mxu0 0.0
        %6491 = vmatprep.subr.mxu0 0.0
        %6492 = vmatpush1.msra.mxu0 0.0
        %6493 = vmatprep.subr.mxu0 0.0
        %6494 = vmatpush1.msra.mxu0 0.0
        %6495 = vmatprep.subr.mxu0 0.0
        %6496 = vmatpush1.msra.mxu0 0.0
        %6497 = vmatprep.subr.mxu0 0.0
        %6498 = vmatpush1.msra.mxu0 0.0
        %6499 = vmatprep.subr.mxu0 0.0
        %6500 = vmatpush1.msra.mxu0 0.0
        %6501 = vmatprep.subr.mxu0 0.0
        %6502 = vmatpush1.msra.mxu0 0.0
        %6503 = vmatprep.mubr.f32.mxu0 0.0
        %6504 = vmatmul.mubr.f32.gmra.mrb[0].mxu0 %v5797
        %v6505 = vpop.f32.mrb[0].mxu0
        %v6506 = vadd.f32 0.0, %v6505
        %v6507 = vpop.f32.mrb[0].mxu0
        %6508 = vmatprep.mubr.f32.mxu0 0.0
        %6509 = vmatmul.mubr.f32.gmra.mrb[0].mxu0 %v5800
        %v6510 = vpop.f32.mrb[0].mxu0
        %v6511 = vadd.f32 0.0, %v6510
        %v6512 = vpop.f32.mrb[0].mxu0
        %6513 = vdwg.mxu0
        %v6514 = vld [vmem:[#allocation14 + $0x40] sm:$0xff]
        %v6515 = vld [vmem:[#allocation14 + $0x48] sm:$0xff]
        %v6517 = vsel %vm5956, %v6514, 0
        %v6520 = vsel %vm5956, %v6515, 0
        %6522 = vmatprep.subr.mxu0 0.0
        %6523 = vmatpush1.msra.mxu0 %v6506
        %6524 = vmatprep.subr.mxu0 0.0
        %6525 = vmatpush1.msra.mxu0 %v6511
        %6526 = vmatprep.subr.mxu0 0.0
        %6527 = vmatpush1.msra.mxu0 0.0
        %6528 = vmatprep.subr.mxu0 0.0
        %6529 = vmatpush1.msra.mxu0 0.0
        %6530 = vmatprep.subr.mxu0 0.0
        %6531 = vmatpush1.msra.mxu0 0.0
        %6532 = vmatprep.subr.mxu0 0.0
        %6533 = vmatpush1.msra.mxu0 0.0
        %6534 = vmatprep.subr.mxu0 0.0
        %6535 = vmatpush1.msra.mxu0 0.0
        %6536 = vmatprep.subr.mxu0 0.0
        %6537 = vmatpush1.msra.mxu0 0.0
        %6538 = vmatprep.subr.mxu0 0.0
        %6539 = vmatpush1.msra.mxu0 0.0
        %6540 = vmatprep.subr.mxu0 0.0
        %6541 = vmatpush1.msra.mxu0 0.0
        %6542 = vmatprep.subr.mxu0 0.0
        %6543 = vmatpush1.msra.mxu0 0.0
        %6544 = vmatprep.subr.mxu0 0.0
        %6545 = vmatpush1.msra.mxu0 0.0
        %6546 = vmatprep.subr.mxu0 0.0
        %6547 = vmatpush1.msra.mxu0 0.0
        %6548 = vmatprep.subr.mxu0 0.0
        %6549 = vmatpush1.msra.mxu0 0.0
        %6550 = vmatprep.subr.mxu0 0.0
        %6551 = vmatpush1.msra.mxu0 0.0
        %6552 = vmatprep.subr.mxu0 0.0
        %6553 = vmatpush1.msra.mxu0 0.0
        %6554 = vmatprep.subr.mxu0 0.0
        %6555 = vmatpush1.msra.mxu0 0.0
        %6556 = vmatprep.subr.mxu0 0.0
        %6557 = vmatpush1.msra.mxu0 0.0
        %6558 = vmatprep.subr.mxu0 0.0
        %6559 = vmatpush1.msra.mxu0 0.0
        %6560 = vmatprep.subr.mxu0 0.0
        %6561 = vmatpush1.msra.mxu0 0.0
        %6562 = vmatprep.subr.mxu0 0.0
        %6563 = vmatpush1.msra.mxu0 0.0
        %6564 = vmatprep.subr.mxu0 0.0
        %6565 = vmatpush1.msra.mxu0 0.0
        %6566 = vmatprep.subr.mxu0 0.0
        %6567 = vmatpush1.msra.mxu0 0.0
        %6568 = vmatprep.subr.mxu0 0.0
        %6569 = vmatpush1.msra.mxu0 0.0
        %6570 = vmatprep.subr.mxu0 0.0
        %6571 = vmatpush1.msra.mxu0 0.0
        %6572 = vmatprep.subr.mxu0 0.0
        %6573 = vmatpush1.msra.mxu0 0.0
        %6574 = vmatprep.subr.mxu0 0.0
        %6575 = vmatpush1.msra.mxu0 0.0
        %6576 = vmatprep.subr.mxu0 0.0
        %6577 = vmatpush1.msra.mxu0 0.0
        %6578 = vmatprep.subr.mxu0 0.0
        %6579 = vmatpush1.msra.mxu0 0.0
        %6580 = vmatprep.subr.mxu0 0.0
        %6581 = vmatpush1.msra.mxu0 0.0
        %6582 = vmatprep.subr.mxu0 0.0
        %6583 = vmatpush1.msra.mxu0 0.0
        %6584 = vmatprep.subr.mxu0 0.0
        %6585 = vmatpush1.msra.mxu0 0.0
        %6586 = vmatprep.mubr.f32.mxu0 0.0
        %6587 = vmatmul.mubr.f32.gmra.mrb[0].mxu0 %v6517
        %v6588 = vpop.f32.mrb[0].mxu0
        %v6589 = vadd.f32 0.0, %v6588
        %v6590 = vpop.f32.mrb[0].mxu0
        %6591 = vmatprep.mubr.f32.mxu0 0.0
        %6592 = vmatmul.mubr.f32.gmra.mrb[0].mxu0 %v6520
        %v6593 = vpop.f32.mrb[0].mxu0
        %v6594 = vadd.f32 0.0, %v6593
        %v6595 = vpop.f32.mrb[0].mxu0
        %6596 = vdwg.mxu0
        %v6597 = vadd.f32 %v6437, %v6589
        %v6598 = vadd.f32 %v6438, %v6594
        %6599 = vmatprep.subr.mxu0 0.0
        %6600 = vmatpush1.msra.mxu0 %v5128
        %6601 = vmatprep.subr.mxu0 0.0
        %6602 = vmatpush1.msra.mxu0 %v5129
        %6603 = vmatprep.subr.mxu0 0.0
        %6604 = vmatpush1.msra.mxu0 %v5130
        %6605 = vmatprep.subr.mxu0 0.0
        %6606 = vmatpush1.msra.mxu0 %v5131
        %6607 = vmatprep.subr.mxu0 0.0
        %6608 = vmatpush1.msra.mxu0 %v5132
        %6609 = vmatprep.subr.mxu0 0.0
        %6610 = vmatpush1.msra.mxu0 %v5133
        %6611 = vmatprep.subr.mxu0 0.0
        %6612 = vmatpush1.msra.mxu0 %v5134
        %6613 = vmatprep.subr.mxu0 0.0
        %6614 = vmatpush1.msra.mxu0 %v5135
        %6615 = vmatprep.subr.mxu0 0.0
        %6616 = vmatpush1.msra.mxu0 0.0
        %6617 = vmatprep.subr.mxu0 0.0
        %6618 = vmatpush1.msra.mxu0 0.0
        %6619 = vmatprep.subr.mxu0 0.0
        %6620 = vmatpush1.msra.mxu0 0.0
        %6621 = vmatprep.subr.mxu0 0.0
        %6622 = vmatpush1.msra.mxu0 0.0
        %6623 = vmatprep.subr.mxu0 0.0
        %6624 = vmatpush1.msra.mxu0 0.0
        %6625 = vmatprep.subr.mxu0 0.0
        %6626 = vmatpush1.msra.mxu0 0.0
        %6627 = vmatprep.subr.mxu0 0.0
        %6628 = vmatpush1.msra.mxu0 0.0
        %6629 = vmatprep.subr.mxu0 0.0
        %6630 = vmatpush1.msra.mxu0 0.0
        %6631 = vmatprep.subr.mxu0 0.0
        %6632 = vmatpush1.msra.mxu0 0.0
        %6633 = vmatprep.subr.mxu0 0.0
        %6634 = vmatpush1.msra.mxu0 0.0
        %6635 = vmatprep.subr.mxu0 0.0
        %6636 = vmatpush1.msra.mxu0 0.0
        %6637 = vmatprep.subr.mxu0 0.0
        %6638 = vmatpush1.msra.mxu0 0.0
        %6639 = vmatprep.subr.mxu0 0.0
        %6640 = vmatpush1.msra.mxu0 0.0
        %6641 = vmatprep.subr.mxu0 0.0
        %6642 = vmatpush1.msra.mxu0 0.0
        %6643 = vmatprep.subr.mxu0 0.0
        %6644 = vmatpush1.msra.mxu0 0.0
        %6645 = vmatprep.subr.mxu0 0.0
        %6646 = vmatpush1.msra.mxu0 0.0
        %6647 = vmatprep.subr.mxu0 0.0
        %6648 = vmatpush1.msra.mxu0 0.0
        %6649 = vmatprep.subr.mxu0 0.0
        %6650 = vmatpush1.msra.mxu0 0.0
        %6651 = vmatprep.subr.mxu0 0.0
        %6652 = vmatpush1.msra.mxu0 0.0
        %6653 = vmatprep.subr.mxu0 0.0
        %6654 = vmatpush1.msra.mxu0 0.0
        %6655 = vmatprep.subr.mxu0 0.0
        %6656 = vmatpush1.msra.mxu0 0.0
        %6657 = vmatprep.subr.mxu0 0.0
        %6658 = vmatpush1.msra.mxu0 0.0
        %6659 = vmatprep.subr.mxu0 0.0
        %6660 = vmatpush1.msra.mxu0 0.0
        %6661 = vmatprep.subr.mxu0 0.0
        %6662 = vmatpush1.msra.mxu0 0.0
        %6663 = vmatprep.mubr.f32.mxu0 0.0
        %6664 = vmatmul.mubr.f32.gmra.mrb[0].mxu0 %v5797
        %v6665 = vpop.f32.mrb[0].mxu0
        %v6666 = vadd.f32 0.0, %v6665
        %v6667 = vpop.f32.mrb[0].mxu0
        %6668 = vmatprep.mubr.f32.mxu0 0.0
        %6669 = vmatmul.mubr.f32.gmra.mrb[0].mxu0 %v5800
        %v6670 = vpop.f32.mrb[0].mxu0
        %v6671 = vadd.f32 0.0, %v6670
        %v6672 = vpop.f32.mrb[0].mxu0
        %6673 = vdwg.mxu0
        %v6674 = vld [vmem:[#allocation14 + $0x50] sm:$0xff]
        %v6675 = vld [vmem:[#allocation14 + $0x58] sm:$0xff]
        %v6677 = vsel %vm5956, %v6674, 0
        %v6680 = vsel %vm5956, %v6675, 0
        %6682 = vmatprep.subr.mxu0 0.0
        %6683 = vmatpush1.msra.mxu0 %v6666
        %6684 = vmatprep.subr.mxu0 0.0
        %6685 = vmatpush1.msra.mxu0 %v6671
        %6686 = vmatprep.subr.mxu0 0.0
        %6687 = vmatpush1.msra.mxu0 0.0
        %6688 = vmatprep.subr.mxu0 0.0
        %6689 = vmatpush1.msra.mxu0 0.0
        %6690 = vmatprep.subr.mxu0 0.0
        %6691 = vmatpush1.msra.mxu0 0.0
        %6692 = vmatprep.subr.mxu0 0.0
        %6693 = vmatpush1.msra.mxu0 0.0
        %6694 = vmatprep.subr.mxu0 0.0
        %6695 = vmatpush1.msra.mxu0 0.0
        %6696 = vmatprep.subr.mxu0 0.0
        %6697 = vmatpush1.msra.mxu0 0.0
        %6698 = vmatprep.subr.mxu0 0.0
        %6699 = vmatpush1.msra.mxu0 0.0
        %6700 = vmatprep.subr.mxu0 0.0
        %6701 = vmatpush1.msra.mxu0 0.0
        %6702 = vmatprep.subr.mxu0 0.0
        %6703 = vmatpush1.msra.mxu0 0.0
        %6704 = vmatprep.subr.mxu0 0.0
        %6705 = vmatpush1.msra.mxu0 0.0
        %6706 = vmatprep.subr.mxu0 0.0
        %6707 = vmatpush1.msra.mxu0 0.0
        %6708 = vmatprep.subr.mxu0 0.0
        %6709 = vmatpush1.msra.mxu0 0.0
        %6710 = vmatprep.subr.mxu0 0.0
        %6711 = vmatpush1.msra.mxu0 0.0
        %6712 = vmatprep.subr.mxu0 0.0
        %6713 = vmatpush1.msra.mxu0 0.0
        %6714 = vmatprep.subr.mxu0 0.0
        %6715 = vmatpush1.msra.mxu0 0.0
        %6716 = vmatprep.subr.mxu0 0.0
        %6717 = vmatpush1.msra.mxu0 0.0
        %6718 = vmatprep.subr.mxu0 0.0
        %6719 = vmatpush1.msra.mxu0 0.0
        %6720 = vmatprep.subr.mxu0 0.0
        %6721 = vmatpush1.msra.mxu0 0.0
        %6722 = vmatprep.subr.mxu0 0.0
        %6723 = vmatpush1.msra.mxu0 0.0
        %6724 = vmatprep.subr.mxu0 0.0
        %6725 = vmatpush1.msra.mxu0 0.0
        %6726 = vmatprep.subr.mxu0 0.0
        %6727 = vmatpush1.msra.mxu0 0.0
        %6728 = vmatprep.subr.mxu0 0.0
        %6729 = vmatpush1.msra.mxu0 0.0
        %6730 = vmatprep.subr.mxu0 0.0
        %6731 = vmatpush1.msra.mxu0 0.0
        %6732 = vmatprep.subr.mxu0 0.0
        %6733 = vmatpush1.msra.mxu0 0.0
        %6734 = vmatprep.subr.mxu0 0.0
        %6735 = vmatpush1.msra.mxu0 0.0
        %6736 = vmatprep.subr.mxu0 0.0
        %6737 = vmatpush1.msra.mxu0 0.0
        %6738 = vmatprep.subr.mxu0 0.0
        %6739 = vmatpush1.msra.mxu0 0.0
        %6740 = vmatprep.subr.mxu0 0.0
        %6741 = vmatpush1.msra.mxu0 0.0
        %6742 = vmatprep.subr.mxu0 0.0
        %6743 = vmatpush1.msra.mxu0 0.0
        %6744 = vmatprep.subr.mxu0 0.0
        %6745 = vmatpush1.msra.mxu0 0.0
        %6746 = vmatprep.mubr.f32.mxu0 0.0
        %6747 = vmatmul.mubr.f32.gmra.mrb[0].mxu0 %v6677
        %v6748 = vpop.f32.mrb[0].mxu0
        %v6749 = vadd.f32 0.0, %v6748
        %v6750 = vpop.f32.mrb[0].mxu0
        %6751 = vmatprep.mubr.f32.mxu0 0.0
        %6752 = vmatmul.mubr.f32.gmra.mrb[0].mxu0 %v6680
        %v6753 = vpop.f32.mrb[0].mxu0
        %v6754 = vadd.f32 0.0, %v6753
        %v6755 = vpop.f32.mrb[0].mxu0
        %6756 = vdwg.mxu0
        %v6757 = vadd.f32 %v6597, %v6749
        %v6758 = vadd.f32 %v6598, %v6754
        %6759 = vmatprep.subr.mxu0 0.0
        %6760 = vmatpush1.msra.mxu0 %v5291
        %6761 = vmatprep.subr.mxu0 0.0
        %6762 = vmatpush1.msra.mxu0 %v5292
        %6763 = vmatprep.subr.mxu0 0.0
        %6764 = vmatpush1.msra.mxu0 %v5293
        %6765 = vmatprep.subr.mxu0 0.0
        %6766 = vmatpush1.msra.mxu0 %v5294
        %6767 = vmatprep.subr.mxu0 0.0
        %6768 = vmatpush1.msra.mxu0 %v5295
        %6769 = vmatprep.subr.mxu0 0.0
        %6770 = vmatpush1.msra.mxu0 %v5296
        %6771 = vmatprep.subr.mxu0 0.0
        %6772 = vmatpush1.msra.mxu0 %v5297
        %6773 = vmatprep.subr.mxu0 0.0
        %6774 = vmatpush1.msra.mxu0 %v5298
        %6775 = vmatprep.subr.mxu0 0.0
        %6776 = vmatpush1.msra.mxu0 0.0
        %6777 = vmatprep.subr.mxu0 0.0
        %6778 = vmatpush1.msra.mxu0 0.0
        %6779 = vmatprep.subr.mxu0 0.0
        %6780 = vmatpush1.msra.mxu0 0.0
        %6781 = vmatprep.subr.mxu0 0.0
        %6782 = vmatpush1.msra.mxu0 0.0
        %6783 = vmatprep.subr.mxu0 0.0
        %6784 = vmatpush1.msra.mxu0 0.0
        %6785 = vmatprep.subr.mxu0 0.0
        %6786 = vmatpush1.msra.mxu0 0.0
        %6787 = vmatprep.subr.mxu0 0.0
        %6788 = vmatpush1.msra.mxu0 0.0
        %6789 = vmatprep.subr.mxu0 0.0
        %6790 = vmatpush1.msra.mxu0 0.0
        %6791 = vmatprep.subr.mxu0 0.0
        %6792 = vmatpush1.msra.mxu0 0.0
        %6793 = vmatprep.subr.mxu0 0.0
        %6794 = vmatpush1.msra.mxu0 0.0
        %6795 = vmatprep.subr.mxu0 0.0
        %6796 = vmatpush1.msra.mxu0 0.0
        %6797 = vmatprep.subr.mxu0 0.0
        %6798 = vmatpush1.msra.mxu0 0.0
        %6799 = vmatprep.subr.mxu0 0.0
        %6800 = vmatpush1.msra.mxu0 0.0
        %6801 = vmatprep.subr.mxu0 0.0
        %6802 = vmatpush1.msra.mxu0 0.0
        %6803 = vmatprep.subr.mxu0 0.0
        %6804 = vmatpush1.msra.mxu0 0.0
        %6805 = vmatprep.subr.mxu0 0.0
        %6806 = vmatpush1.msra.mxu0 0.0
        %6807 = vmatprep.subr.mxu0 0.0
        %6808 = vmatpush1.msra.mxu0 0.0
        %6809 = vmatprep.subr.mxu0 0.0
        %6810 = vmatpush1.msra.mxu0 0.0
        %6811 = vmatprep.subr.mxu0 0.0
        %6812 = vmatpush1.msra.mxu0 0.0
        %6813 = vmatprep.subr.mxu0 0.0
        %6814 = vmatpush1.msra.mxu0 0.0
        %6815 = vmatprep.subr.mxu0 0.0
        %6816 = vmatpush1.msra.mxu0 0.0
        %6817 = vmatprep.subr.mxu0 0.0
        %6818 = vmatpush1.msra.mxu0 0.0
        %6819 = vmatprep.subr.mxu0 0.0
        %6820 = vmatpush1.msra.mxu0 0.0
        %6821 = vmatprep.subr.mxu0 0.0
        %6822 = vmatpush1.msra.mxu0 0.0
        %6823 = vmatprep.mubr.f32.mxu0 0.0
        %6824 = vmatmul.mubr.f32.gmra.mrb[0].mxu0 %v5797
        %v6825 = vpop.f32.mrb[0].mxu0
        %v6826 = vadd.f32 0.0, %v6825
        %v6827 = vpop.f32.mrb[0].mxu0
        %6828 = vmatprep.mubr.f32.mxu0 0.0
        %6829 = vmatmul.mubr.f32.gmra.mrb[0].mxu0 %v5800
        %v6830 = vpop.f32.mrb[0].mxu0
        %v6831 = vadd.f32 0.0, %v6830
        %v6832 = vpop.f32.mrb[0].mxu0
        %6833 = vdwg.mxu0
        %v6834 = vld [vmem:[#allocation14 + $0x60] sm:$0xff]
        %v6835 = vld [vmem:[#allocation14 + $0x68] sm:$0xff]
        %v6837 = vsel %vm5956, %v6834, 0
        %v6840 = vsel %vm5956, %v6835, 0
        %6842 = vmatprep.subr.mxu0 0.0
        %6843 = vmatpush1.msra.mxu0 %v6826
        %6844 = vmatprep.subr.mxu0 0.0
        %6845 = vmatpush1.msra.mxu0 %v6831
        %6846 = vmatprep.subr.mxu0 0.0
        %6847 = vmatpush1.msra.mxu0 0.0
        %6848 = vmatprep.subr.mxu0 0.0
        %6849 = vmatpush1.msra.mxu0 0.0
        %6850 = vmatprep.subr.mxu0 0.0
        %6851 = vmatpush1.msra.mxu0 0.0
        %6852 = vmatprep.subr.mxu0 0.0
        %6853 = vmatpush1.msra.mxu0 0.0
        %6854 = vmatprep.subr.mxu0 0.0
        %6855 = vmatpush1.msra.mxu0 0.0
        %6856 = vmatprep.subr.mxu0 0.0
        %6857 = vmatpush1.msra.mxu0 0.0
        %6858 = vmatprep.subr.mxu0 0.0
        %6859 = vmatpush1.msra.mxu0 0.0
        %6860 = vmatprep.subr.mxu0 0.0
        %6861 = vmatpush1.msra.mxu0 0.0
        %6862 = vmatprep.subr.mxu0 0.0
        %6863 = vmatpush1.msra.mxu0 0.0
        %6864 = vmatprep.subr.mxu0 0.0
        %6865 = vmatpush1.msra.mxu0 0.0
        %6866 = vmatprep.subr.mxu0 0.0
        %6867 = vmatpush1.msra.mxu0 0.0
        %6868 = vmatprep.subr.mxu0 0.0
        %6869 = vmatpush1.msra.mxu0 0.0
        %6870 = vmatprep.subr.mxu0 0.0
        %6871 = vmatpush1.msra.mxu0 0.0
        %6872 = vmatprep.subr.mxu0 0.0
        %6873 = vmatpush1.msra.mxu0 0.0
        %6874 = vmatprep.subr.mxu0 0.0
        %6875 = vmatpush1.msra.mxu0 0.0
        %6876 = vmatprep.subr.mxu0 0.0
        %6877 = vmatpush1.msra.mxu0 0.0
        %6878 = vmatprep.subr.mxu0 0.0
        %6879 = vmatpush1.msra.mxu0 0.0
        %6880 = vmatprep.subr.mxu0 0.0
        %6881 = vmatpush1.msra.mxu0 0.0
        %6882 = vmatprep.subr.mxu0 0.0
        %6883 = vmatpush1.msra.mxu0 0.0
        %6884 = vmatprep.subr.mxu0 0.0
        %6885 = vmatpush1.msra.mxu0 0.0
        %6886 = vmatprep.subr.mxu0 0.0
        %6887 = vmatpush1.msra.mxu0 0.0
        %6888 = vmatprep.subr.mxu0 0.0
        %6889 = vmatpush1.msra.mxu0 0.0
        %6890 = vmatprep.subr.mxu0 0.0
        %6891 = vmatpush1.msra.mxu0 0.0
        %6892 = vmatprep.subr.mxu0 0.0
        %6893 = vmatpush1.msra.mxu0 0.0
        %6894 = vmatprep.subr.mxu0 0.0
        %6895 = vmatpush1.msra.mxu0 0.0
        %6896 = vmatprep.subr.mxu0 0.0
        %6897 = vmatpush1.msra.mxu0 0.0
        %6898 = vmatprep.subr.mxu0 0.0
        %6899 = vmatpush1.msra.mxu0 0.0
        %6900 = vmatprep.subr.mxu0 0.0
        %6901 = vmatpush1.msra.mxu0 0.0
        %6902 = vmatprep.subr.mxu0 0.0
        %6903 = vmatpush1.msra.mxu0 0.0
        %6904 = vmatprep.subr.mxu0 0.0
        %6905 = vmatpush1.msra.mxu0 0.0
        %6906 = vmatprep.mubr.f32.mxu0 0.0
        %6907 = vmatmul.mubr.f32.gmra.mrb[0].mxu0 %v6837
        %v6908 = vpop.f32.mrb[0].mxu0
        %v6909 = vadd.f32 0.0, %v6908
        %v6910 = vpop.f32.mrb[0].mxu0
        %6911 = vmatprep.mubr.f32.mxu0 0.0
        %6912 = vmatmul.mubr.f32.gmra.mrb[0].mxu0 %v6840
        %v6913 = vpop.f32.mrb[0].mxu0
        %v6914 = vadd.f32 0.0, %v6913
        %v6915 = vpop.f32.mrb[0].mxu0
        %6916 = vdwg.mxu0
        %v6917 = vadd.f32 %v6757, %v6909
        %v6918 = vadd.f32 %v6758, %v6914
        %6919 = vmatprep.subr.mxu0 0.0
        %6920 = vmatpush1.msra.mxu0 %v5454
        %6921 = vmatprep.subr.mxu0 0.0
        %6922 = vmatpush1.msra.mxu0 %v5455
        %6923 = vmatprep.subr.mxu0 0.0
        %6924 = vmatpush1.msra.mxu0 %v5456
        %6925 = vmatprep.subr.mxu0 0.0
        %6926 = vmatpush1.msra.mxu0 %v5457
        %6927 = vmatprep.subr.mxu0 0.0
        %6928 = vmatpush1.msra.mxu0 %v5458
        %6929 = vmatprep.subr.mxu0 0.0
        %6930 = vmatpush1.msra.mxu0 %v5459
        %6931 = vmatprep.subr.mxu0 0.0
        %6932 = vmatpush1.msra.mxu0 %v5460
        %6933 = vmatprep.subr.mxu0 0.0
        %6934 = vmatpush1.msra.mxu0 %v5461
        %6935 = vmatprep.subr.mxu0 0.0
        %6936 = vmatpush1.msra.mxu0 0.0
        %6937 = vmatprep.subr.mxu0 0.0
        %6938 = vmatpush1.msra.mxu0 0.0
        %6939 = vmatprep.subr.mxu0 0.0
        %6940 = vmatpush1.msra.mxu0 0.0
        %6941 = vmatprep.subr.mxu0 0.0
        %6942 = vmatpush1.msra.mxu0 0.0
        %6943 = vmatprep.subr.mxu0 0.0
        %6944 = vmatpush1.msra.mxu0 0.0
        %6945 = vmatprep.subr.mxu0 0.0
        %6946 = vmatpush1.msra.mxu0 0.0
        %6947 = vmatprep.subr.mxu0 0.0
        %6948 = vmatpush1.msra.mxu0 0.0
        %6949 = vmatprep.subr.mxu0 0.0
        %6950 = vmatpush1.msra.mxu0 0.0
        %6951 = vmatprep.subr.mxu0 0.0
        %6952 = vmatpush1.msra.mxu0 0.0
        %6953 = vmatprep.subr.mxu0 0.0
        %6954 = vmatpush1.msra.mxu0 0.0
        %6955 = vmatprep.subr.mxu0 0.0
        %6956 = vmatpush1.msra.mxu0 0.0
        %6957 = vmatprep.subr.mxu0 0.0
        %6958 = vmatpush1.msra.mxu0 0.0
        %6959 = vmatprep.subr.mxu0 0.0
        %6960 = vmatpush1.msra.mxu0 0.0
        %6961 = vmatprep.subr.mxu0 0.0
        %6962 = vmatpush1.msra.mxu0 0.0
        %6963 = vmatprep.subr.mxu0 0.0
        %6964 = vmatpush1.msra.mxu0 0.0
        %6965 = vmatprep.subr.mxu0 0.0
        %6966 = vmatpush1.msra.mxu0 0.0
        %6967 = vmatprep.subr.mxu0 0.0
        %6968 = vmatpush1.msra.mxu0 0.0
        %6969 = vmatprep.subr.mxu0 0.0
        %6970 = vmatpush1.msra.mxu0 0.0
        %6971 = vmatprep.subr.mxu0 0.0
        %6972 = vmatpush1.msra.mxu0 0.0
        %6973 = vmatprep.subr.mxu0 0.0
        %6974 = vmatpush1.msra.mxu0 0.0
        %6975 = vmatprep.subr.mxu0 0.0
        %6976 = vmatpush1.msra.mxu0 0.0
        %6977 = vmatprep.subr.mxu0 0.0
        %6978 = vmatpush1.msra.mxu0 0.0
        %6979 = vmatprep.subr.mxu0 0.0
        %6980 = vmatpush1.msra.mxu0 0.0
        %6981 = vmatprep.subr.mxu0 0.0
        %6982 = vmatpush1.msra.mxu0 0.0
        %6983 = vmatprep.mubr.f32.mxu0 0.0
        %6984 = vmatmul.mubr.f32.gmra.mrb[0].mxu0 %v5797
        %v6985 = vpop.f32.mrb[0].mxu0
        %v6986 = vadd.f32 0.0, %v6985
        %v6987 = vpop.f32.mrb[0].mxu0
        %6988 = vmatprep.mubr.f32.mxu0 0.0
        %6989 = vmatmul.mubr.f32.gmra.mrb[0].mxu0 %v5800
        %v6990 = vpop.f32.mrb[0].mxu0
        %v6991 = vadd.f32 0.0, %v6990
        %v6992 = vpop.f32.mrb[0].mxu0
        %6993 = vdwg.mxu0
        %v6994 = vld [vmem:[#allocation14 + $0x70] sm:$0xff]
        %v6995 = vld [vmem:[#allocation14 + $0x78] sm:$0xff]
        %v6997 = vsel %vm5956, %v6994, 0
        %v7000 = vsel %vm5956, %v6995, 0
        %7002 = vmatprep.subr.mxu0 0.0
        %7003 = vmatpush1.msra.mxu0 %v6986
        %7004 = vmatprep.subr.mxu0 0.0
        %7005 = vmatpush1.msra.mxu0 %v6991
        %7006 = vmatprep.subr.mxu0 0.0
        %7007 = vmatpush1.msra.mxu0 0.0
        %7008 = vmatprep.subr.mxu0 0.0
        %7009 = vmatpush1.msra.mxu0 0.0
        %7010 = vmatprep.subr.mxu0 0.0
        %7011 = vmatpush1.msra.mxu0 0.0
        %7012 = vmatprep.subr.mxu0 0.0
        %7013 = vmatpush1.msra.mxu0 0.0
        %7014 = vmatprep.subr.mxu0 0.0
        %7015 = vmatpush1.msra.mxu0 0.0
        %7016 = vmatprep.subr.mxu0 0.0
        %7017 = vmatpush1.msra.mxu0 0.0
        %7018 = vmatprep.subr.mxu0 0.0
        %7019 = vmatpush1.msra.mxu0 0.0
        %7020 = vmatprep.subr.mxu0 0.0
        %7021 = vmatpush1.msra.mxu0 0.0
        %7022 = vmatprep.subr.mxu0 0.0
        %7023 = vmatpush1.msra.mxu0 0.0
        %7024 = vmatprep.subr.mxu0 0.0
        %7025 = vmatpush1.msra.mxu0 0.0
        %7026 = vmatprep.subr.mxu0 0.0
        %7027 = vmatpush1.msra.mxu0 0.0
        %7028 = vmatprep.subr.mxu0 0.0
        %7029 = vmatpush1.msra.mxu0 0.0
        %7030 = vmatprep.subr.mxu0 0.0
        %7031 = vmatpush1.msra.mxu0 0.0
        %7032 = vmatprep.subr.mxu0 0.0
        %7033 = vmatpush1.msra.mxu0 0.0
        %7034 = vmatprep.subr.mxu0 0.0
        %7035 = vmatpush1.msra.mxu0 0.0
        %7036 = vmatprep.subr.mxu0 0.0
        %7037 = vmatpush1.msra.mxu0 0.0
        %7038 = vmatprep.subr.mxu0 0.0
        %7039 = vmatpush1.msra.mxu0 0.0
        %7040 = vmatprep.subr.mxu0 0.0
        %7041 = vmatpush1.msra.mxu0 0.0
        %7042 = vmatprep.subr.mxu0 0.0
        %7043 = vmatpush1.msra.mxu0 0.0
        %7044 = vmatprep.subr.mxu0 0.0
        %7045 = vmatpush1.msra.mxu0 0.0
        %7046 = vmatprep.subr.mxu0 0.0
        %7047 = vmatpush1.msra.mxu0 0.0
        %7048 = vmatprep.subr.mxu0 0.0
        %7049 = vmatpush1.msra.mxu0 0.0
        %7050 = vmatprep.subr.mxu0 0.0
        %7051 = vmatpush1.msra.mxu0 0.0
        %7052 = vmatprep.subr.mxu0 0.0
        %7053 = vmatpush1.msra.mxu0 0.0
        %7054 = vmatprep.subr.mxu0 0.0
        %7055 = vmatpush1.msra.mxu0 0.0
        %7056 = vmatprep.subr.mxu0 0.0
        %7057 = vmatpush1.msra.mxu0 0.0
        %7058 = vmatprep.subr.mxu0 0.0
        %7059 = vmatpush1.msra.mxu0 0.0
        %7060 = vmatprep.subr.mxu0 0.0
        %7061 = vmatpush1.msra.mxu0 0.0
        %7062 = vmatprep.subr.mxu0 0.0
        %7063 = vmatpush1.msra.mxu0 0.0
        %7064 = vmatprep.subr.mxu0 0.0
        %7065 = vmatpush1.msra.mxu0 0.0
        %7066 = vmatprep.mubr.f32.mxu0 0.0
        %7067 = vmatmul.mubr.f32.gmra.mrb[0].mxu0 %v6997
        %v7068 = vpop.f32.mrb[0].mxu0
        %v7069 = vadd.f32 0.0, %v7068
        %v7070 = vpop.f32.mrb[0].mxu0
        %7071 = vmatprep.mubr.f32.mxu0 0.0
        %7072 = vmatmul.mubr.f32.gmra.mrb[0].mxu0 %v7000
        %v7073 = vpop.f32.mrb[0].mxu0
        %v7074 = vadd.f32 0.0, %v7073
        %v7075 = vpop.f32.mrb[0].mxu0
        %7076 = vdwg.mxu0
        %v7077 = vadd.f32 %v6917, %v7069
        %v7078 = vadd.f32 %v6918, %v7074
        %7079 = vmatprep.subr.mxu0 0.0
        %7080 = vmatpush1.msra.mxu0 %v5617
        %7081 = vmatprep.subr.mxu0 0.0
        %7082 = vmatpush1.msra.mxu0 %v5618
        %7083 = vmatprep.subr.mxu0 0.0
        %7084 = vmatpush1.msra.mxu0 %v5619
        %7085 = vmatprep.subr.mxu0 0.0
        %7086 = vmatpush1.msra.mxu0 %v5620
        %7087 = vmatprep.subr.mxu0 0.0
        %7088 = vmatpush1.msra.mxu0 %v5621
        %7089 = vmatprep.subr.mxu0 0.0
        %7090 = vmatpush1.msra.mxu0 %v5622
        %7091 = vmatprep.subr.mxu0 0.0
        %7092 = vmatpush1.msra.mxu0 %v5623
        %7093 = vmatprep.subr.mxu0 0.0
        %7094 = vmatpush1.msra.mxu0 %v5624
        %7095 = vmatprep.subr.mxu0 0.0
        %7096 = vmatpush1.msra.mxu0 0.0
        %7097 = vmatprep.subr.mxu0 0.0
        %7098 = vmatpush1.msra.mxu0 0.0
        %7099 = vmatprep.subr.mxu0 0.0
        %7100 = vmatpush1.msra.mxu0 0.0
        %7101 = vmatprep.subr.mxu0 0.0
        %7102 = vmatpush1.msra.mxu0 0.0
        %7103 = vmatprep.subr.mxu0 0.0
        %7104 = vmatpush1.msra.mxu0 0.0
        %7105 = vmatprep.subr.mxu0 0.0
        %7106 = vmatpush1.msra.mxu0 0.0
        %7107 = vmatprep.subr.mxu0 0.0
        %7108 = vmatpush1.msra.mxu0 0.0
        %7109 = vmatprep.subr.mxu0 0.0
        %7110 = vmatpush1.msra.mxu0 0.0
        %7111 = vmatprep.subr.mxu0 0.0
        %7112 = vmatpush1.msra.mxu0 0.0
        %7113 = vmatprep.subr.mxu0 0.0
        %7114 = vmatpush1.msra.mxu0 0.0
        %7115 = vmatprep.subr.mxu0 0.0
        %7116 = vmatpush1.msra.mxu0 0.0
        %7117 = vmatprep.subr.mxu0 0.0
        %7118 = vmatpush1.msra.mxu0 0.0
        %7119 = vmatprep.subr.mxu0 0.0
        %7120 = vmatpush1.msra.mxu0 0.0
        %7121 = vmatprep.subr.mxu0 0.0
        %7122 = vmatpush1.msra.mxu0 0.0
        %7123 = vmatprep.subr.mxu0 0.0
        %7124 = vmatpush1.msra.mxu0 0.0
        %7125 = vmatprep.subr.mxu0 0.0
        %7126 = vmatpush1.msra.mxu0 0.0
        %7127 = vmatprep.subr.mxu0 0.0
        %7128 = vmatpush1.msra.mxu0 0.0
        %7129 = vmatprep.subr.mxu0 0.0
        %7130 = vmatpush1.msra.mxu0 0.0
        %7131 = vmatprep.subr.mxu0 0.0
        %7132 = vmatpush1.msra.mxu0 0.0
        %7133 = vmatprep.subr.mxu0 0.0
        %7134 = vmatpush1.msra.mxu0 0.0
        %7135 = vmatprep.subr.mxu0 0.0
        %7136 = vmatpush1.msra.mxu0 0.0
        %7137 = vmatprep.subr.mxu0 0.0
        %7138 = vmatpush1.msra.mxu0 0.0
        %7139 = vmatprep.subr.mxu0 0.0
        %7140 = vmatpush1.msra.mxu0 0.0
        %7141 = vmatprep.subr.mxu0 0.0
        %7142 = vmatpush1.msra.mxu0 0.0
        %7143 = vmatprep.mubr.f32.mxu0 0.0
        %7144 = vmatmul.mubr.f32.gmra.mrb[0].mxu0 %v5797
        %v7145 = vpop.f32.mrb[0].mxu0
        %v7146 = vadd.f32 0.0, %v7145
        %v7147 = vpop.f32.mrb[0].mxu0
        %7148 = vmatprep.mubr.f32.mxu0 0.0
        %7149 = vmatmul.mubr.f32.gmra.mrb[0].mxu0 %v5800
        %v7150 = vpop.f32.mrb[0].mxu0
        %v7151 = vadd.f32 0.0, %v7150
        %v7152 = vpop.f32.mrb[0].mxu0
        %7153 = vdwg.mxu0
        %v7154 = vld [vmem:[#allocation14 + $0x80] sm:$0xff]
        %v7155 = vld [vmem:[#allocation14 + $0x88] sm:$0xff]
        %v7157 = vsel %vm5956, %v7154, 0
        %v7160 = vsel %vm5956, %v7155, 0
        %7162 = vmatprep.subr.mxu0 0.0
        %7163 = vmatpush1.msra.mxu0 %v7146
        %7164 = vmatprep.subr.mxu0 0.0
        %7165 = vmatpush1.msra.mxu0 %v7151
        %7166 = vmatprep.subr.mxu0 0.0
        %7167 = vmatpush1.msra.mxu0 0.0
        %7168 = vmatprep.subr.mxu0 0.0
        %7169 = vmatpush1.msra.mxu0 0.0
        %7170 = vmatprep.subr.mxu0 0.0
        %7171 = vmatpush1.msra.mxu0 0.0
        %7172 = vmatprep.subr.mxu0 0.0
        %7173 = vmatpush1.msra.mxu0 0.0
        %7174 = vmatprep.subr.mxu0 0.0
        %7175 = vmatpush1.msra.mxu0 0.0
        %7176 = vmatprep.subr.mxu0 0.0
        %7177 = vmatpush1.msra.mxu0 0.0
        %7178 = vmatprep.subr.mxu0 0.0
        %7179 = vmatpush1.msra.mxu0 0.0
        %7180 = vmatprep.subr.mxu0 0.0
        %7181 = vmatpush1.msra.mxu0 0.0
        %7182 = vmatprep.subr.mxu0 0.0
        %7183 = vmatpush1.msra.mxu0 0.0
        %7184 = vmatprep.subr.mxu0 0.0
        %7185 = vmatpush1.msra.mxu0 0.0
        %7186 = vmatprep.subr.mxu0 0.0
        %7187 = vmatpush1.msra.mxu0 0.0
        %7188 = vmatprep.subr.mxu0 0.0
        %7189 = vmatpush1.msra.mxu0 0.0
        %7190 = vmatprep.subr.mxu0 0.0
        %7191 = vmatpush1.msra.mxu0 0.0
        %7192 = vmatprep.subr.mxu0 0.0
        %7193 = vmatpush1.msra.mxu0 0.0
        %7194 = vmatprep.subr.mxu0 0.0
        %7195 = vmatpush1.msra.mxu0 0.0
        %7196 = vmatprep.subr.mxu0 0.0
        %7197 = vmatpush1.msra.mxu0 0.0
        %7198 = vmatprep.subr.mxu0 0.0
        %7199 = vmatpush1.msra.mxu0 0.0
        %7200 = vmatprep.subr.mxu0 0.0
        %7201 = vmatpush1.msra.mxu0 0.0
        %7202 = vmatprep.subr.mxu0 0.0
        %7203 = vmatpush1.msra.mxu0 0.0
        %7204 = vmatprep.subr.mxu0 0.0
        %7205 = vmatpush1.msra.mxu0 0.0
        %7206 = vmatprep.subr.mxu0 0.0
        %7207 = vmatpush1.msra.mxu0 0.0
        %7208 = vmatprep.subr.mxu0 0.0
        %7209 = vmatpush1.msra.mxu0 0.0
        %7210 = vmatprep.subr.mxu0 0.0
        %7211 = vmatpush1.msra.mxu0 0.0
        %7212 = vmatprep.subr.mxu0 0.0
        %7213 = vmatpush1.msra.mxu0 0.0
        %7214 = vmatprep.subr.mxu0 0.0
        %7215 = vmatpush1.msra.mxu0 0.0
        %7216 = vmatprep.subr.mxu0 0.0
        %7217 = vmatpush1.msra.mxu0 0.0
        %7218 = vmatprep.subr.mxu0 0.0
        %7219 = vmatpush1.msra.mxu0 0.0
        %7220 = vmatprep.subr.mxu0 0.0
        %7221 = vmatpush1.msra.mxu0 0.0
        %7222 = vmatprep.subr.mxu0 0.0
        %7223 = vmatpush1.msra.mxu0 0.0
        %7224 = vmatprep.subr.mxu0 0.0
        %7225 = vmatpush1.msra.mxu0 0.0
        %7226 = vmatprep.mubr.f32.mxu0 0.0
        %7227 = vmatmul.mubr.f32.gmra.mrb[0].mxu0 %v7157
        %v7228 = vpop.f32.mrb[0].mxu0
        %v7229 = vadd.f32 0.0, %v7228
        %v7230 = vpop.f32.mrb[0].mxu0
        %7231 = vmatprep.mubr.f32.mxu0 0.0
        %7232 = vmatmul.mubr.f32.gmra.mrb[0].mxu0 %v7160
        %v7233 = vpop.f32.mrb[0].mxu0
        %v7234 = vadd.f32 0.0, %v7233
        %v7235 = vpop.f32.mrb[0].mxu0
        %7236 = vdwg.mxu0
        %v7237 = vadd.f32 %v7077, %v7229
        %v7238 = vadd.f32 %v7078, %v7234
        %v7239 = vld [vmem:[#allocation16] sm:$0xff]
        %v7240 = vld [vmem:[#allocation16 + $0x8] sm:$0xff]
        %7242 = vset.pattern.permute.xlu0 0
        %7243 = vperm.xlu0 %7242, %v7239
        %v7244 = vpop.permute.xlu0 %7243
        %7247 = vset.pattern.permute.xlu0 0
        %7248 = vperm.xlu0 %7247, %v7240
        %v7249 = vpop.permute.xlu0 %7248
        %v7251 = vadd.f32 %v7237, %v7244
        %v7252 = vadd.f32 %v7238, %v7249
        %v7253 = vmax.f32 %v7251, 0.0
        %v7254 = vmax.f32 %v7252, 0.0
        %v7256 = vsel %vm4321, %v7253, 0
        %v7259 = vsel %vm4321, %v7254, 0
        %7261 = vmatprep.subr.mxu0 0.0
        %7262 = vmatpush1.msra.mxu0 %v5128
        %7263 = vmatprep.subr.mxu0 0.0
        %7264 = vmatpush1.msra.mxu0 %v5129
        %7265 = vmatprep.subr.mxu0 0.0
        %7266 = vmatpush1.msra.mxu0 %v5130
        %7267 = vmatprep.subr.mxu0 0.0
        %7268 = vmatpush1.msra.mxu0 %v5131
        %7269 = vmatprep.subr.mxu0 0.0
        %7270 = vmatpush1.msra.mxu0 %v5132
        %7271 = vmatprep.subr.mxu0 0.0
        %7272 = vmatpush1.msra.mxu0 %v5133
        %7273 = vmatprep.subr.mxu0 0.0
        %7274 = vmatpush1.msra.mxu0 %v5134
        %7275 = vmatprep.subr.mxu0 0.0
        %7276 = vmatpush1.msra.mxu0 %v5135
        %7277 = vmatprep.subr.mxu0 0.0
        %7278 = vmatpush1.msra.mxu0 0.0
        %7279 = vmatprep.subr.mxu0 0.0
        %7280 = vmatpush1.msra.mxu0 0.0
        %7281 = vmatprep.subr.mxu0 0.0
        %7282 = vmatpush1.msra.mxu0 0.0
        %7283 = vmatprep.subr.mxu0 0.0
        %7284 = vmatpush1.msra.mxu0 0.0
        %7285 = vmatprep.subr.mxu0 0.0
        %7286 = vmatpush1.msra.mxu0 0.0
        %7287 = vmatprep.subr.mxu0 0.0
        %7288 = vmatpush1.msra.mxu0 0.0
        %7289 = vmatprep.subr.mxu0 0.0
        %7290 = vmatpush1.msra.mxu0 0.0
        %7291 = vmatprep.subr.mxu0 0.0
        %7292 = vmatpush1.msra.mxu0 0.0
        %7293 = vmatprep.subr.mxu0 0.0
        %7294 = vmatpush1.msra.mxu0 0.0
        %7295 = vmatprep.subr.mxu0 0.0
        %7296 = vmatpush1.msra.mxu0 0.0
        %7297 = vmatprep.subr.mxu0 0.0
        %7298 = vmatpush1.msra.mxu0 0.0
        %7299 = vmatprep.subr.mxu0 0.0
        %7300 = vmatpush1.msra.mxu0 0.0
        %7301 = vmatprep.subr.mxu0 0.0
        %7302 = vmatpush1.msra.mxu0 0.0
        %7303 = vmatprep.subr.mxu0 0.0
        %7304 = vmatpush1.msra.mxu0 0.0
        %7305 = vmatprep.subr.mxu0 0.0
        %7306 = vmatpush1.msra.mxu0 0.0
        %7307 = vmatprep.subr.mxu0 0.0
        %7308 = vmatpush1.msra.mxu0 0.0
        %7309 = vmatprep.subr.mxu0 0.0
        %7310 = vmatpush1.msra.mxu0 0.0
        %7311 = vmatprep.subr.mxu0 0.0
        %7312 = vmatpush1.msra.mxu0 0.0
        %7313 = vmatprep.subr.mxu0 0.0
        %7314 = vmatpush1.msra.mxu0 0.0
        %7315 = vmatprep.subr.mxu0 0.0
        %7316 = vmatpush1.msra.mxu0 0.0
        %7317 = vmatprep.subr.mxu0 0.0
        %7318 = vmatpush1.msra.mxu0 0.0
        %7319 = vmatprep.subr.mxu0 0.0
        %7320 = vmatpush1.msra.mxu0 0.0
        %7321 = vmatprep.subr.mxu0 0.0
        %7322 = vmatpush1.msra.mxu0 0.0
        %7323 = vmatprep.subr.mxu0 0.0
        %7324 = vmatpush1.msra.mxu0 0.0
        %7325 = vmatprep.mubr.f32.mxu0 0.0
        %7326 = vmatmul.mubr.f32.gmra.mrb[0].mxu0 %v7256
        %v7327 = vpop.f32.mrb[0].mxu0
        %v7328 = vadd.f32 0.0, %v7327
        %v7329 = vpop.f32.mrb[0].mxu0
        %7330 = vmatprep.mubr.f32.mxu0 0.0
        %7331 = vmatmul.mubr.f32.gmra.mrb[0].mxu0 %v7259
        %v7332 = vpop.f32.mrb[0].mxu0
        %v7333 = vadd.f32 0.0, %v7332
        %v7334 = vpop.f32.mrb[0].mxu0
        %7335 = vdwg.mxu0
        %v7336 = vmax.f32 %v7253, %v7328
        %v7337 = vmax.f32 %v7254, %v7333
        %v7339 = vsel %vm4321, %v7336, 0
        %v7342 = vsel %vm4321, %v7337, 0
        %7344 = vmatprep.subr.mxu0 0.0
        %7345 = vmatpush1.msra.mxu0 %v5454
        %7346 = vmatprep.subr.mxu0 0.0
        %7347 = vmatpush1.msra.mxu0 %v5455
        %7348 = vmatprep.subr.mxu0 0.0
        %7349 = vmatpush1.msra.mxu0 %v5456
        %7350 = vmatprep.subr.mxu0 0.0
        %7351 = vmatpush1.msra.mxu0 %v5457
        %7352 = vmatprep.subr.mxu0 0.0
        %7353 = vmatpush1.msra.mxu0 %v5458
        %7354 = vmatprep.subr.mxu0 0.0
        %7355 = vmatpush1.msra.mxu0 %v5459
        %7356 = vmatprep.subr.mxu0 0.0
        %7357 = vmatpush1.msra.mxu0 %v5460
        %7358 = vmatprep.subr.mxu0 0.0
        %7359 = vmatpush1.msra.mxu0 %v5461
        %7360 = vmatprep.subr.mxu0 0.0
        %7361 = vmatpush1.msra.mxu0 0.0
        %7362 = vmatprep.subr.mxu0 0.0
        %7363 = vmatpush1.msra.mxu0 0.0
        %7364 = vmatprep.subr.mxu0 0.0
        %7365 = vmatpush1.msra.mxu0 0.0
        %7366 = vmatprep.subr.mxu0 0.0
        %7367 = vmatpush1.msra.mxu0 0.0
        %7368 = vmatprep.subr.mxu0 0.0
        %7369 = vmatpush1.msra.mxu0 0.0
        %7370 = vmatprep.subr.mxu0 0.0
        %7371 = vmatpush1.msra.mxu0 0.0
        %7372 = vmatprep.subr.mxu0 0.0
        %7373 = vmatpush1.msra.mxu0 0.0
        %7374 = vmatprep.subr.mxu0 0.0
        %7375 = vmatpush1.msra.mxu0 0.0
        %7376 = vmatprep.subr.mxu0 0.0
        %7377 = vmatpush1.msra.mxu0 0.0
        %7378 = vmatprep.subr.mxu0 0.0
        %7379 = vmatpush1.msra.mxu0 0.0
        %7380 = vmatprep.subr.mxu0 0.0
        %7381 = vmatpush1.msra.mxu0 0.0
        %7382 = vmatprep.subr.mxu0 0.0
        %7383 = vmatpush1.msra.mxu0 0.0
        %7384 = vmatprep.subr.mxu0 0.0
        %7385 = vmatpush1.msra.mxu0 0.0
        %7386 = vmatprep.subr.mxu0 0.0
        %7387 = vmatpush1.msra.mxu0 0.0
        %7388 = vmatprep.subr.mxu0 0.0
        %7389 = vmatpush1.msra.mxu0 0.0
        %7390 = vmatprep.subr.mxu0 0.0
        %7391 = vmatpush1.msra.mxu0 0.0
        %7392 = vmatprep.subr.mxu0 0.0
        %7393 = vmatpush1.msra.mxu0 0.0
        %7394 = vmatprep.subr.mxu0 0.0
        %7395 = vmatpush1.msra.mxu0 0.0
        %7396 = vmatprep.subr.mxu0 0.0
        %7397 = vmatpush1.msra.mxu0 0.0
        %7398 = vmatprep.subr.mxu0 0.0
        %7399 = vmatpush1.msra.mxu0 0.0
        %7400 = vmatprep.subr.mxu0 0.0
        %7401 = vmatpush1.msra.mxu0 0.0
        %7402 = vmatprep.subr.mxu0 0.0
        %7403 = vmatpush1.msra.mxu0 0.0
        %7404 = vmatprep.subr.mxu0 0.0
        %7405 = vmatpush1.msra.mxu0 0.0
        %7406 = vmatprep.subr.mxu0 0.0
        %7407 = vmatpush1.msra.mxu0 0.0
        %7408 = vmatprep.mubr.f32.mxu0 0.0
        %7409 = vmatmul.mubr.f32.gmra.mrb[0].mxu0 %v7339
        %v7410 = vpop.f32.mrb[0].mxu0
        %v7411 = vadd.f32 0.0, %v7410
        %v7412 = vpop.f32.mrb[0].mxu0
        %7413 = vmatprep.mubr.f32.mxu0 0.0
        %7414 = vmatmul.mubr.f32.gmra.mrb[0].mxu0 %v7342
        %v7415 = vpop.f32.mrb[0].mxu0
        %v7416 = vadd.f32 0.0, %v7415
        %v7417 = vpop.f32.mrb[0].mxu0
        %7418 = vdwg.mxu0
        %v7419 = vmax.f32 %v7336, %v7411
        %v7420 = vmax.f32 %v7337, %v7416
        %v7421 = vld [vmem:[#allocation26] sm:$0xff]
        %v7422 = vld [vmem:[#allocation26 + $0x8] sm:$0xff]
        %v7423 = vld [vmem:[#allocation26 + $0x10] sm:$0xff]
        %v7424 = vld [vmem:[#allocation26 + $0x18] sm:$0xff]
        %v7425 = vld [vmem:[#allocation26 + $0x20] sm:$0xff]
        %v7426 = vld [vmem:[#allocation26 + $0x28] sm:$0xff]
        %v7427 = vld [vmem:[#allocation26 + $0x30] sm:$0xff]
        %v7428 = vld [vmem:[#allocation26 + $0x38] sm:$0xff]
        %v7430 = vsel %vm4321, %v7419, 0
        %v7433 = vsel %vm4321, %v7420, 0
        %7435 = vmatprep.subr.mxu0 0.0
        %7436 = vmatpush1.msra.mxu0 %v7421
        %7437 = vmatprep.subr.mxu0 0.0
        %7438 = vmatpush1.msra.mxu0 %v7422
        %7439 = vmatprep.subr.mxu0 0.0
        %7440 = vmatpush1.msra.mxu0 %v7423
        %7441 = vmatprep.subr.mxu0 0.0
        %7442 = vmatpush1.msra.mxu0 %v7424
        %7443 = vmatprep.subr.mxu0 0.0
        %7444 = vmatpush1.msra.mxu0 %v7425
        %7445 = vmatprep.subr.mxu0 0.0
        %7446 = vmatpush1.msra.mxu0 %v7426
        %7447 = vmatprep.subr.mxu0 0.0
        %7448 = vmatpush1.msra.mxu0 %v7427
        %7449 = vmatprep.subr.mxu0 0.0
        %7450 = vmatpush1.msra.mxu0 %v7428
        %7451 = vmatprep.subr.mxu0 0.0
        %7452 = vmatpush1.msra.mxu0 0.0
        %7453 = vmatprep.subr.mxu0 0.0
        %7454 = vmatpush1.msra.mxu0 0.0
        %7455 = vmatprep.subr.mxu0 0.0
        %7456 = vmatpush1.msra.mxu0 0.0
        %7457 = vmatprep.subr.mxu0 0.0
        %7458 = vmatpush1.msra.mxu0 0.0
        %7459 = vmatprep.subr.mxu0 0.0
        %7460 = vmatpush1.msra.mxu0 0.0
        %7461 = vmatprep.subr.mxu0 0.0
        %7462 = vmatpush1.msra.mxu0 0.0
        %7463 = vmatprep.subr.mxu0 0.0
        %7464 = vmatpush1.msra.mxu0 0.0
        %7465 = vmatprep.subr.mxu0 0.0
        %7466 = vmatpush1.msra.mxu0 0.0
        %7467 = vmatprep.subr.mxu0 0.0
        %7468 = vmatpush1.msra.mxu0 0.0
        %7469 = vmatprep.subr.mxu0 0.0
        %7470 = vmatpush1.msra.mxu0 0.0
        %7471 = vmatprep.subr.mxu0 0.0
        %7472 = vmatpush1.msra.mxu0 0.0
        %7473 = vmatprep.subr.mxu0 0.0
        %7474 = vmatpush1.msra.mxu0 0.0
        %7475 = vmatprep.subr.mxu0 0.0
        %7476 = vmatpush1.msra.mxu0 0.0
        %7477 = vmatprep.subr.mxu0 0.0
        %7478 = vmatpush1.msra.mxu0 0.0
        %7479 = vmatprep.subr.mxu0 0.0
        %7480 = vmatpush1.msra.mxu0 0.0
        %7481 = vmatprep.subr.mxu0 0.0
        %7482 = vmatpush1.msra.mxu0 0.0
        %7483 = vmatprep.subr.mxu0 0.0
        %7484 = vmatpush1.msra.mxu0 0.0
        %7485 = vmatprep.subr.mxu0 0.0
        %7486 = vmatpush1.msra.mxu0 0.0
        %7487 = vmatprep.subr.mxu0 0.0
        %7488 = vmatpush1.msra.mxu0 0.0
        %7489 = vmatprep.subr.mxu0 0.0
        %7490 = vmatpush1.msra.mxu0 0.0
        %7491 = vmatprep.subr.mxu0 0.0
        %7492 = vmatpush1.msra.mxu0 0.0
        %7493 = vmatprep.subr.mxu0 0.0
        %7494 = vmatpush1.msra.mxu0 0.0
        %7495 = vmatprep.subr.mxu0 0.0
        %7496 = vmatpush1.msra.mxu0 0.0
        %7497 = vmatprep.subr.mxu0 0.0
        %7498 = vmatpush1.msra.mxu0 0.0
        %7499 = vmatprep.mubr.f32.mxu0 0.0
        %7500 = vmatmul.mubr.f32.gmra.mrb[0].mxu0 %v7430
        %v7501 = vpop.f32.mrb[0].mxu0
        %v7502 = vadd.f32 0.0, %v7501
        %v7503 = vpop.f32.mrb[0].mxu0
        %7504 = vmatprep.mubr.f32.mxu0 0.0
        %7505 = vmatmul.mubr.f32.gmra.mrb[0].mxu0 %v7433
        %v7506 = vpop.f32.mrb[0].mxu0
        %v7507 = vadd.f32 0.0, %v7506
        %v7508 = vpop.f32.mrb[0].mxu0
        %7509 = vdwg.mxu0
        %v7510 = vld [vmem:[#allocation23] sm:$0xff]
        %v7511 = vld [vmem:[#allocation23 + $0x8] sm:$0xff]
        %v7513 = vsel %vm5956, %v7502, 0
        %v7516 = vsel %vm5956, %v7507, 0
        %7518 = vmatprep.subr.mxu0 0.0
        %7519 = vmatpush1.msra.mxu0 %v7510
        %7520 = vmatprep.subr.mxu0 0.0
        %7521 = vmatpush1.msra.mxu0 %v7511
        %7522 = vmatprep.subr.mxu0 0.0
        %7523 = vmatpush1.msra.mxu0 0.0
        %7524 = vmatprep.subr.mxu0 0.0
        %7525 = vmatpush1.msra.mxu0 0.0
        %7526 = vmatprep.subr.mxu0 0.0
        %7527 = vmatpush1.msra.mxu0 0.0
        %7528 = vmatprep.subr.mxu0 0.0
        %7529 = vmatpush1.msra.mxu0 0.0
        %7530 = vmatprep.subr.mxu0 0.0
        %7531 = vmatpush1.msra.mxu0 0.0
        %7532 = vmatprep.subr.mxu0 0.0
        %7533 = vmatpush1.msra.mxu0 0.0
        %7534 = vmatprep.subr.mxu0 0.0
        %7535 = vmatpush1.msra.mxu0 0.0
        %7536 = vmatprep.subr.mxu0 0.0
        %7537 = vmatpush1.msra.mxu0 0.0
        %7538 = vmatprep.subr.mxu0 0.0
        %7539 = vmatpush1.msra.mxu0 0.0
        %7540 = vmatprep.subr.mxu0 0.0
        %7541 = vmatpush1.msra.mxu0 0.0
        %7542 = vmatprep.subr.mxu0 0.0
        %7543 = vmatpush1.msra.mxu0 0.0
        %7544 = vmatprep.subr.mxu0 0.0
        %7545 = vmatpush1.msra.mxu0 0.0
        %7546 = vmatprep.subr.mxu0 0.0
        %7547 = vmatpush1.msra.mxu0 0.0
        %7548 = vmatprep.subr.mxu0 0.0
        %7549 = vmatpush1.msra.mxu0 0.0
        %7550 = vmatprep.subr.mxu0 0.0
        %7551 = vmatpush1.msra.mxu0 0.0
        %7552 = vmatprep.subr.mxu0 0.0
        %7553 = vmatpush1.msra.mxu0 0.0
        %7554 = vmatprep.subr.mxu0 0.0
        %7555 = vmatpush1.msra.mxu0 0.0
        %7556 = vmatprep.subr.mxu0 0.0
        %7557 = vmatpush1.msra.mxu0 0.0
        %7558 = vmatprep.subr.mxu0 0.0
        %7559 = vmatpush1.msra.mxu0 0.0
        %7560 = vmatprep.subr.mxu0 0.0
        %7561 = vmatpush1.msra.mxu0 0.0
        %7562 = vmatprep.subr.mxu0 0.0
        %7563 = vmatpush1.msra.mxu0 0.0
        %7564 = vmatprep.subr.mxu0 0.0
        %7565 = vmatpush1.msra.mxu0 0.0
        %7566 = vmatprep.subr.mxu0 0.0
        %7567 = vmatpush1.msra.mxu0 0.0
        %7568 = vmatprep.subr.mxu0 0.0
        %7569 = vmatpush1.msra.mxu0 0.0
        %7570 = vmatprep.subr.mxu0 0.0
        %7571 = vmatpush1.msra.mxu0 0.0
        %7572 = vmatprep.subr.mxu0 0.0
        %7573 = vmatpush1.msra.mxu0 0.0
        %7574 = vmatprep.subr.mxu0 0.0
        %7575 = vmatpush1.msra.mxu0 0.0
        %7576 = vmatprep.subr.mxu0 0.0
        %7577 = vmatpush1.msra.mxu0 0.0
        %7578 = vmatprep.subr.mxu0 0.0
        %7579 = vmatpush1.msra.mxu0 0.0
        %7580 = vmatprep.subr.mxu0 0.0
        %7581 = vmatpush1.msra.mxu0 0.0
        %7582 = vmatprep.mubr.f32.mxu0 0.0
        %7583 = vmatmul.mubr.f32.gmra.mrb[0].mxu0 %v7513
        %v7584 = vpop.f32.mrb[0].mxu0
        %v7585 = vadd.f32 0.0, %v7584
        %v7586 = vpop.f32.mrb[0].mxu0
        %7587 = vmatprep.mubr.f32.mxu0 0.0
        %7588 = vmatmul.mubr.f32.gmra.mrb[0].mxu0 %v7516
        %v7589 = vpop.f32.mrb[0].mxu0
        %v7590 = vadd.f32 0.0, %v7589
        %v7591 = vpop.f32.mrb[0].mxu0
        %7592 = vdwg.mxu0
        %v7593 = vld [vmem:[#allocation17] sm:$0xff]
        %v7594 = vld [vmem:[#allocation17 + $0x8] sm:$0xff]
        %v7595 = vld [vmem:[#allocation17 + $0x10] sm:$0xff]
        %v7596 = vld [vmem:[#allocation17 + $0x18] sm:$0xff]
        %v7597 = vld [vmem:[#allocation23 + $0x10] sm:$0xff]
        %v7598 = vld [vmem:[#allocation23 + $0x18] sm:$0xff]
        %7599 = vmatprep.subr.mxu0 0.0
        %7600 = vmatpush1.msra.mxu0 %v7597
        %7601 = vmatprep.subr.mxu0 0.0
        %7602 = vmatpush1.msra.mxu0 %v7598
        %7603 = vmatprep.subr.mxu0 0.0
        %7604 = vmatpush1.msra.mxu0 0.0
        %7605 = vmatprep.subr.mxu0 0.0
        %7606 = vmatpush1.msra.mxu0 0.0
        %7607 = vmatprep.subr.mxu0 0.0
        %7608 = vmatpush1.msra.mxu0 0.0
        %7609 = vmatprep.subr.mxu0 0.0
        %7610 = vmatpush1.msra.mxu0 0.0
        %7611 = vmatprep.subr.mxu0 0.0
        %7612 = vmatpush1.msra.mxu0 0.0
        %7613 = vmatprep.subr.mxu0 0.0
        %7614 = vmatpush1.msra.mxu0 0.0
        %7615 = vmatprep.subr.mxu0 0.0
        %7616 = vmatpush1.msra.mxu0 0.0
        %7617 = vmatprep.subr.mxu0 0.0
        %7618 = vmatpush1.msra.mxu0 0.0
        %7619 = vmatprep.subr.mxu0 0.0
        %7620 = vmatpush1.msra.mxu0 0.0
        %7621 = vmatprep.subr.mxu0 0.0
        %7622 = vmatpush1.msra.mxu0 0.0
        %7623 = vmatprep.subr.mxu0 0.0
        %7624 = vmatpush1.msra.mxu0 0.0
        %7625 = vmatprep.subr.mxu0 0.0
        %7626 = vmatpush1.msra.mxu0 0.0
        %7627 = vmatprep.subr.mxu0 0.0
        %7628 = vmatpush1.msra.mxu0 0.0
        %7629 = vmatprep.subr.mxu0 0.0
        %7630 = vmatpush1.msra.mxu0 0.0
        %7631 = vmatprep.subr.mxu0 0.0
        %7632 = vmatpush1.msra.mxu0 0.0
        %7633 = vmatprep.subr.mxu0 0.0
        %7634 = vmatpush1.msra.mxu0 0.0
        %7635 = vmatprep.subr.mxu0 0.0
        %7636 = vmatpush1.msra.mxu0 0.0
        %7637 = vmatprep.subr.mxu0 0.0
        %7638 = vmatpush1.msra.mxu0 0.0
        %7639 = vmatprep.subr.mxu0 0.0
        %7640 = vmatpush1.msra.mxu0 0.0
        %7641 = vmatprep.subr.mxu0 0.0
        %7642 = vmatpush1.msra.mxu0 0.0
        %7643 = vmatprep.subr.mxu0 0.0
        %7644 = vmatpush1.msra.mxu0 0.0
        %7645 = vmatprep.subr.mxu0 0.0
        %7646 = vmatpush1.msra.mxu0 0.0
        %7647 = vmatprep.subr.mxu0 0.0
        %7648 = vmatpush1.msra.mxu0 0.0
        %7649 = vmatprep.subr.mxu0 0.0
        %7650 = vmatpush1.msra.mxu0 0.0
        %7651 = vmatprep.subr.mxu0 0.0
        %7652 = vmatpush1.msra.mxu0 0.0
        %7653 = vmatprep.subr.mxu0 0.0
        %7654 = vmatpush1.msra.mxu0 0.0
        %7655 = vmatprep.subr.mxu0 0.0
        %7656 = vmatpush1.msra.mxu0 0.0
        %7657 = vmatprep.subr.mxu0 0.0
        %7658 = vmatpush1.msra.mxu0 0.0
        %7659 = vmatprep.subr.mxu0 0.0
        %7660 = vmatpush1.msra.mxu0 0.0
        %7661 = vmatprep.subr.mxu0 0.0
        %7662 = vmatpush1.msra.mxu0 0.0
        %7663 = vmatprep.mubr.f32.mxu0 0.0
        %7664 = vmatmul.mubr.f32.gmra.mrb[0].mxu0 %v7513
        %v7665 = vpop.f32.mrb[0].mxu0
        %v7666 = vadd.f32 0.0, %v7665
        %v7667 = vpop.f32.mrb[0].mxu0
        %7668 = vmatprep.mubr.f32.mxu0 0.0
        %7669 = vmatmul.mubr.f32.gmra.mrb[0].mxu0 %v7516
        %v7670 = vpop.f32.mrb[0].mxu0
        %v7671 = vadd.f32 0.0, %v7670
        %v7672 = vpop.f32.mrb[0].mxu0
        %7673 = vdwg.mxu0
        %v7674 = vld [vmem:[#allocation17 + $0x20] sm:$0xff]
        %v7675 = vld [vmem:[#allocation17 + $0x28] sm:$0xff]
        %v7676 = vld [vmem:[#allocation17 + $0x30] sm:$0xff]
        %v7677 = vld [vmem:[#allocation17 + $0x38] sm:$0xff]
        %v7679 = vsel %vm5956, %v7674, 0
        %v7682 = vsel %vm5956, %v7675, 0
        %v7685 = vsel %vm5956, %v7676, 0
        %v7688 = vsel %vm5956, %v7677, 0
        %7690 = vmatprep.subr.mxu0 0.0
        %7691 = vmatpush1.msra.mxu0 %v7666
        %7692 = vmatprep.subr.mxu0 0.0
        %7693 = vmatpush1.msra.mxu0 %v7671
        %7694 = vmatprep.subr.mxu0 0.0
        %7695 = vmatpush1.msra.mxu0 0.0
        %7696 = vmatprep.subr.mxu0 0.0
        %7697 = vmatpush1.msra.mxu0 0.0
        %7698 = vmatprep.subr.mxu0 0.0
        %7699 = vmatpush1.msra.mxu0 0.0
        %7700 = vmatprep.subr.mxu0 0.0
        %7701 = vmatpush1.msra.mxu0 0.0
        %7702 = vmatprep.subr.mxu0 0.0
        %7703 = vmatpush1.msra.mxu0 0.0
        %7704 = vmatprep.subr.mxu0 0.0
        %7705 = vmatpush1.msra.mxu0 0.0
        %7706 = vmatprep.subr.mxu0 0.0
        %7707 = vmatpush1.msra.mxu0 0.0
        %7708 = vmatprep.subr.mxu0 0.0
        %7709 = vmatpush1.msra.mxu0 0.0
        %7710 = vmatprep.subr.mxu0 0.0
        %7711 = vmatpush1.msra.mxu0 0.0
        %7712 = vmatprep.subr.mxu0 0.0
        %7713 = vmatpush1.msra.mxu0 0.0
        %7714 = vmatprep.subr.mxu0 0.0
        %7715 = vmatpush1.msra.mxu0 0.0
        %7716 = vmatprep.subr.mxu0 0.0
        %7717 = vmatpush1.msra.mxu0 0.0
        %7718 = vmatprep.subr.mxu0 0.0
        %7719 = vmatpush1.msra.mxu0 0.0
        %7720 = vmatprep.subr.mxu0 0.0
        %7721 = vmatpush1.msra.mxu0 0.0
        %7722 = vmatprep.subr.mxu0 0.0
        %7723 = vmatpush1.msra.mxu0 0.0
        %7724 = vmatprep.subr.mxu0 0.0
        %7725 = vmatpush1.msra.mxu0 0.0
        %7726 = vmatprep.subr.mxu0 0.0
        %7727 = vmatpush1.msra.mxu0 0.0
        %7728 = vmatprep.subr.mxu0 0.0
        %7729 = vmatpush1.msra.mxu0 0.0
        %7730 = vmatprep.subr.mxu0 0.0
        %7731 = vmatpush1.msra.mxu0 0.0
        %7732 = vmatprep.subr.mxu0 0.0
        %7733 = vmatpush1.msra.mxu0 0.0
        %7734 = vmatprep.subr.mxu0 0.0
        %7735 = vmatpush1.msra.mxu0 0.0
        %7736 = vmatprep.subr.mxu0 0.0
        %7737 = vmatpush1.msra.mxu0 0.0
        %7738 = vmatprep.subr.mxu0 0.0
        %7739 = vmatpush1.msra.mxu0 0.0
        %7740 = vmatprep.subr.mxu0 0.0
        %7741 = vmatpush1.msra.mxu0 0.0
        %7742 = vmatprep.subr.mxu0 0.0
        %7743 = vmatpush1.msra.mxu0 0.0
        %7744 = vmatprep.subr.mxu0 0.0
        %7745 = vmatpush1.msra.mxu0 0.0
        %7746 = vmatprep.subr.mxu0 0.0
        %7747 = vmatpush1.msra.mxu0 0.0
        %7748 = vmatprep.subr.mxu0 0.0
        %7749 = vmatpush1.msra.mxu0 0.0
        %7750 = vmatprep.subr.mxu0 0.0
        %7751 = vmatpush1.msra.mxu0 0.0
        %7752 = vmatprep.subr.mxu0 0.0
        %7753 = vmatpush1.msra.mxu0 0.0
        %7754 = vmatprep.mubr.f32.mxu0 0.0
        %7755 = vmatmul.mubr.f32.gmra.mrb[0].mxu0 %v7679
        %v7756 = vpop.f32.mrb[0].mxu0
        %v7757 = vadd.f32 0.0, %v7756
        %v7758 = vpop.f32.mrb[0].mxu0
        %7759 = vmatprep.mubr.f32.mxu0 0.0
        %7760 = vmatmul.mubr.f32.gmra.mrb[0].mxu0 %v7682
        %v7761 = vpop.f32.mrb[0].mxu0
        %v7762 = vadd.f32 0.0, %v7761
        %v7763 = vpop.f32.mrb[0].mxu0
        %7764 = vmatprep.mubr.f32.mxu0 0.0
        %7765 = vmatmul.mubr.f32.gmra.mrb[0].mxu0 %v7685
        %v7766 = vpop.f32.mrb[0].mxu0
        %v7767 = vadd.f32 0.0, %v7766
        %v7768 = vpop.f32.mrb[0].mxu0
        %7769 = vmatprep.mubr.f32.mxu0 0.0
        %7770 = vmatmul.mubr.f32.gmra.mrb[0].mxu0 %v7688
        %v7771 = vpop.f32.mrb[0].mxu0
        %v7772 = vadd.f32 0.0, %v7771
        %v7773 = vpop.f32.mrb[0].mxu0
        %7774 = vdwg.mxu0
        %v7776 = vsel %vm5956, %v7593, 0
        %v7779 = vsel %vm5956, %v7594, 0
        %v7782 = vsel %vm5956, %v7595, 0
        %v7785 = vsel %vm5956, %v7596, 0
        %7787 = vmatprep.subr.mxu0 0.0
        %7788 = vmatpush1.msra.mxu0 %v7585
        %7789 = vmatprep.subr.mxu0 0.0
        %7790 = vmatpush1.msra.mxu0 %v7590
        %7791 = vmatprep.subr.mxu0 0.0
        %7792 = vmatpush1.msra.mxu0 0.0
        %7793 = vmatprep.subr.mxu0 0.0
        %7794 = vmatpush1.msra.mxu0 0.0
        %7795 = vmatprep.subr.mxu0 0.0
        %7796 = vmatpush1.msra.mxu0 0.0
        %7797 = vmatprep.subr.mxu0 0.0
        %7798 = vmatpush1.msra.mxu0 0.0
        %7799 = vmatprep.subr.mxu0 0.0
        %7800 = vmatpush1.msra.mxu0 0.0
        %7801 = vmatprep.subr.mxu0 0.0
        %7802 = vmatpush1.msra.mxu0 0.0
        %7803 = vmatprep.subr.mxu0 0.0
        %7804 = vmatpush1.msra.mxu0 0.0
        %7805 = vmatprep.subr.mxu0 0.0
        %7806 = vmatpush1.msra.mxu0 0.0
        %7807 = vmatprep.subr.mxu0 0.0
        %7808 = vmatpush1.msra.mxu0 0.0
        %7809 = vmatprep.subr.mxu0 0.0
        %7810 = vmatpush1.msra.mxu0 0.0
        %7811 = vmatprep.subr.mxu0 0.0
        %7812 = vmatpush1.msra.mxu0 0.0
        %7813 = vmatprep.subr.mxu0 0.0
        %7814 = vmatpush1.msra.mxu0 0.0
        %7815 = vmatprep.subr.mxu0 0.0
        %7816 = vmatpush1.msra.mxu0 0.0
        %7817 = vmatprep.subr.mxu0 0.0
        %7818 = vmatpush1.msra.mxu0 0.0
        %7819 = vmatprep.subr.mxu0 0.0
        %7820 = vmatpush1.msra.mxu0 0.0
        %7821 = vmatprep.subr.mxu0 0.0
        %7822 = vmatpush1.msra.mxu0 0.0
        %7823 = vmatprep.subr.mxu0 0.0
        %7824 = vmatpush1.msra.mxu0 0.0
        %7825 = vmatprep.subr.mxu0 0.0
        %7826 = vmatpush1.msra.mxu0 0.0
        %7827 = vmatprep.subr.mxu0 0.0
        %7828 = vmatpush1.msra.mxu0 0.0
        %7829 = vmatprep.subr.mxu0 0.0
        %7830 = vmatpush1.msra.mxu0 0.0
        %7831 = vmatprep.subr.mxu0 0.0
        %7832 = vmatpush1.msra.mxu0 0.0
        %7833 = vmatprep.subr.mxu0 0.0
        %7834 = vmatpush1.msra.mxu0 0.0
        %7835 = vmatprep.subr.mxu0 0.0
        %7836 = vmatpush1.msra.mxu0 0.0
        %7837 = vmatprep.subr.mxu0 0.0
        %7838 = vmatpush1.msra.mxu0 0.0
        %7839 = vmatprep.subr.mxu0 0.0
        %7840 = vmatpush1.msra.mxu0 0.0
        %7841 = vmatprep.subr.mxu0 0.0
        %7842 = vmatpush1.msra.mxu0 0.0
        %7843 = vmatprep.subr.mxu0 0.0
        %7844 = vmatpush1.msra.mxu0 0.0
        %7845 = vmatprep.subr.mxu0 0.0
        %7846 = vmatpush1.msra.mxu0 0.0
        %7847 = vmatprep.subr.mxu0 0.0
        %7848 = vmatpush1.msra.mxu0 0.0
        %7849 = vmatprep.subr.mxu0 0.0
        %7850 = vmatpush1.msra.mxu0 0.0
        %7851 = vmatprep.mubr.f32.mxu0 0.0
        %7852 = vmatmul.mubr.f32.gmra.mrb[0].mxu0 %v7776
        %v7853 = vpop.f32.mrb[0].mxu0
        %v7854 = vadd.f32 %v7757, %v7853
        %v7855 = vpop.f32.mrb[0].mxu0
        %7856 = vmatprep.mubr.f32.mxu0 0.0
        %7857 = vmatmul.mubr.f32.gmra.mrb[0].mxu0 %v7779
        %v7858 = vpop.f32.mrb[0].mxu0
        %v7859 = vadd.f32 %v7762, %v7858
        %v7860 = vpop.f32.mrb[0].mxu0
        %7861 = vmatprep.mubr.f32.mxu0 0.0
        %7862 = vmatmul.mubr.f32.gmra.mrb[0].mxu0 %v7782
        %v7863 = vpop.f32.mrb[0].mxu0
        %v7864 = vadd.f32 %v7767, %v7863
        %v7865 = vpop.f32.mrb[0].mxu0
        %7866 = vmatprep.mubr.f32.mxu0 0.0
        %7867 = vmatmul.mubr.f32.gmra.mrb[0].mxu0 %v7785
        %v7868 = vpop.f32.mrb[0].mxu0
        %v7869 = vadd.f32 %v7772, %v7868
        %v7870 = vpop.f32.mrb[0].mxu0
        %7871 = vdwg.mxu0
        %v7872 = vld [vmem:[#allocation23 + $0x20] sm:$0xff]
        %v7873 = vld [vmem:[#allocation23 + $0x28] sm:$0xff]
        %7874 = vmatprep.subr.mxu0 0.0
        %7875 = vmatpush1.msra.mxu0 %v7872
        %7876 = vmatprep.subr.mxu0 0.0
        %7877 = vmatpush1.msra.mxu0 %v7873
        %7878 = vmatprep.subr.mxu0 0.0
        %7879 = vmatpush1.msra.mxu0 0.0
        %7880 = vmatprep.subr.mxu0 0.0
        %7881 = vmatpush1.msra.mxu0 0.0
        %7882 = vmatprep.subr.mxu0 0.0
        %7883 = vmatpush1.msra.mxu0 0.0
        %7884 = vmatprep.subr.mxu0 0.0
        %7885 = vmatpush1.msra.mxu0 0.0
        %7886 = vmatprep.subr.mxu0 0.0
        %7887 = vmatpush1.msra.mxu0 0.0
        %7888 = vmatprep.subr.mxu0 0.0
        %7889 = vmatpush1.msra.mxu0 0.0
        %7890 = vmatprep.subr.mxu0 0.0
        %7891 = vmatpush1.msra.mxu0 0.0
        %7892 = vmatprep.subr.mxu0 0.0
        %7893 = vmatpush1.msra.mxu0 0.0
        %7894 = vmatprep.subr.mxu0 0.0
        %7895 = vmatpush1.msra.mxu0 0.0
        %7896 = vmatprep.subr.mxu0 0.0
        %7897 = vmatpush1.msra.mxu0 0.0
        %7898 = vmatprep.subr.mxu0 0.0
        %7899 = vmatpush1.msra.mxu0 0.0
        %7900 = vmatprep.subr.mxu0 0.0
        %7901 = vmatpush1.msra.mxu0 0.0
        %7902 = vmatprep.subr.mxu0 0.0
        %7903 = vmatpush1.msra.mxu0 0.0
        %7904 = vmatprep.subr.mxu0 0.0
        %7905 = vmatpush1.msra.mxu0 0.0
        %7906 = vmatprep.subr.mxu0 0.0
        %7907 = vmatpush1.msra.mxu0 0.0
        %7908 = vmatprep.subr.mxu0 0.0
        %7909 = vmatpush1.msra.mxu0 0.0
        %7910 = vmatprep.subr.mxu0 0.0
        %7911 = vmatpush1.msra.mxu0 0.0
        %7912 = vmatprep.subr.mxu0 0.0
        %7913 = vmatpush1.msra.mxu0 0.0
        %7914 = vmatprep.subr.mxu0 0.0
        %7915 = vmatpush1.msra.mxu0 0.0
        %7916 = vmatprep.subr.mxu0 0.0
        %7917 = vmatpush1.msra.mxu0 0.0
        %7918 = vmatprep.subr.mxu0 0.0
        %7919 = vmatpush1.msra.mxu0 0.0
        %7920 = vmatprep.subr.mxu0 0.0
        %7921 = vmatpush1.msra.mxu0 0.0
        %7922 = vmatprep.subr.mxu0 0.0
        %7923 = vmatpush1.msra.mxu0 0.0
        %7924 = vmatprep.subr.mxu0 0.0
        %7925 = vmatpush1.msra.mxu0 0.0
        %7926 = vmatprep.subr.mxu0 0.0
        %7927 = vmatpush1.msra.mxu0 0.0
        %7928 = vmatprep.subr.mxu0 0.0
        %7929 = vmatpush1.msra.mxu0 0.0
        %7930 = vmatprep.subr.mxu0 0.0
        %7931 = vmatpush1.msra.mxu0 0.0
        %7932 = vmatprep.subr.mxu0 0.0
        %7933 = vmatpush1.msra.mxu0 0.0
        %7934 = vmatprep.subr.mxu0 0.0
        %7935 = vmatpush1.msra.mxu0 0.0
        %7936 = vmatprep.subr.mxu0 0.0
        %7937 = vmatpush1.msra.mxu0 0.0
        %7938 = vmatprep.mubr.f32.mxu0 0.0
        %7939 = vmatmul.mubr.f32.gmra.mrb[0].mxu0 %v7513
        %v7940 = vpop.f32.mrb[0].mxu0
        %v7941 = vadd.f32 0.0, %v7940
        %v7942 = vpop.f32.mrb[0].mxu0
        %7943 = vmatprep.mubr.f32.mxu0 0.0
        %7944 = vmatmul.mubr.f32.gmra.mrb[0].mxu0 %v7516
        %v7945 = vpop.f32.mrb[0].mxu0
        %v7946 = vadd.f32 0.0, %v7945
        %v7947 = vpop.f32.mrb[0].mxu0
        %7948 = vdwg.mxu0
        %v7949 = vld [vmem:[#allocation17 + $0x40] sm:$0xff]
        %v7950 = vld [vmem:[#allocation17 + $0x48] sm:$0xff]
        %v7951 = vld [vmem:[#allocation17 + $0x50] sm:$0xff]
        %v7952 = vld [vmem:[#allocation17 + $0x58] sm:$0xff]
        %v7954 = vsel %vm5956, %v7949, 0
        %v7957 = vsel %vm5956, %v7950, 0
        %v7960 = vsel %vm5956, %v7951, 0
        %v7963 = vsel %vm5956, %v7952, 0
        %7965 = vmatprep.subr.mxu0 0.0
        %7966 = vmatpush1.msra.mxu0 %v7941
        %7967 = vmatprep.subr.mxu0 0.0
        %7968 = vmatpush1.msra.mxu0 %v7946
        %7969 = vmatprep.subr.mxu0 0.0
        %7970 = vmatpush1.msra.mxu0 0.0
        %7971 = vmatprep.subr.mxu0 0.0
        %7972 = vmatpush1.msra.mxu0 0.0
        %7973 = vmatprep.subr.mxu0 0.0
        %7974 = vmatpush1.msra.mxu0 0.0
        %7975 = vmatprep.subr.mxu0 0.0
        %7976 = vmatpush1.msra.mxu0 0.0
        %7977 = vmatprep.subr.mxu0 0.0
        %7978 = vmatpush1.msra.mxu0 0.0
        %7979 = vmatprep.subr.mxu0 0.0
        %7980 = vmatpush1.msra.mxu0 0.0
        %7981 = vmatprep.subr.mxu0 0.0
        %7982 = vmatpush1.msra.mxu0 0.0
        %7983 = vmatprep.subr.mxu0 0.0
        %7984 = vmatpush1.msra.mxu0 0.0
        %7985 = vmatprep.subr.mxu0 0.0
        %7986 = vmatpush1.msra.mxu0 0.0
        %7987 = vmatprep.subr.mxu0 0.0
        %7988 = vmatpush1.msra.mxu0 0.0
        %7989 = vmatprep.subr.mxu0 0.0
        %7990 = vmatpush1.msra.mxu0 0.0
        %7991 = vmatprep.subr.mxu0 0.0
        %7992 = vmatpush1.msra.mxu0 0.0
        %7993 = vmatprep.subr.mxu0 0.0
        %7994 = vmatpush1.msra.mxu0 0.0
        %7995 = vmatprep.subr.mxu0 0.0
        %7996 = vmatpush1.msra.mxu0 0.0
        %7997 = vmatprep.subr.mxu0 0.0
        %7998 = vmatpush1.msra.mxu0 0.0
        %7999 = vmatprep.subr.mxu0 0.0
        %8000 = vmatpush1.msra.mxu0 0.0
        %8001 = vmatprep.subr.mxu0 0.0
        %8002 = vmatpush1.msra.mxu0 0.0
        %8003 = vmatprep.subr.mxu0 0.0
        %8004 = vmatpush1.msra.mxu0 0.0
        %8005 = vmatprep.subr.mxu0 0.0
        %8006 = vmatpush1.msra.mxu0 0.0
        %8007 = vmatprep.subr.mxu0 0.0
        %8008 = vmatpush1.msra.mxu0 0.0
        %8009 = vmatprep.subr.mxu0 0.0
        %8010 = vmatpush1.msra.mxu0 0.0
        %8011 = vmatprep.subr.mxu0 0.0
        %8012 = vmatpush1.msra.mxu0 0.0
        %8013 = vmatprep.subr.mxu0 0.0
        %8014 = vmatpush1.msra.mxu0 0.0
        %8015 = vmatprep.subr.mxu0 0.0
        %8016 = vmatpush1.msra.mxu0 0.0
        %8017 = vmatprep.subr.mxu0 0.0
        %8018 = vmatpush1.msra.mxu0 0.0
        %8019 = vmatprep.subr.mxu0 0.0
        %8020 = vmatpush1.msra.mxu0 0.0
        %8021 = vmatprep.subr.mxu0 0.0
        %8022 = vmatpush1.msra.mxu0 0.0
        %8023 = vmatprep.subr.mxu0 0.0
        %8024 = vmatpush1.msra.mxu0 0.0
        %8025 = vmatprep.subr.mxu0 0.0
        %8026 = vmatpush1.msra.mxu0 0.0
        %8027 = vmatprep.subr.mxu0 0.0
        %8028 = vmatpush1.msra.mxu0 0.0
        %8029 = vmatprep.mubr.f32.mxu0 0.0
        %8030 = vmatmul.mubr.f32.gmra.mrb[0].mxu0 %v7954
        %v8031 = vpop.f32.mrb[0].mxu0
        %v8032 = vadd.f32 0.0, %v8031
        %v8033 = vpop.f32.mrb[0].mxu0
        %8034 = vmatprep.mubr.f32.mxu0 0.0
        %8035 = vmatmul.mubr.f32.gmra.mrb[0].mxu0 %v7957
        %v8036 = vpop.f32.mrb[0].mxu0
        %v8037 = vadd.f32 0.0, %v8036
        %v8038 = vpop.f32.mrb[0].mxu0
        %8039 = vmatprep.mubr.f32.mxu0 0.0
        %8040 = vmatmul.mubr.f32.gmra.mrb[0].mxu0 %v7960
        %v8041 = vpop.f32.mrb[0].mxu0
        %v8042 = vadd.f32 0.0, %v8041
        %v8043 = vpop.f32.mrb[0].mxu0
        %8044 = vmatprep.mubr.f32.mxu0 0.0
        %8045 = vmatmul.mubr.f32.gmra.mrb[0].mxu0 %v7963
        %v8046 = vpop.f32.mrb[0].mxu0
        %v8047 = vadd.f32 0.0, %v8046
        %v8048 = vpop.f32.mrb[0].mxu0
        %8049 = vdwg.mxu0
        %v8050 = vadd.f32 %v7854, %v8032
        %v8051 = vadd.f32 %v7859, %v8037
        %v8052 = vadd.f32 %v7864, %v8042
        %v8053 = vadd.f32 %v7869, %v8047
        %v8054 = vld [vmem:[#allocation23 + $0x30] sm:$0xff]
        %v8055 = vld [vmem:[#allocation23 + $0x38] sm:$0xff]
        %8056 = vmatprep.subr.mxu0 0.0
        %8057 = vmatpush1.msra.mxu0 %v8054
        %8058 = vmatprep.subr.mxu0 0.0
        %8059 = vmatpush1.msra.mxu0 %v8055
        %8060 = vmatprep.subr.mxu0 0.0
        %8061 = vmatpush1.msra.mxu0 0.0
        %8062 = vmatprep.subr.mxu0 0.0
        %8063 = vmatpush1.msra.mxu0 0.0
        %8064 = vmatprep.subr.mxu0 0.0
        %8065 = vmatpush1.msra.mxu0 0.0
        %8066 = vmatprep.subr.mxu0 0.0
        %8067 = vmatpush1.msra.mxu0 0.0
        %8068 = vmatprep.subr.mxu0 0.0
        %8069 = vmatpush1.msra.mxu0 0.0
        %8070 = vmatprep.subr.mxu0 0.0
        %8071 = vmatpush1.msra.mxu0 0.0
        %8072 = vmatprep.subr.mxu0 0.0
        %8073 = vmatpush1.msra.mxu0 0.0
        %8074 = vmatprep.subr.mxu0 0.0
        %8075 = vmatpush1.msra.mxu0 0.0
        %8076 = vmatprep.subr.mxu0 0.0
        %8077 = vmatpush1.msra.mxu0 0.0
        %8078 = vmatprep.subr.mxu0 0.0
        %8079 = vmatpush1.msra.mxu0 0.0
        %8080 = vmatprep.subr.mxu0 0.0
        %8081 = vmatpush1.msra.mxu0 0.0
        %8082 = vmatprep.subr.mxu0 0.0
        %8083 = vmatpush1.msra.mxu0 0.0
        %8084 = vmatprep.subr.mxu0 0.0
        %8085 = vmatpush1.msra.mxu0 0.0
        %8086 = vmatprep.subr.mxu0 0.0
        %8087 = vmatpush1.msra.mxu0 0.0
        %8088 = vmatprep.subr.mxu0 0.0
        %8089 = vmatpush1.msra.mxu0 0.0
        %8090 = vmatprep.subr.mxu0 0.0
        %8091 = vmatpush1.msra.mxu0 0.0
        %8092 = vmatprep.subr.mxu0 0.0
        %8093 = vmatpush1.msra.mxu0 0.0
        %8094 = vmatprep.subr.mxu0 0.0
        %8095 = vmatpush1.msra.mxu0 0.0
        %8096 = vmatprep.subr.mxu0 0.0
        %8097 = vmatpush1.msra.mxu0 0.0
        %8098 = vmatprep.subr.mxu0 0.0
        %8099 = vmatpush1.msra.mxu0 0.0
        %8100 = vmatprep.subr.mxu0 0.0
        %8101 = vmatpush1.msra.mxu0 0.0
        %8102 = vmatprep.subr.mxu0 0.0
        %8103 = vmatpush1.msra.mxu0 0.0
        %8104 = vmatprep.subr.mxu0 0.0
        %8105 = vmatpush1.msra.mxu0 0.0
        %8106 = vmatprep.subr.mxu0 0.0
        %8107 = vmatpush1.msra.mxu0 0.0
        %8108 = vmatprep.subr.mxu0 0.0
        %8109 = vmatpush1.msra.mxu0 0.0
        %8110 = vmatprep.subr.mxu0 0.0
        %8111 = vmatpush1.msra.mxu0 0.0
        %8112 = vmatprep.subr.mxu0 0.0
        %8113 = vmatpush1.msra.mxu0 0.0
        %8114 = vmatprep.subr.mxu0 0.0
        %8115 = vmatpush1.msra.mxu0 0.0
        %8116 = vmatprep.subr.mxu0 0.0
        %8117 = vmatpush1.msra.mxu0 0.0
        %8118 = vmatprep.subr.mxu0 0.0
        %8119 = vmatpush1.msra.mxu0 0.0
        %8120 = vmatprep.mubr.f32.mxu0 0.0
        %8121 = vmatmul.mubr.f32.gmra.mrb[0].mxu0 %v7513
        %v8122 = vpop.f32.mrb[0].mxu0
        %v8123 = vadd.f32 0.0, %v8122
        %v8124 = vpop.f32.mrb[0].mxu0
        %8125 = vmatprep.mubr.f32.mxu0 0.0
        %8126 = vmatmul.mubr.f32.gmra.mrb[0].mxu0 %v7516
        %v8127 = vpop.f32.mrb[0].mxu0
        %v8128 = vadd.f32 0.0, %v8127
        %v8129 = vpop.f32.mrb[0].mxu0
        %8130 = vdwg.mxu0
        %v8131 = vld [vmem:[#allocation17 + $0x60] sm:$0xff]
        %v8132 = vld [vmem:[#allocation17 + $0x68] sm:$0xff]
        %v8133 = vld [vmem:[#allocation17 + $0x70] sm:$0xff]
        %v8134 = vld [vmem:[#allocation17 + $0x78] sm:$0xff]
        %v8136 = vsel %vm5956, %v8131, 0
        %v8139 = vsel %vm5956, %v8132, 0
        %v8142 = vsel %vm5956, %v8133, 0
        %v8145 = vsel %vm5956, %v8134, 0
        %8147 = vmatprep.subr.mxu0 0.0
        %8148 = vmatpush1.msra.mxu0 %v8123
        %8149 = vmatprep.subr.mxu0 0.0
        %8150 = vmatpush1.msra.mxu0 %v8128
        %8151 = vmatprep.subr.mxu0 0.0
        %8152 = vmatpush1.msra.mxu0 0.0
        %8153 = vmatprep.subr.mxu0 0.0
        %8154 = vmatpush1.msra.mxu0 0.0
        %8155 = vmatprep.subr.mxu0 0.0
        %8156 = vmatpush1.msra.mxu0 0.0
        %8157 = vmatprep.subr.mxu0 0.0
        %8158 = vmatpush1.msra.mxu0 0.0
        %8159 = vmatprep.subr.mxu0 0.0
        %8160 = vmatpush1.msra.mxu0 0.0
        %8161 = vmatprep.subr.mxu0 0.0
        %8162 = vmatpush1.msra.mxu0 0.0
        %8163 = vmatprep.subr.mxu0 0.0
        %8164 = vmatpush1.msra.mxu0 0.0
        %8165 = vmatprep.subr.mxu0 0.0
        %8166 = vmatpush1.msra.mxu0 0.0
        %8167 = vmatprep.subr.mxu0 0.0
        %8168 = vmatpush1.msra.mxu0 0.0
        %8169 = vmatprep.subr.mxu0 0.0
        %8170 = vmatpush1.msra.mxu0 0.0
        %8171 = vmatprep.subr.mxu0 0.0
        %8172 = vmatpush1.msra.mxu0 0.0
        %8173 = vmatprep.subr.mxu0 0.0
        %8174 = vmatpush1.msra.mxu0 0.0
        %8175 = vmatprep.subr.mxu0 0.0
        %8176 = vmatpush1.msra.mxu0 0.0
        %8177 = vmatprep.subr.mxu0 0.0
        %8178 = vmatpush1.msra.mxu0 0.0
        %8179 = vmatprep.subr.mxu0 0.0
        %8180 = vmatpush1.msra.mxu0 0.0
        %8181 = vmatprep.subr.mxu0 0.0
        %8182 = vmatpush1.msra.mxu0 0.0
        %8183 = vmatprep.subr.mxu0 0.0
        %8184 = vmatpush1.msra.mxu0 0.0
        %8185 = vmatprep.subr.mxu0 0.0
        %8186 = vmatpush1.msra.mxu0 0.0
        %8187 = vmatprep.subr.mxu0 0.0
        %8188 = vmatpush1.msra.mxu0 0.0
        %8189 = vmatprep.subr.mxu0 0.0
        %8190 = vmatpush1.msra.mxu0 0.0
        %8191 = vmatprep.subr.mxu0 0.0
        %8192 = vmatpush1.msra.mxu0 0.0
        %8193 = vmatprep.subr.mxu0 0.0
        %8194 = vmatpush1.msra.mxu0 0.0
        %8195 = vmatprep.subr.mxu0 0.0
        %8196 = vmatpush1.msra.mxu0 0.0
        %8197 = vmatprep.subr.mxu0 0.0
        %8198 = vmatpush1.msra.mxu0 0.0
        %8199 = vmatprep.subr.mxu0 0.0
        %8200 = vmatpush1.msra.mxu0 0.0
        %8201 = vmatprep.subr.mxu0 0.0
        %8202 = vmatpush1.msra.mxu0 0.0
        %8203 = vmatprep.subr.mxu0 0.0
        %8204 = vmatpush1.msra.mxu0 0.0
        %8205 = vmatprep.subr.mxu0 0.0
        %8206 = vmatpush1.msra.mxu0 0.0
        %8207 = vmatprep.subr.mxu0 0.0
        %8208 = vmatpush1.msra.mxu0 0.0
        %8209 = vmatprep.subr.mxu0 0.0
        %8210 = vmatpush1.msra.mxu0 0.0
        %8211 = vmatprep.mubr.f32.mxu0 0.0
        %8212 = vmatmul.mubr.f32.gmra.mrb[0].mxu0 %v8136
        %v8213 = vpop.f32.mrb[0].mxu0
        %v8214 = vadd.f32 0.0, %v8213
        %v8215 = vpop.f32.mrb[0].mxu0
        %8216 = vmatprep.mubr.f32.mxu0 0.0
        %8217 = vmatmul.mubr.f32.gmra.mrb[0].mxu0 %v8139
        %v8218 = vpop.f32.mrb[0].mxu0
        %v8219 = vadd.f32 0.0, %v8218
        %v8220 = vpop.f32.mrb[0].mxu0
        %8221 = vmatprep.mubr.f32.mxu0 0.0
        %8222 = vmatmul.mubr.f32.gmra.mrb[0].mxu0 %v8142
        %v8223 = vpop.f32.mrb[0].mxu0
        %v8224 = vadd.f32 0.0, %v8223
        %v8225 = vpop.f32.mrb[0].mxu0
        %8226 = vmatprep.mubr.f32.mxu0 0.0
        %8227 = vmatmul.mubr.f32.gmra.mrb[0].mxu0 %v8145
        %v8228 = vpop.f32.mrb[0].mxu0
        %v8229 = vadd.f32 0.0, %v8228
        %v8230 = vpop.f32.mrb[0].mxu0
        %8231 = vdwg.mxu0
        %v8232 = vadd.f32 %v8050, %v8214
        %v8233 = vadd.f32 %v8051, %v8219
        %v8234 = vadd.f32 %v8052, %v8224
        %v8235 = vadd.f32 %v8053, %v8229
        %v8236 = vld [vmem:[#allocation23 + $0x40] sm:$0xff]
        %v8237 = vld [vmem:[#allocation23 + $0x48] sm:$0xff]
        %8238 = vmatprep.subr.mxu0 0.0
        %8239 = vmatpush1.msra.mxu0 %v8236
        %8240 = vmatprep.subr.mxu0 0.0
        %8241 = vmatpush1.msra.mxu0 %v8237
        %8242 = vmatprep.subr.mxu0 0.0
        %8243 = vmatpush1.msra.mxu0 0.0
        %8244 = vmatprep.subr.mxu0 0.0
        %8245 = vmatpush1.msra.mxu0 0.0
        %8246 = vmatprep.subr.mxu0 0.0
        %8247 = vmatpush1.msra.mxu0 0.0
        %8248 = vmatprep.subr.mxu0 0.0
        %8249 = vmatpush1.msra.mxu0 0.0
        %8250 = vmatprep.subr.mxu0 0.0
        %8251 = vmatpush1.msra.mxu0 0.0
        %8252 = vmatprep.subr.mxu0 0.0
        %8253 = vmatpush1.msra.mxu0 0.0
        %8254 = vmatprep.subr.mxu0 0.0
        %8255 = vmatpush1.msra.mxu0 0.0
        %8256 = vmatprep.subr.mxu0 0.0
        %8257 = vmatpush1.msra.mxu0 0.0
        %8258 = vmatprep.subr.mxu0 0.0
        %8259 = vmatpush1.msra.mxu0 0.0
        %8260 = vmatprep.subr.mxu0 0.0
        %8261 = vmatpush1.msra.mxu0 0.0
        %8262 = vmatprep.subr.mxu0 0.0
        %8263 = vmatpush1.msra.mxu0 0.0
        %8264 = vmatprep.subr.mxu0 0.0
        %8265 = vmatpush1.msra.mxu0 0.0
        %8266 = vmatprep.subr.mxu0 0.0
        %8267 = vmatpush1.msra.mxu0 0.0
        %8268 = vmatprep.subr.mxu0 0.0
        %8269 = vmatpush1.msra.mxu0 0.0
        %8270 = vmatprep.subr.mxu0 0.0
        %8271 = vmatpush1.msra.mxu0 0.0
        %8272 = vmatprep.subr.mxu0 0.0
        %8273 = vmatpush1.msra.mxu0 0.0
        %8274 = vmatprep.subr.mxu0 0.0
        %8275 = vmatpush1.msra.mxu0 0.0
        %8276 = vmatprep.subr.mxu0 0.0
        %8277 = vmatpush1.msra.mxu0 0.0
        %8278 = vmatprep.subr.mxu0 0.0
        %8279 = vmatpush1.msra.mxu0 0.0
        %8280 = vmatprep.subr.mxu0 0.0
        %8281 = vmatpush1.msra.mxu0 0.0
        %8282 = vmatprep.subr.mxu0 0.0
        %8283 = vmatpush1.msra.mxu0 0.0
        %8284 = vmatprep.subr.mxu0 0.0
        %8285 = vmatpush1.msra.mxu0 0.0
        %8286 = vmatprep.subr.mxu0 0.0
        %8287 = vmatpush1.msra.mxu0 0.0
        %8288 = vmatprep.subr.mxu0 0.0
        %8289 = vmatpush1.msra.mxu0 0.0
        %8290 = vmatprep.subr.mxu0 0.0
        %8291 = vmatpush1.msra.mxu0 0.0
        %8292 = vmatprep.subr.mxu0 0.0
        %8293 = vmatpush1.msra.mxu0 0.0
        %8294 = vmatprep.subr.mxu0 0.0
        %8295 = vmatpush1.msra.mxu0 0.0
        %8296 = vmatprep.subr.mxu0 0.0
        %8297 = vmatpush1.msra.mxu0 0.0
        %8298 = vmatprep.subr.mxu0 0.0
        %8299 = vmatpush1.msra.mxu0 0.0
        %8300 = vmatprep.subr.mxu0 0.0
        %8301 = vmatpush1.msra.mxu0 0.0
        %8302 = vmatprep.mubr.f32.mxu0 0.0
        %8303 = vmatmul.mubr.f32.gmra.mrb[0].mxu0 %v7513
        %v8304 = vpop.f32.mrb[0].mxu0
        %v8305 = vadd.f32 0.0, %v8304
        %v8306 = vpop.f32.mrb[0].mxu0
        %8307 = vmatprep.mubr.f32.mxu0 0.0
        %8308 = vmatmul.mubr.f32.gmra.mrb[0].mxu0 %v7516
        %v8309 = vpop.f32.mrb[0].mxu0
        %v8310 = vadd.f32 0.0, %v8309
        %v8311 = vpop.f32.mrb[0].mxu0
        %8312 = vdwg.mxu0
        %v8313 = vld [vmem:[#allocation17 + $0x80] sm:$0xff]
        %v8314 = vld [vmem:[#allocation17 + $0x88] sm:$0xff]
        %v8315 = vld [vmem:[#allocation17 + $0x90] sm:$0xff]
        %v8316 = vld [vmem:[#allocation17 + $0x98] sm:$0xff]
        %v8318 = vsel %vm5956, %v8313, 0
        %v8321 = vsel %vm5956, %v8314, 0
        %v8324 = vsel %vm5956, %v8315, 0
        %v8327 = vsel %vm5956, %v8316, 0
        %8329 = vmatprep.subr.mxu0 0.0
        %8330 = vmatpush1.msra.mxu0 %v8305
        %8331 = vmatprep.subr.mxu0 0.0
        %8332 = vmatpush1.msra.mxu0 %v8310
        %8333 = vmatprep.subr.mxu0 0.0
        %8334 = vmatpush1.msra.mxu0 0.0
        %8335 = vmatprep.subr.mxu0 0.0
        %8336 = vmatpush1.msra.mxu0 0.0
        %8337 = vmatprep.subr.mxu0 0.0
        %8338 = vmatpush1.msra.mxu0 0.0
        %8339 = vmatprep.subr.mxu0 0.0
        %8340 = vmatpush1.msra.mxu0 0.0
        %8341 = vmatprep.subr.mxu0 0.0
        %8342 = vmatpush1.msra.mxu0 0.0
        %8343 = vmatprep.subr.mxu0 0.0
        %8344 = vmatpush1.msra.mxu0 0.0
        %8345 = vmatprep.subr.mxu0 0.0
        %8346 = vmatpush1.msra.mxu0 0.0
        %8347 = vmatprep.subr.mxu0 0.0
        %8348 = vmatpush1.msra.mxu0 0.0
        %8349 = vmatprep.subr.mxu0 0.0
        %8350 = vmatpush1.msra.mxu0 0.0
        %8351 = vmatprep.subr.mxu0 0.0
        %8352 = vmatpush1.msra.mxu0 0.0
        %8353 = vmatprep.subr.mxu0 0.0
        %8354 = vmatpush1.msra.mxu0 0.0
        %8355 = vmatprep.subr.mxu0 0.0
        %8356 = vmatpush1.msra.mxu0 0.0
        %8357 = vmatprep.subr.mxu0 0.0
        %8358 = vmatpush1.msra.mxu0 0.0
        %8359 = vmatprep.subr.mxu0 0.0
        %8360 = vmatpush1.msra.mxu0 0.0
        %8361 = vmatprep.subr.mxu0 0.0
        %8362 = vmatpush1.msra.mxu0 0.0
        %8363 = vmatprep.subr.mxu0 0.0
        %8364 = vmatpush1.msra.mxu0 0.0
        %8365 = vmatprep.subr.mxu0 0.0
        %8366 = vmatpush1.msra.mxu0 0.0
        %8367 = vmatprep.subr.mxu0 0.0
        %8368 = vmatpush1.msra.mxu0 0.0
        %8369 = vmatprep.subr.mxu0 0.0
        %8370 = vmatpush1.msra.mxu0 0.0
        %8371 = vmatprep.subr.mxu0 0.0
        %8372 = vmatpush1.msra.mxu0 0.0
        %8373 = vmatprep.subr.mxu0 0.0
        %8374 = vmatpush1.msra.mxu0 0.0
        %8375 = vmatprep.subr.mxu0 0.0
        %8376 = vmatpush1.msra.mxu0 0.0
        %8377 = vmatprep.subr.mxu0 0.0
        %8378 = vmatpush1.msra.mxu0 0.0
        %8379 = vmatprep.subr.mxu0 0.0
        %8380 = vmatpush1.msra.mxu0 0.0
        %8381 = vmatprep.subr.mxu0 0.0
        %8382 = vmatpush1.msra.mxu0 0.0
        %8383 = vmatprep.subr.mxu0 0.0
        %8384 = vmatpush1.msra.mxu0 0.0
        %8385 = vmatprep.subr.mxu0 0.0
        %8386 = vmatpush1.msra.mxu0 0.0
        %8387 = vmatprep.subr.mxu0 0.0
        %8388 = vmatpush1.msra.mxu0 0.0
        %8389 = vmatprep.subr.mxu0 0.0
        %8390 = vmatpush1.msra.mxu0 0.0
        %8391 = vmatprep.subr.mxu0 0.0
        %8392 = vmatpush1.msra.mxu0 0.0
        %8393 = vmatprep.mubr.f32.mxu0 0.0
        %8394 = vmatmul.mubr.f32.gmra.mrb[0].mxu0 %v8318
        %v8395 = vpop.f32.mrb[0].mxu0
        %v8396 = vadd.f32 0.0, %v8395
        %v8397 = vpop.f32.mrb[0].mxu0
        %8398 = vmatprep.mubr.f32.mxu0 0.0
        %8399 = vmatmul.mubr.f32.gmra.mrb[0].mxu0 %v8321
        %v8400 = vpop.f32.mrb[0].mxu0
        %v8401 = vadd.f32 0.0, %v8400
        %v8402 = vpop.f32.mrb[0].mxu0
        %8403 = vmatprep.mubr.f32.mxu0 0.0
        %8404 = vmatmul.mubr.f32.gmra.mrb[0].mxu0 %v8324
        %v8405 = vpop.f32.mrb[0].mxu0
        %v8406 = vadd.f32 0.0, %v8405
        %v8407 = vpop.f32.mrb[0].mxu0
        %8408 = vmatprep.mubr.f32.mxu0 0.0
        %8409 = vmatmul.mubr.f32.gmra.mrb[0].mxu0 %v8327
        %v8410 = vpop.f32.mrb[0].mxu0
        %v8411 = vadd.f32 0.0, %v8410
        %v8412 = vpop.f32.mrb[0].mxu0
        %8413 = vdwg.mxu0
        %v8414 = vadd.f32 %v8232, %v8396
        %v8415 = vadd.f32 %v8233, %v8401
        %v8416 = vadd.f32 %v8234, %v8406
        %v8417 = vadd.f32 %v8235, %v8411
        %v8418 = vld [vmem:[#allocation23 + $0x50] sm:$0xff]
        %v8419 = vld [vmem:[#allocation23 + $0x58] sm:$0xff]
        %8420 = vmatprep.subr.mxu0 0.0
        %8421 = vmatpush1.msra.mxu0 %v8418
        %8422 = vmatprep.subr.mxu0 0.0
        %8423 = vmatpush1.msra.mxu0 %v8419
        %8424 = vmatprep.subr.mxu0 0.0
        %8425 = vmatpush1.msra.mxu0 0.0
        %8426 = vmatprep.subr.mxu0 0.0
        %8427 = vmatpush1.msra.mxu0 0.0
        %8428 = vmatprep.subr.mxu0 0.0
        %8429 = vmatpush1.msra.mxu0 0.0
        %8430 = vmatprep.subr.mxu0 0.0
        %8431 = vmatpush1.msra.mxu0 0.0
        %8432 = vmatprep.subr.mxu0 0.0
        %8433 = vmatpush1.msra.mxu0 0.0
        %8434 = vmatprep.subr.mxu0 0.0
        %8435 = vmatpush1.msra.mxu0 0.0
        %8436 = vmatprep.subr.mxu0 0.0
        %8437 = vmatpush1.msra.mxu0 0.0
        %8438 = vmatprep.subr.mxu0 0.0
        %8439 = vmatpush1.msra.mxu0 0.0
        %8440 = vmatprep.subr.mxu0 0.0
        %8441 = vmatpush1.msra.mxu0 0.0
        %8442 = vmatprep.subr.mxu0 0.0
        %8443 = vmatpush1.msra.mxu0 0.0
        %8444 = vmatprep.subr.mxu0 0.0
        %8445 = vmatpush1.msra.mxu0 0.0
        %8446 = vmatprep.subr.mxu0 0.0
        %8447 = vmatpush1.msra.mxu0 0.0
        %8448 = vmatprep.subr.mxu0 0.0
        %8449 = vmatpush1.msra.mxu0 0.0
        %8450 = vmatprep.subr.mxu0 0.0
        %8451 = vmatpush1.msra.mxu0 0.0
        %8452 = vmatprep.subr.mxu0 0.0
        %8453 = vmatpush1.msra.mxu0 0.0
        %8454 = vmatprep.subr.mxu0 0.0
        %8455 = vmatpush1.msra.mxu0 0.0
        %8456 = vmatprep.subr.mxu0 0.0
        %8457 = vmatpush1.msra.mxu0 0.0
        %8458 = vmatprep.subr.mxu0 0.0
        %8459 = vmatpush1.msra.mxu0 0.0
        %8460 = vmatprep.subr.mxu0 0.0
        %8461 = vmatpush1.msra.mxu0 0.0
        %8462 = vmatprep.subr.mxu0 0.0
        %8463 = vmatpush1.msra.mxu0 0.0
        %8464 = vmatprep.subr.mxu0 0.0
        %8465 = vmatpush1.msra.mxu0 0.0
        %8466 = vmatprep.subr.mxu0 0.0
        %8467 = vmatpush1.msra.mxu0 0.0
        %8468 = vmatprep.subr.mxu0 0.0
        %8469 = vmatpush1.msra.mxu0 0.0
        %8470 = vmatprep.subr.mxu0 0.0
        %8471 = vmatpush1.msra.mxu0 0.0
        %8472 = vmatprep.subr.mxu0 0.0
        %8473 = vmatpush1.msra.mxu0 0.0
        %8474 = vmatprep.subr.mxu0 0.0
        %8475 = vmatpush1.msra.mxu0 0.0
        %8476 = vmatprep.subr.mxu0 0.0
        %8477 = vmatpush1.msra.mxu0 0.0
        %8478 = vmatprep.subr.mxu0 0.0
        %8479 = vmatpush1.msra.mxu0 0.0
        %8480 = vmatprep.subr.mxu0 0.0
        %8481 = vmatpush1.msra.mxu0 0.0
        %8482 = vmatprep.subr.mxu0 0.0
        %8483 = vmatpush1.msra.mxu0 0.0
        %8484 = vmatprep.mubr.f32.mxu0 0.0
        %8485 = vmatmul.mubr.f32.gmra.mrb[0].mxu0 %v7513
        %v8486 = vpop.f32.mrb[0].mxu0
        %v8487 = vadd.f32 0.0, %v8486
        %v8488 = vpop.f32.mrb[0].mxu0
        %8489 = vmatprep.mubr.f32.mxu0 0.0
        %8490 = vmatmul.mubr.f32.gmra.mrb[0].mxu0 %v7516
        %v8491 = vpop.f32.mrb[0].mxu0
        %v8492 = vadd.f32 0.0, %v8491
        %v8493 = vpop.f32.mrb[0].mxu0
        %8494 = vdwg.mxu0
        %v8495 = vld [vmem:[#allocation17 + $0xa0] sm:$0xff]
        %v8496 = vld [vmem:[#allocation17 + $0xa8] sm:$0xff]
        %v8497 = vld [vmem:[#allocation17 + $0xb0] sm:$0xff]
        %v8498 = vld [vmem:[#allocation17 + $0xb8] sm:$0xff]
        %v8500 = vsel %vm5956, %v8495, 0
        %v8503 = vsel %vm5956, %v8496, 0
        %v8506 = vsel %vm5956, %v8497, 0
        %v8509 = vsel %vm5956, %v8498, 0
        %8511 = vmatprep.subr.mxu0 0.0
        %8512 = vmatpush1.msra.mxu0 %v8487
        %8513 = vmatprep.subr.mxu0 0.0
        %8514 = vmatpush1.msra.mxu0 %v8492
        %8515 = vmatprep.subr.mxu0 0.0
        %8516 = vmatpush1.msra.mxu0 0.0
        %8517 = vmatprep.subr.mxu0 0.0
        %8518 = vmatpush1.msra.mxu0 0.0
        %8519 = vmatprep.subr.mxu0 0.0
        %8520 = vmatpush1.msra.mxu0 0.0
        %8521 = vmatprep.subr.mxu0 0.0
        %8522 = vmatpush1.msra.mxu0 0.0
        %8523 = vmatprep.subr.mxu0 0.0
        %8524 = vmatpush1.msra.mxu0 0.0
        %8525 = vmatprep.subr.mxu0 0.0
        %8526 = vmatpush1.msra.mxu0 0.0
        %8527 = vmatprep.subr.mxu0 0.0
        %8528 = vmatpush1.msra.mxu0 0.0
        %8529 = vmatprep.subr.mxu0 0.0
        %8530 = vmatpush1.msra.mxu0 0.0
        %8531 = vmatprep.subr.mxu0 0.0
        %8532 = vmatpush1.msra.mxu0 0.0
        %8533 = vmatprep.subr.mxu0 0.0
        %8534 = vmatpush1.msra.mxu0 0.0
        %8535 = vmatprep.subr.mxu0 0.0
        %8536 = vmatpush1.msra.mxu0 0.0
        %8537 = vmatprep.subr.mxu0 0.0
        %8538 = vmatpush1.msra.mxu0 0.0
        %8539 = vmatprep.subr.mxu0 0.0
        %8540 = vmatpush1.msra.mxu0 0.0
        %8541 = vmatprep.subr.mxu0 0.0
        %8542 = vmatpush1.msra.mxu0 0.0
        %8543 = vmatprep.subr.mxu0 0.0
        %8544 = vmatpush1.msra.mxu0 0.0
        %8545 = vmatprep.subr.mxu0 0.0
        %8546 = vmatpush1.msra.mxu0 0.0
        %8547 = vmatprep.subr.mxu0 0.0
        %8548 = vmatpush1.msra.mxu0 0.0
        %8549 = vmatprep.subr.mxu0 0.0
        %8550 = vmatpush1.msra.mxu0 0.0
        %8551 = vmatprep.subr.mxu0 0.0
        %8552 = vmatpush1.msra.mxu0 0.0
        %8553 = vmatprep.subr.mxu0 0.0
        %8554 = vmatpush1.msra.mxu0 0.0
        %8555 = vmatprep.subr.mxu0 0.0
        %8556 = vmatpush1.msra.mxu0 0.0
        %8557 = vmatprep.subr.mxu0 0.0
        %8558 = vmatpush1.msra.mxu0 0.0
        %8559 = vmatprep.subr.mxu0 0.0
        %8560 = vmatpush1.msra.mxu0 0.0
        %8561 = vmatprep.subr.mxu0 0.0
        %8562 = vmatpush1.msra.mxu0 0.0
        %8563 = vmatprep.subr.mxu0 0.0
        %8564 = vmatpush1.msra.mxu0 0.0
        %8565 = vmatprep.subr.mxu0 0.0
        %8566 = vmatpush1.msra.mxu0 0.0
        %8567 = vmatprep.subr.mxu0 0.0
        %8568 = vmatpush1.msra.mxu0 0.0
        %8569 = vmatprep.subr.mxu0 0.0
        %8570 = vmatpush1.msra.mxu0 0.0
        %8571 = vmatprep.subr.mxu0 0.0
        %8572 = vmatpush1.msra.mxu0 0.0
        %8573 = vmatprep.subr.mxu0 0.0
        %8574 = vmatpush1.msra.mxu0 0.0
        %8575 = vmatprep.mubr.f32.mxu0 0.0
        %8576 = vmatmul.mubr.f32.gmra.mrb[0].mxu0 %v8500
        %v8577 = vpop.f32.mrb[0].mxu0
        %v8578 = vadd.f32 0.0, %v8577
        %v8579 = vpop.f32.mrb[0].mxu0
        %8580 = vmatprep.mubr.f32.mxu0 0.0
        %8581 = vmatmul.mubr.f32.gmra.mrb[0].mxu0 %v8503
        %v8582 = vpop.f32.mrb[0].mxu0
        %v8583 = vadd.f32 0.0, %v8582
        %v8584 = vpop.f32.mrb[0].mxu0
        %8585 = vmatprep.mubr.f32.mxu0 0.0
        %8586 = vmatmul.mubr.f32.gmra.mrb[0].mxu0 %v8506
        %v8587 = vpop.f32.mrb[0].mxu0
        %v8588 = vadd.f32 0.0, %v8587
        %v8589 = vpop.f32.mrb[0].mxu0
        %8590 = vmatprep.mubr.f32.mxu0 0.0
        %8591 = vmatmul.mubr.f32.gmra.mrb[0].mxu0 %v8509
        %v8592 = vpop.f32.mrb[0].mxu0
        %v8593 = vadd.f32 0.0, %v8592
        %v8594 = vpop.f32.mrb[0].mxu0
        %8595 = vdwg.mxu0
        %v8596 = vadd.f32 %v8414, %v8578
        %v8597 = vadd.f32 %v8415, %v8583
        %v8598 = vadd.f32 %v8416, %v8588
        %v8599 = vadd.f32 %v8417, %v8593
        %v8600 = vld [vmem:[#allocation23 + $0x60] sm:$0xff]
        %v8601 = vld [vmem:[#allocation23 + $0x68] sm:$0xff]
        %8602 = vmatprep.subr.mxu0 0.0
        %8603 = vmatpush1.msra.mxu0 %v8600
        %8604 = vmatprep.subr.mxu0 0.0
        %8605 = vmatpush1.msra.mxu0 %v8601
        %8606 = vmatprep.subr.mxu0 0.0
        %8607 = vmatpush1.msra.mxu0 0.0
        %8608 = vmatprep.subr.mxu0 0.0
        %8609 = vmatpush1.msra.mxu0 0.0
        %8610 = vmatprep.subr.mxu0 0.0
        %8611 = vmatpush1.msra.mxu0 0.0
        %8612 = vmatprep.subr.mxu0 0.0
        %8613 = vmatpush1.msra.mxu0 0.0
        %8614 = vmatprep.subr.mxu0 0.0
        %8615 = vmatpush1.msra.mxu0 0.0
        %8616 = vmatprep.subr.mxu0 0.0
        %8617 = vmatpush1.msra.mxu0 0.0
        %8618 = vmatprep.subr.mxu0 0.0
        %8619 = vmatpush1.msra.mxu0 0.0
        %8620 = vmatprep.subr.mxu0 0.0
        %8621 = vmatpush1.msra.mxu0 0.0
        %8622 = vmatprep.subr.mxu0 0.0
        %8623 = vmatpush1.msra.mxu0 0.0
        %8624 = vmatprep.subr.mxu0 0.0
        %8625 = vmatpush1.msra.mxu0 0.0
        %8626 = vmatprep.subr.mxu0 0.0
        %8627 = vmatpush1.msra.mxu0 0.0
        %8628 = vmatprep.subr.mxu0 0.0
        %8629 = vmatpush1.msra.mxu0 0.0
        %8630 = vmatprep.subr.mxu0 0.0
        %8631 = vmatpush1.msra.mxu0 0.0
        %8632 = vmatprep.subr.mxu0 0.0
        %8633 = vmatpush1.msra.mxu0 0.0
        %8634 = vmatprep.subr.mxu0 0.0
        %8635 = vmatpush1.msra.mxu0 0.0
        %8636 = vmatprep.subr.mxu0 0.0
        %8637 = vmatpush1.msra.mxu0 0.0
        %8638 = vmatprep.subr.mxu0 0.0
        %8639 = vmatpush1.msra.mxu0 0.0
        %8640 = vmatprep.subr.mxu0 0.0
        %8641 = vmatpush1.msra.mxu0 0.0
        %8642 = vmatprep.subr.mxu0 0.0
        %8643 = vmatpush1.msra.mxu0 0.0
        %8644 = vmatprep.subr.mxu0 0.0
        %8645 = vmatpush1.msra.mxu0 0.0
        %8646 = vmatprep.subr.mxu0 0.0
        %8647 = vmatpush1.msra.mxu0 0.0
        %8648 = vmatprep.subr.mxu0 0.0
        %8649 = vmatpush1.msra.mxu0 0.0
        %8650 = vmatprep.subr.mxu0 0.0
        %8651 = vmatpush1.msra.mxu0 0.0
        %8652 = vmatprep.subr.mxu0 0.0
        %8653 = vmatpush1.msra.mxu0 0.0
        %8654 = vmatprep.subr.mxu0 0.0
        %8655 = vmatpush1.msra.mxu0 0.0
        %8656 = vmatprep.subr.mxu0 0.0
        %8657 = vmatpush1.msra.mxu0 0.0
        %8658 = vmatprep.subr.mxu0 0.0
        %8659 = vmatpush1.msra.mxu0 0.0
        %8660 = vmatprep.subr.mxu0 0.0
        %8661 = vmatpush1.msra.mxu0 0.0
        %8662 = vmatprep.subr.mxu0 0.0
        %8663 = vmatpush1.msra.mxu0 0.0
        %8664 = vmatprep.subr.mxu0 0.0
        %8665 = vmatpush1.msra.mxu0 0.0
        %8666 = vmatprep.mubr.f32.mxu0 0.0
        %8667 = vmatmul.mubr.f32.gmra.mrb[0].mxu0 %v7513
        %v8668 = vpop.f32.mrb[0].mxu0
        %v8669 = vadd.f32 0.0, %v8668
        %v8670 = vpop.f32.mrb[0].mxu0
        %8671 = vmatprep.mubr.f32.mxu0 0.0
        %8672 = vmatmul.mubr.f32.gmra.mrb[0].mxu0 %v7516
        %v8673 = vpop.f32.mrb[0].mxu0
        %v8674 = vadd.f32 0.0, %v8673
        %v8675 = vpop.f32.mrb[0].mxu0
        %8676 = vdwg.mxu0
        %v8677 = vld [vmem:[#allocation17 + $0xc0] sm:$0xff]
        %v8678 = vld [vmem:[#allocation17 + $0xc8] sm:$0xff]
        %v8679 = vld [vmem:[#allocation17 + $0xd0] sm:$0xff]
        %v8680 = vld [vmem:[#allocation17 + $0xd8] sm:$0xff]
        %v8682 = vsel %vm5956, %v8677, 0
        %v8685 = vsel %vm5956, %v8678, 0
        %v8688 = vsel %vm5956, %v8679, 0
        %v8691 = vsel %vm5956, %v8680, 0
        %8693 = vmatprep.subr.mxu0 0.0
        %8694 = vmatpush1.msra.mxu0 %v8669
        %8695 = vmatprep.subr.mxu0 0.0
        %8696 = vmatpush1.msra.mxu0 %v8674
        %8697 = vmatprep.subr.mxu0 0.0
        %8698 = vmatpush1.msra.mxu0 0.0
        %8699 = vmatprep.subr.mxu0 0.0
        %8700 = vmatpush1.msra.mxu0 0.0
        %8701 = vmatprep.subr.mxu0 0.0
        %8702 = vmatpush1.msra.mxu0 0.0
        %8703 = vmatprep.subr.mxu0 0.0
        %8704 = vmatpush1.msra.mxu0 0.0
        %8705 = vmatprep.subr.mxu0 0.0
        %8706 = vmatpush1.msra.mxu0 0.0
        %8707 = vmatprep.subr.mxu0 0.0
        %8708 = vmatpush1.msra.mxu0 0.0
        %8709 = vmatprep.subr.mxu0 0.0
        %8710 = vmatpush1.msra.mxu0 0.0
        %8711 = vmatprep.subr.mxu0 0.0
        %8712 = vmatpush1.msra.mxu0 0.0
        %8713 = vmatprep.subr.mxu0 0.0
        %8714 = vmatpush1.msra.mxu0 0.0
        %8715 = vmatprep.subr.mxu0 0.0
        %8716 = vmatpush1.msra.mxu0 0.0
        %8717 = vmatprep.subr.mxu0 0.0
        %8718 = vmatpush1.msra.mxu0 0.0
        %8719 = vmatprep.subr.mxu0 0.0
        %8720 = vmatpush1.msra.mxu0 0.0
        %8721 = vmatprep.subr.mxu0 0.0
        %8722 = vmatpush1.msra.mxu0 0.0
        %8723 = vmatprep.subr.mxu0 0.0
        %8724 = vmatpush1.msra.mxu0 0.0
        %8725 = vmatprep.subr.mxu0 0.0
        %8726 = vmatpush1.msra.mxu0 0.0
        %8727 = vmatprep.subr.mxu0 0.0
        %8728 = vmatpush1.msra.mxu0 0.0
        %8729 = vmatprep.subr.mxu0 0.0
        %8730 = vmatpush1.msra.mxu0 0.0
        %8731 = vmatprep.subr.mxu0 0.0
        %8732 = vmatpush1.msra.mxu0 0.0
        %8733 = vmatprep.subr.mxu0 0.0
        %8734 = vmatpush1.msra.mxu0 0.0
        %8735 = vmatprep.subr.mxu0 0.0
        %8736 = vmatpush1.msra.mxu0 0.0
        %8737 = vmatprep.subr.mxu0 0.0
        %8738 = vmatpush1.msra.mxu0 0.0
        %8739 = vmatprep.subr.mxu0 0.0
        %8740 = vmatpush1.msra.mxu0 0.0
        %8741 = vmatprep.subr.mxu0 0.0
        %8742 = vmatpush1.msra.mxu0 0.0
        %8743 = vmatprep.subr.mxu0 0.0
        %8744 = vmatpush1.msra.mxu0 0.0
        %8745 = vmatprep.subr.mxu0 0.0
        %8746 = vmatpush1.msra.mxu0 0.0
        %8747 = vmatprep.subr.mxu0 0.0
        %8748 = vmatpush1.msra.mxu0 0.0
        %8749 = vmatprep.subr.mxu0 0.0
        %8750 = vmatpush1.msra.mxu0 0.0
        %8751 = vmatprep.subr.mxu0 0.0
        %8752 = vmatpush1.msra.mxu0 0.0
        %8753 = vmatprep.subr.mxu0 0.0
        %8754 = vmatpush1.msra.mxu0 0.0
        %8755 = vmatprep.subr.mxu0 0.0
        %8756 = vmatpush1.msra.mxu0 0.0
        %8757 = vmatprep.mubr.f32.mxu0 0.0
        %8758 = vmatmul.mubr.f32.gmra.mrb[0].mxu0 %v8682
        %v8759 = vpop.f32.mrb[0].mxu0
        %v8760 = vadd.f32 0.0, %v8759
        %v8761 = vpop.f32.mrb[0].mxu0
        %8762 = vmatprep.mubr.f32.mxu0 0.0
        %8763 = vmatmul.mubr.f32.gmra.mrb[0].mxu0 %v8685
        %v8764 = vpop.f32.mrb[0].mxu0
        %v8765 = vadd.f32 0.0, %v8764
        %v8766 = vpop.f32.mrb[0].mxu0
        %8767 = vmatprep.mubr.f32.mxu0 0.0
        %8768 = vmatmul.mubr.f32.gmra.mrb[0].mxu0 %v8688
        %v8769 = vpop.f32.mrb[0].mxu0
        %v8770 = vadd.f32 0.0, %v8769
        %v8771 = vpop.f32.mrb[0].mxu0
        %8772 = vmatprep.mubr.f32.mxu0 0.0
        %8773 = vmatmul.mubr.f32.gmra.mrb[0].mxu0 %v8691
        %v8774 = vpop.f32.mrb[0].mxu0
        %v8775 = vadd.f32 0.0, %v8774
        %v8776 = vpop.f32.mrb[0].mxu0
        %8777 = vdwg.mxu0
        %v8778 = vadd.f32 %v8596, %v8760
        %v8779 = vadd.f32 %v8597, %v8765
        %v8780 = vadd.f32 %v8598, %v8770
        %v8781 = vadd.f32 %v8599, %v8775
        %v8782 = vld [vmem:[#allocation23 + $0x70] sm:$0xff]
        %v8783 = vld [vmem:[#allocation23 + $0x78] sm:$0xff]
        %8784 = vmatprep.subr.mxu0 0.0
        %8785 = vmatpush1.msra.mxu0 %v8782
        %8786 = vmatprep.subr.mxu0 0.0
        %8787 = vmatpush1.msra.mxu0 %v8783
        %8788 = vmatprep.subr.mxu0 0.0
        %8789 = vmatpush1.msra.mxu0 0.0
        %8790 = vmatprep.subr.mxu0 0.0
        %8791 = vmatpush1.msra.mxu0 0.0
        %8792 = vmatprep.subr.mxu0 0.0
        %8793 = vmatpush1.msra.mxu0 0.0
        %8794 = vmatprep.subr.mxu0 0.0
        %8795 = vmatpush1.msra.mxu0 0.0
        %8796 = vmatprep.subr.mxu0 0.0
        %8797 = vmatpush1.msra.mxu0 0.0
        %8798 = vmatprep.subr.mxu0 0.0
        %8799 = vmatpush1.msra.mxu0 0.0
        %8800 = vmatprep.subr.mxu0 0.0
        %8801 = vmatpush1.msra.mxu0 0.0
        %8802 = vmatprep.subr.mxu0 0.0
        %8803 = vmatpush1.msra.mxu0 0.0
        %8804 = vmatprep.subr.mxu0 0.0
        %8805 = vmatpush1.msra.mxu0 0.0
        %8806 = vmatprep.subr.mxu0 0.0
        %8807 = vmatpush1.msra.mxu0 0.0
        %8808 = vmatprep.subr.mxu0 0.0
        %8809 = vmatpush1.msra.mxu0 0.0
        %8810 = vmatprep.subr.mxu0 0.0
        %8811 = vmatpush1.msra.mxu0 0.0
        %8812 = vmatprep.subr.mxu0 0.0
        %8813 = vmatpush1.msra.mxu0 0.0
        %8814 = vmatprep.subr.mxu0 0.0
        %8815 = vmatpush1.msra.mxu0 0.0
        %8816 = vmatprep.subr.mxu0 0.0
        %8817 = vmatpush1.msra.mxu0 0.0
        %8818 = vmatprep.subr.mxu0 0.0
        %8819 = vmatpush1.msra.mxu0 0.0
        %8820 = vmatprep.subr.mxu0 0.0
        %8821 = vmatpush1.msra.mxu0 0.0
        %8822 = vmatprep.subr.mxu0 0.0
        %8823 = vmatpush1.msra.mxu0 0.0
        %8824 = vmatprep.subr.mxu0 0.0
        %8825 = vmatpush1.msra.mxu0 0.0
        %8826 = vmatprep.subr.mxu0 0.0
        %8827 = vmatpush1.msra.mxu0 0.0
        %8828 = vmatprep.subr.mxu0 0.0
        %8829 = vmatpush1.msra.mxu0 0.0
        %8830 = vmatprep.subr.mxu0 0.0
        %8831 = vmatpush1.msra.mxu0 0.0
        %8832 = vmatprep.subr.mxu0 0.0
        %8833 = vmatpush1.msra.mxu0 0.0
        %8834 = vmatprep.subr.mxu0 0.0
        %8835 = vmatpush1.msra.mxu0 0.0
        %8836 = vmatprep.subr.mxu0 0.0
        %8837 = vmatpush1.msra.mxu0 0.0
        %8838 = vmatprep.subr.mxu0 0.0
        %8839 = vmatpush1.msra.mxu0 0.0
        %8840 = vmatprep.subr.mxu0 0.0
        %8841 = vmatpush1.msra.mxu0 0.0
        %8842 = vmatprep.subr.mxu0 0.0
        %8843 = vmatpush1.msra.mxu0 0.0
        %8844 = vmatprep.subr.mxu0 0.0
        %8845 = vmatpush1.msra.mxu0 0.0
        %8846 = vmatprep.subr.mxu0 0.0
        %8847 = vmatpush1.msra.mxu0 0.0
        %8848 = vmatprep.mubr.f32.mxu0 0.0
        %8849 = vmatmul.mubr.f32.gmra.mrb[0].mxu0 %v7513
        %v8850 = vpop.f32.mrb[0].mxu0
        %v8851 = vadd.f32 0.0, %v8850
        %v8852 = vpop.f32.mrb[0].mxu0
        %8853 = vmatprep.mubr.f32.mxu0 0.0
        %8854 = vmatmul.mubr.f32.gmra.mrb[0].mxu0 %v7516
        %v8855 = vpop.f32.mrb[0].mxu0
        %v8856 = vadd.f32 0.0, %v8855
        %v8857 = vpop.f32.mrb[0].mxu0
        %8858 = vdwg.mxu0
        %v8859 = vld [vmem:[#allocation17 + $0xe0] sm:$0xff]
        %v8860 = vld [vmem:[#allocation17 + $0xe8] sm:$0xff]
        %v8861 = vld [vmem:[#allocation17 + $0xf0] sm:$0xff]
        %v8862 = vld [vmem:[#allocation17 + $0xf8] sm:$0xff]
        %v8864 = vsel %vm5956, %v8859, 0
        %v8867 = vsel %vm5956, %v8860, 0
        %v8870 = vsel %vm5956, %v8861, 0
        %v8873 = vsel %vm5956, %v8862, 0
        %8875 = vmatprep.subr.mxu0 0.0
        %8876 = vmatpush1.msra.mxu0 %v8851
        %8877 = vmatprep.subr.mxu0 0.0
        %8878 = vmatpush1.msra.mxu0 %v8856
        %8879 = vmatprep.subr.mxu0 0.0
        %8880 = vmatpush1.msra.mxu0 0.0
        %8881 = vmatprep.subr.mxu0 0.0
        %8882 = vmatpush1.msra.mxu0 0.0
        %8883 = vmatprep.subr.mxu0 0.0
        %8884 = vmatpush1.msra.mxu0 0.0
        %8885 = vmatprep.subr.mxu0 0.0
        %8886 = vmatpush1.msra.mxu0 0.0
        %8887 = vmatprep.subr.mxu0 0.0
        %8888 = vmatpush1.msra.mxu0 0.0
        %8889 = vmatprep.subr.mxu0 0.0
        %8890 = vmatpush1.msra.mxu0 0.0
        %8891 = vmatprep.subr.mxu0 0.0
        %8892 = vmatpush1.msra.mxu0 0.0
        %8893 = vmatprep.subr.mxu0 0.0
        %8894 = vmatpush1.msra.mxu0 0.0
        %8895 = vmatprep.subr.mxu0 0.0
        %8896 = vmatpush1.msra.mxu0 0.0
        %8897 = vmatprep.subr.mxu0 0.0
        %8898 = vmatpush1.msra.mxu0 0.0
        %8899 = vmatprep.subr.mxu0 0.0
        %8900 = vmatpush1.msra.mxu0 0.0
        %8901 = vmatprep.subr.mxu0 0.0
        %8902 = vmatpush1.msra.mxu0 0.0
        %8903 = vmatprep.subr.mxu0 0.0
        %8904 = vmatpush1.msra.mxu0 0.0
        %8905 = vmatprep.subr.mxu0 0.0
        %8906 = vmatpush1.msra.mxu0 0.0
        %8907 = vmatprep.subr.mxu0 0.0
        %8908 = vmatpush1.msra.mxu0 0.0
        %8909 = vmatprep.subr.mxu0 0.0
        %8910 = vmatpush1.msra.mxu0 0.0
        %8911 = vmatprep.subr.mxu0 0.0
        %8912 = vmatpush1.msra.mxu0 0.0
        %8913 = vmatprep.subr.mxu0 0.0
        %8914 = vmatpush1.msra.mxu0 0.0
        %8915 = vmatprep.subr.mxu0 0.0
        %8916 = vmatpush1.msra.mxu0 0.0
        %8917 = vmatprep.subr.mxu0 0.0
        %8918 = vmatpush1.msra.mxu0 0.0
        %8919 = vmatprep.subr.mxu0 0.0
        %8920 = vmatpush1.msra.mxu0 0.0
        %8921 = vmatprep.subr.mxu0 0.0
        %8922 = vmatpush1.msra.mxu0 0.0
        %8923 = vmatprep.subr.mxu0 0.0
        %8924 = vmatpush1.msra.mxu0 0.0
        %8925 = vmatprep.subr.mxu0 0.0
        %8926 = vmatpush1.msra.mxu0 0.0
        %8927 = vmatprep.subr.mxu0 0.0
        %8928 = vmatpush1.msra.mxu0 0.0
        %8929 = vmatprep.subr.mxu0 0.0
        %8930 = vmatpush1.msra.mxu0 0.0
        %8931 = vmatprep.subr.mxu0 0.0
        %8932 = vmatpush1.msra.mxu0 0.0
        %8933 = vmatprep.subr.mxu0 0.0
        %8934 = vmatpush1.msra.mxu0 0.0
        %8935 = vmatprep.subr.mxu0 0.0
        %8936 = vmatpush1.msra.mxu0 0.0
        %8937 = vmatprep.subr.mxu0 0.0
        %8938 = vmatpush1.msra.mxu0 0.0
        %8939 = vmatprep.mubr.f32.mxu0 0.0
        %8940 = vmatmul.mubr.f32.gmra.mrb[0].mxu0 %v8864
        %v8941 = vpop.f32.mrb[0].mxu0
        %v8942 = vadd.f32 0.0, %v8941
        %v8943 = vpop.f32.mrb[0].mxu0
        %8944 = vmatprep.mubr.f32.mxu0 0.0
        %8945 = vmatmul.mubr.f32.gmra.mrb[0].mxu0 %v8867
        %v8946 = vpop.f32.mrb[0].mxu0
        %v8947 = vadd.f32 0.0, %v8946
        %v8948 = vpop.f32.mrb[0].mxu0
        %8949 = vmatprep.mubr.f32.mxu0 0.0
        %8950 = vmatmul.mubr.f32.gmra.mrb[0].mxu0 %v8870
        %v8951 = vpop.f32.mrb[0].mxu0
        %v8952 = vadd.f32 0.0, %v8951
        %v8953 = vpop.f32.mrb[0].mxu0
        %8954 = vmatprep.mubr.f32.mxu0 0.0
        %8955 = vmatmul.mubr.f32.gmra.mrb[0].mxu0 %v8873
        %v8956 = vpop.f32.mrb[0].mxu0
        %v8957 = vadd.f32 0.0, %v8956
        %v8958 = vpop.f32.mrb[0].mxu0
        %8959 = vdwg.mxu0
        %v8960 = vadd.f32 %v8778, %v8942
        %v8961 = vadd.f32 %v8779, %v8947
        %v8962 = vadd.f32 %v8780, %v8952
        %v8963 = vadd.f32 %v8781, %v8957
        %v8964 = vld [vmem:[#allocation23 + $0x80] sm:$0xff]
        %v8965 = vld [vmem:[#allocation23 + $0x88] sm:$0xff]
        %8966 = vmatprep.subr.mxu0 0.0
        %8967 = vmatpush1.msra.mxu0 %v8964
        %8968 = vmatprep.subr.mxu0 0.0
        %8969 = vmatpush1.msra.mxu0 %v8965
        %8970 = vmatprep.subr.mxu0 0.0
        %8971 = vmatpush1.msra.mxu0 0.0
        %8972 = vmatprep.subr.mxu0 0.0
        %8973 = vmatpush1.msra.mxu0 0.0
        %8974 = vmatprep.subr.mxu0 0.0
        %8975 = vmatpush1.msra.mxu0 0.0
        %8976 = vmatprep.subr.mxu0 0.0
        %8977 = vmatpush1.msra.mxu0 0.0
        %8978 = vmatprep.subr.mxu0 0.0
        %8979 = vmatpush1.msra.mxu0 0.0
        %8980 = vmatprep.subr.mxu0 0.0
        %8981 = vmatpush1.msra.mxu0 0.0
        %8982 = vmatprep.subr.mxu0 0.0
        %8983 = vmatpush1.msra.mxu0 0.0
        %8984 = vmatprep.subr.mxu0 0.0
        %8985 = vmatpush1.msra.mxu0 0.0
        %8986 = vmatprep.subr.mxu0 0.0
        %8987 = vmatpush1.msra.mxu0 0.0
        %8988 = vmatprep.subr.mxu0 0.0
        %8989 = vmatpush1.msra.mxu0 0.0
        %8990 = vmatprep.subr.mxu0 0.0
        %8991 = vmatpush1.msra.mxu0 0.0
        %8992 = vmatprep.subr.mxu0 0.0
        %8993 = vmatpush1.msra.mxu0 0.0
        %8994 = vmatprep.subr.mxu0 0.0
        %8995 = vmatpush1.msra.mxu0 0.0
        %8996 = vmatprep.subr.mxu0 0.0
        %8997 = vmatpush1.msra.mxu0 0.0
        %8998 = vmatprep.subr.mxu0 0.0
        %8999 = vmatpush1.msra.mxu0 0.0
        %9000 = vmatprep.subr.mxu0 0.0
        %9001 = vmatpush1.msra.mxu0 0.0
        %9002 = vmatprep.subr.mxu0 0.0
        %9003 = vmatpush1.msra.mxu0 0.0
        %9004 = vmatprep.subr.mxu0 0.0
        %9005 = vmatpush1.msra.mxu0 0.0
        %9006 = vmatprep.subr.mxu0 0.0
        %9007 = vmatpush1.msra.mxu0 0.0
        %9008 = vmatprep.subr.mxu0 0.0
        %9009 = vmatpush1.msra.mxu0 0.0
        %9010 = vmatprep.subr.mxu0 0.0
        %9011 = vmatpush1.msra.mxu0 0.0
        %9012 = vmatprep.subr.mxu0 0.0
        %9013 = vmatpush1.msra.mxu0 0.0
        %9014 = vmatprep.subr.mxu0 0.0
        %9015 = vmatpush1.msra.mxu0 0.0
        %9016 = vmatprep.subr.mxu0 0.0
        %9017 = vmatpush1.msra.mxu0 0.0
        %9018 = vmatprep.subr.mxu0 0.0
        %9019 = vmatpush1.msra.mxu0 0.0
        %9020 = vmatprep.subr.mxu0 0.0
        %9021 = vmatpush1.msra.mxu0 0.0
        %9022 = vmatprep.subr.mxu0 0.0
        %9023 = vmatpush1.msra.mxu0 0.0
        %9024 = vmatprep.subr.mxu0 0.0
        %9025 = vmatpush1.msra.mxu0 0.0
        %9026 = vmatprep.subr.mxu0 0.0
        %9027 = vmatpush1.msra.mxu0 0.0
        %9028 = vmatprep.subr.mxu0 0.0
        %9029 = vmatpush1.msra.mxu0 0.0
        %9030 = vmatprep.mubr.f32.mxu0 0.0
        %9031 = vmatmul.mubr.f32.gmra.mrb[0].mxu0 %v7513
        %v9032 = vpop.f32.mrb[0].mxu0
        %v9033 = vadd.f32 0.0, %v9032
        %v9034 = vpop.f32.mrb[0].mxu0
        %9035 = vmatprep.mubr.f32.mxu0 0.0
        %9036 = vmatmul.mubr.f32.gmra.mrb[0].mxu0 %v7516
        %v9037 = vpop.f32.mrb[0].mxu0
        %v9038 = vadd.f32 0.0, %v9037
        %v9039 = vpop.f32.mrb[0].mxu0
        %9040 = vdwg.mxu0
        %v9041 = vld [vmem:[#allocation17 + $0x100] sm:$0xff]
        %v9042 = vld [vmem:[#allocation17 + $0x108] sm:$0xff]
        %v9043 = vld [vmem:[#allocation17 + $0x110] sm:$0xff]
        %v9044 = vld [vmem:[#allocation17 + $0x118] sm:$0xff]
        %v9046 = vsel %vm5956, %v9041, 0
        %v9049 = vsel %vm5956, %v9042, 0
        %v9052 = vsel %vm5956, %v9043, 0
        %v9055 = vsel %vm5956, %v9044, 0
        %9057 = vmatprep.subr.mxu0 0.0
        %9058 = vmatpush1.msra.mxu0 %v9033
        %9059 = vmatprep.subr.mxu0 0.0
        %9060 = vmatpush1.msra.mxu0 %v9038
        %9061 = vmatprep.subr.mxu0 0.0
        %9062 = vmatpush1.msra.mxu0 0.0
        %9063 = vmatprep.subr.mxu0 0.0
        %9064 = vmatpush1.msra.mxu0 0.0
        %9065 = vmatprep.subr.mxu0 0.0
        %9066 = vmatpush1.msra.mxu0 0.0
        %9067 = vmatprep.subr.mxu0 0.0
        %9068 = vmatpush1.msra.mxu0 0.0
        %9069 = vmatprep.subr.mxu0 0.0
        %9070 = vmatpush1.msra.mxu0 0.0
        %9071 = vmatprep.subr.mxu0 0.0
        %9072 = vmatpush1.msra.mxu0 0.0
        %9073 = vmatprep.subr.mxu0 0.0
        %9074 = vmatpush1.msra.mxu0 0.0
        %9075 = vmatprep.subr.mxu0 0.0
        %9076 = vmatpush1.msra.mxu0 0.0
        %9077 = vmatprep.subr.mxu0 0.0
        %9078 = vmatpush1.msra.mxu0 0.0
        %9079 = vmatprep.subr.mxu0 0.0
        %9080 = vmatpush1.msra.mxu0 0.0
        %9081 = vmatprep.subr.mxu0 0.0
        %9082 = vmatpush1.msra.mxu0 0.0
        %9083 = vmatprep.subr.mxu0 0.0
        %9084 = vmatpush1.msra.mxu0 0.0
        %9085 = vmatprep.subr.mxu0 0.0
        %9086 = vmatpush1.msra.mxu0 0.0
        %9087 = vmatprep.subr.mxu0 0.0
        %9088 = vmatpush1.msra.mxu0 0.0
        %9089 = vmatprep.subr.mxu0 0.0
        %9090 = vmatpush1.msra.mxu0 0.0
        %9091 = vmatprep.subr.mxu0 0.0
        %9092 = vmatpush1.msra.mxu0 0.0
        %9093 = vmatprep.subr.mxu0 0.0
        %9094 = vmatpush1.msra.mxu0 0.0
        %9095 = vmatprep.subr.mxu0 0.0
        %9096 = vmatpush1.msra.mxu0 0.0
        %9097 = vmatprep.subr.mxu0 0.0
        %9098 = vmatpush1.msra.mxu0 0.0
        %9099 = vmatprep.subr.mxu0 0.0
        %9100 = vmatpush1.msra.mxu0 0.0
        %9101 = vmatprep.subr.mxu0 0.0
        %9102 = vmatpush1.msra.mxu0 0.0
        %9103 = vmatprep.subr.mxu0 0.0
        %9104 = vmatpush1.msra.mxu0 0.0
        %9105 = vmatprep.subr.mxu0 0.0
        %9106 = vmatpush1.msra.mxu0 0.0
        %9107 = vmatprep.subr.mxu0 0.0
        %9108 = vmatpush1.msra.mxu0 0.0
        %9109 = vmatprep.subr.mxu0 0.0
        %9110 = vmatpush1.msra.mxu0 0.0
        %9111 = vmatprep.subr.mxu0 0.0
        %9112 = vmatpush1.msra.mxu0 0.0
        %9113 = vmatprep.subr.mxu0 0.0
        %9114 = vmatpush1.msra.mxu0 0.0
        %9115 = vmatprep.subr.mxu0 0.0
        %9116 = vmatpush1.msra.mxu0 0.0
        %9117 = vmatprep.subr.mxu0 0.0
        %9118 = vmatpush1.msra.mxu0 0.0
        %9119 = vmatprep.subr.mxu0 0.0
        %9120 = vmatpush1.msra.mxu0 0.0
        %9121 = vmatprep.mubr.f32.mxu0 0.0
        %9122 = vmatmul.mubr.f32.gmra.mrb[0].mxu0 %v9046
        %v9123 = vpop.f32.mrb[0].mxu0
        %v9124 = vadd.f32 0.0, %v9123
        %v9125 = vpop.f32.mrb[0].mxu0
        %9126 = vmatprep.mubr.f32.mxu0 0.0
        %9127 = vmatmul.mubr.f32.gmra.mrb[0].mxu0 %v9049
        %v9128 = vpop.f32.mrb[0].mxu0
        %v9129 = vadd.f32 0.0, %v9128
        %v9130 = vpop.f32.mrb[0].mxu0
        %9131 = vmatprep.mubr.f32.mxu0 0.0
        %9132 = vmatmul.mubr.f32.gmra.mrb[0].mxu0 %v9052
        %v9133 = vpop.f32.mrb[0].mxu0
        %v9134 = vadd.f32 0.0, %v9133
        %v9135 = vpop.f32.mrb[0].mxu0
        %9136 = vmatprep.mubr.f32.mxu0 0.0
        %9137 = vmatmul.mubr.f32.gmra.mrb[0].mxu0 %v9055
        %v9138 = vpop.f32.mrb[0].mxu0
        %v9139 = vadd.f32 0.0, %v9138
        %v9140 = vpop.f32.mrb[0].mxu0
        %9141 = vdwg.mxu0
        %v9142 = vadd.f32 %v8960, %v9124
        %v9143 = vadd.f32 %v8961, %v9129
        %v9144 = vadd.f32 %v8962, %v9134
        %v9145 = vadd.f32 %v8963, %v9139
        %v9146 = vld [vmem:[#allocation19] sm:$0xff]
        %v9147 = vld [vmem:[#allocation19 + $0x8] sm:$0xff]
        %v9148 = vld [vmem:[#allocation19 + $0x10] sm:$0xff]
        %v9149 = vld [vmem:[#allocation19 + $0x18] sm:$0xff]
        %9151 = vset.pattern.permute.xlu0 0
        %9152 = vperm.xlu0 %9151, %v9146
        %v9153 = vpop.permute.xlu0 %9152
        %9156 = vset.pattern.permute.xlu0 0
        %9157 = vperm.xlu0 %9156, %v9147
        %v9158 = vpop.permute.xlu0 %9157
        %9161 = vset.pattern.permute.xlu0 0
        %9162 = vperm.xlu0 %9161, %v9148
        %v9163 = vpop.permute.xlu0 %9162
        %9166 = vset.pattern.permute.xlu0 0
        %9167 = vperm.xlu0 %9166, %v9149
        %v9168 = vpop.permute.xlu0 %9167
        %v9170 = vadd.f32 %v9142, %v9153
        %v9171 = vadd.f32 %v9143, %v9158
        %v9172 = vadd.f32 %v9144, %v9163
        %v9173 = vadd.f32 %v9145, %v9168
        %v9174 = vmax.f32 %v9170, 0.0
        %v9175 = vmax.f32 %v9171, 0.0
        %v9176 = vmax.f32 %v9172, 0.0
        %v9177 = vmax.f32 %v9173, 0.0
        %9178 = vst.msk [vmem:[%s751] sm:$0xff] %vm5956, %v9174
        %9179 = vst.msk [vmem:[%s751 + $0x8] sm:$0xff] %vm5956, %v9175
        %9180 = vst.msk [vmem:[%s751 + $0x10] sm:$0xff] %vm5956, %v9176
        %9181 = vst.msk [vmem:[%s751 + $0x18] sm:$0xff] %vm5956, %v9177
        %s9182 = sand.u32 %s390, 1
        %s9183 = scalar_lea.sflag [#allocation4], %s9182
        %s9184 = sand.u32 %s390, 1
        %s9185 = smul.addr %s9184, 32
        %s9186 = scalar_lea.vmem [#allocation28], %s9185
        // Predicated region
        $region149: #{feature_extractor.1} parent=83 // pred_check
          %p9187 = pneg %p400
        $region150: #{feature_extractor.1} parent=83 // pred_check_branch
          %9189 = sbr.rel (%p9187) target = $region152
        $region151: #{feature_extractor.1} parent=83 // pred_region
          %s9191 = ssub.s32 512, 512
          %9192 = vsyncadd %s9183, %s9191
          %s9193 = smul.addr %s41, 4
          %s9194 = smul.addr %s9193, 128
          %s9195 = scalar_lea.hbm %s16, %s9194
          %s9196 = sshll.u32 %s9186, 4
          %s9197 = int_to_ptr.vmem [resolvable:$true] %s9196
          %9202 = dma.vmem_to_hbm [thread:$0]  %s9197, 512, %s9195, %s9183, 128, 128, 8
        $region152: #{feature_extractor.1} parent=83 // pred_fallthru
          _
      $region84: #{feature_extractor.1} parent=5 // pred_fallthru
        _
      %p9203 = scmp.le.s32.totalorder 2, %s36
      // Predicated region
      $region153: #{feature_extractor.1} parent=5 // pred_check
        %p9204 = pneg %p9203
      $region154: #{feature_extractor.1} parent=5 // pred_check_branch
        %9206 = sbr.rel (%p9204) target = $region156
      $region155: #{feature_extractor.1} parent=5 // pred_region
        %s9207 = ssub.s32 %s36, 2
        // Predicated region
        $region157: #{feature_extractor.1} parent=155 // pred_check
          %p9208 = pneg %p406
        $region158: #{feature_extractor.1} parent=155 // pred_check_branch
          %9210 = sbr.rel (%p9208) target = $region160
        $region159: #{feature_extractor.1} parent=155 // pred_region
          %s9211 = sand.u32 %s391, 1
          %s9212 = scalar_lea.sflag [#allocation4], %s9211
          %s9213 = sand.u32 %s391, 1
          %s9214 = smul.addr %s9213, 32
          %s9215 = scalar_lea.vmem [#allocation28], %s9214
          %9216 = dma.done %s9212, 512
        $region160: #{feature_extractor.1} parent=155 // pred_fallthru
          _
      $region156: #{feature_extractor.1} parent=5 // pred_fallthru
        _
    $region6: #{feature_extractor.1} parent=1 // loop_footer
      %s40 = sadd.s32 1, %s36
    $region7: #{feature_extractor.1} parent=1 // loop_footer_branch
      %35 = sbr.rel target = $region3
    $region8: #{feature_extractor.1} parent=1 // loop_exit
      _
    %9217 = vsyncpa [#allocation3], 1
    %s9218 = scalar_lea.sflag [#allocation3], 1
    %9219 = vsyncpa %s9218, 1
    %9220 = vsyncpa [#allocation6], 1
    %9221 = vsyncpa [#allocation9], 1
    %9222 = vsyncpa [#allocation12], 1
    %9223 = vsyncpa [#allocation15], 1
    %9224 = vsyncpa [#allocation18], 1
    %9225 = vsyncpa [#allocation21], 1
    %9226 = vsyncpa [#allocation24], 1
    %9227 = vsyncpa [#allocation27], 1
    %9228 = vsyncpa [#allocation4], 1
    %s9229 = scalar_lea.sflag [#allocation4], 1
    %9230 = vsyncpa %s9229, 1

</llo_original>
